<compile_context>
chip_gen: v5e
topology: v5e:2x2
jax: 0.10.0
libtpu: 0.0.40
codegen_flags: <defaults>
</compile_context>

<pallas_src>
import numpy as np
import jax
import jax.numpy as jnp
from jax import lax
from jax.experimental import pallas as pl
from jax.experimental.pallas import tpu as pltpu

_EPS = 1e-5
_COL0 = 8   # interior column offset in the padded scratch: keeps the big interior
            # *stores* sublane-aligned (only the +-1 halo reads are unaligned)


# ------------------------------------------------------------------ helpers

def _bilinear_matrix(out_size, in_size):
    # 1-D interpolation weights matching F.interpolate(mode='bilinear',
    # align_corners=False).  numpy so it becomes a trace-time constant.
    i = np.arange(out_size, dtype=np.float64)
    src = np.clip((i + 0.5) * (in_size / out_size) - 0.5, 0.0, in_size - 1)
    i0 = np.floor(src).astype(np.int64)
    i1 = np.minimum(i0 + 1, in_size - 1)
    frac = (src - i0).astype(np.float32)
    w = np.zeros((out_size, in_size), np.float32)
    w[np.arange(out_size), i0] += 1.0 - frac
    w[np.arange(out_size), i1] += frac
    return w


# ------------------------------------------------------------------ wrapper

def decoder_forward(params, encoder_feature_nchw, shortcut_nchw, images_per_block=None):
    """Fused DeepLabV3+ Decoder forward.  Inputs/outputs are NCHW (PyTorch)."""
    p = params
    N, CE, Hi, Wi = encoder_feature_nchw.shape
    _, _, H, W = shortcut_nchw.shape
    HW, HiWi = H * W, Hi * Wi
    CS = p['dw1s'].shape[-1]          # 48 shortcut-branch channels (unpadded)
    c0 = _COL0

    if images_per_block is None:
        # 2-wide "parallel" grid whenever possible (one block per v7x TensorCore);
        # larger even batches pack 2 images per block to better fill MXU rows.
        images_per_block = 1 if N <= 2 else (2 if N % 2 == 0 else 1)
    ipb = images_per_block
    assert N % ipb == 0, (N, ipb)
    nblk = N // ipb

    # NCHW inputs are only *reshaped* (free); all transposition happens in-kernel.
    enc = encoder_feature_nchw.reshape(N, CE, HiWi)
    sc = shortcut_nchw.reshape(N, CE, HW)
    # trace-time constant 2-D bilinear interpolation matrix (H*W, Hi*Wi)
    m = jnp.asarray(np.kron(_bilinear_matrix(H, Hi), _bilinear_matrix(W, Wi)))

    def kernel(enc_ref, sc_ref, m_ref, wsc_ref,
               dw1e_ref, b1e_ref, dw1s_ref, b1s_ref, pw1_ref, b12_ref,
               dw2_ref, b21_ref, pw2t_ref, b22_ref,
               o_ref, pe_ref, ps_ref):
        f32, bf16 = jnp.float32, jnp.bfloat16

        def stack_rows(pieces):                        # ipb x (HW, C) -> (ipb*HW, C)
            return pieces[0] if ipb == 1 else jnp.concatenate(pieces, axis=0)

        def zero_halo(ref):
            # Only the strips the 3x3 windows actually read: rows 0 / H+1 over
            # cols c0-1..c0+W, and cols c0-1 / c0+W over all rows.
            C = ref.shape[-1]
            zr = jnp.zeros((ipb, 1, W + 2, C), f32)
            zc = jnp.zeros((ipb, H + 2, 1, C), f32)
            ref[:, 0:1, c0 - 1:c0 + W + 1, :] = zr
            ref[:, H + 1:H + 2, c0 - 1:c0 + W + 1, :] = zr
            ref[:, :, c0 - 1:c0, :] = zc
            ref[:, :, c0 + W:c0 + W + 1, :] = zc

        def dwconv_bias_relu(pad_ref, dw_ref, b_ref):
            # depthwise 3x3 (BN scale pre-folded) + bias + ReLU on the VPU.
            C = pad_ref.shape[-1]
            dw = dw_ref[...].astype(f32)               # (9, C)
            bias = b_ref[...].reshape(1, 1, C)
            outs = []
            for b in range(ipb):
                acc = jnp.zeros((H, W, C), f32)
                for dx in range(3):                    # 3 column views, reused over dy
                    col = pad_ref[b, :, c0 - 1 + dx:c0 - 1 + dx + W, :]   # (H+2, W, C)
                    for dy in range(3):
                        tap = dw[3 * dy + dx:3 * dy + dx + 1, :].reshape(1, 1, C)
                        acc = acc + col[dy:dy + H] * tap
                outs.append(jnp.maximum(acc + bias, 0.0).reshape(HW, C))
            return stack_rows(outs)                    # (ipb*HW, C) f32

        zero_halo(pe_ref)
        zero_halo(ps_ref)

        # --- shortcut = Conv2d(256 -> CS, 3x3, pad 1, bias=False).  Input arrives
        #     NCHW; transpose to NHWC once in-kernel, im2col against bf16 weights.
        for b in range(ipb):
            pe_ref[b, 1:H + 1, c0:c0 + W, :] = sc_ref[b].T.reshape(H, W, CE)
        sc_conv = jnp.zeros((ipb * HW, CS), f32)
        for dx in range(3):
            cols = [pe_ref[b, :, c0 - 1 + dx:c0 - 1 + dx + W, :] for b in range(ipb)]
            for dy in range(3):
                patch = stack_rows([c[dy:dy + H].reshape(HW, CE) for c in cols])
                sc_conv = sc_conv + jnp.dot(patch.astype(bf16), wsc_ref[3 * dy + dx],
                                            preferred_element_type=f32)
        for b in range(ipb):
            ps_ref[b, 1:H + 1, c0:c0 + W, :] = \
                sc_conv[b * HW:(b + 1) * HW].reshape(H, W, CS)

        # --- encoder_feature: bilinear resize fused with NCHW->NHWC transpose
        #     (enc block is (CE, HiWi); contract over HiWi => (HW, CE)).
        for b in range(ipb):
            enc_up = lax.dot_general(m_ref[...], enc_ref[b],
                                     (((1,), (1,)), ((), ())),
                                     preferred_element_type=f32)          # (HW, CE)
            pe_ref[b, 1:H + 1, c0:c0 + W, :] = enc_up.reshape(H, W, CE)

        # --- sep1: depthwise split across the (virtual) 256|48 concat, then one
        #     fused pointwise matmul over K = 256 + 48.
        h1e = dwconv_bias_relu(pe_ref, dw1e_ref, b1e_ref)                 # (ipb*HW, CE)
        h1s = dwconv_bias_relu(ps_ref, dw1s_ref, b1s_ref)                 # (ipb*HW, CS)
        h1 = jnp.concatenate([h1e, h1s], axis=-1).astype(bf16)            # (ipb*HW, CE+CS)
        y1 = jnp.dot(h1, pw1_ref[...], preferred_element_type=f32)
        y1 = jnp.maximum(y1 + b12_ref[...], 0.0)                          # (ipb*HW, CE)

        # --- sep2: depthwise + pointwise; pointwise computed transposed
        #     (pw2^T @ h^T) so the store is already NCHW.
        for b in range(ipb):
            pe_ref[b, 1:H + 1, c0:c0 + W, :] = \
                y1[b * HW:(b + 1) * HW].reshape(H, W, CE)
        h2 = dwconv_bias_relu(pe_ref, dw2_ref, b21_ref)                   # (ipb*HW, CE)
        for b in range(ipb):
            h2b = h2[b * HW:(b + 1) * HW, :].astype(bf16)
            y2t = lax.dot_general(pw2t_ref[...], h2b,
                                  (((1,), (1,)), ((), ())),
                                  preferred_element_type=f32)             # (CE, HW)
            o_ref[b] = jnp.maximum(y2t + b22_ref[...], 0.0).astype(o_ref.dtype)

    def weight_spec(a):
        return pl.BlockSpec(a.shape, lambda n: (0,) * a.ndim)             # resident weight

    in_specs = [
        pl.BlockSpec((ipb, CE, HiWi), lambda n: (n, 0, 0)),   # encoder feature (NCHW)
        pl.BlockSpec((ipb, CE, HW), lambda n: (n, 0, 0)),     # shortcut feature (NCHW)
        weight_spec(m), weight_spec(p['wsc']),
        weight_spec(p['dw1e']), weight_spec(p['b1e']),
        weight_spec(p['dw1s']), weight_spec(p['b1s']),
        weight_spec(p['pw1']), weight_spec(p['b12']),
        weight_spec(p['dw2']), weight_spec(p['b21']),
        weight_spec(p['pw2t']), weight_spec(p['b22']),
    ]
    args = (enc, sc, m, p['wsc'], p['dw1e'], p['b1e'], p['dw1s'], p['b1s'],
            p['pw1'], p['b12'], p['dw2'], p['b21'], p['pw2t'], p['b22'])

    flops = 2 * N * HW * (9 * CE * CS + HiWi * CE + 9 * (CE + CS)
                          + (CE + CS) * CE + 9 * CE + CE * CE)
    bytes_accessed = sum(int(a.size) * a.dtype.itemsize for a in args) \
        + N * CE * HW * enc.dtype.itemsize
    cost = pl.CostEstimate(flops=int(flops), transcendentals=0,
                           bytes_accessed=int(bytes_accessed))

    out_flat = pl.pallas_call(
        kernel,
        out_shape=jax.ShapeDtypeStruct((N, CE, HW), enc.dtype),
        grid=(nblk,),
        in_specs=in_specs,
        out_specs=pl.BlockSpec((ipb, CE, HW), lambda n: (n, 0, 0)),
        scratch_shapes=[
            pltpu.VMEM((ipb, H + 2, c0 + W + 1, CE), jnp.float32),  # 256-ch halo buffer
            pltpu.VMEM((ipb, H + 2, c0 + W + 1, CS), jnp.float32),  # 48-ch halo buffer
        ],
        compiler_params=pltpu.CompilerParams(
            dimension_semantics=("parallel",),        # v7x: one image block per core
            vmem_limit_bytes=32 * 1024 * 1024),
        cost_estimate=cost,
    )(*args)

    return out_flat.reshape(N, CE, H, W)              # already NCHW


# -------------------------------------------------------------- parameters

def _bn_fold(g, b, m, v):
    s = g / jnp.sqrt(v + _EPS)
    return s, b - s * m


def prepare_decoder_params(raw, short_channel=48):
    """Fold eval-mode BN into conv weights, move to kernel layouts.  Big matmul
    weights are shipped to HBM in bf16 (f32 MXU accumulation in-kernel); the tiny
    depthwise weights and all biases stay f32."""
    ce = 256
    cc = ce + short_channel   # 304 = sep1 input channels
    bf16 = jnp.bfloat16

    # shortcut conv OIHW (48,256,3,3) -> (9, 256, 48): (tap, Cin, Cout), no padding
    wsc = jnp.transpose(raw['shortcut_w'], (2, 3, 1, 0)).reshape(9, ce, short_channel)

    def sep_fold(p, cin):
        s1, b1 = _bn_fold(p['bn1_g'], p['bn1_b'], p['bn1_m'], p['bn1_v'])
        s2, b2 = _bn_fold(p['bn2_g'], p['bn2_b'], p['bn2_m'], p['bn2_v'])
        dw = jnp.transpose(p['dw'].reshape(cin, 9)) * s1[None, :]   # (9, cin)
        pw = jnp.transpose(p['pw']) * s2[None, :]                   # (cin, 256)
        return dw, b1, pw, b2

    dw1, b11, pw1, b12 = sep_fold(raw['sep1'], cc)
    dw2, b21, pw2, b22 = sep_fold(raw['sep2'], ce)

    return dict(
        wsc=wsc.astype(bf16),
        # sep1 split across the virtual concat: [0:256] encoder, [256:304] shortcut
        dw1e=dw1[:, :ce], b1e=b11[:ce].reshape(1, ce),
        dw1s=dw1[:, ce:], b1s=b11[ce:].reshape(1, short_channel),
        pw1=pw1.astype(bf16),                        # stacked (304, 256)
        b12=b12.reshape(1, ce),
        dw2=dw2, b21=b21.reshape(1, ce),
        pw2t=jnp.transpose(pw2).astype(bf16),        # (Cout, Cin) for the NCHW store
        b22=b22.reshape(ce, 1),
    )


def init_decoder_params(key, short_channel=48):
    """Random parameters in PyTorch layouts (OIHW convs, (C,3,3) depthwise)
    with non-trivial eval-mode BN running stats."""
    def bn_stats(k, c):
        kg, kb, km, kv = jax.random.split(k, 4)
        return dict(g=1.0 + 0.1 * jax.random.normal(kg, (c,), jnp.float32),
                    b=0.1 * jax.random.normal(kb, (c,), jnp.float32),
                    m=0.1 * jax.random.normal(km, (c,), jnp.float32),
                    v=0.5 + jax.random.uniform(kv, (c,), jnp.float32))

    def sep(k, cin, cout):
        k1, k2, k3, k4 = jax.random.split(k, 4)
        bn1 = bn_stats(k2, cin)
        bn2 = bn_stats(k4, cout)
        return dict(dw=0.1 * jax.random.normal(k1, (cin, 3, 3), jnp.float32),
                    pw=0.05 * jax.random.normal(k3, (cout, cin), jnp.float32),
                    bn1_g=bn1['g'], bn1_b=bn1['b'], bn1_m=bn1['m'], bn1_v=bn1['v'],
                    bn2_g=bn2['g'], bn2_b=bn2['b'], bn2_m=bn2['m'], bn2_v=bn2['v'])

    k0, k1, k2 = jax.random.split(key, 3)
    return {
        'shortcut_w': 0.05 * jax.random.normal(k0, (short_channel, 256, 3, 3), jnp.float32),
        'sep1': sep(k1, 256 + short_channel, 256),
        'sep2': sep(k2, 256, 256),
    }


# ---------------------------------------------------------------- reference

def _reference_forward(raw, encoder_feature_nchw, shortcut_nchw):
    """Pure-JAX reference mirroring the PyTorch module (eval-mode BN)."""
    hi = lax.Precision.HIGHEST
    enc = jnp.transpose(encoder_feature_nchw, (0, 2, 3, 1))
    sc = jnp.transpose(shortcut_nchw, (0, 2, 3, 1))
    N, Hi, Wi, _ = enc.shape
    _, H, W, _ = sc.shape

    def conv3x3(x, w_oihw):
        w = jnp.transpose(w_oihw, (2, 3, 1, 0))               # HWIO
        return lax.conv_general_dilated(
            x, w, (1, 1), 'SAME',
            dimension_numbers=('NHWC', 'HWIO', 'NHWC'), precision=hi)

    def dwconv3x3(x, w_c33):
        C = w_c33.shape[0]
        w = jnp.transpose(w_c33, (1, 2, 0))[:, :, None, :]    # (3,3,1,C)
        return lax.conv_general_dilated(
            x, w, (1, 1), 'SAME',
            dimension_numbers=('NHWC', 'HWIO', 'NHWC'),
            feature_group_count=C, precision=hi)

    def bn(x, g, b, m, v):
        return (x - m) / jnp.sqrt(v + _EPS) * g + b

    s = conv3x3(sc, raw['shortcut_w'])
    mh = jnp.asarray(_bilinear_matrix(H, Hi))
    mw = jnp.asarray(_bilinear_matrix(W, Wi))
    e = jnp.einsum('hi,nijc->nhjc', mh, enc, precision=hi)
    e = jnp.einsum('wj,nhjc->nhwc', mw, e, precision=hi)
    x = jnp.concatenate([e, s], axis=-1)
    for name in ('sep1', 'sep2'):
        p = raw[name]
        x = dwconv3x3(x, p['dw'])
        x = jax.nn.relu(bn(x, p['bn1_g'], p['bn1_b'], p['bn1_m'], p['bn1_v']))
        x = jnp.einsum('nhwc,oc->nhwo', x, p['pw'], precision=hi)
        x = jax.nn.relu(bn(x, p['bn2_g'], p['bn2_b'], p['bn2_m'], p['bn2_v']))
    return jnp.transpose(x, (0, 3, 1, 2))


# --------------------------------------------------------------------- main

if __name__ == "__main__":
    key = jax.random.PRNGKey(0)
    k_enc, k_sc, k_par = jax.random.split(key, 3)

    short_channel = 48
    # PyTorch-style NCHW inputs (module mandates 256 input channels)
    encoder_feature = jax.random.normal(k_enc, (2, 256, 4, 4), jnp.float32)
    shortcut = jax.random.normal(k_sc, (2, 256, 8, 8), jnp.float32)

    raw = init_decoder_params(k_par, short_channel)
    params = prepare_decoder_params(raw, short_channel)

    out = jax.jit(decoder_forward)(params, encoder_feature, shortcut)
    out = jax.block_until_ready(out)
    assert out.shape == (2, 256, 8, 8), out.shape
    assert out.dtype == jnp.float32

    ref = _reference_forward(raw, encoder_feature, shortcut)
    err = float(jnp.max(jnp.abs(out - ref)))
    # bf16 weights + bf16 MXU operands (f32 accumulation) => looser tolerance than
    # the previous all-f32 version.
    assert err < 5e-2, f"max abs error vs reference: {err}"

    print("KERNEL_OK")
</pallas_src>

<mosaic_0001>
module attributes {stable_mosaic.version = 11 : i64} {
  func.func @kernel(%arg0: i32, %arg1: memref<1x256x16xf32, #tpu.memory_space<vmem>>, %arg2: memref<1x256x64xf32, #tpu.memory_space<vmem>>, %arg3: memref<64x16xf32, #tpu.memory_space<vmem>>, %arg4: memref<9x256x48xbf16, #tpu.memory_space<vmem>>, %arg5: memref<9x256xf32, #tpu.memory_space<vmem>>, %arg6: memref<1x256xf32, #tpu.memory_space<vmem>>, %arg7: memref<9x48xf32, #tpu.memory_space<vmem>>, %arg8: memref<1x48xf32, #tpu.memory_space<vmem>>, %arg9: memref<304x256xbf16, #tpu.memory_space<vmem>>, %arg10: memref<1x256xf32, #tpu.memory_space<vmem>>, %arg11: memref<9x256xf32, #tpu.memory_space<vmem>>, %arg12: memref<1x256xf32, #tpu.memory_space<vmem>>, %arg13: memref<256x256xbf16, #tpu.memory_space<vmem>>, %arg14: memref<256x1xf32, #tpu.memory_space<vmem>>, %arg15: memref<1x256x64xf32, #tpu.memory_space<vmem>>, %arg16: memref<1x10x17x256xf32, #tpu.memory_space<vmem>>, %arg17: memref<1x10x17x48xf32, #tpu.memory_space<vmem>>) attributes {dimension_semantics = [#tpu.dimension_semantics<parallel>], iteration_bounds = array<i64: 2>, scalar_prefetch = 0 : i64, scratch_operands = 2 : i64, tpu.core_type = #tpu.core_type<tc>, window_params = [{transform_indices = @transform_0, window_bounds = array<i64: 1, 256, 16>}, {transform_indices = @transform_1, window_bounds = array<i64: 1, 256, 64>}, {pipeline_mode = #tpu.pipeline_mode<synchronous>, transform_indices = @transform_2, window_bounds = array<i64: 64, 16>}, {pipeline_mode = #tpu.pipeline_mode<synchronous>, transform_indices = @transform_3, window_bounds = array<i64: 9, 256, 48>}, {pipeline_mode = #tpu.pipeline_mode<synchronous>, transform_indices = @transform_4, window_bounds = array<i64: 9, 256>}, {pipeline_mode = #tpu.pipeline_mode<synchronous>, transform_indices = @transform_5, window_bounds = array<i64: 1, 256>}, {pipeline_mode = #tpu.pipeline_mode<synchronous>, transform_indices = @transform_6, window_bounds = array<i64: 9, 48>}, {pipeline_mode = #tpu.pipeline_mode<synchronous>, transform_indices = @transform_7, window_bounds = array<i64: 1, 48>}, {pipeline_mode = #tpu.pipeline_mode<synchronous>, transform_indices = @transform_8, window_bounds = array<i64: 304, 256>}, {pipeline_mode = #tpu.pipeline_mode<synchronous>, transform_indices = @transform_9, window_bounds = array<i64: 1, 256>}, {pipeline_mode = #tpu.pipeline_mode<synchronous>, transform_indices = @transform_10, window_bounds = array<i64: 9, 256>}, {pipeline_mode = #tpu.pipeline_mode<synchronous>, transform_indices = @transform_11, window_bounds = array<i64: 1, 256>}, {pipeline_mode = #tpu.pipeline_mode<synchronous>, transform_indices = @transform_12, window_bounds = array<i64: 256, 256>}, {pipeline_mode = #tpu.pipeline_mode<synchronous>, transform_indices = @transform_13, window_bounds = array<i64: 256, 1>}, {transform_indices = @transform_14, window_bounds = array<i64: 1, 256, 64>}]} {
    %cst = arith.constant 0.000000e+00 : f32
    %0 = vector.broadcast %cst : f32 to vector<1x1x10x256xf32>
    %cst_0 = arith.constant 0.000000e+00 : f32
    %1 = vector.broadcast %cst_0 : f32 to vector<1x10x1x256xf32>
    %c0 = arith.constant 0 : index
    %c0_1 = arith.constant 0 : index
    %c7 = arith.constant 7 : index
    %c0_2 = arith.constant 0 : index
    %2 = vector.load %arg16[%c0, %c0_1, %c7, %c0_2] : memref<1x10x17x256xf32, #tpu.memory_space<vmem>>, vector<1x1x10x256xf32>
    tpu.vector_store %arg16[%c0, %c0_1, %c7, %c0_2], %0 {strides = array<i32>} : memref<1x10x17x256xf32, #tpu.memory_space<vmem>>, vector<1x1x10x256xf32>,
    %c0_3 = arith.constant 0 : index
    %c9 = arith.constant 9 : index
    %c7_4 = arith.constant 7 : index
    %c0_5 = arith.constant 0 : index
    %3 = vector.load %arg16[%c0_3, %c9, %c7_4, %c0_5] : memref<1x10x17x256xf32, #tpu.memory_space<vmem>>, vector<1x1x10x256xf32>
    tpu.vector_store %arg16[%c0_3, %c9, %c7_4, %c0_5], %0 {strides = array<i32>} : memref<1x10x17x256xf32, #tpu.memory_space<vmem>>, vector<1x1x10x256xf32>,
    %c0_6 = arith.constant 0 : index
    %c0_7 = arith.constant 0 : index
    %c7_8 = arith.constant 7 : index
    %c0_9 = arith.constant 0 : index
    %4 = vector.load %arg16[%c0_6, %c0_7, %c7_8, %c0_9] : memref<1x10x17x256xf32, #tpu.memory_space<vmem>>, vector<1x10x1x256xf32>
    tpu.vector_store %arg16[%c0_6, %c0_7, %c7_8, %c0_9], %1 {strides = array<i32>} : memref<1x10x17x256xf32, #tpu.memory_space<vmem>>, vector<1x10x1x256xf32>,
    %c0_10 = arith.constant 0 : index
    %c0_11 = arith.constant 0 : index
    %c16 = arith.constant 16 : index
    %c0_12 = arith.constant 0 : index
    %5 = vector.load %arg16[%c0_10, %c0_11, %c16, %c0_12] : memref<1x10x17x256xf32, #tpu.memory_space<vmem>>, vector<1x10x1x256xf32>
    tpu.vector_store %arg16[%c0_10, %c0_11, %c16, %c0_12], %1 {strides = array<i32>} : memref<1x10x17x256xf32, #tpu.memory_space<vmem>>, vector<1x10x1x256xf32>,
    %cst_13 = arith.constant 0.000000e+00 : f32
    %6 = vector.broadcast %cst_13 : f32 to vector<1x1x10x48xf32>
    %cst_14 = arith.constant 0.000000e+00 : f32
    %7 = vector.broadcast %cst_14 : f32 to vector<1x10x1x48xf32>
    %c0_15 = arith.constant 0 : index
    %c0_16 = arith.constant 0 : index
    %c7_17 = arith.constant 7 : index
    %c0_18 = arith.constant 0 : index
    %8 = vector.load %arg17[%c0_15, %c0_16, %c7_17, %c0_18] : memref<1x10x17x48xf32, #tpu.memory_space<vmem>>, vector<1x1x10x48xf32>
    tpu.vector_store %arg17[%c0_15, %c0_16, %c7_17, %c0_18], %6 {strides = array<i32>} : memref<1x10x17x48xf32, #tpu.memory_space<vmem>>, vector<1x1x10x48xf32>,
    %c0_19 = arith.constant 0 : index
    %c9_20 = arith.constant 9 : index
    %c7_21 = arith.constant 7 : index
    %c0_22 = arith.constant 0 : index
    %9 = vector.load %arg17[%c0_19, %c9_20, %c7_21, %c0_22] : memref<1x10x17x48xf32, #tpu.memory_space<vmem>>, vector<1x1x10x48xf32>
    tpu.vector_store %arg17[%c0_19, %c9_20, %c7_21, %c0_22], %6 {strides = array<i32>} : memref<1x10x17x48xf32, #tpu.memory_space<vmem>>, vector<1x1x10x48xf32>,
    %c0_23 = arith.constant 0 : index
    %c0_24 = arith.constant 0 : index
    %c7_25 = arith.constant 7 : index
    %c0_26 = arith.constant 0 : index
    %10 = vector.load %arg17[%c0_23, %c0_24, %c7_25, %c0_26] : memref<1x10x17x48xf32, #tpu.memory_space<vmem>>, vector<1x10x1x48xf32>
    tpu.vector_store %arg17[%c0_23, %c0_24, %c7_25, %c0_26], %7 {strides = array<i32>} : memref<1x10x17x48xf32, #tpu.memory_space<vmem>>, vector<1x10x1x48xf32>,
    %c0_27 = arith.constant 0 : index
    %c0_28 = arith.constant 0 : index
    %c16_29 = arith.constant 16 : index
    %c0_30 = arith.constant 0 : index
    %11 = vector.load %arg17[%c0_27, %c0_28, %c16_29, %c0_30] : memref<1x10x17x48xf32, #tpu.memory_space<vmem>>, vector<1x10x1x48xf32>
    tpu.vector_store %arg17[%c0_27, %c0_28, %c16_29, %c0_30], %7 {strides = array<i32>} : memref<1x10x17x48xf32, #tpu.memory_space<vmem>>, vector<1x10x1x48xf32>,
    %c0_31 = arith.constant 0 : index
    %c0_32 = arith.constant 0 : index
    %c0_33 = arith.constant 0 : index
    %12 = vector.load %arg2[%c0_31, %c0_32, %c0_33] : memref<1x256x64xf32, #tpu.memory_space<vmem>>, vector<1x256x64xf32>
    %13 = vector.shape_cast %12 : vector<1x256x64xf32> to vector<256x64xf32>
    %14 = tpu.transpose %13, [1, 0] : vector<256x64xf32> -> vector<64x256xf32>
    %15 = vector.shape_cast %14 : vector<64x256xf32> to vector<8x8x256xf32>
    %c0_34 = arith.constant 0 : index
    %c1 = arith.constant 1 : index
    %c8 = arith.constant 8 : index
    %c0_35 = arith.constant 0 : index
    %16 = vector.load %arg16[%c0_34, %c1, %c8, %c0_35] : memref<1x10x17x256xf32, #tpu.memory_space<vmem>>, vector<1x8x8x256xf32>
    %17 = vector.shape_cast %16 : vector<1x8x8x256xf32> to vector<8x8x256xf32>
    %18 = vector.shape_cast %15 : vector<8x8x256xf32> to vector<1x8x8x256xf32>
    tpu.vector_store %arg16[%c0_34, %c1, %c8, %c0_35], %18 {strides = array<i32>} : memref<1x10x17x256xf32, #tpu.memory_space<vmem>>, vector<1x8x8x256xf32>,
    %cst_36 = arith.constant 0.000000e+00 : f32
    %19 = vector.broadcast %cst_36 : f32 to vector<64x48xf32>
    %c0_37 = arith.constant 0 : index
    %c0_38 = arith.constant 0 : index
    %c7_39 = arith.constant 7 : index
    %c0_40 = arith.constant 0 : index
    %20 = vector.load %arg16[%c0_37, %c0_38, %c7_39, %c0_40] : memref<1x10x17x256xf32, #tpu.memory_space<vmem>>, vector<1x10x8x256xf32>
    %21 = vector.shape_cast %20 : vector<1x10x8x256xf32> to vector<10x8x256xf32>
    %22 = vector.extract_strided_slice %21 {offsets = [0, 0, 0], sizes = [8, 8, 256], strides = [1, 1, 1]} : vector<10x8x256xf32> to vector<8x8x256xf32>
    %23 = vector.shape_cast %22 : vector<8x8x256xf32> to vector<64x256xf32>
    %24 = arith.truncf %23 : vector<64x256xf32> to vector<64x256xbf16>
    %c0_41 = arith.constant 0 : index
    %c0_42 = arith.constant 0 : index
    %c0_43 = arith.constant 0 : index
    %25 = vector.load %arg4[%c0_41, %c0_42, %c0_43] : memref<9x256x48xbf16, #tpu.memory_space<vmem>>, vector<1x256x48xbf16>
    %26 = vector.shape_cast %25 : vector<1x256x48xbf16> to vector<256x48xbf16>
    %cst_44 = arith.constant dense<0.000000e+00> : vector<64x48xf32>
    %27 = tpu.matmul %24, %26, %cst_44 {dimension_numbers = #tpu.dot_dimension_numbers<[1], [0], [0], [1], [0, 0, 1, 1], [], []>} : vector<64x256xbf16>, vector<256x48xbf16>, vector<64x48xf32> -> vector<64x48xf32>
    %28 = arith.addf %19, %27 : vector<64x48xf32>
    %29 = vector.extract_strided_slice %21 {offsets = [1, 0, 0], sizes = [8, 8, 256], strides = [1, 1, 1]} : vector<10x8x256xf32> to vector<8x8x256xf32>
    %30 = vector.shape_cast %29 : vector<8x8x256xf32> to vector<64x256xf32>
    %31 = arith.truncf %30 : vector<64x256xf32> to vector<64x256xbf16>
    %c3 = arith.constant 3 : index
    %c0_45 = arith.constant 0 : index
    %c0_46 = arith.constant 0 : index
    %32 = vector.load %arg4[%c3, %c0_45, %c0_46] : memref<9x256x48xbf16, #tpu.memory_space<vmem>>, vector<1x256x48xbf16>
    %33 = vector.shape_cast %32 : vector<1x256x48xbf16> to vector<256x48xbf16>
    %cst_47 = arith.constant dense<0.000000e+00> : vector<64x48xf32>
    %34 = tpu.matmul %31, %33, %cst_47 {dimension_numbers = #tpu.dot_dimension_numbers<[1], [0], [0], [1], [0, 0, 1, 1], [], []>} : vector<64x256xbf16>, vector<256x48xbf16>, vector<64x48xf32> -> vector<64x48xf32>
    %35 = arith.addf %28, %34 : vector<64x48xf32>
    %36 = vector.extract_strided_slice %21 {offsets = [2, 0, 0], sizes = [8, 8, 256], strides = [1, 1, 1]} : vector<10x8x256xf32> to vector<8x8x256xf32>
    %37 = vector.shape_cast %36 : vector<8x8x256xf32> to vector<64x256xf32>
    %38 = arith.truncf %37 : vector<64x256xf32> to vector<64x256xbf16>
    %c6 = arith.constant 6 : index
    %c0_48 = arith.constant 0 : index
    %c0_49 = arith.constant 0 : index
    %39 = vector.load %arg4[%c6, %c0_48, %c0_49] : memref<9x256x48xbf16, #tpu.memory_space<vmem>>, vector<1x256x48xbf16>
    %40 = vector.shape_cast %39 : vector<1x256x48xbf16> to vector<256x48xbf16>
    %cst_50 = arith.constant dense<0.000000e+00> : vector<64x48xf32>
    %41 = tpu.matmul %38, %40, %cst_50 {dimension_numbers = #tpu.dot_dimension_numbers<[1], [0], [0], [1], [0, 0, 1, 1], [], []>} : vector<64x256xbf16>, vector<256x48xbf16>, vector<64x48xf32> -> vector<64x48xf32>
    %42 = arith.addf %35, %41 : vector<64x48xf32>
    %c0_51 = arith.constant 0 : index
    %c0_52 = arith.constant 0 : index
    %c8_53 = arith.constant 8 : index
    %c0_54 = arith.constant 0 : index
    %43 = vector.load %arg16[%c0_51, %c0_52, %c8_53, %c0_54] : memref<1x10x17x256xf32, #tpu.memory_space<vmem>>, vector<1x10x8x256xf32>
    %44 = vector.shape_cast %43 : vector<1x10x8x256xf32> to vector<10x8x256xf32>
    %45 = vector.extract_strided_slice %44 {offsets = [0, 0, 0], sizes = [8, 8, 256], strides = [1, 1, 1]} : vector<10x8x256xf32> to vector<8x8x256xf32>
    %46 = vector.shape_cast %45 : vector<8x8x256xf32> to vector<64x256xf32>
    %47 = arith.truncf %46 : vector<64x256xf32> to vector<64x256xbf16>
    %c1_55 = arith.constant 1 : index
    %c0_56 = arith.constant 0 : index
    %c0_57 = arith.constant 0 : index
    %48 = vector.load %arg4[%c1_55, %c0_56, %c0_57] : memref<9x256x48xbf16, #tpu.memory_space<vmem>>, vector<1x256x48xbf16>
    %49 = vector.shape_cast %48 : vector<1x256x48xbf16> to vector<256x48xbf16>
    %cst_58 = arith.constant dense<0.000000e+00> : vector<64x48xf32>
    %50 = tpu.matmul %47, %49, %cst_58 {dimension_numbers = #tpu.dot_dimension_numbers<[1], [0], [0], [1], [0, 0, 1, 1], [], []>} : vector<64x256xbf16>, vector<256x48xbf16>, vector<64x48xf32> -> vector<64x48xf32>
    %51 = arith.addf %42, %50 : vector<64x48xf32>
    %52 = vector.extract_strided_slice %44 {offsets = [1, 0, 0], sizes = [8, 8, 256], strides = [1, 1, 1]} : vector<10x8x256xf32> to vector<8x8x256xf32>
    %53 = vector.shape_cast %52 : vector<8x8x256xf32> to vector<64x256xf32>
    %54 = arith.truncf %53 : vector<64x256xf32> to vector<64x256xbf16>
    %c4 = arith.constant 4 : index
    %c0_59 = arith.constant 0 : index
    %c0_60 = arith.constant 0 : index
    %55 = vector.load %arg4[%c4, %c0_59, %c0_60] : memref<9x256x48xbf16, #tpu.memory_space<vmem>>, vector<1x256x48xbf16>
    %56 = vector.shape_cast %55 : vector<1x256x48xbf16> to vector<256x48xbf16>
    %cst_61 = arith.constant dense<0.000000e+00> : vector<64x48xf32>
    %57 = tpu.matmul %54, %56, %cst_61 {dimension_numbers = #tpu.dot_dimension_numbers<[1], [0], [0], [1], [0, 0, 1, 1], [], []>} : vector<64x256xbf16>, vector<256x48xbf16>, vector<64x48xf32> -> vector<64x48xf32>
    %58 = arith.addf %51, %57 : vector<64x48xf32>
    %59 = vector.extract_strided_slice %44 {offsets = [2, 0, 0], sizes = [8, 8, 256], strides = [1, 1, 1]} : vector<10x8x256xf32> to vector<8x8x256xf32>
    %60 = vector.shape_cast %59 : vector<8x8x256xf32> to vector<64x256xf32>
    %61 = arith.truncf %60 : vector<64x256xf32> to vector<64x256xbf16>
    %c7_62 = arith.constant 7 : index
    %c0_63 = arith.constant 0 : index
    %c0_64 = arith.constant 0 : index
    %62 = vector.load %arg4[%c7_62, %c0_63, %c0_64] : memref<9x256x48xbf16, #tpu.memory_space<vmem>>, vector<1x256x48xbf16>
    %63 = vector.shape_cast %62 : vector<1x256x48xbf16> to vector<256x48xbf16>
    %cst_65 = arith.constant dense<0.000000e+00> : vector<64x48xf32>
    %64 = tpu.matmul %61, %63, %cst_65 {dimension_numbers = #tpu.dot_dimension_numbers<[1], [0], [0], [1], [0, 0, 1, 1], [], []>} : vector<64x256xbf16>, vector<256x48xbf16>, vector<64x48xf32> -> vector<64x48xf32>
    %65 = arith.addf %58, %64 : vector<64x48xf32>
    %c0_66 = arith.constant 0 : index
    %c0_67 = arith.constant 0 : index
    %c9_68 = arith.constant 9 : index
    %c0_69 = arith.constant 0 : index
    %66 = vector.load %arg16[%c0_66, %c0_67, %c9_68, %c0_69] : memref<1x10x17x256xf32, #tpu.memory_space<vmem>>, vector<1x10x8x256xf32>
    %67 = vector.shape_cast %66 : vector<1x10x8x256xf32> to vector<10x8x256xf32>
    %68 = vector.extract_strided_slice %67 {offsets = [0, 0, 0], sizes = [8, 8, 256], strides = [1, 1, 1]} : vector<10x8x256xf32> to vector<8x8x256xf32>
    %69 = vector.shape_cast %68 : vector<8x8x256xf32> to vector<64x256xf32>
    %70 = arith.truncf %69 : vector<64x256xf32> to vector<64x256xbf16>
    %c2 = arith.constant 2 : index
    %c0_70 = arith.constant 0 : index
    %c0_71 = arith.constant 0 : index
    %71 = vector.load %arg4[%c2, %c0_70, %c0_71] : memref<9x256x48xbf16, #tpu.memory_space<vmem>>, vector<1x256x48xbf16>
    %72 = vector.shape_cast %71 : vector<1x256x48xbf16> to vector<256x48xbf16>
    %cst_72 = arith.constant dense<0.000000e+00> : vector<64x48xf32>
    %73 = tpu.matmul %70, %72, %cst_72 {dimension_numbers = #tpu.dot_dimension_numbers<[1], [0], [0], [1], [0, 0, 1, 1], [], []>} : vector<64x256xbf16>, vector<256x48xbf16>, vector<64x48xf32> -> vector<64x48xf32>
    %74 = arith.addf %65, %73 : vector<64x48xf32>
    %75 = vector.extract_strided_slice %67 {offsets = [1, 0, 0], sizes = [8, 8, 256], strides = [1, 1, 1]} : vector<10x8x256xf32> to vector<8x8x256xf32>
    %76 = vector.shape_cast %75 : vector<8x8x256xf32> to vector<64x256xf32>
    %77 = arith.truncf %76 : vector<64x256xf32> to vector<64x256xbf16>
    %c5 = arith.constant 5 : index
    %c0_73 = arith.constant 0 : index
    %c0_74 = arith.constant 0 : index
    %78 = vector.load %arg4[%c5, %c0_73, %c0_74] : memref<9x256x48xbf16, #tpu.memory_space<vmem>>, vector<1x256x48xbf16>
    %79 = vector.shape_cast %78 : vector<1x256x48xbf16> to vector<256x48xbf16>
    %cst_75 = arith.constant dense<0.000000e+00> : vector<64x48xf32>
    %80 = tpu.matmul %77, %79, %cst_75 {dimension_numbers = #tpu.dot_dimension_numbers<[1], [0], [0], [1], [0, 0, 1, 1], [], []>} : vector<64x256xbf16>, vector<256x48xbf16>, vector<64x48xf32> -> vector<64x48xf32>
    %81 = arith.addf %74, %80 : vector<64x48xf32>
    %82 = vector.extract_strided_slice %67 {offsets = [2, 0, 0], sizes = [8, 8, 256], strides = [1, 1, 1]} : vector<10x8x256xf32> to vector<8x8x256xf32>
    %83 = vector.shape_cast %82 : vector<8x8x256xf32> to vector<64x256xf32>
    %84 = arith.truncf %83 : vector<64x256xf32> to vector<64x256xbf16>
    %c8_76 = arith.constant 8 : index
    %c0_77 = arith.constant 0 : index
    %c0_78 = arith.constant 0 : index
    %85 = vector.load %arg4[%c8_76, %c0_77, %c0_78] : memref<9x256x48xbf16, #tpu.memory_space<vmem>>, vector<1x256x48xbf16>
    %86 = vector.shape_cast %85 : vector<1x256x48xbf16> to vector<256x48xbf16>
    %cst_79 = arith.constant dense<0.000000e+00> : vector<64x48xf32>
    %87 = tpu.matmul %84, %86, %cst_79 {dimension_numbers = #tpu.dot_dimension_numbers<[1], [0], [0], [1], [0, 0, 1, 1], [], []>} : vector<64x256xbf16>, vector<256x48xbf16>, vector<64x48xf32> -> vector<64x48xf32>
    %88 = arith.addf %81, %87 : vector<64x48xf32>
    %89 = vector.shape_cast %88 : vector<64x48xf32> to vector<8x8x48xf32>
    %c0_80 = arith.constant 0 : index
    %c1_81 = arith.constant 1 : index
    %c8_82 = arith.constant 8 : index
    %c0_83 = arith.constant 0 : index
    %90 = vector.load %arg17[%c0_80, %c1_81, %c8_82, %c0_83] : memref<1x10x17x48xf32, #tpu.memory_space<vmem>>, vector<1x8x8x48xf32>
    %91 = vector.shape_cast %90 : vector<1x8x8x48xf32> to vector<8x8x48xf32>
    %92 = vector.shape_cast %89 : vector<8x8x48xf32> to vector<1x8x8x48xf32>
    tpu.vector_store %arg17[%c0_80, %c1_81, %c8_82, %c0_83], %92 {strides = array<i32>} : memref<1x10x17x48xf32, #tpu.memory_space<vmem>>, vector<1x8x8x48xf32>,
    %c0_84 = arith.constant 0 : index
    %c0_85 = arith.constant 0 : index
    %93 = vector.load %arg3[%c0_84, %c0_85] : memref<64x16xf32, #tpu.memory_space<vmem>>, vector<64x16xf32>
    %c0_86 = arith.constant 0 : index
    %c0_87 = arith.constant 0 : index
    %c0_88 = arith.constant 0 : index
    %94 = vector.load %arg1[%c0_86, %c0_87, %c0_88] : memref<1x256x16xf32, #tpu.memory_space<vmem>>, vector<1x256x16xf32>
    %95 = vector.shape_cast %94 : vector<1x256x16xf32> to vector<256x16xf32>
    %cst_89 = arith.constant dense<0.000000e+00> : vector<64x256xf32>
    %96 = tpu.matmul %93, %95, %cst_89 {dimension_numbers = #tpu.dot_dimension_numbers<[1], [1], [0], [0], [0, 0, 1, 0], [], []>} : vector<64x16xf32>, vector<256x16xf32>, vector<64x256xf32> -> vector<64x256xf32>
    %97 = vector.shape_cast %96 : vector<64x256xf32> to vector<8x8x256xf32>
    %c0_90 = arith.constant 0 : index
    %c1_91 = arith.constant 1 : index
    %c8_92 = arith.constant 8 : index
    %c0_93 = arith.constant 0 : index
    %98 = vector.load %arg16[%c0_90, %c1_91, %c8_92, %c0_93] : memref<1x10x17x256xf32, #tpu.memory_space<vmem>>, vector<1x8x8x256xf32>
    %99 = vector.shape_cast %98 : vector<1x8x8x256xf32> to vector<8x8x256xf32>
    %100 = vector.shape_cast %97 : vector<8x8x256xf32> to vector<1x8x8x256xf32>
    tpu.vector_store %arg16[%c0_90, %c1_91, %c8_92, %c0_93], %100 {strides = array<i32>} : memref<1x10x17x256xf32, #tpu.memory_space<vmem>>, vector<1x8x8x256xf32>,
    %c0_94 = arith.constant 0 : index
    %c0_95 = arith.constant 0 : index
    %101 = vector.load %arg5[%c0_94, %c0_95] : memref<9x256xf32, #tpu.memory_space<vmem>>, vector<9x256xf32>
    %c0_96 = arith.constant 0 : index
    %c0_97 = arith.constant 0 : index
    %102 = vector.load %arg6[%c0_96, %c0_97] : memref<1x256xf32, #tpu.memory_space<vmem>>, vector<1x256xf32>
    %103 = vector.shape_cast %102 : vector<1x256xf32> to vector<1x1x256xf32>
    %cst_98 = arith.constant 0.000000e+00 : f32
    %104 = vector.broadcast %cst_98 : f32 to vector<8x8x256xf32>
    %c0_99 = arith.constant 0 : index
    %c0_100 = arith.constant 0 : index
    %c7_101 = arith.constant 7 : index
    %c0_102 = arith.constant 0 : index
    %105 = vector.load %arg16[%c0_99, %c0_100, %c7_101, %c0_102] : memref<1x10x17x256xf32, #tpu.memory_space<vmem>>, vector<1x10x8x256xf32>
    %106 = vector.shape_cast %105 : vector<1x10x8x256xf32> to vector<10x8x256xf32>
    %107 = vector.extract_strided_slice %101 {offsets = [0, 0], sizes = [1, 256], strides = [1, 1]} : vector<9x256xf32> to vector<1x256xf32>
    %108 = vector.shape_cast %107 : vector<1x256xf32> to vector<1x1x256xf32>
    %109 = vector.extract_strided_slice %106 {offsets = [0, 0, 0], sizes = [8, 8, 256], strides = [1, 1, 1]} : vector<10x8x256xf32> to vector<8x8x256xf32>
    %110 = vector.broadcast %108 : vector<1x1x256xf32> to vector<8x8x256xf32>
    %111 = arith.mulf %109, %110 : vector<8x8x256xf32>
    %112 = arith.addf %104, %111 : vector<8x8x256xf32>
    %113 = vector.extract_strided_slice %101 {offsets = [3, 0], sizes = [1, 256], strides = [1, 1]} : vector<9x256xf32> to vector<1x256xf32>
    %114 = vector.shape_cast %113 : vector<1x256xf32> to vector<1x1x256xf32>
    %115 = vector.extract_strided_slice %106 {offsets = [1, 0, 0], sizes = [8, 8, 256], strides = [1, 1, 1]} : vector<10x8x256xf32> to vector<8x8x256xf32>
    %116 = vector.broadcast %114 : vector<1x1x256xf32> to vector<8x8x256xf32>
    %117 = arith.mulf %115, %116 : vector<8x8x256xf32>
    %118 = arith.addf %112, %117 : vector<8x8x256xf32>
    %119 = vector.extract_strided_slice %101 {offsets = [6, 0], sizes = [1, 256], strides = [1, 1]} : vector<9x256xf32> to vector<1x256xf32>
    %120 = vector.shape_cast %119 : vector<1x256xf32> to vector<1x1x256xf32>
    %121 = vector.extract_strided_slice %106 {offsets = [2, 0, 0], sizes = [8, 8, 256], strides = [1, 1, 1]} : vector<10x8x256xf32> to vector<8x8x256xf32>
    %122 = vector.broadcast %120 : vector<1x1x256xf32> to vector<8x8x256xf32>
    %123 = arith.mulf %121, %122 : vector<8x8x256xf32>
    %124 = arith.addf %118, %123 : vector<8x8x256xf32>
    %c0_103 = arith.constant 0 : index
    %c0_104 = arith.constant 0 : index
    %c8_105 = arith.constant 8 : index
    %c0_106 = arith.constant 0 : index
    %125 = vector.load %arg16[%c0_103, %c0_104, %c8_105, %c0_106] : memref<1x10x17x256xf32, #tpu.memory_space<vmem>>, vector<1x10x8x256xf32>
    %126 = vector.shape_cast %125 : vector<1x10x8x256xf32> to vector<10x8x256xf32>
    %127 = vector.extract_strided_slice %101 {offsets = [1, 0], sizes = [1, 256], strides = [1, 1]} : vector<9x256xf32> to vector<1x256xf32>
    %128 = vector.shape_cast %127 : vector<1x256xf32> to vector<1x1x256xf32>
    %129 = vector.extract_strided_slice %126 {offsets = [0, 0, 0], sizes = [8, 8, 256], strides = [1, 1, 1]} : vector<10x8x256xf32> to vector<8x8x256xf32>
    %130 = vector.broadcast %128 : vector<1x1x256xf32> to vector<8x8x256xf32>
    %131 = arith.mulf %129, %130 : vector<8x8x256xf32>
    %132 = arith.addf %124, %131 : vector<8x8x256xf32>
    %133 = vector.extract_strided_slice %101 {offsets = [4, 0], sizes = [1, 256], strides = [1, 1]} : vector<9x256xf32> to vector<1x256xf32>
    %134 = vector.shape_cast %133 : vector<1x256xf32> to vector<1x1x256xf32>
    %135 = vector.extract_strided_slice %126 {offsets = [1, 0, 0], sizes = [8, 8, 256], strides = [1, 1, 1]} : vector<10x8x256xf32> to vector<8x8x256xf32>
    %136 = vector.broadcast %134 : vector<1x1x256xf32> to vector<8x8x256xf32>
    %137 = arith.mulf %135, %136 : vector<8x8x256xf32>
    %138 = arith.addf %132, %137 : vector<8x8x256xf32>
    %139 = vector.extract_strided_slice %101 {offsets = [7, 0], sizes = [1, 256], strides = [1, 1]} : vector<9x256xf32> to vector<1x256xf32>
    %140 = vector.shape_cast %139 : vector<1x256xf32> to vector<1x1x256xf32>
    %141 = vector.extract_strided_slice %126 {offsets = [2, 0, 0], sizes = [8, 8, 256], strides = [1, 1, 1]} : vector<10x8x256xf32> to vector<8x8x256xf32>
    %142 = vector.broadcast %140 : vector<1x1x256xf32> to vector<8x8x256xf32>
    %143 = arith.mulf %141, %142 : vector<8x8x256xf32>
    %144 = arith.addf %138, %143 : vector<8x8x256xf32>
    %c0_107 = arith.constant 0 : index
    %c0_108 = arith.constant 0 : index
    %c9_109 = arith.constant 9 : index
    %c0_110 = arith.constant 0 : index
    %145 = vector.load %arg16[%c0_107, %c0_108, %c9_109, %c0_110] : memref<1x10x17x256xf32, #tpu.memory_space<vmem>>, vector<1x10x8x256xf32>
    %146 = vector.shape_cast %145 : vector<1x10x8x256xf32> to vector<10x8x256xf32>
    %147 = vector.extract_strided_slice %101 {offsets = [2, 0], sizes = [1, 256], strides = [1, 1]} : vector<9x256xf32> to vector<1x256xf32>
    %148 = vector.shape_cast %147 : vector<1x256xf32> to vector<1x1x256xf32>
    %149 = vector.extract_strided_slice %146 {offsets = [0, 0, 0], sizes = [8, 8, 256], strides = [1, 1, 1]} : vector<10x8x256xf32> to vector<8x8x256xf32>
    %150 = vector.broadcast %148 : vector<1x1x256xf32> to vector<8x8x256xf32>
    %151 = arith.mulf %149, %150 : vector<8x8x256xf32>
    %152 = arith.addf %144, %151 : vector<8x8x256xf32>
    %153 = vector.extract_strided_slice %101 {offsets = [5, 0], sizes = [1, 256], strides = [1, 1]} : vector<9x256xf32> to vector<1x256xf32>
    %154 = vector.shape_cast %153 : vector<1x256xf32> to vector<1x1x256xf32>
    %155 = vector.extract_strided_slice %146 {offsets = [1, 0, 0], sizes = [8, 8, 256], strides = [1, 1, 1]} : vector<10x8x256xf32> to vector<8x8x256xf32>
    %156 = vector.broadcast %154 : vector<1x1x256xf32> to vector<8x8x256xf32>
    %157 = arith.mulf %155, %156 : vector<8x8x256xf32>
    %158 = arith.addf %152, %157 : vector<8x8x256xf32>
    %159 = vector.extract_strided_slice %101 {offsets = [8, 0], sizes = [1, 256], strides = [1, 1]} : vector<9x256xf32> to vector<1x256xf32>
    %160 = vector.shape_cast %159 : vector<1x256xf32> to vector<1x1x256xf32>
    %161 = vector.extract_strided_slice %146 {offsets = [2, 0, 0], sizes = [8, 8, 256], strides = [1, 1, 1]} : vector<10x8x256xf32> to vector<8x8x256xf32>
    %162 = vector.broadcast %160 : vector<1x1x256xf32> to vector<8x8x256xf32>
    %163 = arith.mulf %161, %162 : vector<8x8x256xf32>
    %164 = arith.addf %158, %163 : vector<8x8x256xf32>
    %165 = vector.broadcast %103 : vector<1x1x256xf32> to vector<8x8x256xf32>
    %166 = arith.addf %164, %165 : vector<8x8x256xf32>
    %cst_111 = arith.constant 0.000000e+00 : f32
    %167 = vector.broadcast %cst_111 : f32 to vector<8x8x256xf32>
    %168 = arith.maximumf %166, %167 : vector<8x8x256xf32>
    %169 = vector.shape_cast %168 : vector<8x8x256xf32> to vector<64x256xf32>
    %c0_112 = arith.constant 0 : index
    %c0_113 = arith.constant 0 : index
    %170 = vector.load %arg7[%c0_112, %c0_113] : memref<9x48xf32, #tpu.memory_space<vmem>>, vector<9x48xf32>
    %c0_114 = arith.constant 0 : index
    %c0_115 = arith.constant 0 : index
    %171 = vector.load %arg8[%c0_114, %c0_115] : memref<1x48xf32, #tpu.memory_space<vmem>>, vector<1x48xf32>
    %172 = vector.shape_cast %171 : vector<1x48xf32> to vector<1x1x48xf32>
    %cst_116 = arith.constant 0.000000e+00 : f32
    %173 = vector.broadcast %cst_116 : f32 to vector<8x8x48xf32>
    %c0_117 = arith.constant 0 : index
    %c0_118 = arith.constant 0 : index
    %c7_119 = arith.constant 7 : index
    %c0_120 = arith.constant 0 : index
    %174 = vector.load %arg17[%c0_117, %c0_118, %c7_119, %c0_120] : memref<1x10x17x48xf32, #tpu.memory_space<vmem>>, vector<1x10x8x48xf32>
    %175 = vector.shape_cast %174 : vector<1x10x8x48xf32> to vector<10x8x48xf32>
    %176 = vector.extract_strided_slice %170 {offsets = [0, 0], sizes = [1, 48], strides = [1, 1]} : vector<9x48xf32> to vector<1x48xf32>
    %177 = vector.shape_cast %176 : vector<1x48xf32> to vector<1x1x48xf32>
    %178 = vector.extract_strided_slice %175 {offsets = [0, 0, 0], sizes = [8, 8, 48], strides = [1, 1, 1]} : vector<10x8x48xf32> to vector<8x8x48xf32>
    %179 = vector.broadcast %177 : vector<1x1x48xf32> to vector<8x8x48xf32>
    %180 = arith.mulf %178, %179 : vector<8x8x48xf32>
    %181 = arith.addf %173, %180 : vector<8x8x48xf32>
    %182 = vector.extract_strided_slice %170 {offsets = [3, 0], sizes = [1, 48], strides = [1, 1]} : vector<9x48xf32> to vector<1x48xf32>
    %183 = vector.shape_cast %182 : vector<1x48xf32> to vector<1x1x48xf32>
    %184 = vector.extract_strided_slice %175 {offsets = [1, 0, 0], sizes = [8, 8, 48], strides = [1, 1, 1]} : vector<10x8x48xf32> to vector<8x8x48xf32>
    %185 = vector.broadcast %183 : vector<1x1x48xf32> to vector<8x8x48xf32>
    %186 = arith.mulf %184, %185 : vector<8x8x48xf32>
    %187 = arith.addf %181, %186 : vector<8x8x48xf32>
    %188 = vector.extract_strided_slice %170 {offsets = [6, 0], sizes = [1, 48], strides = [1, 1]} : vector<9x48xf32> to vector<1x48xf32>
    %189 = vector.shape_cast %188 : vector<1x48xf32> to vector<1x1x48xf32>
    %190 = vector.extract_strided_slice %175 {offsets = [2, 0, 0], sizes = [8, 8, 48], strides = [1, 1, 1]} : vector<10x8x48xf32> to vector<8x8x48xf32>
    %191 = vector.broadcast %189 : vector<1x1x48xf32> to vector<8x8x48xf32>
    %192 = arith.mulf %190, %191 : vector<8x8x48xf32>
    %193 = arith.addf %187, %192 : vector<8x8x48xf32>
    %c0_121 = arith.constant 0 : index
    %c0_122 = arith.constant 0 : index
    %c8_123 = arith.constant 8 : index
    %c0_124 = arith.constant 0 : index
    %194 = vector.load %arg17[%c0_121, %c0_122, %c8_123, %c0_124] : memref<1x10x17x48xf32, #tpu.memory_space<vmem>>, vector<1x10x8x48xf32>
    %195 = vector.shape_cast %194 : vector<1x10x8x48xf32> to vector<10x8x48xf32>
    %196 = vector.extract_strided_slice %170 {offsets = [1, 0], sizes = [1, 48], strides = [1, 1]} : vector<9x48xf32> to vector<1x48xf32>
    %197 = vector.shape_cast %196 : vector<1x48xf32> to vector<1x1x48xf32>
    %198 = vector.extract_strided_slice %195 {offsets = [0, 0, 0], sizes = [8, 8, 48], strides = [1, 1, 1]} : vector<10x8x48xf32> to vector<8x8x48xf32>
    %199 = vector.broadcast %197 : vector<1x1x48xf32> to vector<8x8x48xf32>
    %200 = arith.mulf %198, %199 : vector<8x8x48xf32>
    %201 = arith.addf %193, %200 : vector<8x8x48xf32>
    %202 = vector.extract_strided_slice %170 {offsets = [4, 0], sizes = [1, 48], strides = [1, 1]} : vector<9x48xf32> to vector<1x48xf32>
    %203 = vector.shape_cast %202 : vector<1x48xf32> to vector<1x1x48xf32>
    %204 = vector.extract_strided_slice %195 {offsets = [1, 0, 0], sizes = [8, 8, 48], strides = [1, 1, 1]} : vector<10x8x48xf32> to vector<8x8x48xf32>
    %205 = vector.broadcast %203 : vector<1x1x48xf32> to vector<8x8x48xf32>
    %206 = arith.mulf %204, %205 : vector<8x8x48xf32>
    %207 = arith.addf %201, %206 : vector<8x8x48xf32>
    %208 = vector.extract_strided_slice %170 {offsets = [7, 0], sizes = [1, 48], strides = [1, 1]} : vector<9x48xf32> to vector<1x48xf32>
    %209 = vector.shape_cast %208 : vector<1x48xf32> to vector<1x1x48xf32>
    %210 = vector.extract_strided_slice %195 {offsets = [2, 0, 0], sizes = [8, 8, 48], strides = [1, 1, 1]} : vector<10x8x48xf32> to vector<8x8x48xf32>
    %211 = vector.broadcast %209 : vector<1x1x48xf32> to vector<8x8x48xf32>
    %212 = arith.mulf %210, %211 : vector<8x8x48xf32>
    %213 = arith.addf %207, %212 : vector<8x8x48xf32>
    %c0_125 = arith.constant 0 : index
    %c0_126 = arith.constant 0 : index
    %c9_127 = arith.constant 9 : index
    %c0_128 = arith.constant 0 : index
    %214 = vector.load %arg17[%c0_125, %c0_126, %c9_127, %c0_128] : memref<1x10x17x48xf32, #tpu.memory_space<vmem>>, vector<1x10x8x48xf32>
    %215 = vector.shape_cast %214 : vector<1x10x8x48xf32> to vector<10x8x48xf32>
    %216 = vector.extract_strided_slice %170 {offsets = [2, 0], sizes = [1, 48], strides = [1, 1]} : vector<9x48xf32> to vector<1x48xf32>
    %217 = vector.shape_cast %216 : vector<1x48xf32> to vector<1x1x48xf32>
    %218 = vector.extract_strided_slice %215 {offsets = [0, 0, 0], sizes = [8, 8, 48], strides = [1, 1, 1]} : vector<10x8x48xf32> to vector<8x8x48xf32>
    %219 = vector.broadcast %217 : vector<1x1x48xf32> to vector<8x8x48xf32>
    %220 = arith.mulf %218, %219 : vector<8x8x48xf32>
    %221 = arith.addf %213, %220 : vector<8x8x48xf32>
    %222 = vector.extract_strided_slice %170 {offsets = [5, 0], sizes = [1, 48], strides = [1, 1]} : vector<9x48xf32> to vector<1x48xf32>
    %223 = vector.shape_cast %222 : vector<1x48xf32> to vector<1x1x48xf32>
    %224 = vector.extract_strided_slice %215 {offsets = [1, 0, 0], sizes = [8, 8, 48], strides = [1, 1, 1]} : vector<10x8x48xf32> to vector<8x8x48xf32>
    %225 = vector.broadcast %223 : vector<1x1x48xf32> to vector<8x8x48xf32>
    %226 = arith.mulf %224, %225 : vector<8x8x48xf32>
    %227 = arith.addf %221, %226 : vector<8x8x48xf32>
    %228 = vector.extract_strided_slice %170 {offsets = [8, 0], sizes = [1, 48], strides = [1, 1]} : vector<9x48xf32> to vector<1x48xf32>
    %229 = vector.shape_cast %228 : vector<1x48xf32> to vector<1x1x48xf32>
    %230 = vector.extract_strided_slice %215 {offsets = [2, 0, 0], sizes = [8, 8, 48], strides = [1, 1, 1]} : vector<10x8x48xf32> to vector<8x8x48xf32>
    %231 = vector.broadcast %229 : vector<1x1x48xf32> to vector<8x8x48xf32>
    %232 = arith.mulf %230, %231 : vector<8x8x48xf32>
    %233 = arith.addf %227, %232 : vector<8x8x48xf32>
    %234 = vector.broadcast %172 : vector<1x1x48xf32> to vector<8x8x48xf32>
    %235 = arith.addf %233, %234 : vector<8x8x48xf32>
    %cst_129 = arith.constant 0.000000e+00 : f32
    %236 = vector.broadcast %cst_129 : f32 to vector<8x8x48xf32>
    %237 = arith.maximumf %235, %236 : vector<8x8x48xf32>
    %238 = vector.shape_cast %237 : vector<8x8x48xf32> to vector<64x48xf32>
    %239 = tpu.concatenate %169, %238 in 1 : vector<64x256xf32>, vector<64x48xf32> -> vector<64x304xf32>
    %240 = arith.truncf %239 : vector<64x304xf32> to vector<64x304xbf16>
    %c0_130 = arith.constant 0 : index
    %c0_131 = arith.constant 0 : index
    %241 = vector.load %arg9[%c0_130, %c0_131] : memref<304x256xbf16, #tpu.memory_space<vmem>>, vector<304x256xbf16>
    %cst_132 = arith.constant dense<0.000000e+00> : vector<64x256xf32>
    %242 = tpu.matmul %240, %241, %cst_132 {dimension_numbers = #tpu.dot_dimension_numbers<[1], [0], [0], [1], [0, 0, 1, 1], [], []>} : vector<64x304xbf16>, vector<304x256xbf16>, vector<64x256xf32> -> vector<64x256xf32>
    %c0_133 = arith.constant 0 : index
    %c0_134 = arith.constant 0 : index
    %243 = vector.load %arg10[%c0_133, %c0_134] : memref<1x256xf32, #tpu.memory_space<vmem>>, vector<1x256xf32>
    %244 = vector.broadcast %243 : vector<1x256xf32> to vector<64x256xf32>
    %245 = arith.addf %242, %244 : vector<64x256xf32>
    %cst_135 = arith.constant 0.000000e+00 : f32
    %246 = vector.broadcast %cst_135 : f32 to vector<64x256xf32>
    %247 = arith.maximumf %245, %246 : vector<64x256xf32>
    %248 = vector.shape_cast %247 : vector<64x256xf32> to vector<8x8x256xf32>
    %c0_136 = arith.constant 0 : index
    %c1_137 = arith.constant 1 : index
    %c8_138 = arith.constant 8 : index
    %c0_139 = arith.constant 0 : index
    %249 = vector.load %arg16[%c0_136, %c1_137, %c8_138, %c0_139] : memref<1x10x17x256xf32, #tpu.memory_space<vmem>>, vector<1x8x8x256xf32>
    %250 = vector.shape_cast %249 : vector<1x8x8x256xf32> to vector<8x8x256xf32>
    %251 = vector.shape_cast %248 : vector<8x8x256xf32> to vector<1x8x8x256xf32>
    tpu.vector_store %arg16[%c0_136, %c1_137, %c8_138, %c0_139], %251 {strides = array<i32>} : memref<1x10x17x256xf32, #tpu.memory_space<vmem>>, vector<1x8x8x256xf32>,
    %c0_140 = arith.constant 0 : index
    %c0_141 = arith.constant 0 : index
    %252 = vector.load %arg11[%c0_140, %c0_141] : memref<9x256xf32, #tpu.memory_space<vmem>>, vector<9x256xf32>
    %c0_142 = arith.constant 0 : index
    %c0_143 = arith.constant 0 : index
    %253 = vector.load %arg12[%c0_142, %c0_143] : memref<1x256xf32, #tpu.memory_space<vmem>>, vector<1x256xf32>
    %254 = vector.shape_cast %253 : vector<1x256xf32> to vector<1x1x256xf32>
    %cst_144 = arith.constant 0.000000e+00 : f32
    %255 = vector.broadcast %cst_144 : f32 to vector<8x8x256xf32>
    %c0_145 = arith.constant 0 : index
    %c0_146 = arith.constant 0 : index
    %c7_147 = arith.constant 7 : index
    %c0_148 = arith.constant 0 : index
    %256 = vector.load %arg16[%c0_145, %c0_146, %c7_147, %c0_148] : memref<1x10x17x256xf32, #tpu.memory_space<vmem>>, vector<1x10x8x256xf32>
    %257 = vector.shape_cast %256 : vector<1x10x8x256xf32> to vector<10x8x256xf32>
    %258 = vector.extract_strided_slice %252 {offsets = [0, 0], sizes = [1, 256], strides = [1, 1]} : vector<9x256xf32> to vector<1x256xf32>
    %259 = vector.shape_cast %258 : vector<1x256xf32> to vector<1x1x256xf32>
    %260 = vector.extract_strided_slice %257 {offsets = [0, 0, 0], sizes = [8, 8, 256], strides = [1, 1, 1]} : vector<10x8x256xf32> to vector<8x8x256xf32>
    %261 = vector.broadcast %259 : vector<1x1x256xf32> to vector<8x8x256xf32>
    %262 = arith.mulf %260, %261 : vector<8x8x256xf32>
    %263 = arith.addf %255, %262 : vector<8x8x256xf32>
    %264 = vector.extract_strided_slice %252 {offsets = [3, 0], sizes = [1, 256], strides = [1, 1]} : vector<9x256xf32> to vector<1x256xf32>
    %265 = vector.shape_cast %264 : vector<1x256xf32> to vector<1x1x256xf32>
    %266 = vector.extract_strided_slice %257 {offsets = [1, 0, 0], sizes = [8, 8, 256], strides = [1, 1, 1]} : vector<10x8x256xf32> to vector<8x8x256xf32>
    %267 = vector.broadcast %265 : vector<1x1x256xf32> to vector<8x8x256xf32>
    %268 = arith.mulf %266, %267 : vector<8x8x256xf32>
    %269 = arith.addf %263, %268 : vector<8x8x256xf32>
    %270 = vector.extract_strided_slice %252 {offsets = [6, 0], sizes = [1, 256], strides = [1, 1]} : vector<9x256xf32> to vector<1x256xf32>
    %271 = vector.shape_cast %270 : vector<1x256xf32> to vector<1x1x256xf32>
    %272 = vector.extract_strided_slice %257 {offsets = [2, 0, 0], sizes = [8, 8, 256], strides = [1, 1, 1]} : vector<10x8x256xf32> to vector<8x8x256xf32>
    %273 = vector.broadcast %271 : vector<1x1x256xf32> to vector<8x8x256xf32>
    %274 = arith.mulf %272, %273 : vector<8x8x256xf32>
    %275 = arith.addf %269, %274 : vector<8x8x256xf32>
    %c0_149 = arith.constant 0 : index
    %c0_150 = arith.constant 0 : index
    %c8_151 = arith.constant 8 : index
    %c0_152 = arith.constant 0 : index
    %276 = vector.load %arg16[%c0_149, %c0_150, %c8_151, %c0_152] : memref<1x10x17x256xf32, #tpu.memory_space<vmem>>, vector<1x10x8x256xf32>
    %277 = vector.shape_cast %276 : vector<1x10x8x256xf32> to vector<10x8x256xf32>
    %278 = vector.extract_strided_slice %252 {offsets = [1, 0], sizes = [1, 256], strides = [1, 1]} : vector<9x256xf32> to vector<1x256xf32>
    %279 = vector.shape_cast %278 : vector<1x256xf32> to vector<1x1x256xf32>
    %280 = vector.extract_strided_slice %277 {offsets = [0, 0, 0], sizes = [8, 8, 256], strides = [1, 1, 1]} : vector<10x8x256xf32> to vector<8x8x256xf32>
    %281 = vector.broadcast %279 : vector<1x1x256xf32> to vector<8x8x256xf32>
    %282 = arith.mulf %280, %281 : vector<8x8x256xf32>
    %283 = arith.addf %275, %282 : vector<8x8x256xf32>
    %284 = vector.extract_strided_slice %252 {offsets = [4, 0], sizes = [1, 256], strides = [1, 1]} : vector<9x256xf32> to vector<1x256xf32>
    %285 = vector.shape_cast %284 : vector<1x256xf32> to vector<1x1x256xf32>
    %286 = vector.extract_strided_slice %277 {offsets = [1, 0, 0], sizes = [8, 8, 256], strides = [1, 1, 1]} : vector<10x8x256xf32> to vector<8x8x256xf32>
    %287 = vector.broadcast %285 : vector<1x1x256xf32> to vector<8x8x256xf32>
    %288 = arith.mulf %286, %287 : vector<8x8x256xf32>
    %289 = arith.addf %283, %288 : vector<8x8x256xf32>
    %290 = vector.extract_strided_slice %252 {offsets = [7, 0], sizes = [1, 256], strides = [1, 1]} : vector<9x256xf32> to vector<1x256xf32>
    %291 = vector.shape_cast %290 : vector<1x256xf32> to vector<1x1x256xf32>
    %292 = vector.extract_strided_slice %277 {offsets = [2, 0, 0], sizes = [8, 8, 256], strides = [1, 1, 1]} : vector<10x8x256xf32> to vector<8x8x256xf32>
    %293 = vector.broadcast %291 : vector<1x1x256xf32> to vector<8x8x256xf32>
    %294 = arith.mulf %292, %293 : vector<8x8x256xf32>
    %295 = arith.addf %289, %294 : vector<8x8x256xf32>
    %c0_153 = arith.constant 0 : index
    %c0_154 = arith.constant 0 : index
    %c9_155 = arith.constant 9 : index
    %c0_156 = arith.constant 0 : index
    %296 = vector.load %arg16[%c0_153, %c0_154, %c9_155, %c0_156] : memref<1x10x17x256xf32, #tpu.memory_space<vmem>>, vector<1x10x8x256xf32>
    %297 = vector.shape_cast %296 : vector<1x10x8x256xf32> to vector<10x8x256xf32>
    %298 = vector.extract_strided_slice %252 {offsets = [2, 0], sizes = [1, 256], strides = [1, 1]} : vector<9x256xf32> to vector<1x256xf32>
    %299 = vector.shape_cast %298 : vector<1x256xf32> to vector<1x1x256xf32>
    %300 = vector.extract_strided_slice %297 {offsets = [0, 0, 0], sizes = [8, 8, 256], strides = [1, 1, 1]} : vector<10x8x256xf32> to vector<8x8x256xf32>
    %301 = vector.broadcast %299 : vector<1x1x256xf32> to vector<8x8x256xf32>
    %302 = arith.mulf %300, %301 : vector<8x8x256xf32>
    %303 = arith.addf %295, %302 : vector<8x8x256xf32>
    %304 = vector.extract_strided_slice %252 {offsets = [5, 0], sizes = [1, 256], strides = [1, 1]} : vector<9x256xf32> to vector<1x256xf32>
    %305 = vector.shape_cast %304 : vector<1x256xf32> to vector<1x1x256xf32>
    %306 = vector.extract_strided_slice %297 {offsets = [1, 0, 0], sizes = [8, 8, 256], strides = [1, 1, 1]} : vector<10x8x256xf32> to vector<8x8x256xf32>
    %307 = vector.broadcast %305 : vector<1x1x256xf32> to vector<8x8x256xf32>
    %308 = arith.mulf %306, %307 : vector<8x8x256xf32>
    %309 = arith.addf %303, %308 : vector<8x8x256xf32>
    %310 = vector.extract_strided_slice %252 {offsets = [8, 0], sizes = [1, 256], strides = [1, 1]} : vector<9x256xf32> to vector<1x256xf32>
    %311 = vector.shape_cast %310 : vector<1x256xf32> to vector<1x1x256xf32>
    %312 = vector.extract_strided_slice %297 {offsets = [2, 0, 0], sizes = [8, 8, 256], strides = [1, 1, 1]} : vector<10x8x256xf32> to vector<8x8x256xf32>
    %313 = vector.broadcast %311 : vector<1x1x256xf32> to vector<8x8x256xf32>
    %314 = arith.mulf %312, %313 : vector<8x8x256xf32>
    %315 = arith.addf %309, %314 : vector<8x8x256xf32>
    %316 = vector.broadcast %254 : vector<1x1x256xf32> to vector<8x8x256xf32>
    %317 = arith.addf %315, %316 : vector<8x8x256xf32>
    %cst_157 = arith.constant 0.000000e+00 : f32
    %318 = vector.broadcast %cst_157 : f32 to vector<8x8x256xf32>
    %319 = arith.maximumf %317, %318 : vector<8x8x256xf32>
    %320 = vector.shape_cast %319 : vector<8x8x256xf32> to vector<64x256xf32>
    %321 = arith.truncf %320 : vector<64x256xf32> to vector<64x256xbf16>
    %c0_158 = arith.constant 0 : index
    %c0_159 = arith.constant 0 : index
    %322 = vector.load %arg13[%c0_158, %c0_159] : memref<256x256xbf16, #tpu.memory_space<vmem>>, vector<256x256xbf16>
    %cst_160 = arith.constant dense<0.000000e+00> : vector<256x64xf32>
    %323 = tpu.matmul %322, %321, %cst_160 {dimension_numbers = #tpu.dot_dimension_numbers<[1], [1], [0], [0], [0, 0, 1, 0], [], []>} : vector<256x256xbf16>, vector<64x256xbf16>, vector<256x64xf32> -> vector<256x64xf32>
    %c0_161 = arith.constant 0 : index
    %c0_162 = arith.constant 0 : index
    %324 = vector.load %arg14[%c0_161, %c0_162] : memref<256x1xf32, #tpu.memory_space<vmem>>, vector<256x1xf32>
    %325 = vector.broadcast %324 : vector<256x1xf32> to vector<256x64xf32>
    %326 = arith.addf %323, %325 : vector<256x64xf32>
    %cst_163 = arith.constant 0.000000e+00 : f32
    %327 = vector.broadcast %cst_163 : f32 to vector<256x64xf32>
    %328 = arith.maximumf %326, %327 : vector<256x64xf32>
    %c0_164 = arith.constant 0 : index
    %c0_165 = arith.constant 0 : index
    %c0_166 = arith.constant 0 : index
    %329 = vector.load %arg15[%c0_164, %c0_165, %c0_166] : memref<1x256x64xf32, #tpu.memory_space<vmem>>, vector<1x256x64xf32>
    %330 = vector.shape_cast %329 : vector<1x256x64xf32> to vector<256x64xf32>
    %331 = vector.shape_cast %328 : vector<256x64xf32> to vector<1x256x64xf32>
    tpu.vector_store %arg15[%c0_164, %c0_165, %c0_166], %331 {strides = array<i32>} : memref<1x256x64xf32, #tpu.memory_space<vmem>>, vector<1x256x64xf32>,
    return
  }
  func.func @transform_0(%arg0: i32) -> (i32, i32, i32) {
    %c0_i32 = arith.constant 0 : i32
    %c0_i32_0 = arith.constant 0 : i32
    %c0_i32_1 = arith.constant 0 : i32
    return %arg0, %c0_i32, %c0_i32_0 : i32, i32, i32
  }
  func.func @transform_1(%arg0: i32) -> (i32, i32, i32) {
    %c0_i32 = arith.constant 0 : i32
    %c0_i32_0 = arith.constant 0 : i32
    %c0_i32_1 = arith.constant 0 : i32
    return %arg0, %c0_i32, %c0_i32_0 : i32, i32, i32
  }
  func.func @transform_2(%arg0: i32) -> (i32, i32) {
    %c0_i32 = arith.constant 0 : i32
    %c0_i32_0 = arith.constant 0 : i32
    %c0_i32_1 = arith.constant 0 : i32
    return %c0_i32, %c0_i32_0 : i32, i32
  }
  func.func @transform_3(%arg0: i32) -> (i32, i32, i32) {
    %c0_i32 = arith.constant 0 : i32
    %c0_i32_0 = arith.constant 0 : i32
    %c0_i32_1 = arith.constant 0 : i32
    %c0_i32_2 = arith.constant 0 : i32
    return %c0_i32, %c0_i32_0, %c0_i32_1 : i32, i32, i32
  }
  func.func @transform_4(%arg0: i32) -> (i32, i32) {
    %c0_i32 = arith.constant 0 : i32
    %c0_i32_0 = arith.constant 0 : i32
    %c0_i32_1 = arith.constant 0 : i32
    return %c0_i32, %c0_i32_0 : i32, i32
  }
  func.func @transform_5(%arg0: i32) -> (i32, i32) {
    %c0_i32 = arith.constant 0 : i32
    %c0_i32_0 = arith.constant 0 : i32
    %c0_i32_1 = arith.constant 0 : i32
    return %c0_i32, %c0_i32_0 : i32, i32
  }
  func.func @transform_6(%arg0: i32) -> (i32, i32) {
    %c0_i32 = arith.constant 0 : i32
    %c0_i32_0 = arith.constant 0 : i32
    %c0_i32_1 = arith.constant 0 : i32
    return %c0_i32, %c0_i32_0 : i32, i32
  }
  func.func @transform_7(%arg0: i32) -> (i32, i32) {
    %c0_i32 = arith.constant 0 : i32
    %c0_i32_0 = arith.constant 0 : i32
    %c0_i32_1 = arith.constant 0 : i32
    return %c0_i32, %c0_i32_0 : i32, i32
  }
  func.func @transform_8(%arg0: i32) -> (i32, i32) {
    %c0_i32 = arith.constant 0 : i32
    %c0_i32_0 = arith.constant 0 : i32
    %c0_i32_1 = arith.constant 0 : i32
    return %c0_i32, %c0_i32_0 : i32, i32
  }
  func.func @transform_9(%arg0: i32) -> (i32, i32) {
    %c0_i32 = arith.constant 0 : i32
    %c0_i32_0 = arith.constant 0 : i32
    %c0_i32_1 = arith.constant 0 : i32
    return %c0_i32, %c0_i32_0 : i32, i32
  }
  func.func @transform_10(%arg0: i32) -> (i32, i32) {
    %c0_i32 = arith.constant 0 : i32
    %c0_i32_0 = arith.constant 0 : i32
    %c0_i32_1 = arith.constant 0 : i32
    return %c0_i32, %c0_i32_0 : i32, i32
  }
  func.func @transform_11(%arg0: i32) -> (i32, i32) {
    %c0_i32 = arith.constant 0 : i32
    %c0_i32_0 = arith.constant 0 : i32
    %c0_i32_1 = arith.constant 0 : i32
    return %c0_i32, %c0_i32_0 : i32, i32
  }
  func.func @transform_12(%arg0: i32) -> (i32, i32) {
    %c0_i32 = arith.constant 0 : i32
    %c0_i32_0 = arith.constant 0 : i32
    %c0_i32_1 = arith.constant 0 : i32
    return %c0_i32, %c0_i32_0 : i32, i32
  }
  func.func @transform_13(%arg0: i32) -> (i32, i32) {
    %c0_i32 = arith.constant 0 : i32
    %c0_i32_0 = arith.constant 0 : i32
    %c0_i32_1 = arith.constant 0 : i32
    return %c0_i32, %c0_i32_0 : i32, i32
  }
  func.func @transform_14(%arg0: i32) -> (i32, i32, i32) {
    %c0_i32 = arith.constant 0 : i32
    %c0_i32_0 = arith.constant 0 : i32
    %c0_i32_1 = arith.constant 0 : i32
    return %arg0, %c0_i32, %c0_i32_0 : i32, i32, i32
  }
}

</mosaic_0001>

<llo_original>
// kernel: decoder_forward.1
$region0: #{decoder_forward.1}
  #allocation0 [shape = 'u32[]', space=smem, size = 0x4, offset = 0x4, fixed_abs, tag = 'smem constant byte address 0x4 - core index']
  #allocation1 [shape = 'u32[72,128]{1,0:T(1,128)}', space=vmem, size = 0x9000, scoped, tag = 'internal scratch']
  #allocation2 [shape = 'f32[1,10,17,256]{3,2,1,0:T(8,128)}', space=vmem, size = 0x3c000, scoped, tag = 'scratch operand']
  #allocation3 [shape = 'f32[1,10,17,48]{3,2,1,0:T(8,128)}', space=vmem, size = 0x1e000, scoped, tag = 'scratch operand']
  %s0 = inlined_call_operand.vmem [shape: f32[2,256,16], index: 0, kind: input, shape index: {}]
  %s1 = inlined_call_operand.vmem [shape: f32[2,256,64], index: 1, kind: input, shape index: {}]
  %s2 = inlined_call_operand.vmem [shape: f32[64,16], index: 2, kind: input, shape index: {}]
  %s3 = inlined_call_operand.vmem [shape: bf16[9,256,48], index: 3, kind: input, shape index: {}]
  %s4 = inlined_call_operand.vmem [shape: f32[9,256], index: 4, kind: input, shape index: {}]
  %s5 = inlined_call_operand.vmem [shape: f32[1,256], index: 5, kind: input, shape index: {}]
  %s6 = inlined_call_operand.vmem [shape: f32[9,48], index: 6, kind: input, shape index: {}]
  %s7 = inlined_call_operand.vmem [shape: f32[1,48], index: 7, kind: input, shape index: {}]
  %s8 = inlined_call_operand.vmem [shape: bf16[304,256], index: 8, kind: input, shape index: {}]
  %s9 = inlined_call_operand.vmem [shape: f32[1,256], index: 9, kind: input, shape index: {}]
  %s10 = inlined_call_operand.vmem [shape: f32[9,256], index: 10, kind: input, shape index: {}]
  %s11 = inlined_call_operand.vmem [shape: f32[1,256], index: 11, kind: input, shape index: {}]
  %s12 = inlined_call_operand.vmem [shape: bf16[256,256], index: 12, kind: input, shape index: {}]
  %s13 = inlined_call_operand.vmem [shape: f32[256,1], index: 13, kind: input, shape index: {}]
  %s14 = inlined_call_operand.vmem [shape: f32[2,256,64], index: 14, kind: output, shape index: {}]
  %s15 = sld [smem:[#allocation0]]
  $region89: #{decoder_forward.1} parent=0
    _
  %s17 = ssub.s32 1, %s15
  %s18 = scalar_select 0, %s17, %s15
  loop: start=0, step=1, limit=4
  $region2: #{decoder_forward.1} parent=0 // loop_pre_header
    _
  $region3: #{decoder_forward.1} parent=0 // loop_header
    %s20 = sphi 0, %s24
    %p21 = scmp.ge.s32.totalorder %s20, 4
    %s30 = sphi 0, %s32
    %s33 = sphi 0, %s30
    %s34 = sphi 0, %s33
    %s50 = sphi 0, %s34
    %s56 = sphi 0, %s58
    %s59 = sphi 0, %s56
    %s60 = sphi 0, %s59
    %s76 = sphi 0, %s60
    %s80 = sphi 0, %s80
    %s82 = sphi 0, %s80
    %s83 = sphi 0, %s82
    %s97 = sphi 0, %s83
    %s101 = sphi 0, %s101
    %s103 = sphi 0, %s101
    %s104 = sphi 0, %s103
    %s118 = sphi 0, %s104
    %s122 = sphi 0, %s122
    %s124 = sphi 0, %s122
    %s125 = sphi 0, %s124
    %s139 = sphi 0, %s125
    %s143 = sphi 0, %s143
    %s145 = sphi 0, %s143
    %s146 = sphi 0, %s145
    %s160 = sphi 0, %s146
    %s164 = sphi 0, %s164
    %s166 = sphi 0, %s164
    %s167 = sphi 0, %s166
    %s181 = sphi 0, %s167
    %s185 = sphi 0, %s185
    %s187 = sphi 0, %s185
    %s188 = sphi 0, %s187
    %s202 = sphi 0, %s188
    %s206 = sphi 0, %s206
    %s208 = sphi 0, %s206
    %s209 = sphi 0, %s208
    %s223 = sphi 0, %s209
    %s227 = sphi 0, %s227
    %s229 = sphi 0, %s227
    %s230 = sphi 0, %s229
    %s244 = sphi 0, %s230
    %s248 = sphi 0, %s248
    %s250 = sphi 0, %s248
    %s251 = sphi 0, %s250
    %s265 = sphi 0, %s251
    %s269 = sphi 0, %s269
    %s271 = sphi 0, %s269
    %s272 = sphi 0, %s271
    %s286 = sphi 0, %s272
    %s290 = sphi 0, %s290
    %s292 = sphi 0, %s290
    %s293 = sphi 0, %s292
    %s307 = sphi 0, %s293
    %s311 = sphi 0, %s311
    %s313 = sphi 0, %s311
    %s314 = sphi 0, %s313
    %s328 = sphi 0, %s314
    %s334 = sphi 0, %s336
    %s337 = sphi 0, %s334
    %s338 = sphi 0, %s337
    %s354 = sphi 0, %s338
  $region4: #{decoder_forward.1} parent=0 // loop_header_branch
    %23 = sbr.rel (%p21) target = $region8
  $region5: #{decoder_forward.1} parent=0 // loop_body
    %s25 = ssub.s32 %s20, 1
    %s26 = ssub.s32 %s20, 2
    %s27 = sadd.s32 %s20, 1
    %s28 = ssub.s32 %s20, %s27
    %p29 = scmp.eq.s32.totalorder %s28, 0
    %s31 = sadd.s32 %s30, 1
    %s32 = scalar_select %p29, %s30, %s31
    %p35 = pneg %p29
    %p36 = scmp.eq.s32.totalorder %s20, 1
    %p37 = por %p35, %p36
    %p38 = scmp.ne.s32.totalorder %s30, %s33
    %p39 = scmp.eq.s32.totalorder %s20, 0
    %p40 = por %p38, %p39
    %p41 = scmp.ne.s32.totalorder %s30, %s33
    %p42 = scmp.eq.s32.totalorder %s25, 1
    %p43 = por %p41, %p42
    %p44 = scmp.ne.s32.totalorder %s33, %s34
    %p45 = scmp.eq.s32.totalorder %s25, 0
    %p46 = por %p44, %p45
    %p47 = scmp.ne.s32.totalorder %s33, %s34
    %p48 = scmp.eq.s32.totalorder %s26, 1
    %p49 = por %p47, %p48
    %p51 = scmp.ne.s32.totalorder %s34, %s50
    %p52 = scmp.eq.s32.totalorder %s26, 0
    %p53 = por %p51, %p52
    %s54 = ssub.s32 %s20, %s27
    %p55 = scmp.eq.s32.totalorder %s54, 0
    %s57 = sadd.s32 %s56, 1
    %s58 = scalar_select %p55, %s56, %s57
    %p61 = pneg %p55
    %p62 = scmp.eq.s32.totalorder %s20, 1
    %p63 = por %p61, %p62
    %p64 = scmp.ne.s32.totalorder %s56, %s59
    %p65 = scmp.eq.s32.totalorder %s20, 0
    %p66 = por %p64, %p65
    %p67 = scmp.ne.s32.totalorder %s56, %s59
    %p68 = scmp.eq.s32.totalorder %s25, 1
    %p69 = por %p67, %p68
    %p70 = scmp.ne.s32.totalorder %s59, %s60
    %p71 = scmp.eq.s32.totalorder %s25, 0
    %p72 = por %p70, %p71
    %p73 = scmp.ne.s32.totalorder %s59, %s60
    %p74 = scmp.eq.s32.totalorder %s26, 1
    %p75 = por %p73, %p74
    %p77 = scmp.ne.s32.totalorder %s60, %s76
    %p78 = scmp.eq.s32.totalorder %s26, 0
    %p79 = por %p77, %p78
    %s81 = sadd.s32 %s80, 1
    %p84 = scmp.eq.s32.totalorder %s20, 1
    %p85 = scmp.ne.s32.totalorder %s80, %s82
    %p86 = scmp.eq.s32.totalorder %s20, 0
    %p87 = por %p85, %p86
    %p88 = scmp.ne.s32.totalorder %s80, %s82
    %p89 = scmp.eq.s32.totalorder %s25, 1
    %p90 = por %p88, %p89
    %p91 = scmp.ne.s32.totalorder %s82, %s83
    %p92 = scmp.eq.s32.totalorder %s25, 0
    %p93 = por %p91, %p92
    %p94 = scmp.ne.s32.totalorder %s82, %s83
    %p95 = scmp.eq.s32.totalorder %s26, 1
    %p96 = por %p94, %p95
    %p98 = scmp.ne.s32.totalorder %s83, %s97
    %p99 = scmp.eq.s32.totalorder %s26, 0
    %p100 = por %p98, %p99
    %s102 = sadd.s32 %s101, 1
    %p105 = scmp.eq.s32.totalorder %s20, 1
    %p106 = scmp.ne.s32.totalorder %s101, %s103
    %p107 = scmp.eq.s32.totalorder %s20, 0
    %p108 = por %p106, %p107
    %p109 = scmp.ne.s32.totalorder %s101, %s103
    %p110 = scmp.eq.s32.totalorder %s25, 1
    %p111 = por %p109, %p110
    %p112 = scmp.ne.s32.totalorder %s103, %s104
    %p113 = scmp.eq.s32.totalorder %s25, 0
    %p114 = por %p112, %p113
    %p115 = scmp.ne.s32.totalorder %s103, %s104
    %p116 = scmp.eq.s32.totalorder %s26, 1
    %p117 = por %p115, %p116
    %p119 = scmp.ne.s32.totalorder %s104, %s118
    %p120 = scmp.eq.s32.totalorder %s26, 0
    %p121 = por %p119, %p120
    %s123 = sadd.s32 %s122, 1
    %p126 = scmp.eq.s32.totalorder %s20, 1
    %p127 = scmp.ne.s32.totalorder %s122, %s124
    %p128 = scmp.eq.s32.totalorder %s20, 0
    %p129 = por %p127, %p128
    %p130 = scmp.ne.s32.totalorder %s122, %s124
    %p131 = scmp.eq.s32.totalorder %s25, 1
    %p132 = por %p130, %p131
    %p133 = scmp.ne.s32.totalorder %s124, %s125
    %p134 = scmp.eq.s32.totalorder %s25, 0
    %p135 = por %p133, %p134
    %p136 = scmp.ne.s32.totalorder %s124, %s125
    %p137 = scmp.eq.s32.totalorder %s26, 1
    %p138 = por %p136, %p137
    %p140 = scmp.ne.s32.totalorder %s125, %s139
    %p141 = scmp.eq.s32.totalorder %s26, 0
    %p142 = por %p140, %p141
    %s144 = sadd.s32 %s143, 1
    %p147 = scmp.eq.s32.totalorder %s20, 1
    %p148 = scmp.ne.s32.totalorder %s143, %s145
    %p149 = scmp.eq.s32.totalorder %s20, 0
    %p150 = por %p148, %p149
    %p151 = scmp.ne.s32.totalorder %s143, %s145
    %p152 = scmp.eq.s32.totalorder %s25, 1
    %p153 = por %p151, %p152
    %p154 = scmp.ne.s32.totalorder %s145, %s146
    %p155 = scmp.eq.s32.totalorder %s25, 0
    %p156 = por %p154, %p155
    %p157 = scmp.ne.s32.totalorder %s145, %s146
    %p158 = scmp.eq.s32.totalorder %s26, 1
    %p159 = por %p157, %p158
    %p161 = scmp.ne.s32.totalorder %s146, %s160
    %p162 = scmp.eq.s32.totalorder %s26, 0
    %p163 = por %p161, %p162
    %s165 = sadd.s32 %s164, 1
    %p168 = scmp.eq.s32.totalorder %s20, 1
    %p169 = scmp.ne.s32.totalorder %s164, %s166
    %p170 = scmp.eq.s32.totalorder %s20, 0
    %p171 = por %p169, %p170
    %p172 = scmp.ne.s32.totalorder %s164, %s166
    %p173 = scmp.eq.s32.totalorder %s25, 1
    %p174 = por %p172, %p173
    %p175 = scmp.ne.s32.totalorder %s166, %s167
    %p176 = scmp.eq.s32.totalorder %s25, 0
    %p177 = por %p175, %p176
    %p178 = scmp.ne.s32.totalorder %s166, %s167
    %p179 = scmp.eq.s32.totalorder %s26, 1
    %p180 = por %p178, %p179
    %p182 = scmp.ne.s32.totalorder %s167, %s181
    %p183 = scmp.eq.s32.totalorder %s26, 0
    %p184 = por %p182, %p183
    %s186 = sadd.s32 %s185, 1
    %p189 = scmp.eq.s32.totalorder %s20, 1
    %p190 = scmp.ne.s32.totalorder %s185, %s187
    %p191 = scmp.eq.s32.totalorder %s20, 0
    %p192 = por %p190, %p191
    %p193 = scmp.ne.s32.totalorder %s185, %s187
    %p194 = scmp.eq.s32.totalorder %s25, 1
    %p195 = por %p193, %p194
    %p196 = scmp.ne.s32.totalorder %s187, %s188
    %p197 = scmp.eq.s32.totalorder %s25, 0
    %p198 = por %p196, %p197
    %p199 = scmp.ne.s32.totalorder %s187, %s188
    %p200 = scmp.eq.s32.totalorder %s26, 1
    %p201 = por %p199, %p200
    %p203 = scmp.ne.s32.totalorder %s188, %s202
    %p204 = scmp.eq.s32.totalorder %s26, 0
    %p205 = por %p203, %p204
    %s207 = sadd.s32 %s206, 1
    %p210 = scmp.eq.s32.totalorder %s20, 1
    %p211 = scmp.ne.s32.totalorder %s206, %s208
    %p212 = scmp.eq.s32.totalorder %s20, 0
    %p213 = por %p211, %p212
    %p214 = scmp.ne.s32.totalorder %s206, %s208
    %p215 = scmp.eq.s32.totalorder %s25, 1
    %p216 = por %p214, %p215
    %p217 = scmp.ne.s32.totalorder %s208, %s209
    %p218 = scmp.eq.s32.totalorder %s25, 0
    %p219 = por %p217, %p218
    %p220 = scmp.ne.s32.totalorder %s208, %s209
    %p221 = scmp.eq.s32.totalorder %s26, 1
    %p222 = por %p220, %p221
    %p224 = scmp.ne.s32.totalorder %s209, %s223
    %p225 = scmp.eq.s32.totalorder %s26, 0
    %p226 = por %p224, %p225
    %s228 = sadd.s32 %s227, 1
    %p231 = scmp.eq.s32.totalorder %s20, 1
    %p232 = scmp.ne.s32.totalorder %s227, %s229
    %p233 = scmp.eq.s32.totalorder %s20, 0
    %p234 = por %p232, %p233
    %p235 = scmp.ne.s32.totalorder %s227, %s229
    %p236 = scmp.eq.s32.totalorder %s25, 1
    %p237 = por %p235, %p236
    %p238 = scmp.ne.s32.totalorder %s229, %s230
    %p239 = scmp.eq.s32.totalorder %s25, 0
    %p240 = por %p238, %p239
    %p241 = scmp.ne.s32.totalorder %s229, %s230
    %p242 = scmp.eq.s32.totalorder %s26, 1
    %p243 = por %p241, %p242
    %p245 = scmp.ne.s32.totalorder %s230, %s244
    %p246 = scmp.eq.s32.totalorder %s26, 0
    %p247 = por %p245, %p246
    %s249 = sadd.s32 %s248, 1
    %p252 = scmp.eq.s32.totalorder %s20, 1
    %p253 = scmp.ne.s32.totalorder %s248, %s250
    %p254 = scmp.eq.s32.totalorder %s20, 0
    %p255 = por %p253, %p254
    %p256 = scmp.ne.s32.totalorder %s248, %s250
    %p257 = scmp.eq.s32.totalorder %s25, 1
    %p258 = por %p256, %p257
    %p259 = scmp.ne.s32.totalorder %s250, %s251
    %p260 = scmp.eq.s32.totalorder %s25, 0
    %p261 = por %p259, %p260
    %p262 = scmp.ne.s32.totalorder %s250, %s251
    %p263 = scmp.eq.s32.totalorder %s26, 1
    %p264 = por %p262, %p263
    %p266 = scmp.ne.s32.totalorder %s251, %s265
    %p267 = scmp.eq.s32.totalorder %s26, 0
    %p268 = por %p266, %p267
    %s270 = sadd.s32 %s269, 1
    %p273 = scmp.eq.s32.totalorder %s20, 1
    %p274 = scmp.ne.s32.totalorder %s269, %s271
    %p275 = scmp.eq.s32.totalorder %s20, 0
    %p276 = por %p274, %p275
    %p277 = scmp.ne.s32.totalorder %s269, %s271
    %p278 = scmp.eq.s32.totalorder %s25, 1
    %p279 = por %p277, %p278
    %p280 = scmp.ne.s32.totalorder %s271, %s272
    %p281 = scmp.eq.s32.totalorder %s25, 0
    %p282 = por %p280, %p281
    %p283 = scmp.ne.s32.totalorder %s271, %s272
    %p284 = scmp.eq.s32.totalorder %s26, 1
    %p285 = por %p283, %p284
    %p287 = scmp.ne.s32.totalorder %s272, %s286
    %p288 = scmp.eq.s32.totalorder %s26, 0
    %p289 = por %p287, %p288
    %s291 = sadd.s32 %s290, 1
    %p294 = scmp.eq.s32.totalorder %s20, 1
    %p295 = scmp.ne.s32.totalorder %s290, %s292
    %p296 = scmp.eq.s32.totalorder %s20, 0
    %p297 = por %p295, %p296
    %p298 = scmp.ne.s32.totalorder %s290, %s292
    %p299 = scmp.eq.s32.totalorder %s25, 1
    %p300 = por %p298, %p299
    %p301 = scmp.ne.s32.totalorder %s292, %s293
    %p302 = scmp.eq.s32.totalorder %s25, 0
    %p303 = por %p301, %p302
    %p304 = scmp.ne.s32.totalorder %s292, %s293
    %p305 = scmp.eq.s32.totalorder %s26, 1
    %p306 = por %p304, %p305
    %p308 = scmp.ne.s32.totalorder %s293, %s307
    %p309 = scmp.eq.s32.totalorder %s26, 0
    %p310 = por %p308, %p309
    %s312 = sadd.s32 %s311, 1
    %p315 = scmp.eq.s32.totalorder %s20, 1
    %p316 = scmp.ne.s32.totalorder %s311, %s313
    %p317 = scmp.eq.s32.totalorder %s20, 0
    %p318 = por %p316, %p317
    %p319 = scmp.ne.s32.totalorder %s311, %s313
    %p320 = scmp.eq.s32.totalorder %s25, 1
    %p321 = por %p319, %p320
    %p322 = scmp.ne.s32.totalorder %s313, %s314
    %p323 = scmp.eq.s32.totalorder %s25, 0
    %p324 = por %p322, %p323
    %p325 = scmp.ne.s32.totalorder %s313, %s314
    %p326 = scmp.eq.s32.totalorder %s26, 1
    %p327 = por %p325, %p326
    %p329 = scmp.ne.s32.totalorder %s314, %s328
    %p330 = scmp.eq.s32.totalorder %s26, 0
    %p331 = por %p329, %p330
    %s332 = ssub.s32 %s20, %s27
    %p333 = scmp.eq.s32.totalorder %s332, 0
    %s335 = sadd.s32 %s334, 1
    %s336 = scalar_select %p333, %s334, %s335
    %p339 = pneg %p333
    %p340 = scmp.eq.s32.totalorder %s20, 1
    %p341 = por %p339, %p340
    %p342 = scmp.ne.s32.totalorder %s334, %s337
    %p343 = scmp.eq.s32.totalorder %s20, 0
    %p344 = por %p342, %p343
    %p345 = scmp.ne.s32.totalorder %s334, %s337
    %p346 = scmp.eq.s32.totalorder %s25, 1
    %p347 = por %p345, %p346
    %p348 = scmp.ne.s32.totalorder %s337, %s338
    %p349 = scmp.eq.s32.totalorder %s25, 0
    %p350 = por %p348, %p349
    %p351 = scmp.ne.s32.totalorder %s337, %s338
    %p352 = scmp.eq.s32.totalorder %s26, 1
    %p353 = por %p351, %p352
    %p355 = scmp.ne.s32.totalorder %s338, %s354
    %p356 = scmp.eq.s32.totalorder %s26, 0
    %p357 = por %p355, %p356
    %p358 = scmp.le.s32.totalorder 1, %s20
    %p359 = scmp.lt.s32.totalorder %s20, 3
    %p360 = pnand %p358, %p359
    %p361 = pneg %p360
    // Predicated region
    $region9: #{decoder_forward.1} parent=5 // pred_check
      _
    $region10: #{decoder_forward.1} parent=5 // pred_check_branch
      %363 = sbr.rel (%p360) target = $region12
    $region11: #{decoder_forward.1} parent=5 // pred_region
      %s364 = ssub.s32 %s20, 1
      // Predicated region
      $region13: #{decoder_forward.1} parent=11 // pred_check
        %p365 = pneg %p93
      $region14: #{decoder_forward.1} parent=11 // pred_check_branch
        %367 = sbr.rel (%p365) target = $region16
      $region15: #{decoder_forward.1} parent=11 // pred_region
        _
      $region16: #{decoder_forward.1} parent=11 // pred_fallthru
        _
      // Predicated region
      $region17: #{decoder_forward.1} parent=11 // pred_check
        %p368 = pneg %p114
      $region18: #{decoder_forward.1} parent=11 // pred_check_branch
        %370 = sbr.rel (%p368) target = $region20
      $region19: #{decoder_forward.1} parent=11 // pred_region
        _
      $region20: #{decoder_forward.1} parent=11 // pred_fallthru
        _
      // Predicated region
      $region21: #{decoder_forward.1} parent=11 // pred_check
        %p371 = pneg %p135
      $region22: #{decoder_forward.1} parent=11 // pred_check_branch
        %373 = sbr.rel (%p371) target = $region24
      $region23: #{decoder_forward.1} parent=11 // pred_region
        _
      $region24: #{decoder_forward.1} parent=11 // pred_fallthru
        _
      // Predicated region
      $region25: #{decoder_forward.1} parent=11 // pred_check
        %p374 = pneg %p156
      $region26: #{decoder_forward.1} parent=11 // pred_check_branch
        %376 = sbr.rel (%p374) target = $region28
      $region27: #{decoder_forward.1} parent=11 // pred_region
        _
      $region28: #{decoder_forward.1} parent=11 // pred_fallthru
        _
      // Predicated region
      $region29: #{decoder_forward.1} parent=11 // pred_check
        %p377 = pneg %p177
      $region30: #{decoder_forward.1} parent=11 // pred_check_branch
        %379 = sbr.rel (%p377) target = $region32
      $region31: #{decoder_forward.1} parent=11 // pred_region
        _
      $region32: #{decoder_forward.1} parent=11 // pred_fallthru
        _
      // Predicated region
      $region33: #{decoder_forward.1} parent=11 // pred_check
        %p380 = pneg %p198
      $region34: #{decoder_forward.1} parent=11 // pred_check_branch
        %382 = sbr.rel (%p380) target = $region36
      $region35: #{decoder_forward.1} parent=11 // pred_region
        _
      $region36: #{decoder_forward.1} parent=11 // pred_fallthru
        _
      // Predicated region
      $region37: #{decoder_forward.1} parent=11 // pred_check
        %p383 = pneg %p219
      $region38: #{decoder_forward.1} parent=11 // pred_check_branch
        %385 = sbr.rel (%p383) target = $region40
      $region39: #{decoder_forward.1} parent=11 // pred_region
        _
      $region40: #{decoder_forward.1} parent=11 // pred_fallthru
        _
      // Predicated region
      $region41: #{decoder_forward.1} parent=11 // pred_check
        %p386 = pneg %p240
      $region42: #{decoder_forward.1} parent=11 // pred_check_branch
        %388 = sbr.rel (%p386) target = $region44
      $region43: #{decoder_forward.1} parent=11 // pred_region
        _
      $region44: #{decoder_forward.1} parent=11 // pred_fallthru
        _
      // Predicated region
      $region45: #{decoder_forward.1} parent=11 // pred_check
        %p389 = pneg %p261
      $region46: #{decoder_forward.1} parent=11 // pred_check_branch
        %391 = sbr.rel (%p389) target = $region48
      $region47: #{decoder_forward.1} parent=11 // pred_region
        _
      $region48: #{decoder_forward.1} parent=11 // pred_fallthru
        _
      // Predicated region
      $region49: #{decoder_forward.1} parent=11 // pred_check
        %p392 = pneg %p282
      $region50: #{decoder_forward.1} parent=11 // pred_check_branch
        %394 = sbr.rel (%p392) target = $region52
      $region51: #{decoder_forward.1} parent=11 // pred_region
        _
      $region52: #{decoder_forward.1} parent=11 // pred_fallthru
        _
      // Predicated region
      $region53: #{decoder_forward.1} parent=11 // pred_check
        %p395 = pneg %p303
      $region54: #{decoder_forward.1} parent=11 // pred_check_branch
        %397 = sbr.rel (%p395) target = $region56
      $region55: #{decoder_forward.1} parent=11 // pred_region
        _
      $region56: #{decoder_forward.1} parent=11 // pred_fallthru
        _
      // Predicated region
      $region57: #{decoder_forward.1} parent=11 // pred_check
        %p398 = pneg %p324
      $region58: #{decoder_forward.1} parent=11 // pred_check_branch
        %400 = sbr.rel (%p398) target = $region60
      $region59: #{decoder_forward.1} parent=11 // pred_region
        _
      $region60: #{decoder_forward.1} parent=11 // pred_fallthru
        _
    $region12: #{decoder_forward.1} parent=5 // pred_fallthru
      _
    %p401 = scmp.lt.s32.totalorder %s20, 2
    // Predicated region
    $region61: #{decoder_forward.1} parent=5 // pred_check
      %p402 = pneg %p401
    $region62: #{decoder_forward.1} parent=5 // pred_check_branch
      %404 = sbr.rel (%p402) target = $region64
    $region63: #{decoder_forward.1} parent=5 // pred_region
      // Predicated region
      $region65: #{decoder_forward.1} parent=63 // pred_check
        %p405 = pneg %p40
      $region66: #{decoder_forward.1} parent=63 // pred_check_branch
        %407 = sbr.rel (%p405) target = $region68
      $region67: #{decoder_forward.1} parent=63 // pred_region
        %p408 = scmp.lt.s32.totalorder %s20, 1
        %s409 = scalar_select %p408, %s20, 1
        %s410 = smul.addr %s409, 32
        %s411 = smul.addr %s410, 8
        %s412 = scalar_lea.vmem %s0, %s411
      $region68: #{decoder_forward.1} parent=63 // pred_fallthru
        _
      // Predicated region
      $region69: #{decoder_forward.1} parent=63 // pred_check
        %p413 = pneg %p66
      $region70: #{decoder_forward.1} parent=63 // pred_check_branch
        %415 = sbr.rel (%p413) target = $region72
      $region71: #{decoder_forward.1} parent=63 // pred_region
        %p416 = scmp.lt.s32.totalorder %s20, 1
        %s417 = scalar_select %p416, %s20, 1
        %s418 = smul.addr %s417, 32
        %s419 = smul.addr %s418, 8
        %s420 = scalar_lea.vmem %s1, %s419
      $region72: #{decoder_forward.1} parent=63 // pred_fallthru
        _
    $region64: #{decoder_forward.1} parent=5 // pred_fallthru
      _
    %p421 = scmp.le.s32.totalorder 1, %s20
    %p422 = scmp.lt.s32.totalorder %s20, 3
    %p423 = pnand %p421, %p422
    %p424 = pneg %p423
    // Predicated region
    $region73: #{decoder_forward.1} parent=5 // pred_check
      _
    $region74: #{decoder_forward.1} parent=5 // pred_check_branch
      %426 = sbr.rel (%p423) target = $region76
    $region75: #{decoder_forward.1} parent=5 // pred_region
      %s427 = ssub.s32 %s20, 1
      %p428 = scmp.lt.s32.totalorder %s25, 1
      %s429 = scalar_select %p428, %s25, 1
      %s430 = smul.addr %s429, 32
      %s431 = smul.addr %s430, 8
      %s432 = scalar_lea.vmem %s0, %s431
      %p433 = pneg %p46
      %p434 = pneg %p43
      %p435 = scmp.lt.s32.totalorder %s25, 1
      %s436 = scalar_select %p435, %s25, 1
      %s437 = smul.addr %s436, 32
      %s438 = smul.addr %s437, 8
      %s439 = scalar_lea.vmem %s1, %s438
      %p440 = pneg %p72
      %p441 = pneg %p69
      %p442 = pneg %p93
      %p443 = pneg %p90
      %p444 = pneg %p114
      %p445 = pneg %p111
      %p446 = pneg %p135
      %p447 = pneg %p132
      %p448 = pneg %p156
      %p449 = pneg %p153
      %p450 = pneg %p177
      %p451 = pneg %p174
      %p452 = pneg %p198
      %p453 = pneg %p195
      %p454 = pneg %p219
      %p455 = pneg %p216
      %p456 = pneg %p240
      %p457 = pneg %p237
      %p458 = pneg %p261
      %p459 = pneg %p258
      %p460 = pneg %p282
      %p461 = pneg %p279
      %p462 = pneg %p303
      %p463 = pneg %p300
      %p464 = pneg %p324
      %p465 = pneg %p321
      %p466 = pneg %p350
      %p467 = pneg %p347
      %p468 = scmp.lt.s32.totalorder %s25, 1
      %s469 = scalar_select %p468, %s25, 1
      %s470 = smul.addr %s469, 32
      %s471 = smul.addr %s470, 8
      %s472 = scalar_lea.vmem %s14, %s471
      %p473 = scmp.lt.s32.totalorder %s25, 1
      %s474 = scalar_select %p473, %s25, 1
      %s475 = smul.addr %s474, 32
      %s476 = smul.addr %s475, 8
      %s477 = scalar_lea.vmem %s0, %s476
      %p478 = scmp.lt.s32.totalorder %s25, 1
      %s479 = scalar_select %p478, %s25, 1
      %s480 = smul.addr %s479, 32
      %s481 = smul.addr %s480, 8
      %s482 = scalar_lea.vmem %s1, %s481
      %p483 = scmp.lt.s32.totalorder %s25, 1
      %s484 = scalar_select %p483, %s25, 1
      %s485 = smul.addr %s484, 32
      %s486 = smul.addr %s485, 8
      %s487 = scalar_lea.vmem %s14, %s486
      %489 = vst [vmem:[#allocation2] sm:$0x80] 0.0
      %490 = vst [vmem:[#allocation2 + $0x8] sm:$0x80] 0.0
      %491 = vst [vmem:[#allocation2 + $0x10] sm:$0xff] 0.0
      %492 = vst [vmem:[#allocation2 + $0x18] sm:$0xff] 0.0
      %493 = vst [vmem:[#allocation2 + $0x20] sm:$0x1] 0.0
      %494 = vst [vmem:[#allocation2 + $0x28] sm:$0x1] 0.0
      %s495 = scalar_lea.vmem [#allocation2], 432
      %496 = vst [vmem:[%s495] sm:$0x80] 0.0
      %497 = vst [vmem:[%s495 + $0x8] sm:$0x80] 0.0
      %498 = vst [vmem:[%s495 + $0x10] sm:$0xff] 0.0
      %499 = vst [vmem:[%s495 + $0x18] sm:$0xff] 0.0
      %500 = vst [vmem:[%s495 + $0x20] sm:$0x1] 0.0
      %501 = vst [vmem:[%s495 + $0x28] sm:$0x1] 0.0
      %v502 = vlaneseq
      %vm503 = vcmp.ge.s32.totalorder %v502, 0
      %vm504 = vcmp.lt.s32.totalorder %v502, 256
      %vm505 = vmand %vm503, %vm504
      %s506 = scalar_lea.vmem [#allocation2], 7
      %507 = vst.msk [vmem:[%s506] ss:$8 sm:$0x3] %vm505, 0.0
      %508 = vst.msk [vmem:[%s506] ss:$8 sm:$0x0] %vm505, 0.0
      %s509 = scalar_lea.vmem [#allocation2], 55
      %510 = vst.msk [vmem:[%s509] ss:$8 sm:$0x3] %vm505, 0.0
      %511 = vst.msk [vmem:[%s509] ss:$8 sm:$0x0] %vm505, 0.0
      %s512 = scalar_lea.vmem [#allocation2], 103
      %513 = vst.msk [vmem:[%s512] ss:$8 sm:$0x3] %vm505, 0.0
      %514 = vst.msk [vmem:[%s512] ss:$8 sm:$0x0] %vm505, 0.0
      %s515 = scalar_lea.vmem [#allocation2], 151
      %516 = vst.msk [vmem:[%s515] ss:$8 sm:$0x3] %vm505, 0.0
      %517 = vst.msk [vmem:[%s515] ss:$8 sm:$0x0] %vm505, 0.0
      %s518 = scalar_lea.vmem [#allocation2], 199
      %519 = vst.msk [vmem:[%s518] ss:$8 sm:$0x3] %vm505, 0.0
      %520 = vst.msk [vmem:[%s518] ss:$8 sm:$0x0] %vm505, 0.0
      %s521 = scalar_lea.vmem [#allocation2], 247
      %522 = vst.msk [vmem:[%s521] ss:$8 sm:$0x3] %vm505, 0.0
      %523 = vst.msk [vmem:[%s521] ss:$8 sm:$0x0] %vm505, 0.0
      %s524 = scalar_lea.vmem [#allocation2], 295
      %525 = vst.msk [vmem:[%s524] ss:$8 sm:$0x3] %vm505, 0.0
      %526 = vst.msk [vmem:[%s524] ss:$8 sm:$0x0] %vm505, 0.0
      %s527 = scalar_lea.vmem [#allocation2], 343
      %528 = vst.msk [vmem:[%s527] ss:$8 sm:$0x3] %vm505, 0.0
      %529 = vst.msk [vmem:[%s527] ss:$8 sm:$0x0] %vm505, 0.0
      %s530 = scalar_lea.vmem [#allocation2], 391
      %531 = vst.msk [vmem:[%s530] ss:$8 sm:$0x3] %vm505, 0.0
      %532 = vst.msk [vmem:[%s530] ss:$8 sm:$0x0] %vm505, 0.0
      %s533 = scalar_lea.vmem [#allocation2], 439
      %534 = vst.msk [vmem:[%s533] ss:$8 sm:$0x3] %vm505, 0.0
      %535 = vst.msk [vmem:[%s533] ss:$8 sm:$0x0] %vm505, 0.0
      %s536 = scalar_lea.vmem [#allocation2], 32
      %537 = vst.msk [vmem:[%s536] ss:$8 sm:$0x3] %vm505, 0.0
      %538 = vst.msk [vmem:[%s536] ss:$8 sm:$0x0] %vm505, 0.0
      %s539 = scalar_lea.vmem [#allocation2], 80
      %540 = vst.msk [vmem:[%s539] ss:$8 sm:$0x3] %vm505, 0.0
      %541 = vst.msk [vmem:[%s539] ss:$8 sm:$0x0] %vm505, 0.0
      %s542 = scalar_lea.vmem [#allocation2], 128
      %543 = vst.msk [vmem:[%s542] ss:$8 sm:$0x3] %vm505, 0.0
      %544 = vst.msk [vmem:[%s542] ss:$8 sm:$0x0] %vm505, 0.0
      %s545 = scalar_lea.vmem [#allocation2], 176
      %546 = vst.msk [vmem:[%s545] ss:$8 sm:$0x3] %vm505, 0.0
      %547 = vst.msk [vmem:[%s545] ss:$8 sm:$0x0] %vm505, 0.0
      %s548 = scalar_lea.vmem [#allocation2], 224
      %549 = vst.msk [vmem:[%s548] ss:$8 sm:$0x3] %vm505, 0.0
      %550 = vst.msk [vmem:[%s548] ss:$8 sm:$0x0] %vm505, 0.0
      %s551 = scalar_lea.vmem [#allocation2], 272
      %552 = vst.msk [vmem:[%s551] ss:$8 sm:$0x3] %vm505, 0.0
      %553 = vst.msk [vmem:[%s551] ss:$8 sm:$0x0] %vm505, 0.0
      %s554 = scalar_lea.vmem [#allocation2], 320
      %555 = vst.msk [vmem:[%s554] ss:$8 sm:$0x3] %vm505, 0.0
      %556 = vst.msk [vmem:[%s554] ss:$8 sm:$0x0] %vm505, 0.0
      %s557 = scalar_lea.vmem [#allocation2], 368
      %558 = vst.msk [vmem:[%s557] ss:$8 sm:$0x3] %vm505, 0.0
      %559 = vst.msk [vmem:[%s557] ss:$8 sm:$0x0] %vm505, 0.0
      %s560 = scalar_lea.vmem [#allocation2], 416
      %561 = vst.msk [vmem:[%s560] ss:$8 sm:$0x3] %vm505, 0.0
      %562 = vst.msk [vmem:[%s560] ss:$8 sm:$0x0] %vm505, 0.0
      %s563 = scalar_lea.vmem [#allocation2], 464
      %564 = vst.msk [vmem:[%s563] ss:$8 sm:$0x3] %vm505, 0.0
      %565 = vst.msk [vmem:[%s563] ss:$8 sm:$0x0] %vm505, 0.0
      %vm566 = vcmask 392192
      %567 = vst.msk [vmem:[#allocation3 + $0x7] sm:$0xff] %vm566, 0.0
      %vm568 = vcmask 386048
      %569 = vst.msk [vmem:[#allocation3 + $0xf] sm:$0x3] %vm568, 0.0
      %s570 = scalar_lea.vmem [#allocation3], 216
      %571 = vst.msk [vmem:[%s570 + $0x7] sm:$0xff] %vm566, 0.0
      %572 = vst.msk [vmem:[%s570 + $0xf] sm:$0x3] %vm568, 0.0
      %vm573 = vcmask 385024
      %574 = vst.msk [vmem:[#allocation3 + $0x7] sm:$0x1] %vm573, 0.0
      %575 = vst.msk [vmem:[#allocation3 + $0x1f] sm:$0x1] %vm573, 0.0
      %576 = vst.msk [vmem:[#allocation3 + $0x37] sm:$0x1] %vm573, 0.0
      %577 = vst.msk [vmem:[#allocation3 + $0x4f] sm:$0x1] %vm573, 0.0
      %578 = vst.msk [vmem:[#allocation3 + $0x67] sm:$0x1] %vm573, 0.0
      %579 = vst.msk [vmem:[#allocation3 + $0x7f] sm:$0x1] %vm573, 0.0
      %580 = vst.msk [vmem:[#allocation3 + $0x97] sm:$0x1] %vm573, 0.0
      %581 = vst.msk [vmem:[#allocation3 + $0xaf] sm:$0x1] %vm573, 0.0
      %582 = vst.msk [vmem:[#allocation3 + $0xc7] sm:$0x1] %vm573, 0.0
      %583 = vst.msk [vmem:[#allocation3 + $0xdf] sm:$0x1] %vm573, 0.0
      %584 = vst.msk [vmem:[#allocation3 + $0x10] sm:$0x1] %vm573, 0.0
      %585 = vst.msk [vmem:[#allocation3 + $0x28] sm:$0x1] %vm573, 0.0
      %586 = vst.msk [vmem:[#allocation3 + $0x40] sm:$0x1] %vm573, 0.0
      %587 = vst.msk [vmem:[#allocation3 + $0x58] sm:$0x1] %vm573, 0.0
      %588 = vst.msk [vmem:[#allocation3 + $0x70] sm:$0x1] %vm573, 0.0
      %589 = vst.msk [vmem:[#allocation3 + $0x88] sm:$0x1] %vm573, 0.0
      %590 = vst.msk [vmem:[#allocation3 + $0xa0] sm:$0x1] %vm573, 0.0
      %591 = vst.msk [vmem:[#allocation3 + $0xb8] sm:$0x1] %vm573, 0.0
      %592 = vst.msk [vmem:[#allocation3 + $0xd0] sm:$0x1] %vm573, 0.0
      %593 = vst.msk [vmem:[#allocation3 + $0xe8] sm:$0x1] %vm573, 0.0
      %v594 = vld [vmem:[%s482] sm:$0xff]
      %v595 = vld [vmem:[%s482 + $0x8] sm:$0xff]
      %v596 = vld [vmem:[%s482 + $0x10] sm:$0xff]
      %v597 = vld [vmem:[%s482 + $0x18] sm:$0xff]
      %v598 = vld [vmem:[%s482 + $0x20] sm:$0xff]
      %v599 = vld [vmem:[%s482 + $0x28] sm:$0xff]
      %v600 = vld [vmem:[%s482 + $0x30] sm:$0xff]
      %v601 = vld [vmem:[%s482 + $0x38] sm:$0xff]
      %v602 = vld [vmem:[%s482 + $0x40] sm:$0xff]
      %v603 = vld [vmem:[%s482 + $0x48] sm:$0xff]
      %v604 = vld [vmem:[%s482 + $0x50] sm:$0xff]
      %v605 = vld [vmem:[%s482 + $0x58] sm:$0xff]
      %v606 = vld [vmem:[%s482 + $0x60] sm:$0xff]
      %v607 = vld [vmem:[%s482 + $0x68] sm:$0xff]
      %v608 = vld [vmem:[%s482 + $0x70] sm:$0xff]
      %v609 = vld [vmem:[%s482 + $0x78] sm:$0xff]
      %v610 = vld [vmem:[%s482 + $0x80] sm:$0xff]
      %v611 = vld [vmem:[%s482 + $0x88] sm:$0xff]
      %v612 = vld [vmem:[%s482 + $0x90] sm:$0xff]
      %v613 = vld [vmem:[%s482 + $0x98] sm:$0xff]
      %v614 = vld [vmem:[%s482 + $0xa0] sm:$0xff]
      %v615 = vld [vmem:[%s482 + $0xa8] sm:$0xff]
      %v616 = vld [vmem:[%s482 + $0xb0] sm:$0xff]
      %v617 = vld [vmem:[%s482 + $0xb8] sm:$0xff]
      %v618 = vld [vmem:[%s482 + $0xc0] sm:$0xff]
      %v619 = vld [vmem:[%s482 + $0xc8] sm:$0xff]
      %v620 = vld [vmem:[%s482 + $0xd0] sm:$0xff]
      %v621 = vld [vmem:[%s482 + $0xd8] sm:$0xff]
      %v622 = vld [vmem:[%s482 + $0xe0] sm:$0xff]
      %v623 = vld [vmem:[%s482 + $0xe8] sm:$0xff]
      %v624 = vld [vmem:[%s482 + $0xf0] sm:$0xff]
      %v625 = vld [vmem:[%s482 + $0xf8] sm:$0xff]
      %626 = vxpose.xlu0.b32.start [1/16] %v594, 128
      %627 = vxpose.xlu0.b32.cont [2/16] %v595, 128
      %628 = vxpose.xlu0.b32.cont [3/16] %v596, 128
      %629 = vxpose.xlu0.b32.cont [4/16] %v597, 128
      %630 = vxpose.xlu0.b32.cont [5/16] %v598, 128
      %631 = vxpose.xlu0.b32.cont [6/16] %v599, 128
      %632 = vxpose.xlu0.b32.cont [7/16] %v600, 128
      %633 = vxpose.xlu0.b32.cont [8/16] %v601, 128
      %634 = vxpose.xlu0.b32.cont [9/16] %v602, 128
      %635 = vxpose.xlu0.b32.cont [10/16] %v603, 128
      %636 = vxpose.xlu0.b32.cont [11/16] %v604, 128
      %637 = vxpose.xlu0.b32.cont [12/16] %v605, 128
      %638 = vxpose.xlu0.b32.cont [13/16] %v606, 128
      %639 = vxpose.xlu0.b32.cont [14/16] %v607, 128
      %640 = vxpose.xlu0.b32.cont [15/16] %v608, 128
      %641 = vxpose.xlu0.b32.end [16/16] %v609, 128
      %v642 = vpop.trf.xlu0
      %v643 = vpop.trf.xlu0
      %v644 = vpop.trf.xlu0
      %v645 = vpop.trf.xlu0
      %v646 = vpop.trf.xlu0
      %v647 = vpop.trf.xlu0
      %v648 = vpop.trf.xlu0
      %v649 = vpop.trf.xlu0
      %v650 = vpop.trf.xlu0
      %v651 = vpop.trf.xlu0
      %v652 = vpop.trf.xlu0
      %v653 = vpop.trf.xlu0
      %v654 = vpop.trf.xlu0
      %v655 = vpop.trf.xlu0
      %v656 = vpop.trf.xlu0
      %v657 = vpop.trf.xlu0
      %658 = vxpose.xlu0.b32.start [1/16] %v610, 128
      %659 = vxpose.xlu0.b32.cont [2/16] %v611, 128
      %660 = vxpose.xlu0.b32.cont [3/16] %v612, 128
      %661 = vxpose.xlu0.b32.cont [4/16] %v613, 128
      %662 = vxpose.xlu0.b32.cont [5/16] %v614, 128
      %663 = vxpose.xlu0.b32.cont [6/16] %v615, 128
      %664 = vxpose.xlu0.b32.cont [7/16] %v616, 128
      %665 = vxpose.xlu0.b32.cont [8/16] %v617, 128
      %666 = vxpose.xlu0.b32.cont [9/16] %v618, 128
      %667 = vxpose.xlu0.b32.cont [10/16] %v619, 128
      %668 = vxpose.xlu0.b32.cont [11/16] %v620, 128
      %669 = vxpose.xlu0.b32.cont [12/16] %v621, 128
      %670 = vxpose.xlu0.b32.cont [13/16] %v622, 128
      %671 = vxpose.xlu0.b32.cont [14/16] %v623, 128
      %672 = vxpose.xlu0.b32.cont [15/16] %v624, 128
      %673 = vxpose.xlu0.b32.end [16/16] %v625, 128
      %v674 = vpop.trf.xlu0
      %v675 = vpop.trf.xlu0
      %v676 = vpop.trf.xlu0
      %v677 = vpop.trf.xlu0
      %v678 = vpop.trf.xlu0
      %v679 = vpop.trf.xlu0
      %v680 = vpop.trf.xlu0
      %v681 = vpop.trf.xlu0
      %v682 = vpop.trf.xlu0
      %v683 = vpop.trf.xlu0
      %v684 = vpop.trf.xlu0
      %v685 = vpop.trf.xlu0
      %v686 = vpop.trf.xlu0
      %v687 = vpop.trf.xlu0
      %v688 = vpop.trf.xlu0
      %v689 = vpop.trf.xlu0
      %s690 = scalar_lea.vmem [#allocation2], 48
      %691 = vst [vmem:[%s690 + $0x10] sm:$0xff] %v642
      %692 = vst [vmem:[%s690 + $0x18] sm:$0xff] %v674
      %693 = vst [vmem:[%s690 + $0x40] sm:$0xff] %v643
      %694 = vst [vmem:[%s690 + $0x48] sm:$0xff] %v675
      %695 = vst [vmem:[%s690 + $0x70] sm:$0xff] %v644
      %696 = vst [vmem:[%s690 + $0x78] sm:$0xff] %v676
      %697 = vst [vmem:[%s690 + $0xa0] sm:$0xff] %v645
      %698 = vst [vmem:[%s690 + $0xa8] sm:$0xff] %v677
      %699 = vst [vmem:[%s690 + $0xd0] sm:$0xff] %v646
      %700 = vst [vmem:[%s690 + $0xd8] sm:$0xff] %v678
      %701 = vst [vmem:[%s690 + $0x100] sm:$0xff] %v647
      %702 = vst [vmem:[%s690 + $0x108] sm:$0xff] %v679
      %703 = vst [vmem:[%s690 + $0x130] sm:$0xff] %v648
      %704 = vst [vmem:[%s690 + $0x138] sm:$0xff] %v680
      %705 = vst [vmem:[%s690 + $0x160] sm:$0xff] %v649
      %706 = vst [vmem:[%s690 + $0x168] sm:$0xff] %v681
      %v707 = vld [vmem:[#allocation2] sm:$0x80]
      %v708 = vld [vmem:[#allocation2 + $0x8] sm:$0x80]
      %v709 = vld [vmem:[#allocation2 + $0x10] sm:$0x7f]
      %v710 = vld [vmem:[#allocation2 + $0x18] sm:$0x7f]
      %v711 = vld [vmem:[#allocation2 + $0x30] sm:$0x80]
      %v712 = vld [vmem:[#allocation2 + $0x38] sm:$0x80]
      %v713 = vld [vmem:[#allocation2 + $0x40] sm:$0x7f]
      %v714 = vld [vmem:[#allocation2 + $0x48] sm:$0x7f]
      %v715 = vld [vmem:[#allocation2 + $0x60] sm:$0x80]
      %v716 = vld [vmem:[#allocation2 + $0x68] sm:$0x80]
      %v717 = vld [vmem:[#allocation2 + $0x70] sm:$0x7f]
      %v718 = vld [vmem:[#allocation2 + $0x78] sm:$0x7f]
      %v719 = vld [vmem:[#allocation2 + $0x90] sm:$0x80]
      %v720 = vld [vmem:[#allocation2 + $0x98] sm:$0x80]
      %v721 = vld [vmem:[#allocation2 + $0xa0] sm:$0x7f]
      %v722 = vld [vmem:[#allocation2 + $0xa8] sm:$0x7f]
      %v723 = vld [vmem:[#allocation2 + $0xc0] sm:$0x80]
      %v724 = vld [vmem:[#allocation2 + $0xc8] sm:$0x80]
      %v725 = vld [vmem:[#allocation2 + $0xd0] sm:$0x7f]
      %v726 = vld [vmem:[#allocation2 + $0xd8] sm:$0x7f]
      %v727 = vld [vmem:[#allocation2 + $0xf0] sm:$0x80]
      %v728 = vld [vmem:[#allocation2 + $0xf8] sm:$0x80]
      %v729 = vld [vmem:[#allocation2 + $0x100] sm:$0x7f]
      %v730 = vld [vmem:[#allocation2 + $0x108] sm:$0x7f]
      %v731 = vld [vmem:[#allocation2 + $0x120] sm:$0x80]
      %v732 = vld [vmem:[#allocation2 + $0x128] sm:$0x80]
      %v733 = vld [vmem:[#allocation2 + $0x130] sm:$0x7f]
      %v734 = vld [vmem:[#allocation2 + $0x138] sm:$0x7f]
      %v735 = vld [vmem:[#allocation2 + $0x150] sm:$0x80]
      %v736 = vld [vmem:[#allocation2 + $0x158] sm:$0x80]
      %v737 = vld [vmem:[#allocation2 + $0x160] sm:$0x7f]
      %v738 = vld [vmem:[#allocation2 + $0x168] sm:$0x7f]
      %v739 = vld [vmem:[#allocation2 + $0x180] sm:$0x80]
      %v740 = vld [vmem:[#allocation2 + $0x188] sm:$0x80]
      %v741 = vld [vmem:[#allocation2 + $0x190] sm:$0x7f]
      %v742 = vld [vmem:[#allocation2 + $0x198] sm:$0x7f]
      %v743 = vld [vmem:[#allocation2 + $0x1b0] sm:$0x80]
      %v744 = vld [vmem:[#allocation2 + $0x1b8] sm:$0x80]
      %v745 = vld [vmem:[#allocation2 + $0x1c0] sm:$0x7f]
      %v746 = vld [vmem:[#allocation2 + $0x1c8] sm:$0x7f]
      %vm779 = vcmask 1040384
      %v780 = vrot.slane %v707, 7
      %v781 = vrot.slane %v709, 7
      %v782 = vsel %vm779, %v780, %v781
      %v783 = vrot.slane %v708, 7
      %v784 = vrot.slane %v710, 7
      %v785 = vsel %vm779, %v783, %v784
      %v786 = vrot.slane %v711, 7
      %v787 = vrot.slane %v713, 7
      %v788 = vsel %vm779, %v786, %v787
      %v789 = vrot.slane %v712, 7
      %v790 = vrot.slane %v714, 7
      %v791 = vsel %vm779, %v789, %v790
      %v792 = vrot.slane %v715, 7
      %v793 = vrot.slane %v717, 7
      %v794 = vsel %vm779, %v792, %v793
      %v795 = vrot.slane %v716, 7
      %v796 = vrot.slane %v718, 7
      %v797 = vsel %vm779, %v795, %v796
      %v798 = vrot.slane %v719, 7
      %v799 = vrot.slane %v721, 7
      %v800 = vsel %vm779, %v798, %v799
      %v801 = vrot.slane %v720, 7
      %v802 = vrot.slane %v722, 7
      %v803 = vsel %vm779, %v801, %v802
      %v804 = vrot.slane %v723, 7
      %v805 = vrot.slane %v725, 7
      %v806 = vsel %vm779, %v804, %v805
      %v807 = vrot.slane %v724, 7
      %v808 = vrot.slane %v726, 7
      %v809 = vsel %vm779, %v807, %v808
      %v810 = vrot.slane %v727, 7
      %v811 = vrot.slane %v729, 7
      %v812 = vsel %vm779, %v810, %v811
      %v813 = vrot.slane %v728, 7
      %v814 = vrot.slane %v730, 7
      %v815 = vsel %vm779, %v813, %v814
      %v816 = vrot.slane %v731, 7
      %v817 = vrot.slane %v733, 7
      %v818 = vsel %vm779, %v816, %v817
      %v819 = vrot.slane %v732, 7
      %v820 = vrot.slane %v734, 7
      %v821 = vsel %vm779, %v819, %v820
      %v822 = vrot.slane %v735, 7
      %v823 = vrot.slane %v737, 7
      %v824 = vsel %vm779, %v822, %v823
      %v825 = vrot.slane %v736, 7
      %v826 = vrot.slane %v738, 7
      %v827 = vsel %vm779, %v825, %v826
      %v844 = vpack.c.bf16 %v788, %v782
      %v845 = vpack.c.bf16 %v791, %v785
      %v846 = vpack.c.bf16 %v800, %v794
      %v847 = vpack.c.bf16 %v803, %v797
      %v848 = vpack.c.bf16 %v812, %v806
      %v849 = vpack.c.bf16 %v815, %v809
      %v850 = vpack.c.bf16 %v824, %v818
      %v851 = vpack.c.bf16 %v827, %v821
      %v852 = vld [vmem:[%s3] sm:$0xf]
      %v853 = vld [vmem:[%s3 + $0x4] sm:$0xf]
      %v854 = vld [vmem:[%s3 + $0x8] sm:$0xf]
      %v855 = vld [vmem:[%s3 + $0xc] sm:$0xf]
      %v856 = vld [vmem:[%s3 + $0x10] sm:$0xf]
      %v857 = vld [vmem:[%s3 + $0x14] sm:$0xf]
      %v858 = vld [vmem:[%s3 + $0x18] sm:$0xf]
      %v859 = vld [vmem:[%s3 + $0x1c] sm:$0xf]
      %v860 = vld [vmem:[%s3 + $0x20] sm:$0xf]
      %v861 = vld [vmem:[%s3 + $0x24] sm:$0xf]
      %v862 = vld [vmem:[%s3 + $0x28] sm:$0xf]
      %v863 = vld [vmem:[%s3 + $0x2c] sm:$0xf]
      %v864 = vld [vmem:[%s3 + $0x30] sm:$0xf]
      %v865 = vld [vmem:[%s3 + $0x34] sm:$0xf]
      %v866 = vld [vmem:[%s3 + $0x38] sm:$0xf]
      %v867 = vld [vmem:[%s3 + $0x3c] sm:$0xf]
      %v868 = vld [vmem:[%s3 + $0x40] sm:$0xf]
      %v869 = vld [vmem:[%s3 + $0x44] sm:$0xf]
      %v870 = vld [vmem:[%s3 + $0x48] sm:$0xf]
      %v871 = vld [vmem:[%s3 + $0x4c] sm:$0xf]
      %v872 = vld [vmem:[%s3 + $0x50] sm:$0xf]
      %v873 = vld [vmem:[%s3 + $0x54] sm:$0xf]
      %v874 = vld [vmem:[%s3 + $0x58] sm:$0xf]
      %v875 = vld [vmem:[%s3 + $0x5c] sm:$0xf]
      %v876 = vld [vmem:[%s3 + $0x60] sm:$0xf]
      %v877 = vld [vmem:[%s3 + $0x64] sm:$0xf]
      %v878 = vld [vmem:[%s3 + $0x68] sm:$0xf]
      %v879 = vld [vmem:[%s3 + $0x6c] sm:$0xf]
      %v880 = vld [vmem:[%s3 + $0x70] sm:$0xf]
      %v881 = vld [vmem:[%s3 + $0x74] sm:$0xf]
      %v882 = vld [vmem:[%s3 + $0x78] sm:$0xf]
      %v883 = vld [vmem:[%s3 + $0x7c] sm:$0xf]
      %v888 = vrot.slane %v739, 7
      %v889 = vrot.slane %v741, 7
      %v890 = vsel %vm779, %v888, %v889
      %v891 = vrot.slane %v740, 7
      %v892 = vrot.slane %v742, 7
      %v893 = vsel %vm779, %v891, %v892
      %v896 = vpack.c.bf16 %v794, %v788
      %v897 = vpack.c.bf16 %v797, %v791
      %v898 = vpack.c.bf16 %v806, %v800
      %v899 = vpack.c.bf16 %v809, %v803
      %v900 = vpack.c.bf16 %v818, %v812
      %v901 = vpack.c.bf16 %v821, %v815
      %v902 = vpack.c.bf16 %v890, %v824
      %v903 = vpack.c.bf16 %v893, %v827
      %s904 = scalar_lea.vmem %s3, 384
      %v905 = vld [vmem:[%s904] sm:$0xf]
      %v906 = vld [vmem:[%s904 + $0x4] sm:$0xf]
      %v907 = vld [vmem:[%s904 + $0x8] sm:$0xf]
      %v908 = vld [vmem:[%s904 + $0xc] sm:$0xf]
      %v909 = vld [vmem:[%s904 + $0x10] sm:$0xf]
      %v910 = vld [vmem:[%s904 + $0x14] sm:$0xf]
      %v911 = vld [vmem:[%s904 + $0x18] sm:$0xf]
      %v912 = vld [vmem:[%s904 + $0x1c] sm:$0xf]
      %v913 = vld [vmem:[%s904 + $0x20] sm:$0xf]
      %v914 = vld [vmem:[%s904 + $0x24] sm:$0xf]
      %v915 = vld [vmem:[%s904 + $0x28] sm:$0xf]
      %v916 = vld [vmem:[%s904 + $0x2c] sm:$0xf]
      %v917 = vld [vmem:[%s904 + $0x30] sm:$0xf]
      %v918 = vld [vmem:[%s904 + $0x34] sm:$0xf]
      %v919 = vld [vmem:[%s904 + $0x38] sm:$0xf]
      %v920 = vld [vmem:[%s904 + $0x3c] sm:$0xf]
      %v921 = vld [vmem:[%s904 + $0x40] sm:$0xf]
      %v922 = vld [vmem:[%s904 + $0x44] sm:$0xf]
      %v923 = vld [vmem:[%s904 + $0x48] sm:$0xf]
      %v924 = vld [vmem:[%s904 + $0x4c] sm:$0xf]
      %v925 = vld [vmem:[%s904 + $0x50] sm:$0xf]
      %v926 = vld [vmem:[%s904 + $0x54] sm:$0xf]
      %v927 = vld [vmem:[%s904 + $0x58] sm:$0xf]
      %v928 = vld [vmem:[%s904 + $0x5c] sm:$0xf]
      %v929 = vld [vmem:[%s904 + $0x60] sm:$0xf]
      %v930 = vld [vmem:[%s904 + $0x64] sm:$0xf]
      %v931 = vld [vmem:[%s904 + $0x68] sm:$0xf]
      %v932 = vld [vmem:[%s904 + $0x6c] sm:$0xf]
      %v933 = vld [vmem:[%s904 + $0x70] sm:$0xf]
      %v934 = vld [vmem:[%s904 + $0x74] sm:$0xf]
      %v935 = vld [vmem:[%s904 + $0x78] sm:$0xf]
      %v936 = vld [vmem:[%s904 + $0x7c] sm:$0xf]
      %v969 = vunpack.c.l.b16 %v905
      %v970 = vunpack.c.l.b16 %v906
      %v971 = vunpack.c.l.b16 %v907
      %v972 = vunpack.c.l.b16 %v908
      %v973 = vunpack.c.l.b16 %v909
      %v974 = vunpack.c.l.b16 %v910
      %v975 = vunpack.c.l.b16 %v911
      %v976 = vunpack.c.l.b16 %v912
      %v977 = vunpack.c.l.b16 %v913
      %v978 = vunpack.c.l.b16 %v914
      %v979 = vunpack.c.l.b16 %v915
      %v980 = vunpack.c.l.b16 %v916
      %v981 = vunpack.c.l.b16 %v917
      %v982 = vunpack.c.l.b16 %v918
      %v983 = vunpack.c.l.b16 %v919
      %v984 = vunpack.c.l.b16 %v920
      %v985 = vunpack.c.l.b16 %v921
      %v986 = vunpack.c.l.b16 %v922
      %v987 = vunpack.c.l.b16 %v923
      %v988 = vunpack.c.l.b16 %v924
      %v989 = vunpack.c.l.b16 %v925
      %v990 = vunpack.c.l.b16 %v926
      %v991 = vunpack.c.l.b16 %v927
      %v992 = vunpack.c.l.b16 %v928
      %v993 = vunpack.c.l.b16 %v929
      %v994 = vunpack.c.l.b16 %v930
      %v995 = vunpack.c.l.b16 %v931
      %v996 = vunpack.c.l.b16 %v932
      %v997 = vunpack.c.l.b16 %v933
      %v998 = vunpack.c.l.b16 %v934
      %v999 = vunpack.c.l.b16 %v935
      %v1000 = vunpack.c.l.b16 %v936
      %v1001 = vpack.c.b16 %v970, %v969
      %v1002 = vpack.c.b16 %v972, %v971
      %v1003 = vpack.c.b16 %v974, %v973
      %v1004 = vpack.c.b16 %v976, %v975
      %v1005 = vpack.c.b16 %v978, %v977
      %v1006 = vpack.c.b16 %v980, %v979
      %v1007 = vpack.c.b16 %v982, %v981
      %v1008 = vpack.c.b16 %v984, %v983
      %v1009 = vpack.c.b16 %v986, %v985
      %v1010 = vpack.c.b16 %v988, %v987
      %v1011 = vpack.c.b16 %v990, %v989
      %v1012 = vpack.c.b16 %v992, %v991
      %v1013 = vpack.c.b16 %v994, %v993
      %v1014 = vpack.c.b16 %v996, %v995
      %v1015 = vpack.c.b16 %v998, %v997
      %v1016 = vpack.c.b16 %v1000, %v999
      %1033 = vmatpush.bf16.msra.mxu0 %v1008
      %1034 = vmatpush.bf16.msra.mxu0 %v1007
      %1035 = vmatpush.bf16.msra.mxu0 %v1006
      %1036 = vmatpush.bf16.msra.mxu0 %v1005
      %1037 = vmatpush.bf16.msra.mxu0 %v1004
      %1038 = vmatpush.bf16.msra.mxu0 %v1003
      %1039 = vmatpush.bf16.msra.mxu0 %v1002
      %1040 = vmatpush.bf16.msra.mxu0 %v1001
      %1041 = vmatmul.bf16.gmra.mxu0 %v896
      %v1042 = vpop.f32.mrf.mxu0
      %v1043 = vadd.f32 0.0, %v1042
      %v1044 = vpop.f32.mrf.mxu0
      %v1045 = vadd.f32 0.0, %v1044
      %1046 = vmatmul.bf16.gmra.mxu0 %v898
      %v1047 = vpop.f32.mrf.mxu0
      %v1048 = vadd.f32 0.0, %v1047
      %v1049 = vpop.f32.mrf.mxu0
      %v1050 = vadd.f32 0.0, %v1049
      %1051 = vmatmul.bf16.gmra.mxu0 %v900
      %v1052 = vpop.f32.mrf.mxu0
      %v1053 = vadd.f32 0.0, %v1052
      %v1054 = vpop.f32.mrf.mxu0
      %v1055 = vadd.f32 0.0, %v1054
      %1056 = vmatmul.bf16.gmra.mxu0 %v902
      %v1057 = vpop.f32.mrf.mxu0
      %v1058 = vadd.f32 0.0, %v1057
      %v1059 = vpop.f32.mrf.mxu0
      %v1060 = vadd.f32 0.0, %v1059
      %1061 = vdwg.mxu0
      %1062 = vmatpush.bf16.msra.mxu0 %v1016
      %1063 = vmatpush.bf16.msra.mxu0 %v1015
      %1064 = vmatpush.bf16.msra.mxu0 %v1014
      %1065 = vmatpush.bf16.msra.mxu0 %v1013
      %1066 = vmatpush.bf16.msra.mxu0 %v1012
      %1067 = vmatpush.bf16.msra.mxu0 %v1011
      %1068 = vmatpush.bf16.msra.mxu0 %v1010
      %1069 = vmatpush.bf16.msra.mxu0 %v1009
      %1070 = vmatmul.bf16.gmra.mxu0 %v897
      %v1071 = vpop.f32.mrf.mxu0
      %v1072 = vadd.f32 %v1043, %v1071
      %v1073 = vpop.f32.mrf.mxu0
      %v1074 = vadd.f32 %v1045, %v1073
      %1075 = vmatmul.bf16.gmra.mxu0 %v899
      %v1076 = vpop.f32.mrf.mxu0
      %v1077 = vadd.f32 %v1048, %v1076
      %v1078 = vpop.f32.mrf.mxu0
      %v1079 = vadd.f32 %v1050, %v1078
      %1080 = vmatmul.bf16.gmra.mxu0 %v901
      %v1081 = vpop.f32.mrf.mxu0
      %v1082 = vadd.f32 %v1053, %v1081
      %v1083 = vpop.f32.mrf.mxu0
      %v1084 = vadd.f32 %v1055, %v1083
      %1085 = vmatmul.bf16.gmra.mxu0 %v903
      %v1086 = vpop.f32.mrf.mxu0
      %v1087 = vadd.f32 %v1058, %v1086
      %v1088 = vpop.f32.mrf.mxu0
      %v1089 = vadd.f32 %v1060, %v1088
      %1090 = vdwg.mxu0
      %v1123 = vunpack.c.l.b16 %v852
      %v1124 = vunpack.c.l.b16 %v853
      %v1125 = vunpack.c.l.b16 %v854
      %v1126 = vunpack.c.l.b16 %v855
      %v1127 = vunpack.c.l.b16 %v856
      %v1128 = vunpack.c.l.b16 %v857
      %v1129 = vunpack.c.l.b16 %v858
      %v1130 = vunpack.c.l.b16 %v859
      %v1131 = vunpack.c.l.b16 %v860
      %v1132 = vunpack.c.l.b16 %v861
      %v1133 = vunpack.c.l.b16 %v862
      %v1134 = vunpack.c.l.b16 %v863
      %v1135 = vunpack.c.l.b16 %v864
      %v1136 = vunpack.c.l.b16 %v865
      %v1137 = vunpack.c.l.b16 %v866
      %v1138 = vunpack.c.l.b16 %v867
      %v1139 = vunpack.c.l.b16 %v868
      %v1140 = vunpack.c.l.b16 %v869
      %v1141 = vunpack.c.l.b16 %v870
      %v1142 = vunpack.c.l.b16 %v871
      %v1143 = vunpack.c.l.b16 %v872
      %v1144 = vunpack.c.l.b16 %v873
      %v1145 = vunpack.c.l.b16 %v874
      %v1146 = vunpack.c.l.b16 %v875
      %v1147 = vunpack.c.l.b16 %v876
      %v1148 = vunpack.c.l.b16 %v877
      %v1149 = vunpack.c.l.b16 %v878
      %v1150 = vunpack.c.l.b16 %v879
      %v1151 = vunpack.c.l.b16 %v880
      %v1152 = vunpack.c.l.b16 %v881
      %v1153 = vunpack.c.l.b16 %v882
      %v1154 = vunpack.c.l.b16 %v883
      %v1155 = vpack.c.b16 %v1124, %v1123
      %v1156 = vpack.c.b16 %v1126, %v1125
      %v1157 = vpack.c.b16 %v1128, %v1127
      %v1158 = vpack.c.b16 %v1130, %v1129
      %v1159 = vpack.c.b16 %v1132, %v1131
      %v1160 = vpack.c.b16 %v1134, %v1133
      %v1161 = vpack.c.b16 %v1136, %v1135
      %v1162 = vpack.c.b16 %v1138, %v1137
      %v1163 = vpack.c.b16 %v1140, %v1139
      %v1164 = vpack.c.b16 %v1142, %v1141
      %v1165 = vpack.c.b16 %v1144, %v1143
      %v1166 = vpack.c.b16 %v1146, %v1145
      %v1167 = vpack.c.b16 %v1148, %v1147
      %v1168 = vpack.c.b16 %v1150, %v1149
      %v1169 = vpack.c.b16 %v1152, %v1151
      %v1170 = vpack.c.b16 %v1154, %v1153
      %1187 = vmatpush.bf16.msra.mxu0 %v1162
      %1188 = vmatpush.bf16.msra.mxu0 %v1161
      %1189 = vmatpush.bf16.msra.mxu0 %v1160
      %1190 = vmatpush.bf16.msra.mxu0 %v1159
      %1191 = vmatpush.bf16.msra.mxu0 %v1158
      %1192 = vmatpush.bf16.msra.mxu0 %v1157
      %1193 = vmatpush.bf16.msra.mxu0 %v1156
      %1194 = vmatpush.bf16.msra.mxu0 %v1155
      %1195 = vmatmul.bf16.gmra.mxu0 %v844
      %v1196 = vpop.f32.mrf.mxu0
      %v1197 = vadd.f32 %v1072, %v1196
      %v1198 = vpop.f32.mrf.mxu0
      %v1199 = vadd.f32 %v1074, %v1198
      %1200 = vmatmul.bf16.gmra.mxu0 %v846
      %v1201 = vpop.f32.mrf.mxu0
      %v1202 = vadd.f32 %v1077, %v1201
      %v1203 = vpop.f32.mrf.mxu0
      %v1204 = vadd.f32 %v1079, %v1203
      %1205 = vmatmul.bf16.gmra.mxu0 %v848
      %v1206 = vpop.f32.mrf.mxu0
      %v1207 = vadd.f32 %v1082, %v1206
      %v1208 = vpop.f32.mrf.mxu0
      %v1209 = vadd.f32 %v1084, %v1208
      %1210 = vmatmul.bf16.gmra.mxu0 %v850
      %v1211 = vpop.f32.mrf.mxu0
      %v1212 = vadd.f32 %v1087, %v1211
      %v1213 = vpop.f32.mrf.mxu0
      %v1214 = vadd.f32 %v1089, %v1213
      %1215 = vdwg.mxu0
      %1216 = vmatpush.bf16.msra.mxu0 %v1170
      %1217 = vmatpush.bf16.msra.mxu0 %v1169
      %1218 = vmatpush.bf16.msra.mxu0 %v1168
      %1219 = vmatpush.bf16.msra.mxu0 %v1167
      %1220 = vmatpush.bf16.msra.mxu0 %v1166
      %1221 = vmatpush.bf16.msra.mxu0 %v1165
      %1222 = vmatpush.bf16.msra.mxu0 %v1164
      %1223 = vmatpush.bf16.msra.mxu0 %v1163
      %1224 = vmatmul.bf16.gmra.mxu0 %v845
      %v1225 = vpop.f32.mrf.mxu0
      %v1226 = vadd.f32 %v1197, %v1225
      %v1227 = vpop.f32.mrf.mxu0
      %v1228 = vadd.f32 %v1199, %v1227
      %1229 = vmatmul.bf16.gmra.mxu0 %v847
      %v1230 = vpop.f32.mrf.mxu0
      %v1231 = vadd.f32 %v1202, %v1230
      %v1232 = vpop.f32.mrf.mxu0
      %v1233 = vadd.f32 %v1204, %v1232
      %1234 = vmatmul.bf16.gmra.mxu0 %v849
      %v1235 = vpop.f32.mrf.mxu0
      %v1236 = vadd.f32 %v1207, %v1235
      %v1237 = vpop.f32.mrf.mxu0
      %v1238 = vadd.f32 %v1209, %v1237
      %1239 = vmatmul.bf16.gmra.mxu0 %v851
      %v1240 = vpop.f32.mrf.mxu0
      %v1241 = vadd.f32 %v1212, %v1240
      %v1242 = vpop.f32.mrf.mxu0
      %v1243 = vadd.f32 %v1214, %v1242
      %1244 = vdwg.mxu0
      %v1249 = vrot.slane %v743, 7
      %v1250 = vrot.slane %v745, 7
      %v1251 = vsel %vm779, %v1249, %v1250
      %v1252 = vrot.slane %v744, 7
      %v1253 = vrot.slane %v746, 7
      %v1254 = vsel %vm779, %v1252, %v1253
      %v1257 = vpack.c.bf16 %v1251, %v890
      %v1258 = vpack.c.bf16 %v1254, %v893
      %s1259 = scalar_lea.vmem %s3, 768
      %v1260 = vld [vmem:[%s1259] sm:$0xf]
      %v1261 = vld [vmem:[%s1259 + $0x4] sm:$0xf]
      %v1262 = vld [vmem:[%s1259 + $0x8] sm:$0xf]
      %v1263 = vld [vmem:[%s1259 + $0xc] sm:$0xf]
      %v1264 = vld [vmem:[%s1259 + $0x10] sm:$0xf]
      %v1265 = vld [vmem:[%s1259 + $0x14] sm:$0xf]
      %v1266 = vld [vmem:[%s1259 + $0x18] sm:$0xf]
      %v1267 = vld [vmem:[%s1259 + $0x1c] sm:$0xf]
      %v1268 = vld [vmem:[%s1259 + $0x20] sm:$0xf]
      %v1269 = vld [vmem:[%s1259 + $0x24] sm:$0xf]
      %v1270 = vld [vmem:[%s1259 + $0x28] sm:$0xf]
      %v1271 = vld [vmem:[%s1259 + $0x2c] sm:$0xf]
      %v1272 = vld [vmem:[%s1259 + $0x30] sm:$0xf]
      %v1273 = vld [vmem:[%s1259 + $0x34] sm:$0xf]
      %v1274 = vld [vmem:[%s1259 + $0x38] sm:$0xf]
      %v1275 = vld [vmem:[%s1259 + $0x3c] sm:$0xf]
      %v1276 = vld [vmem:[%s1259 + $0x40] sm:$0xf]
      %v1277 = vld [vmem:[%s1259 + $0x44] sm:$0xf]
      %v1278 = vld [vmem:[%s1259 + $0x48] sm:$0xf]
      %v1279 = vld [vmem:[%s1259 + $0x4c] sm:$0xf]
      %v1280 = vld [vmem:[%s1259 + $0x50] sm:$0xf]
      %v1281 = vld [vmem:[%s1259 + $0x54] sm:$0xf]
      %v1282 = vld [vmem:[%s1259 + $0x58] sm:$0xf]
      %v1283 = vld [vmem:[%s1259 + $0x5c] sm:$0xf]
      %v1284 = vld [vmem:[%s1259 + $0x60] sm:$0xf]
      %v1285 = vld [vmem:[%s1259 + $0x64] sm:$0xf]
      %v1286 = vld [vmem:[%s1259 + $0x68] sm:$0xf]
      %v1287 = vld [vmem:[%s1259 + $0x6c] sm:$0xf]
      %v1288 = vld [vmem:[%s1259 + $0x70] sm:$0xf]
      %v1289 = vld [vmem:[%s1259 + $0x74] sm:$0xf]
      %v1290 = vld [vmem:[%s1259 + $0x78] sm:$0xf]
      %v1291 = vld [vmem:[%s1259 + $0x7c] sm:$0xf]
      %v1324 = vunpack.c.l.b16 %v1260
      %v1325 = vunpack.c.l.b16 %v1261
      %v1326 = vunpack.c.l.b16 %v1262
      %v1327 = vunpack.c.l.b16 %v1263
      %v1328 = vunpack.c.l.b16 %v1264
      %v1329 = vunpack.c.l.b16 %v1265
      %v1330 = vunpack.c.l.b16 %v1266
      %v1331 = vunpack.c.l.b16 %v1267
      %v1332 = vunpack.c.l.b16 %v1268
      %v1333 = vunpack.c.l.b16 %v1269
      %v1334 = vunpack.c.l.b16 %v1270
      %v1335 = vunpack.c.l.b16 %v1271
      %v1336 = vunpack.c.l.b16 %v1272
      %v1337 = vunpack.c.l.b16 %v1273
      %v1338 = vunpack.c.l.b16 %v1274
      %v1339 = vunpack.c.l.b16 %v1275
      %v1340 = vunpack.c.l.b16 %v1276
      %v1341 = vunpack.c.l.b16 %v1277
      %v1342 = vunpack.c.l.b16 %v1278
      %v1343 = vunpack.c.l.b16 %v1279
      %v1344 = vunpack.c.l.b16 %v1280
      %v1345 = vunpack.c.l.b16 %v1281
      %v1346 = vunpack.c.l.b16 %v1282
      %v1347 = vunpack.c.l.b16 %v1283
      %v1348 = vunpack.c.l.b16 %v1284
      %v1349 = vunpack.c.l.b16 %v1285
      %v1350 = vunpack.c.l.b16 %v1286
      %v1351 = vunpack.c.l.b16 %v1287
      %v1352 = vunpack.c.l.b16 %v1288
      %v1353 = vunpack.c.l.b16 %v1289
      %v1354 = vunpack.c.l.b16 %v1290
      %v1355 = vunpack.c.l.b16 %v1291
      %v1356 = vpack.c.b16 %v1325, %v1324
      %v1357 = vpack.c.b16 %v1327, %v1326
      %v1358 = vpack.c.b16 %v1329, %v1328
      %v1359 = vpack.c.b16 %v1331, %v1330
      %v1360 = vpack.c.b16 %v1333, %v1332
      %v1361 = vpack.c.b16 %v1335, %v1334
      %v1362 = vpack.c.b16 %v1337, %v1336
      %v1363 = vpack.c.b16 %v1339, %v1338
      %v1364 = vpack.c.b16 %v1341, %v1340
      %v1365 = vpack.c.b16 %v1343, %v1342
      %v1366 = vpack.c.b16 %v1345, %v1344
      %v1367 = vpack.c.b16 %v1347, %v1346
      %v1368 = vpack.c.b16 %v1349, %v1348
      %v1369 = vpack.c.b16 %v1351, %v1350
      %v1370 = vpack.c.b16 %v1353, %v1352
      %v1371 = vpack.c.b16 %v1355, %v1354
      %1388 = vmatpush.bf16.msra.mxu0 %v1363
      %1389 = vmatpush.bf16.msra.mxu0 %v1362
      %1390 = vmatpush.bf16.msra.mxu0 %v1361
      %1391 = vmatpush.bf16.msra.mxu0 %v1360
      %1392 = vmatpush.bf16.msra.mxu0 %v1359
      %1393 = vmatpush.bf16.msra.mxu0 %v1358
      %1394 = vmatpush.bf16.msra.mxu0 %v1357
      %1395 = vmatpush.bf16.msra.mxu0 %v1356
      %1396 = vmatmul.bf16.gmra.mxu0 %v846
      %v1397 = vpop.f32.mrf.mxu0
      %v1398 = vadd.f32 0.0, %v1397
      %v1399 = vpop.f32.mrf.mxu0
      %v1400 = vadd.f32 0.0, %v1399
      %1401 = vmatmul.bf16.gmra.mxu0 %v848
      %v1402 = vpop.f32.mrf.mxu0
      %v1403 = vadd.f32 0.0, %v1402
      %v1404 = vpop.f32.mrf.mxu0
      %v1405 = vadd.f32 0.0, %v1404
      %1406 = vmatmul.bf16.gmra.mxu0 %v850
      %v1407 = vpop.f32.mrf.mxu0
      %v1408 = vadd.f32 0.0, %v1407
      %v1409 = vpop.f32.mrf.mxu0
      %v1410 = vadd.f32 0.0, %v1409
      %1411 = vmatmul.bf16.gmra.mxu0 %v1257
      %v1412 = vpop.f32.mrf.mxu0
      %v1413 = vadd.f32 0.0, %v1412
      %v1414 = vpop.f32.mrf.mxu0
      %v1415 = vadd.f32 0.0, %v1414
      %1416 = vdwg.mxu0
      %1417 = vmatpush.bf16.msra.mxu0 %v1371
      %1418 = vmatpush.bf16.msra.mxu0 %v1370
      %1419 = vmatpush.bf16.msra.mxu0 %v1369
      %1420 = vmatpush.bf16.msra.mxu0 %v1368
      %1421 = vmatpush.bf16.msra.mxu0 %v1367
      %1422 = vmatpush.bf16.msra.mxu0 %v1366
      %1423 = vmatpush.bf16.msra.mxu0 %v1365
      %1424 = vmatpush.bf16.msra.mxu0 %v1364
      %1425 = vmatmul.bf16.gmra.mxu0 %v847
      %v1426 = vpop.f32.mrf.mxu0
      %v1427 = vadd.f32 %v1398, %v1426
      %v1428 = vpop.f32.mrf.mxu0
      %v1429 = vadd.f32 %v1400, %v1428
      %1430 = vmatmul.bf16.gmra.mxu0 %v849
      %v1431 = vpop.f32.mrf.mxu0
      %v1432 = vadd.f32 %v1403, %v1431
      %v1433 = vpop.f32.mrf.mxu0
      %v1434 = vadd.f32 %v1405, %v1433
      %1435 = vmatmul.bf16.gmra.mxu0 %v851
      %v1436 = vpop.f32.mrf.mxu0
      %v1437 = vadd.f32 %v1408, %v1436
      %v1438 = vpop.f32.mrf.mxu0
      %v1439 = vadd.f32 %v1410, %v1438
      %1440 = vmatmul.bf16.gmra.mxu0 %v1258
      %v1441 = vpop.f32.mrf.mxu0
      %v1442 = vadd.f32 %v1413, %v1441
      %v1443 = vpop.f32.mrf.mxu0
      %v1444 = vadd.f32 %v1415, %v1443
      %1445 = vdwg.mxu0
      %v1446 = vadd.f32 %v1226, %v1427
      %v1447 = vadd.f32 %v1228, %v1429
      %v1448 = vadd.f32 %v1231, %v1432
      %v1449 = vadd.f32 %v1233, %v1434
      %v1450 = vadd.f32 %v1236, %v1437
      %v1451 = vadd.f32 %v1238, %v1439
      %v1452 = vadd.f32 %v1241, %v1442
      %v1453 = vadd.f32 %v1243, %v1444
      %v1454 = vld [vmem:[#allocation2 + $0x10] sm:$0xff]
      %v1455 = vld [vmem:[#allocation2 + $0x18] sm:$0xff]
      %v1456 = vld [vmem:[#allocation2 + $0x40] sm:$0xff]
      %v1457 = vld [vmem:[#allocation2 + $0x48] sm:$0xff]
      %v1458 = vld [vmem:[#allocation2 + $0x70] sm:$0xff]
      %v1459 = vld [vmem:[#allocation2 + $0x78] sm:$0xff]
      %v1460 = vld [vmem:[#allocation2 + $0xa0] sm:$0xff]
      %v1461 = vld [vmem:[#allocation2 + $0xa8] sm:$0xff]
      %v1462 = vld [vmem:[#allocation2 + $0xd0] sm:$0xff]
      %v1463 = vld [vmem:[#allocation2 + $0xd8] sm:$0xff]
      %v1464 = vld [vmem:[#allocation2 + $0x100] sm:$0xff]
      %v1465 = vld [vmem:[#allocation2 + $0x108] sm:$0xff]
      %v1466 = vld [vmem:[#allocation2 + $0x130] sm:$0xff]
      %v1467 = vld [vmem:[#allocation2 + $0x138] sm:$0xff]
      %v1468 = vld [vmem:[#allocation2 + $0x160] sm:$0xff]
      %v1469 = vld [vmem:[#allocation2 + $0x168] sm:$0xff]
      %v1470 = vld [vmem:[#allocation2 + $0x190] sm:$0xff]
      %v1471 = vld [vmem:[#allocation2 + $0x198] sm:$0xff]
      %v1472 = vld [vmem:[#allocation2 + $0x1c0] sm:$0xff]
      %v1473 = vld [vmem:[#allocation2 + $0x1c8] sm:$0xff]
      %v1474 = vpack.c.bf16 %v1456, %v1454
      %v1475 = vpack.c.bf16 %v1457, %v1455
      %v1476 = vpack.c.bf16 %v1460, %v1458
      %v1477 = vpack.c.bf16 %v1461, %v1459
      %v1478 = vpack.c.bf16 %v1464, %v1462
      %v1479 = vpack.c.bf16 %v1465, %v1463
      %v1480 = vpack.c.bf16 %v1468, %v1466
      %v1481 = vpack.c.bf16 %v1469, %v1467
      %s1482 = scalar_lea.vmem %s3, 128
      %v1483 = vld [vmem:[%s1482] sm:$0xf]
      %v1484 = vld [vmem:[%s1482 + $0x4] sm:$0xf]
      %v1485 = vld [vmem:[%s1482 + $0x8] sm:$0xf]
      %v1486 = vld [vmem:[%s1482 + $0xc] sm:$0xf]
      %v1487 = vld [vmem:[%s1482 + $0x10] sm:$0xf]
      %v1488 = vld [vmem:[%s1482 + $0x14] sm:$0xf]
      %v1489 = vld [vmem:[%s1482 + $0x18] sm:$0xf]
      %v1490 = vld [vmem:[%s1482 + $0x1c] sm:$0xf]
      %v1491 = vld [vmem:[%s1482 + $0x20] sm:$0xf]
      %v1492 = vld [vmem:[%s1482 + $0x24] sm:$0xf]
      %v1493 = vld [vmem:[%s1482 + $0x28] sm:$0xf]
      %v1494 = vld [vmem:[%s1482 + $0x2c] sm:$0xf]
      %v1495 = vld [vmem:[%s1482 + $0x30] sm:$0xf]
      %v1496 = vld [vmem:[%s1482 + $0x34] sm:$0xf]
      %v1497 = vld [vmem:[%s1482 + $0x38] sm:$0xf]
      %v1498 = vld [vmem:[%s1482 + $0x3c] sm:$0xf]
      %v1499 = vld [vmem:[%s1482 + $0x40] sm:$0xf]
      %v1500 = vld [vmem:[%s1482 + $0x44] sm:$0xf]
      %v1501 = vld [vmem:[%s1482 + $0x48] sm:$0xf]
      %v1502 = vld [vmem:[%s1482 + $0x4c] sm:$0xf]
      %v1503 = vld [vmem:[%s1482 + $0x50] sm:$0xf]
      %v1504 = vld [vmem:[%s1482 + $0x54] sm:$0xf]
      %v1505 = vld [vmem:[%s1482 + $0x58] sm:$0xf]
      %v1506 = vld [vmem:[%s1482 + $0x5c] sm:$0xf]
      %v1507 = vld [vmem:[%s1482 + $0x60] sm:$0xf]
      %v1508 = vld [vmem:[%s1482 + $0x64] sm:$0xf]
      %v1509 = vld [vmem:[%s1482 + $0x68] sm:$0xf]
      %v1510 = vld [vmem:[%s1482 + $0x6c] sm:$0xf]
      %v1511 = vld [vmem:[%s1482 + $0x70] sm:$0xf]
      %v1512 = vld [vmem:[%s1482 + $0x74] sm:$0xf]
      %v1513 = vld [vmem:[%s1482 + $0x78] sm:$0xf]
      %v1514 = vld [vmem:[%s1482 + $0x7c] sm:$0xf]
      %v1547 = vunpack.c.l.b16 %v1483
      %v1548 = vunpack.c.l.b16 %v1484
      %v1549 = vunpack.c.l.b16 %v1485
      %v1550 = vunpack.c.l.b16 %v1486
      %v1551 = vunpack.c.l.b16 %v1487
      %v1552 = vunpack.c.l.b16 %v1488
      %v1553 = vunpack.c.l.b16 %v1489
      %v1554 = vunpack.c.l.b16 %v1490
      %v1555 = vunpack.c.l.b16 %v1491
      %v1556 = vunpack.c.l.b16 %v1492
      %v1557 = vunpack.c.l.b16 %v1493
      %v1558 = vunpack.c.l.b16 %v1494
      %v1559 = vunpack.c.l.b16 %v1495
      %v1560 = vunpack.c.l.b16 %v1496
      %v1561 = vunpack.c.l.b16 %v1497
      %v1562 = vunpack.c.l.b16 %v1498
      %v1563 = vunpack.c.l.b16 %v1499
      %v1564 = vunpack.c.l.b16 %v1500
      %v1565 = vunpack.c.l.b16 %v1501
      %v1566 = vunpack.c.l.b16 %v1502
      %v1567 = vunpack.c.l.b16 %v1503
      %v1568 = vunpack.c.l.b16 %v1504
      %v1569 = vunpack.c.l.b16 %v1505
      %v1570 = vunpack.c.l.b16 %v1506
      %v1571 = vunpack.c.l.b16 %v1507
      %v1572 = vunpack.c.l.b16 %v1508
      %v1573 = vunpack.c.l.b16 %v1509
      %v1574 = vunpack.c.l.b16 %v1510
      %v1575 = vunpack.c.l.b16 %v1511
      %v1576 = vunpack.c.l.b16 %v1512
      %v1577 = vunpack.c.l.b16 %v1513
      %v1578 = vunpack.c.l.b16 %v1514
      %v1579 = vpack.c.b16 %v1548, %v1547
      %v1580 = vpack.c.b16 %v1550, %v1549
      %v1581 = vpack.c.b16 %v1552, %v1551
      %v1582 = vpack.c.b16 %v1554, %v1553
      %v1583 = vpack.c.b16 %v1556, %v1555
      %v1584 = vpack.c.b16 %v1558, %v1557
      %v1585 = vpack.c.b16 %v1560, %v1559
      %v1586 = vpack.c.b16 %v1562, %v1561
      %v1587 = vpack.c.b16 %v1564, %v1563
      %v1588 = vpack.c.b16 %v1566, %v1565
      %v1589 = vpack.c.b16 %v1568, %v1567
      %v1590 = vpack.c.b16 %v1570, %v1569
      %v1591 = vpack.c.b16 %v1572, %v1571
      %v1592 = vpack.c.b16 %v1574, %v1573
      %v1593 = vpack.c.b16 %v1576, %v1575
      %v1594 = vpack.c.b16 %v1578, %v1577
      %1611 = vmatpush.bf16.msra.mxu0 %v1586
      %1612 = vmatpush.bf16.msra.mxu0 %v1585
      %1613 = vmatpush.bf16.msra.mxu0 %v1584
      %1614 = vmatpush.bf16.msra.mxu0 %v1583
      %1615 = vmatpush.bf16.msra.mxu0 %v1582
      %1616 = vmatpush.bf16.msra.mxu0 %v1581
      %1617 = vmatpush.bf16.msra.mxu0 %v1580
      %1618 = vmatpush.bf16.msra.mxu0 %v1579
      %1619 = vmatmul.bf16.gmra.mxu0 %v1474
      %v1620 = vpop.f32.mrf.mxu0
      %v1621 = vadd.f32 0.0, %v1620
      %v1622 = vpop.f32.mrf.mxu0
      %v1623 = vadd.f32 0.0, %v1622
      %1624 = vmatmul.bf16.gmra.mxu0 %v1476
      %v1625 = vpop.f32.mrf.mxu0
      %v1626 = vadd.f32 0.0, %v1625
      %v1627 = vpop.f32.mrf.mxu0
      %v1628 = vadd.f32 0.0, %v1627
      %1629 = vmatmul.bf16.gmra.mxu0 %v1478
      %v1630 = vpop.f32.mrf.mxu0
      %v1631 = vadd.f32 0.0, %v1630
      %v1632 = vpop.f32.mrf.mxu0
      %v1633 = vadd.f32 0.0, %v1632
      %1634 = vmatmul.bf16.gmra.mxu0 %v1480
      %v1635 = vpop.f32.mrf.mxu0
      %v1636 = vadd.f32 0.0, %v1635
      %v1637 = vpop.f32.mrf.mxu0
      %v1638 = vadd.f32 0.0, %v1637
      %1639 = vdwg.mxu0
      %1640 = vmatpush.bf16.msra.mxu0 %v1594
      %1641 = vmatpush.bf16.msra.mxu0 %v1593
      %1642 = vmatpush.bf16.msra.mxu0 %v1592
      %1643 = vmatpush.bf16.msra.mxu0 %v1591
      %1644 = vmatpush.bf16.msra.mxu0 %v1590
      %1645 = vmatpush.bf16.msra.mxu0 %v1589
      %1646 = vmatpush.bf16.msra.mxu0 %v1588
      %1647 = vmatpush.bf16.msra.mxu0 %v1587
      %1648 = vmatmul.bf16.gmra.mxu0 %v1475
      %v1649 = vpop.f32.mrf.mxu0
      %v1650 = vadd.f32 %v1621, %v1649
      %v1651 = vpop.f32.mrf.mxu0
      %v1652 = vadd.f32 %v1623, %v1651
      %1653 = vmatmul.bf16.gmra.mxu0 %v1477
      %v1654 = vpop.f32.mrf.mxu0
      %v1655 = vadd.f32 %v1626, %v1654
      %v1656 = vpop.f32.mrf.mxu0
      %v1657 = vadd.f32 %v1628, %v1656
      %1658 = vmatmul.bf16.gmra.mxu0 %v1479
      %v1659 = vpop.f32.mrf.mxu0
      %v1660 = vadd.f32 %v1631, %v1659
      %v1661 = vpop.f32.mrf.mxu0
      %v1662 = vadd.f32 %v1633, %v1661
      %1663 = vmatmul.bf16.gmra.mxu0 %v1481
      %v1664 = vpop.f32.mrf.mxu0
      %v1665 = vadd.f32 %v1636, %v1664
      %v1666 = vpop.f32.mrf.mxu0
      %v1667 = vadd.f32 %v1638, %v1666
      %1668 = vdwg.mxu0
      %v1669 = vadd.f32 %v1446, %v1650
      %v1670 = vadd.f32 %v1447, %v1652
      %v1671 = vadd.f32 %v1448, %v1655
      %v1672 = vadd.f32 %v1449, %v1657
      %v1673 = vadd.f32 %v1450, %v1660
      %v1674 = vadd.f32 %v1451, %v1662
      %v1675 = vadd.f32 %v1452, %v1665
      %v1676 = vadd.f32 %v1453, %v1667
      %v1677 = vpack.c.bf16 %v1458, %v1456
      %v1678 = vpack.c.bf16 %v1459, %v1457
      %v1679 = vpack.c.bf16 %v1462, %v1460
      %v1680 = vpack.c.bf16 %v1463, %v1461
      %v1681 = vpack.c.bf16 %v1466, %v1464
      %v1682 = vpack.c.bf16 %v1467, %v1465
      %v1683 = vpack.c.bf16 %v1470, %v1468
      %v1684 = vpack.c.bf16 %v1471, %v1469
      %s1685 = scalar_lea.vmem %s3, 512
      %v1686 = vld [vmem:[%s1685] sm:$0xf]
      %v1687 = vld [vmem:[%s1685 + $0x4] sm:$0xf]
      %v1688 = vld [vmem:[%s1685 + $0x8] sm:$0xf]
      %v1689 = vld [vmem:[%s1685 + $0xc] sm:$0xf]
      %v1690 = vld [vmem:[%s1685 + $0x10] sm:$0xf]
      %v1691 = vld [vmem:[%s1685 + $0x14] sm:$0xf]
      %v1692 = vld [vmem:[%s1685 + $0x18] sm:$0xf]
      %v1693 = vld [vmem:[%s1685 + $0x1c] sm:$0xf]
      %v1694 = vld [vmem:[%s1685 + $0x20] sm:$0xf]
      %v1695 = vld [vmem:[%s1685 + $0x24] sm:$0xf]
      %v1696 = vld [vmem:[%s1685 + $0x28] sm:$0xf]
      %v1697 = vld [vmem:[%s1685 + $0x2c] sm:$0xf]
      %v1698 = vld [vmem:[%s1685 + $0x30] sm:$0xf]
      %v1699 = vld [vmem:[%s1685 + $0x34] sm:$0xf]
      %v1700 = vld [vmem:[%s1685 + $0x38] sm:$0xf]
      %v1701 = vld [vmem:[%s1685 + $0x3c] sm:$0xf]
      %v1702 = vld [vmem:[%s1685 + $0x40] sm:$0xf]
      %v1703 = vld [vmem:[%s1685 + $0x44] sm:$0xf]
      %v1704 = vld [vmem:[%s1685 + $0x48] sm:$0xf]
      %v1705 = vld [vmem:[%s1685 + $0x4c] sm:$0xf]
      %v1706 = vld [vmem:[%s1685 + $0x50] sm:$0xf]
      %v1707 = vld [vmem:[%s1685 + $0x54] sm:$0xf]
      %v1708 = vld [vmem:[%s1685 + $0x58] sm:$0xf]
      %v1709 = vld [vmem:[%s1685 + $0x5c] sm:$0xf]
      %v1710 = vld [vmem:[%s1685 + $0x60] sm:$0xf]
      %v1711 = vld [vmem:[%s1685 + $0x64] sm:$0xf]
      %v1712 = vld [vmem:[%s1685 + $0x68] sm:$0xf]
      %v1713 = vld [vmem:[%s1685 + $0x6c] sm:$0xf]
      %v1714 = vld [vmem:[%s1685 + $0x70] sm:$0xf]
      %v1715 = vld [vmem:[%s1685 + $0x74] sm:$0xf]
      %v1716 = vld [vmem:[%s1685 + $0x78] sm:$0xf]
      %v1717 = vld [vmem:[%s1685 + $0x7c] sm:$0xf]
      %v1750 = vunpack.c.l.b16 %v1686
      %v1751 = vunpack.c.l.b16 %v1687
      %v1752 = vunpack.c.l.b16 %v1688
      %v1753 = vunpack.c.l.b16 %v1689
      %v1754 = vunpack.c.l.b16 %v1690
      %v1755 = vunpack.c.l.b16 %v1691
      %v1756 = vunpack.c.l.b16 %v1692
      %v1757 = vunpack.c.l.b16 %v1693
      %v1758 = vunpack.c.l.b16 %v1694
      %v1759 = vunpack.c.l.b16 %v1695
      %v1760 = vunpack.c.l.b16 %v1696
      %v1761 = vunpack.c.l.b16 %v1697
      %v1762 = vunpack.c.l.b16 %v1698
      %v1763 = vunpack.c.l.b16 %v1699
      %v1764 = vunpack.c.l.b16 %v1700
      %v1765 = vunpack.c.l.b16 %v1701
      %v1766 = vunpack.c.l.b16 %v1702
      %v1767 = vunpack.c.l.b16 %v1703
      %v1768 = vunpack.c.l.b16 %v1704
      %v1769 = vunpack.c.l.b16 %v1705
      %v1770 = vunpack.c.l.b16 %v1706
      %v1771 = vunpack.c.l.b16 %v1707
      %v1772 = vunpack.c.l.b16 %v1708
      %v1773 = vunpack.c.l.b16 %v1709
      %v1774 = vunpack.c.l.b16 %v1710
      %v1775 = vunpack.c.l.b16 %v1711
      %v1776 = vunpack.c.l.b16 %v1712
      %v1777 = vunpack.c.l.b16 %v1713
      %v1778 = vunpack.c.l.b16 %v1714
      %v1779 = vunpack.c.l.b16 %v1715
      %v1780 = vunpack.c.l.b16 %v1716
      %v1781 = vunpack.c.l.b16 %v1717
      %v1782 = vpack.c.b16 %v1751, %v1750
      %v1783 = vpack.c.b16 %v1753, %v1752
      %v1784 = vpack.c.b16 %v1755, %v1754
      %v1785 = vpack.c.b16 %v1757, %v1756
      %v1786 = vpack.c.b16 %v1759, %v1758
      %v1787 = vpack.c.b16 %v1761, %v1760
      %v1788 = vpack.c.b16 %v1763, %v1762
      %v1789 = vpack.c.b16 %v1765, %v1764
      %v1790 = vpack.c.b16 %v1767, %v1766
      %v1791 = vpack.c.b16 %v1769, %v1768
      %v1792 = vpack.c.b16 %v1771, %v1770
      %v1793 = vpack.c.b16 %v1773, %v1772
      %v1794 = vpack.c.b16 %v1775, %v1774
      %v1795 = vpack.c.b16 %v1777, %v1776
      %v1796 = vpack.c.b16 %v1779, %v1778
      %v1797 = vpack.c.b16 %v1781, %v1780
      %1814 = vmatpush.bf16.msra.mxu0 %v1789
      %1815 = vmatpush.bf16.msra.mxu0 %v1788
      %1816 = vmatpush.bf16.msra.mxu0 %v1787
      %1817 = vmatpush.bf16.msra.mxu0 %v1786
      %1818 = vmatpush.bf16.msra.mxu0 %v1785
      %1819 = vmatpush.bf16.msra.mxu0 %v1784
      %1820 = vmatpush.bf16.msra.mxu0 %v1783
      %1821 = vmatpush.bf16.msra.mxu0 %v1782
      %1822 = vmatmul.bf16.gmra.mxu0 %v1677
      %v1823 = vpop.f32.mrf.mxu0
      %v1824 = vadd.f32 0.0, %v1823
      %v1825 = vpop.f32.mrf.mxu0
      %v1826 = vadd.f32 0.0, %v1825
      %1827 = vmatmul.bf16.gmra.mxu0 %v1679
      %v1828 = vpop.f32.mrf.mxu0
      %v1829 = vadd.f32 0.0, %v1828
      %v1830 = vpop.f32.mrf.mxu0
      %v1831 = vadd.f32 0.0, %v1830
      %1832 = vmatmul.bf16.gmra.mxu0 %v1681
      %v1833 = vpop.f32.mrf.mxu0
      %v1834 = vadd.f32 0.0, %v1833
      %v1835 = vpop.f32.mrf.mxu0
      %v1836 = vadd.f32 0.0, %v1835
      %1837 = vmatmul.bf16.gmra.mxu0 %v1683
      %v1838 = vpop.f32.mrf.mxu0
      %v1839 = vadd.f32 0.0, %v1838
      %v1840 = vpop.f32.mrf.mxu0
      %v1841 = vadd.f32 0.0, %v1840
      %1842 = vdwg.mxu0
      %1843 = vmatpush.bf16.msra.mxu0 %v1797
      %1844 = vmatpush.bf16.msra.mxu0 %v1796
      %1845 = vmatpush.bf16.msra.mxu0 %v1795
      %1846 = vmatpush.bf16.msra.mxu0 %v1794
      %1847 = vmatpush.bf16.msra.mxu0 %v1793
      %1848 = vmatpush.bf16.msra.mxu0 %v1792
      %1849 = vmatpush.bf16.msra.mxu0 %v1791
      %1850 = vmatpush.bf16.msra.mxu0 %v1790
      %1851 = vmatmul.bf16.gmra.mxu0 %v1678
      %v1852 = vpop.f32.mrf.mxu0
      %v1853 = vadd.f32 %v1824, %v1852
      %v1854 = vpop.f32.mrf.mxu0
      %v1855 = vadd.f32 %v1826, %v1854
      %1856 = vmatmul.bf16.gmra.mxu0 %v1680
      %v1857 = vpop.f32.mrf.mxu0
      %v1858 = vadd.f32 %v1829, %v1857
      %v1859 = vpop.f32.mrf.mxu0
      %v1860 = vadd.f32 %v1831, %v1859
      %1861 = vmatmul.bf16.gmra.mxu0 %v1682
      %v1862 = vpop.f32.mrf.mxu0
      %v1863 = vadd.f32 %v1834, %v1862
      %v1864 = vpop.f32.mrf.mxu0
      %v1865 = vadd.f32 %v1836, %v1864
      %1866 = vmatmul.bf16.gmra.mxu0 %v1684
      %v1867 = vpop.f32.mrf.mxu0
      %v1868 = vadd.f32 %v1839, %v1867
      %v1869 = vpop.f32.mrf.mxu0
      %v1870 = vadd.f32 %v1841, %v1869
      %1871 = vdwg.mxu0
      %v1872 = vadd.f32 %v1669, %v1853
      %v1873 = vadd.f32 %v1670, %v1855
      %v1874 = vadd.f32 %v1671, %v1858
      %v1875 = vadd.f32 %v1672, %v1860
      %v1876 = vadd.f32 %v1673, %v1863
      %v1877 = vadd.f32 %v1674, %v1865
      %v1878 = vadd.f32 %v1675, %v1868
      %v1879 = vadd.f32 %v1676, %v1870
      %v1880 = vpack.c.bf16 %v1472, %v1470
      %v1881 = vpack.c.bf16 %v1473, %v1471
      %s1882 = scalar_lea.vmem %s3, 896
      %v1883 = vld [vmem:[%s1882] sm:$0xf]
      %v1884 = vld [vmem:[%s1882 + $0x4] sm:$0xf]
      %v1885 = vld [vmem:[%s1882 + $0x8] sm:$0xf]
      %v1886 = vld [vmem:[%s1882 + $0xc] sm:$0xf]
      %v1887 = vld [vmem:[%s1882 + $0x10] sm:$0xf]
      %v1888 = vld [vmem:[%s1882 + $0x14] sm:$0xf]
      %v1889 = vld [vmem:[%s1882 + $0x18] sm:$0xf]
      %v1890 = vld [vmem:[%s1882 + $0x1c] sm:$0xf]
      %v1891 = vld [vmem:[%s1882 + $0x20] sm:$0xf]
      %v1892 = vld [vmem:[%s1882 + $0x24] sm:$0xf]
      %v1893 = vld [vmem:[%s1882 + $0x28] sm:$0xf]
      %v1894 = vld [vmem:[%s1882 + $0x2c] sm:$0xf]
      %v1895 = vld [vmem:[%s1882 + $0x30] sm:$0xf]
      %v1896 = vld [vmem:[%s1882 + $0x34] sm:$0xf]
      %v1897 = vld [vmem:[%s1882 + $0x38] sm:$0xf]
      %v1898 = vld [vmem:[%s1882 + $0x3c] sm:$0xf]
      %v1899 = vld [vmem:[%s1882 + $0x40] sm:$0xf]
      %v1900 = vld [vmem:[%s1882 + $0x44] sm:$0xf]
      %v1901 = vld [vmem:[%s1882 + $0x48] sm:$0xf]
      %v1902 = vld [vmem:[%s1882 + $0x4c] sm:$0xf]
      %v1903 = vld [vmem:[%s1882 + $0x50] sm:$0xf]
      %v1904 = vld [vmem:[%s1882 + $0x54] sm:$0xf]
      %v1905 = vld [vmem:[%s1882 + $0x58] sm:$0xf]
      %v1906 = vld [vmem:[%s1882 + $0x5c] sm:$0xf]
      %v1907 = vld [vmem:[%s1882 + $0x60] sm:$0xf]
      %v1908 = vld [vmem:[%s1882 + $0x64] sm:$0xf]
      %v1909 = vld [vmem:[%s1882 + $0x68] sm:$0xf]
      %v1910 = vld [vmem:[%s1882 + $0x6c] sm:$0xf]
      %v1911 = vld [vmem:[%s1882 + $0x70] sm:$0xf]
      %v1912 = vld [vmem:[%s1882 + $0x74] sm:$0xf]
      %v1913 = vld [vmem:[%s1882 + $0x78] sm:$0xf]
      %v1914 = vld [vmem:[%s1882 + $0x7c] sm:$0xf]
      %v1947 = vunpack.c.l.b16 %v1883
      %v1948 = vunpack.c.l.b16 %v1884
      %v1949 = vunpack.c.l.b16 %v1885
      %v1950 = vunpack.c.l.b16 %v1886
      %v1951 = vunpack.c.l.b16 %v1887
      %v1952 = vunpack.c.l.b16 %v1888
      %v1953 = vunpack.c.l.b16 %v1889
      %v1954 = vunpack.c.l.b16 %v1890
      %v1955 = vunpack.c.l.b16 %v1891
      %v1956 = vunpack.c.l.b16 %v1892
      %v1957 = vunpack.c.l.b16 %v1893
      %v1958 = vunpack.c.l.b16 %v1894
      %v1959 = vunpack.c.l.b16 %v1895
      %v1960 = vunpack.c.l.b16 %v1896
      %v1961 = vunpack.c.l.b16 %v1897
      %v1962 = vunpack.c.l.b16 %v1898
      %v1963 = vunpack.c.l.b16 %v1899
      %v1964 = vunpack.c.l.b16 %v1900
      %v1965 = vunpack.c.l.b16 %v1901
      %v1966 = vunpack.c.l.b16 %v1902
      %v1967 = vunpack.c.l.b16 %v1903
      %v1968 = vunpack.c.l.b16 %v1904
      %v1969 = vunpack.c.l.b16 %v1905
      %v1970 = vunpack.c.l.b16 %v1906
      %v1971 = vunpack.c.l.b16 %v1907
      %v1972 = vunpack.c.l.b16 %v1908
      %v1973 = vunpack.c.l.b16 %v1909
      %v1974 = vunpack.c.l.b16 %v1910
      %v1975 = vunpack.c.l.b16 %v1911
      %v1976 = vunpack.c.l.b16 %v1912
      %v1977 = vunpack.c.l.b16 %v1913
      %v1978 = vunpack.c.l.b16 %v1914
      %v1979 = vpack.c.b16 %v1948, %v1947
      %v1980 = vpack.c.b16 %v1950, %v1949
      %v1981 = vpack.c.b16 %v1952, %v1951
      %v1982 = vpack.c.b16 %v1954, %v1953
      %v1983 = vpack.c.b16 %v1956, %v1955
      %v1984 = vpack.c.b16 %v1958, %v1957
      %v1985 = vpack.c.b16 %v1960, %v1959
      %v1986 = vpack.c.b16 %v1962, %v1961
      %v1987 = vpack.c.b16 %v1964, %v1963
      %v1988 = vpack.c.b16 %v1966, %v1965
      %v1989 = vpack.c.b16 %v1968, %v1967
      %v1990 = vpack.c.b16 %v1970, %v1969
      %v1991 = vpack.c.b16 %v1972, %v1971
      %v1992 = vpack.c.b16 %v1974, %v1973
      %v1993 = vpack.c.b16 %v1976, %v1975
      %v1994 = vpack.c.b16 %v1978, %v1977
      %2011 = vmatpush.bf16.msra.mxu0 %v1986
      %2012 = vmatpush.bf16.msra.mxu0 %v1985
      %2013 = vmatpush.bf16.msra.mxu0 %v1984
      %2014 = vmatpush.bf16.msra.mxu0 %v1983
      %2015 = vmatpush.bf16.msra.mxu0 %v1982
      %2016 = vmatpush.bf16.msra.mxu0 %v1981
      %2017 = vmatpush.bf16.msra.mxu0 %v1980
      %2018 = vmatpush.bf16.msra.mxu0 %v1979
      %2019 = vmatmul.bf16.gmra.mxu0 %v1476
      %v2020 = vpop.f32.mrf.mxu0
      %v2021 = vadd.f32 0.0, %v2020
      %v2022 = vpop.f32.mrf.mxu0
      %v2023 = vadd.f32 0.0, %v2022
      %2024 = vmatmul.bf16.gmra.mxu0 %v1478
      %v2025 = vpop.f32.mrf.mxu0
      %v2026 = vadd.f32 0.0, %v2025
      %v2027 = vpop.f32.mrf.mxu0
      %v2028 = vadd.f32 0.0, %v2027
      %2029 = vmatmul.bf16.gmra.mxu0 %v1480
      %v2030 = vpop.f32.mrf.mxu0
      %v2031 = vadd.f32 0.0, %v2030
      %v2032 = vpop.f32.mrf.mxu0
      %v2033 = vadd.f32 0.0, %v2032
      %2034 = vmatmul.bf16.gmra.mxu0 %v1880
      %v2035 = vpop.f32.mrf.mxu0
      %v2036 = vadd.f32 0.0, %v2035
      %v2037 = vpop.f32.mrf.mxu0
      %v2038 = vadd.f32 0.0, %v2037
      %2039 = vdwg.mxu0
      %2040 = vmatpush.bf16.msra.mxu0 %v1994
      %2041 = vmatpush.bf16.msra.mxu0 %v1993
      %2042 = vmatpush.bf16.msra.mxu0 %v1992
      %2043 = vmatpush.bf16.msra.mxu0 %v1991
      %2044 = vmatpush.bf16.msra.mxu0 %v1990
      %2045 = vmatpush.bf16.msra.mxu0 %v1989
      %2046 = vmatpush.bf16.msra.mxu0 %v1988
      %2047 = vmatpush.bf16.msra.mxu0 %v1987
      %2048 = vmatmul.bf16.gmra.mxu0 %v1477
      %v2049 = vpop.f32.mrf.mxu0
      %v2050 = vadd.f32 %v2021, %v2049
      %v2051 = vpop.f32.mrf.mxu0
      %v2052 = vadd.f32 %v2023, %v2051
      %2053 = vmatmul.bf16.gmra.mxu0 %v1479
      %v2054 = vpop.f32.mrf.mxu0
      %v2055 = vadd.f32 %v2026, %v2054
      %v2056 = vpop.f32.mrf.mxu0
      %v2057 = vadd.f32 %v2028, %v2056
      %2058 = vmatmul.bf16.gmra.mxu0 %v1481
      %v2059 = vpop.f32.mrf.mxu0
      %v2060 = vadd.f32 %v2031, %v2059
      %v2061 = vpop.f32.mrf.mxu0
      %v2062 = vadd.f32 %v2033, %v2061
      %2063 = vmatmul.bf16.gmra.mxu0 %v1881
      %v2064 = vpop.f32.mrf.mxu0
      %v2065 = vadd.f32 %v2036, %v2064
      %v2066 = vpop.f32.mrf.mxu0
      %v2067 = vadd.f32 %v2038, %v2066
      %2068 = vdwg.mxu0
      %v2069 = vadd.f32 %v1872, %v2050
      %v2070 = vadd.f32 %v1873, %v2052
      %v2071 = vadd.f32 %v1874, %v2055
      %v2072 = vadd.f32 %v1875, %v2057
      %v2073 = vadd.f32 %v1876, %v2060
      %v2074 = vadd.f32 %v1877, %v2062
      %v2075 = vadd.f32 %v1878, %v2065
      %v2076 = vadd.f32 %v1879, %v2067
      %v2077 = vld [vmem:[#allocation2 + $0x10] sm:$0xfe]
      %v2078 = vld [vmem:[#allocation2 + $0x18] sm:$0xfe]
      %v2079 = vld [vmem:[#allocation2 + $0x20] sm:$0x1]
      %v2080 = vld [vmem:[#allocation2 + $0x28] sm:$0x1]
      %v2081 = vld [vmem:[#allocation2 + $0x40] sm:$0xfe]
      %v2082 = vld [vmem:[#allocation2 + $0x48] sm:$0xfe]
      %v2083 = vld [vmem:[#allocation2 + $0x50] sm:$0x1]
      %v2084 = vld [vmem:[#allocation2 + $0x58] sm:$0x1]
      %v2085 = vld [vmem:[#allocation2 + $0x70] sm:$0xfe]
      %v2086 = vld [vmem:[#allocation2 + $0x78] sm:$0xfe]
      %v2087 = vld [vmem:[#allocation2 + $0x80] sm:$0x1]
      %v2088 = vld [vmem:[#allocation2 + $0x88] sm:$0x1]
      %v2089 = vld [vmem:[#allocation2 + $0xa0] sm:$0xfe]
      %v2090 = vld [vmem:[#allocation2 + $0xa8] sm:$0xfe]
      %v2091 = vld [vmem:[#allocation2 + $0xb0] sm:$0x1]
      %v2092 = vld [vmem:[#allocation2 + $0xb8] sm:$0x1]
      %v2093 = vld [vmem:[#allocation2 + $0xd0] sm:$0xfe]
      %v2094 = vld [vmem:[#allocation2 + $0xd8] sm:$0xfe]
      %v2095 = vld [vmem:[#allocation2 + $0xe0] sm:$0x1]
      %v2096 = vld [vmem:[#allocation2 + $0xe8] sm:$0x1]
      %v2097 = vld [vmem:[#allocation2 + $0x100] sm:$0xfe]
      %v2098 = vld [vmem:[#allocation2 + $0x108] sm:$0xfe]
      %v2099 = vld [vmem:[#allocation2 + $0x110] sm:$0x1]
      %v2100 = vld [vmem:[#allocation2 + $0x118] sm:$0x1]
      %v2101 = vld [vmem:[#allocation2 + $0x130] sm:$0xfe]
      %v2102 = vld [vmem:[#allocation2 + $0x138] sm:$0xfe]
      %v2103 = vld [vmem:[#allocation2 + $0x140] sm:$0x1]
      %v2104 = vld [vmem:[#allocation2 + $0x148] sm:$0x1]
      %v2105 = vld [vmem:[#allocation2 + $0x160] sm:$0xfe]
      %v2106 = vld [vmem:[#allocation2 + $0x168] sm:$0xfe]
      %v2107 = vld [vmem:[#allocation2 + $0x170] sm:$0x1]
      %v2108 = vld [vmem:[#allocation2 + $0x178] sm:$0x1]
      %v2109 = vld [vmem:[#allocation2 + $0x190] sm:$0xfe]
      %v2110 = vld [vmem:[#allocation2 + $0x198] sm:$0xfe]
      %v2111 = vld [vmem:[#allocation2 + $0x1a0] sm:$0x1]
      %v2112 = vld [vmem:[#allocation2 + $0x1a8] sm:$0x1]
      %v2113 = vld [vmem:[#allocation2 + $0x1c0] sm:$0xfe]
      %v2114 = vld [vmem:[#allocation2 + $0x1c8] sm:$0xfe]
      %v2115 = vld [vmem:[#allocation2 + $0x1d0] sm:$0x1]
      %v2116 = vld [vmem:[#allocation2 + $0x1d8] sm:$0x1]
      %vm2149 = vcmask 1046528
      %v2150 = vrot.slane %v2077, 1
      %v2151 = vrot.slane %v2079, 1
      %v2152 = vsel %vm2149, %v2150, %v2151
      %v2153 = vrot.slane %v2078, 1
      %v2154 = vrot.slane %v2080, 1
      %v2155 = vsel %vm2149, %v2153, %v2154
      %v2156 = vrot.slane %v2081, 1
      %v2157 = vrot.slane %v2083, 1
      %v2158 = vsel %vm2149, %v2156, %v2157
      %v2159 = vrot.slane %v2082, 1
      %v2160 = vrot.slane %v2084, 1
      %v2161 = vsel %vm2149, %v2159, %v2160
      %v2162 = vrot.slane %v2085, 1
      %v2163 = vrot.slane %v2087, 1
      %v2164 = vsel %vm2149, %v2162, %v2163
      %v2165 = vrot.slane %v2086, 1
      %v2166 = vrot.slane %v2088, 1
      %v2167 = vsel %vm2149, %v2165, %v2166
      %v2168 = vrot.slane %v2089, 1
      %v2169 = vrot.slane %v2091, 1
      %v2170 = vsel %vm2149, %v2168, %v2169
      %v2171 = vrot.slane %v2090, 1
      %v2172 = vrot.slane %v2092, 1
      %v2173 = vsel %vm2149, %v2171, %v2172
      %v2174 = vrot.slane %v2093, 1
      %v2175 = vrot.slane %v2095, 1
      %v2176 = vsel %vm2149, %v2174, %v2175
      %v2177 = vrot.slane %v2094, 1
      %v2178 = vrot.slane %v2096, 1
      %v2179 = vsel %vm2149, %v2177, %v2178
      %v2180 = vrot.slane %v2097, 1
      %v2181 = vrot.slane %v2099, 1
      %v2182 = vsel %vm2149, %v2180, %v2181
      %v2183 = vrot.slane %v2098, 1
      %v2184 = vrot.slane %v2100, 1
      %v2185 = vsel %vm2149, %v2183, %v2184
      %v2186 = vrot.slane %v2101, 1
      %v2187 = vrot.slane %v2103, 1
      %v2188 = vsel %vm2149, %v2186, %v2187
      %v2189 = vrot.slane %v2102, 1
      %v2190 = vrot.slane %v2104, 1
      %v2191 = vsel %vm2149, %v2189, %v2190
      %v2192 = vrot.slane %v2105, 1
      %v2193 = vrot.slane %v2107, 1
      %v2194 = vsel %vm2149, %v2192, %v2193
      %v2195 = vrot.slane %v2106, 1
      %v2196 = vrot.slane %v2108, 1
      %v2197 = vsel %vm2149, %v2195, %v2196
      %v2214 = vpack.c.bf16 %v2158, %v2152
      %v2215 = vpack.c.bf16 %v2161, %v2155
      %v2216 = vpack.c.bf16 %v2170, %v2164
      %v2217 = vpack.c.bf16 %v2173, %v2167
      %v2218 = vpack.c.bf16 %v2182, %v2176
      %v2219 = vpack.c.bf16 %v2185, %v2179
      %v2220 = vpack.c.bf16 %v2194, %v2188
      %v2221 = vpack.c.bf16 %v2197, %v2191
      %s2222 = scalar_lea.vmem %s3, 256
      %v2223 = vld [vmem:[%s2222] sm:$0xf]
      %v2224 = vld [vmem:[%s2222 + $0x4] sm:$0xf]
      %v2225 = vld [vmem:[%s2222 + $0x8] sm:$0xf]
      %v2226 = vld [vmem:[%s2222 + $0xc] sm:$0xf]
      %v2227 = vld [vmem:[%s2222 + $0x10] sm:$0xf]
      %v2228 = vld [vmem:[%s2222 + $0x14] sm:$0xf]
      %v2229 = vld [vmem:[%s2222 + $0x18] sm:$0xf]
      %v2230 = vld [vmem:[%s2222 + $0x1c] sm:$0xf]
      %v2231 = vld [vmem:[%s2222 + $0x20] sm:$0xf]
      %v2232 = vld [vmem:[%s2222 + $0x24] sm:$0xf]
      %v2233 = vld [vmem:[%s2222 + $0x28] sm:$0xf]
      %v2234 = vld [vmem:[%s2222 + $0x2c] sm:$0xf]
      %v2235 = vld [vmem:[%s2222 + $0x30] sm:$0xf]
      %v2236 = vld [vmem:[%s2222 + $0x34] sm:$0xf]
      %v2237 = vld [vmem:[%s2222 + $0x38] sm:$0xf]
      %v2238 = vld [vmem:[%s2222 + $0x3c] sm:$0xf]
      %v2239 = vld [vmem:[%s2222 + $0x40] sm:$0xf]
      %v2240 = vld [vmem:[%s2222 + $0x44] sm:$0xf]
      %v2241 = vld [vmem:[%s2222 + $0x48] sm:$0xf]
      %v2242 = vld [vmem:[%s2222 + $0x4c] sm:$0xf]
      %v2243 = vld [vmem:[%s2222 + $0x50] sm:$0xf]
      %v2244 = vld [vmem:[%s2222 + $0x54] sm:$0xf]
      %v2245 = vld [vmem:[%s2222 + $0x58] sm:$0xf]
      %v2246 = vld [vmem:[%s2222 + $0x5c] sm:$0xf]
      %v2247 = vld [vmem:[%s2222 + $0x60] sm:$0xf]
      %v2248 = vld [vmem:[%s2222 + $0x64] sm:$0xf]
      %v2249 = vld [vmem:[%s2222 + $0x68] sm:$0xf]
      %v2250 = vld [vmem:[%s2222 + $0x6c] sm:$0xf]
      %v2251 = vld [vmem:[%s2222 + $0x70] sm:$0xf]
      %v2252 = vld [vmem:[%s2222 + $0x74] sm:$0xf]
      %v2253 = vld [vmem:[%s2222 + $0x78] sm:$0xf]
      %v2254 = vld [vmem:[%s2222 + $0x7c] sm:$0xf]
      %v2287 = vunpack.c.l.b16 %v2223
      %v2288 = vunpack.c.l.b16 %v2224
      %v2289 = vunpack.c.l.b16 %v2225
      %v2290 = vunpack.c.l.b16 %v2226
      %v2291 = vunpack.c.l.b16 %v2227
      %v2292 = vunpack.c.l.b16 %v2228
      %v2293 = vunpack.c.l.b16 %v2229
      %v2294 = vunpack.c.l.b16 %v2230
      %v2295 = vunpack.c.l.b16 %v2231
      %v2296 = vunpack.c.l.b16 %v2232
      %v2297 = vunpack.c.l.b16 %v2233
      %v2298 = vunpack.c.l.b16 %v2234
      %v2299 = vunpack.c.l.b16 %v2235
      %v2300 = vunpack.c.l.b16 %v2236
      %v2301 = vunpack.c.l.b16 %v2237
      %v2302 = vunpack.c.l.b16 %v2238
      %v2303 = vunpack.c.l.b16 %v2239
      %v2304 = vunpack.c.l.b16 %v2240
      %v2305 = vunpack.c.l.b16 %v2241
      %v2306 = vunpack.c.l.b16 %v2242
      %v2307 = vunpack.c.l.b16 %v2243
      %v2308 = vunpack.c.l.b16 %v2244
      %v2309 = vunpack.c.l.b16 %v2245
      %v2310 = vunpack.c.l.b16 %v2246
      %v2311 = vunpack.c.l.b16 %v2247
      %v2312 = vunpack.c.l.b16 %v2248
      %v2313 = vunpack.c.l.b16 %v2249
      %v2314 = vunpack.c.l.b16 %v2250
      %v2315 = vunpack.c.l.b16 %v2251
      %v2316 = vunpack.c.l.b16 %v2252
      %v2317 = vunpack.c.l.b16 %v2253
      %v2318 = vunpack.c.l.b16 %v2254
      %v2319 = vpack.c.b16 %v2288, %v2287
      %v2320 = vpack.c.b16 %v2290, %v2289
      %v2321 = vpack.c.b16 %v2292, %v2291
      %v2322 = vpack.c.b16 %v2294, %v2293
      %v2323 = vpack.c.b16 %v2296, %v2295
      %v2324 = vpack.c.b16 %v2298, %v2297
      %v2325 = vpack.c.b16 %v2300, %v2299
      %v2326 = vpack.c.b16 %v2302, %v2301
      %v2327 = vpack.c.b16 %v2304, %v2303
      %v2328 = vpack.c.b16 %v2306, %v2305
      %v2329 = vpack.c.b16 %v2308, %v2307
      %v2330 = vpack.c.b16 %v2310, %v2309
      %v2331 = vpack.c.b16 %v2312, %v2311
      %v2332 = vpack.c.b16 %v2314, %v2313
      %v2333 = vpack.c.b16 %v2316, %v2315
      %v2334 = vpack.c.b16 %v2318, %v2317
      %2351 = vmatpush.bf16.msra.mxu0 %v2326
      %2352 = vmatpush.bf16.msra.mxu0 %v2325
      %2353 = vmatpush.bf16.msra.mxu0 %v2324
      %2354 = vmatpush.bf16.msra.mxu0 %v2323
      %2355 = vmatpush.bf16.msra.mxu0 %v2322
      %2356 = vmatpush.bf16.msra.mxu0 %v2321
      %2357 = vmatpush.bf16.msra.mxu0 %v2320
      %2358 = vmatpush.bf16.msra.mxu0 %v2319
      %2359 = vmatmul.bf16.gmra.mxu0 %v2214
      %v2360 = vpop.f32.mrf.mxu0
      %v2361 = vadd.f32 0.0, %v2360
      %v2362 = vpop.f32.mrf.mxu0
      %v2363 = vadd.f32 0.0, %v2362
      %2364 = vmatmul.bf16.gmra.mxu0 %v2216
      %v2365 = vpop.f32.mrf.mxu0
      %v2366 = vadd.f32 0.0, %v2365
      %v2367 = vpop.f32.mrf.mxu0
      %v2368 = vadd.f32 0.0, %v2367
      %2369 = vmatmul.bf16.gmra.mxu0 %v2218
      %v2370 = vpop.f32.mrf.mxu0
      %v2371 = vadd.f32 0.0, %v2370
      %v2372 = vpop.f32.mrf.mxu0
      %v2373 = vadd.f32 0.0, %v2372
      %2374 = vmatmul.bf16.gmra.mxu0 %v2220
      %v2375 = vpop.f32.mrf.mxu0
      %v2376 = vadd.f32 0.0, %v2375
      %v2377 = vpop.f32.mrf.mxu0
      %v2378 = vadd.f32 0.0, %v2377
      %2379 = vdwg.mxu0
      %2380 = vmatpush.bf16.msra.mxu0 %v2334
      %2381 = vmatpush.bf16.msra.mxu0 %v2333
      %2382 = vmatpush.bf16.msra.mxu0 %v2332
      %2383 = vmatpush.bf16.msra.mxu0 %v2331
      %2384 = vmatpush.bf16.msra.mxu0 %v2330
      %2385 = vmatpush.bf16.msra.mxu0 %v2329
      %2386 = vmatpush.bf16.msra.mxu0 %v2328
      %2387 = vmatpush.bf16.msra.mxu0 %v2327
      %2388 = vmatmul.bf16.gmra.mxu0 %v2215
      %v2389 = vpop.f32.mrf.mxu0
      %v2390 = vadd.f32 %v2361, %v2389
      %v2391 = vpop.f32.mrf.mxu0
      %v2392 = vadd.f32 %v2363, %v2391
      %2393 = vmatmul.bf16.gmra.mxu0 %v2217
      %v2394 = vpop.f32.mrf.mxu0
      %v2395 = vadd.f32 %v2366, %v2394
      %v2396 = vpop.f32.mrf.mxu0
      %v2397 = vadd.f32 %v2368, %v2396
      %2398 = vmatmul.bf16.gmra.mxu0 %v2219
      %v2399 = vpop.f32.mrf.mxu0
      %v2400 = vadd.f32 %v2371, %v2399
      %v2401 = vpop.f32.mrf.mxu0
      %v2402 = vadd.f32 %v2373, %v2401
      %2403 = vmatmul.bf16.gmra.mxu0 %v2221
      %v2404 = vpop.f32.mrf.mxu0
      %v2405 = vadd.f32 %v2376, %v2404
      %v2406 = vpop.f32.mrf.mxu0
      %v2407 = vadd.f32 %v2378, %v2406
      %2408 = vdwg.mxu0
      %v2409 = vadd.f32 %v2069, %v2390
      %v2410 = vadd.f32 %v2070, %v2392
      %v2411 = vadd.f32 %v2071, %v2395
      %v2412 = vadd.f32 %v2072, %v2397
      %v2413 = vadd.f32 %v2073, %v2400
      %v2414 = vadd.f32 %v2074, %v2402
      %v2415 = vadd.f32 %v2075, %v2405
      %v2416 = vadd.f32 %v2076, %v2407
      %v2421 = vrot.slane %v2109, 1
      %v2422 = vrot.slane %v2111, 1
      %v2423 = vsel %vm2149, %v2421, %v2422
      %v2424 = vrot.slane %v2110, 1
      %v2425 = vrot.slane %v2112, 1
      %v2426 = vsel %vm2149, %v2424, %v2425
      %v2429 = vpack.c.bf16 %v2164, %v2158
      %v2430 = vpack.c.bf16 %v2167, %v2161
      %v2431 = vpack.c.bf16 %v2176, %v2170
      %v2432 = vpack.c.bf16 %v2179, %v2173
      %v2433 = vpack.c.bf16 %v2188, %v2182
      %v2434 = vpack.c.bf16 %v2191, %v2185
      %v2435 = vpack.c.bf16 %v2423, %v2194
      %v2436 = vpack.c.bf16 %v2426, %v2197
      %s2437 = scalar_lea.vmem %s3, 640
      %v2438 = vld [vmem:[%s2437] sm:$0xf]
      %v2439 = vld [vmem:[%s2437 + $0x4] sm:$0xf]
      %v2440 = vld [vmem:[%s2437 + $0x8] sm:$0xf]
      %v2441 = vld [vmem:[%s2437 + $0xc] sm:$0xf]
      %v2442 = vld [vmem:[%s2437 + $0x10] sm:$0xf]
      %v2443 = vld [vmem:[%s2437 + $0x14] sm:$0xf]
      %v2444 = vld [vmem:[%s2437 + $0x18] sm:$0xf]
      %v2445 = vld [vmem:[%s2437 + $0x1c] sm:$0xf]
      %v2446 = vld [vmem:[%s2437 + $0x20] sm:$0xf]
      %v2447 = vld [vmem:[%s2437 + $0x24] sm:$0xf]
      %v2448 = vld [vmem:[%s2437 + $0x28] sm:$0xf]
      %v2449 = vld [vmem:[%s2437 + $0x2c] sm:$0xf]
      %v2450 = vld [vmem:[%s2437 + $0x30] sm:$0xf]
      %v2451 = vld [vmem:[%s2437 + $0x34] sm:$0xf]
      %v2452 = vld [vmem:[%s2437 + $0x38] sm:$0xf]
      %v2453 = vld [vmem:[%s2437 + $0x3c] sm:$0xf]
      %v2454 = vld [vmem:[%s2437 + $0x40] sm:$0xf]
      %v2455 = vld [vmem:[%s2437 + $0x44] sm:$0xf]
      %v2456 = vld [vmem:[%s2437 + $0x48] sm:$0xf]
      %v2457 = vld [vmem:[%s2437 + $0x4c] sm:$0xf]
      %v2458 = vld [vmem:[%s2437 + $0x50] sm:$0xf]
      %v2459 = vld [vmem:[%s2437 + $0x54] sm:$0xf]
      %v2460 = vld [vmem:[%s2437 + $0x58] sm:$0xf]
      %v2461 = vld [vmem:[%s2437 + $0x5c] sm:$0xf]
      %v2462 = vld [vmem:[%s2437 + $0x60] sm:$0xf]
      %v2463 = vld [vmem:[%s2437 + $0x64] sm:$0xf]
      %v2464 = vld [vmem:[%s2437 + $0x68] sm:$0xf]
      %v2465 = vld [vmem:[%s2437 + $0x6c] sm:$0xf]
      %v2466 = vld [vmem:[%s2437 + $0x70] sm:$0xf]
      %v2467 = vld [vmem:[%s2437 + $0x74] sm:$0xf]
      %v2468 = vld [vmem:[%s2437 + $0x78] sm:$0xf]
      %v2469 = vld [vmem:[%s2437 + $0x7c] sm:$0xf]
      %v2502 = vunpack.c.l.b16 %v2438
      %v2503 = vunpack.c.l.b16 %v2439
      %v2504 = vunpack.c.l.b16 %v2440
      %v2505 = vunpack.c.l.b16 %v2441
      %v2506 = vunpack.c.l.b16 %v2442
      %v2507 = vunpack.c.l.b16 %v2443
      %v2508 = vunpack.c.l.b16 %v2444
      %v2509 = vunpack.c.l.b16 %v2445
      %v2510 = vunpack.c.l.b16 %v2446
      %v2511 = vunpack.c.l.b16 %v2447
      %v2512 = vunpack.c.l.b16 %v2448
      %v2513 = vunpack.c.l.b16 %v2449
      %v2514 = vunpack.c.l.b16 %v2450
      %v2515 = vunpack.c.l.b16 %v2451
      %v2516 = vunpack.c.l.b16 %v2452
      %v2517 = vunpack.c.l.b16 %v2453
      %v2518 = vunpack.c.l.b16 %v2454
      %v2519 = vunpack.c.l.b16 %v2455
      %v2520 = vunpack.c.l.b16 %v2456
      %v2521 = vunpack.c.l.b16 %v2457
      %v2522 = vunpack.c.l.b16 %v2458
      %v2523 = vunpack.c.l.b16 %v2459
      %v2524 = vunpack.c.l.b16 %v2460
      %v2525 = vunpack.c.l.b16 %v2461
      %v2526 = vunpack.c.l.b16 %v2462
      %v2527 = vunpack.c.l.b16 %v2463
      %v2528 = vunpack.c.l.b16 %v2464
      %v2529 = vunpack.c.l.b16 %v2465
      %v2530 = vunpack.c.l.b16 %v2466
      %v2531 = vunpack.c.l.b16 %v2467
      %v2532 = vunpack.c.l.b16 %v2468
      %v2533 = vunpack.c.l.b16 %v2469
      %v2534 = vpack.c.b16 %v2503, %v2502
      %v2535 = vpack.c.b16 %v2505, %v2504
      %v2536 = vpack.c.b16 %v2507, %v2506
      %v2537 = vpack.c.b16 %v2509, %v2508
      %v2538 = vpack.c.b16 %v2511, %v2510
      %v2539 = vpack.c.b16 %v2513, %v2512
      %v2540 = vpack.c.b16 %v2515, %v2514
      %v2541 = vpack.c.b16 %v2517, %v2516
      %v2542 = vpack.c.b16 %v2519, %v2518
      %v2543 = vpack.c.b16 %v2521, %v2520
      %v2544 = vpack.c.b16 %v2523, %v2522
      %v2545 = vpack.c.b16 %v2525, %v2524
      %v2546 = vpack.c.b16 %v2527, %v2526
      %v2547 = vpack.c.b16 %v2529, %v2528
      %v2548 = vpack.c.b16 %v2531, %v2530
      %v2549 = vpack.c.b16 %v2533, %v2532
      %2566 = vmatpush.bf16.msra.mxu0 %v2541
      %2567 = vmatpush.bf16.msra.mxu0 %v2540
      %2568 = vmatpush.bf16.msra.mxu0 %v2539
      %2569 = vmatpush.bf16.msra.mxu0 %v2538
      %2570 = vmatpush.bf16.msra.mxu0 %v2537
      %2571 = vmatpush.bf16.msra.mxu0 %v2536
      %2572 = vmatpush.bf16.msra.mxu0 %v2535
      %2573 = vmatpush.bf16.msra.mxu0 %v2534
      %2574 = vmatmul.bf16.gmra.mxu0 %v2429
      %v2575 = vpop.f32.mrf.mxu0
      %v2576 = vadd.f32 0.0, %v2575
      %v2577 = vpop.f32.mrf.mxu0
      %v2578 = vadd.f32 0.0, %v2577
      %2579 = vmatmul.bf16.gmra.mxu0 %v2431
      %v2580 = vpop.f32.mrf.mxu0
      %v2581 = vadd.f32 0.0, %v2580
      %v2582 = vpop.f32.mrf.mxu0
      %v2583 = vadd.f32 0.0, %v2582
      %2584 = vmatmul.bf16.gmra.mxu0 %v2433
      %v2585 = vpop.f32.mrf.mxu0
      %v2586 = vadd.f32 0.0, %v2585
      %v2587 = vpop.f32.mrf.mxu0
      %v2588 = vadd.f32 0.0, %v2587
      %2589 = vmatmul.bf16.gmra.mxu0 %v2435
      %v2590 = vpop.f32.mrf.mxu0
      %v2591 = vadd.f32 0.0, %v2590
      %v2592 = vpop.f32.mrf.mxu0
      %v2593 = vadd.f32 0.0, %v2592
      %2594 = vdwg.mxu0
      %2595 = vmatpush.bf16.msra.mxu0 %v2549
      %2596 = vmatpush.bf16.msra.mxu0 %v2548
      %2597 = vmatpush.bf16.msra.mxu0 %v2547
      %2598 = vmatpush.bf16.msra.mxu0 %v2546
      %2599 = vmatpush.bf16.msra.mxu0 %v2545
      %2600 = vmatpush.bf16.msra.mxu0 %v2544
      %2601 = vmatpush.bf16.msra.mxu0 %v2543
      %2602 = vmatpush.bf16.msra.mxu0 %v2542
      %2603 = vmatmul.bf16.gmra.mxu0 %v2430
      %v2604 = vpop.f32.mrf.mxu0
      %v2605 = vadd.f32 %v2576, %v2604
      %v2606 = vpop.f32.mrf.mxu0
      %v2607 = vadd.f32 %v2578, %v2606
      %2608 = vmatmul.bf16.gmra.mxu0 %v2432
      %v2609 = vpop.f32.mrf.mxu0
      %v2610 = vadd.f32 %v2581, %v2609
      %v2611 = vpop.f32.mrf.mxu0
      %v2612 = vadd.f32 %v2583, %v2611
      %2613 = vmatmul.bf16.gmra.mxu0 %v2434
      %v2614 = vpop.f32.mrf.mxu0
      %v2615 = vadd.f32 %v2586, %v2614
      %v2616 = vpop.f32.mrf.mxu0
      %v2617 = vadd.f32 %v2588, %v2616
      %2618 = vmatmul.bf16.gmra.mxu0 %v2436
      %v2619 = vpop.f32.mrf.mxu0
      %v2620 = vadd.f32 %v2591, %v2619
      %v2621 = vpop.f32.mrf.mxu0
      %v2622 = vadd.f32 %v2593, %v2621
      %2623 = vdwg.mxu0
      %v2624 = vadd.f32 %v2409, %v2605
      %v2625 = vadd.f32 %v2410, %v2607
      %v2626 = vadd.f32 %v2411, %v2610
      %v2627 = vadd.f32 %v2412, %v2612
      %v2628 = vadd.f32 %v2413, %v2615
      %v2629 = vadd.f32 %v2414, %v2617
      %v2630 = vadd.f32 %v2415, %v2620
      %v2631 = vadd.f32 %v2416, %v2622
      %v2636 = vrot.slane %v2113, 1
      %v2637 = vrot.slane %v2115, 1
      %v2638 = vsel %vm2149, %v2636, %v2637
      %v2639 = vrot.slane %v2114, 1
      %v2640 = vrot.slane %v2116, 1
      %v2641 = vsel %vm2149, %v2639, %v2640
      %v2644 = vpack.c.bf16 %v2638, %v2423
      %v2645 = vpack.c.bf16 %v2641, %v2426
      %s2646 = scalar_lea.vmem %s3, 1024
      %v2647 = vld [vmem:[%s2646] sm:$0xf]
      %v2648 = vld [vmem:[%s2646 + $0x4] sm:$0xf]
      %v2649 = vld [vmem:[%s2646 + $0x8] sm:$0xf]
      %v2650 = vld [vmem:[%s2646 + $0xc] sm:$0xf]
      %v2651 = vld [vmem:[%s2646 + $0x10] sm:$0xf]
      %v2652 = vld [vmem:[%s2646 + $0x14] sm:$0xf]
      %v2653 = vld [vmem:[%s2646 + $0x18] sm:$0xf]
      %v2654 = vld [vmem:[%s2646 + $0x1c] sm:$0xf]
      %v2655 = vld [vmem:[%s2646 + $0x20] sm:$0xf]
      %v2656 = vld [vmem:[%s2646 + $0x24] sm:$0xf]
      %v2657 = vld [vmem:[%s2646 + $0x28] sm:$0xf]
      %v2658 = vld [vmem:[%s2646 + $0x2c] sm:$0xf]
      %v2659 = vld [vmem:[%s2646 + $0x30] sm:$0xf]
      %v2660 = vld [vmem:[%s2646 + $0x34] sm:$0xf]
      %v2661 = vld [vmem:[%s2646 + $0x38] sm:$0xf]
      %v2662 = vld [vmem:[%s2646 + $0x3c] sm:$0xf]
      %v2663 = vld [vmem:[%s2646 + $0x40] sm:$0xf]
      %v2664 = vld [vmem:[%s2646 + $0x44] sm:$0xf]
      %v2665 = vld [vmem:[%s2646 + $0x48] sm:$0xf]
      %v2666 = vld [vmem:[%s2646 + $0x4c] sm:$0xf]
      %v2667 = vld [vmem:[%s2646 + $0x50] sm:$0xf]
      %v2668 = vld [vmem:[%s2646 + $0x54] sm:$0xf]
      %v2669 = vld [vmem:[%s2646 + $0x58] sm:$0xf]
      %v2670 = vld [vmem:[%s2646 + $0x5c] sm:$0xf]
      %v2671 = vld [vmem:[%s2646 + $0x60] sm:$0xf]
      %v2672 = vld [vmem:[%s2646 + $0x64] sm:$0xf]
      %v2673 = vld [vmem:[%s2646 + $0x68] sm:$0xf]
      %v2674 = vld [vmem:[%s2646 + $0x6c] sm:$0xf]
      %v2675 = vld [vmem:[%s2646 + $0x70] sm:$0xf]
      %v2676 = vld [vmem:[%s2646 + $0x74] sm:$0xf]
      %v2677 = vld [vmem:[%s2646 + $0x78] sm:$0xf]
      %v2678 = vld [vmem:[%s2646 + $0x7c] sm:$0xf]
      %v2711 = vunpack.c.l.b16 %v2647
      %v2712 = vunpack.c.l.b16 %v2648
      %v2713 = vunpack.c.l.b16 %v2649
      %v2714 = vunpack.c.l.b16 %v2650
      %v2715 = vunpack.c.l.b16 %v2651
      %v2716 = vunpack.c.l.b16 %v2652
      %v2717 = vunpack.c.l.b16 %v2653
      %v2718 = vunpack.c.l.b16 %v2654
      %v2719 = vunpack.c.l.b16 %v2655
      %v2720 = vunpack.c.l.b16 %v2656
      %v2721 = vunpack.c.l.b16 %v2657
      %v2722 = vunpack.c.l.b16 %v2658
      %v2723 = vunpack.c.l.b16 %v2659
      %v2724 = vunpack.c.l.b16 %v2660
      %v2725 = vunpack.c.l.b16 %v2661
      %v2726 = vunpack.c.l.b16 %v2662
      %v2727 = vunpack.c.l.b16 %v2663
      %v2728 = vunpack.c.l.b16 %v2664
      %v2729 = vunpack.c.l.b16 %v2665
      %v2730 = vunpack.c.l.b16 %v2666
      %v2731 = vunpack.c.l.b16 %v2667
      %v2732 = vunpack.c.l.b16 %v2668
      %v2733 = vunpack.c.l.b16 %v2669
      %v2734 = vunpack.c.l.b16 %v2670
      %v2735 = vunpack.c.l.b16 %v2671
      %v2736 = vunpack.c.l.b16 %v2672
      %v2737 = vunpack.c.l.b16 %v2673
      %v2738 = vunpack.c.l.b16 %v2674
      %v2739 = vunpack.c.l.b16 %v2675
      %v2740 = vunpack.c.l.b16 %v2676
      %v2741 = vunpack.c.l.b16 %v2677
      %v2742 = vunpack.c.l.b16 %v2678
      %v2743 = vpack.c.b16 %v2712, %v2711
      %v2744 = vpack.c.b16 %v2714, %v2713
      %v2745 = vpack.c.b16 %v2716, %v2715
      %v2746 = vpack.c.b16 %v2718, %v2717
      %v2747 = vpack.c.b16 %v2720, %v2719
      %v2748 = vpack.c.b16 %v2722, %v2721
      %v2749 = vpack.c.b16 %v2724, %v2723
      %v2750 = vpack.c.b16 %v2726, %v2725
      %v2751 = vpack.c.b16 %v2728, %v2727
      %v2752 = vpack.c.b16 %v2730, %v2729
      %v2753 = vpack.c.b16 %v2732, %v2731
      %v2754 = vpack.c.b16 %v2734, %v2733
      %v2755 = vpack.c.b16 %v2736, %v2735
      %v2756 = vpack.c.b16 %v2738, %v2737
      %v2757 = vpack.c.b16 %v2740, %v2739
      %v2758 = vpack.c.b16 %v2742, %v2741
      %2775 = vmatpush.bf16.msra.mxu0 %v2750
      %2776 = vmatpush.bf16.msra.mxu0 %v2749
      %2777 = vmatpush.bf16.msra.mxu0 %v2748
      %2778 = vmatpush.bf16.msra.mxu0 %v2747
      %2779 = vmatpush.bf16.msra.mxu0 %v2746
      %2780 = vmatpush.bf16.msra.mxu0 %v2745
      %2781 = vmatpush.bf16.msra.mxu0 %v2744
      %2782 = vmatpush.bf16.msra.mxu0 %v2743
      %2783 = vmatmul.bf16.gmra.mxu0 %v2216
      %v2784 = vpop.f32.mrf.mxu0
      %v2785 = vadd.f32 0.0, %v2784
      %v2786 = vpop.f32.mrf.mxu0
      %v2787 = vadd.f32 0.0, %v2786
      %2788 = vmatmul.bf16.gmra.mxu0 %v2218
      %v2789 = vpop.f32.mrf.mxu0
      %v2790 = vadd.f32 0.0, %v2789
      %v2791 = vpop.f32.mrf.mxu0
      %v2792 = vadd.f32 0.0, %v2791
      %2793 = vmatmul.bf16.gmra.mxu0 %v2220
      %v2794 = vpop.f32.mrf.mxu0
      %v2795 = vadd.f32 0.0, %v2794
      %v2796 = vpop.f32.mrf.mxu0
      %v2797 = vadd.f32 0.0, %v2796
      %2798 = vmatmul.bf16.gmra.mxu0 %v2644
      %v2799 = vpop.f32.mrf.mxu0
      %v2800 = vadd.f32 0.0, %v2799
      %v2801 = vpop.f32.mrf.mxu0
      %v2802 = vadd.f32 0.0, %v2801
      %2803 = vdwg.mxu0
      %2804 = vmatpush.bf16.msra.mxu0 %v2758
      %2805 = vmatpush.bf16.msra.mxu0 %v2757
      %2806 = vmatpush.bf16.msra.mxu0 %v2756
      %2807 = vmatpush.bf16.msra.mxu0 %v2755
      %2808 = vmatpush.bf16.msra.mxu0 %v2754
      %2809 = vmatpush.bf16.msra.mxu0 %v2753
      %2810 = vmatpush.bf16.msra.mxu0 %v2752
      %2811 = vmatpush.bf16.msra.mxu0 %v2751
      %2812 = vmatmul.bf16.gmra.mxu0 %v2217
      %v2813 = vpop.f32.mrf.mxu0
      %v2814 = vadd.f32 %v2785, %v2813
      %v2815 = vpop.f32.mrf.mxu0
      %v2816 = vadd.f32 %v2787, %v2815
      %2817 = vmatmul.bf16.gmra.mxu0 %v2219
      %v2818 = vpop.f32.mrf.mxu0
      %v2819 = vadd.f32 %v2790, %v2818
      %v2820 = vpop.f32.mrf.mxu0
      %v2821 = vadd.f32 %v2792, %v2820
      %2822 = vmatmul.bf16.gmra.mxu0 %v2221
      %v2823 = vpop.f32.mrf.mxu0
      %v2824 = vadd.f32 %v2795, %v2823
      %v2825 = vpop.f32.mrf.mxu0
      %v2826 = vadd.f32 %v2797, %v2825
      %2827 = vmatmul.bf16.gmra.mxu0 %v2645
      %v2828 = vpop.f32.mrf.mxu0
      %v2829 = vadd.f32 %v2800, %v2828
      %v2830 = vpop.f32.mrf.mxu0
      %v2831 = vadd.f32 %v2802, %v2830
      %2832 = vdwg.mxu0
      %v2833 = vadd.f32 %v2624, %v2814
      %v2834 = vadd.f32 %v2625, %v2816
      %v2835 = vadd.f32 %v2626, %v2819
      %v2836 = vadd.f32 %v2627, %v2821
      %v2837 = vadd.f32 %v2628, %v2824
      %v2838 = vadd.f32 %v2629, %v2826
      %v2839 = vadd.f32 %v2630, %v2829
      %v2840 = vadd.f32 %v2631, %v2831
      %s2841 = scalar_lea.vmem [#allocation3], 24
      %2842 = vst.msk [vmem:[%s2841 + $0x8] sm:$0xff] %vm566, %v2833
      %2843 = vst.msk [vmem:[%s2841 + $0x20] sm:$0xff] %vm566, %v2834
      %2844 = vst.msk [vmem:[%s2841 + $0x38] sm:$0xff] %vm566, %v2835
      %2845 = vst.msk [vmem:[%s2841 + $0x50] sm:$0xff] %vm566, %v2836
      %2846 = vst.msk [vmem:[%s2841 + $0x68] sm:$0xff] %vm566, %v2837
      %2847 = vst.msk [vmem:[%s2841 + $0x80] sm:$0xff] %vm566, %v2838
      %2848 = vst.msk [vmem:[%s2841 + $0x98] sm:$0xff] %vm566, %v2839
      %2849 = vst.msk [vmem:[%s2841 + $0xb0] sm:$0xff] %vm566, %v2840
      %v2850 = vld [vmem:[%s2] sm:$0xff]
      %v2851 = vld [vmem:[%s2 + $0x8] sm:$0xff]
      %v2852 = vld [vmem:[%s2 + $0x10] sm:$0xff]
      %v2853 = vld [vmem:[%s2 + $0x18] sm:$0xff]
      %v2854 = vld [vmem:[%s2 + $0x20] sm:$0xff]
      %v2855 = vld [vmem:[%s2 + $0x28] sm:$0xff]
      %v2856 = vld [vmem:[%s2 + $0x30] sm:$0xff]
      %v2857 = vld [vmem:[%s2 + $0x38] sm:$0xff]
      %v2858 = vld [vmem:[%s477] sm:$0xff]
      %v2859 = vld [vmem:[%s477 + $0x8] sm:$0xff]
      %v2860 = vld [vmem:[%s477 + $0x10] sm:$0xff]
      %v2861 = vld [vmem:[%s477 + $0x18] sm:$0xff]
      %v2862 = vld [vmem:[%s477 + $0x20] sm:$0xff]
      %v2863 = vld [vmem:[%s477 + $0x28] sm:$0xff]
      %v2864 = vld [vmem:[%s477 + $0x30] sm:$0xff]
      %v2865 = vld [vmem:[%s477 + $0x38] sm:$0xff]
      %v2866 = vld [vmem:[%s477 + $0x40] sm:$0xff]
      %v2867 = vld [vmem:[%s477 + $0x48] sm:$0xff]
      %v2868 = vld [vmem:[%s477 + $0x50] sm:$0xff]
      %v2869 = vld [vmem:[%s477 + $0x58] sm:$0xff]
      %v2870 = vld [vmem:[%s477 + $0x60] sm:$0xff]
      %v2871 = vld [vmem:[%s477 + $0x68] sm:$0xff]
      %v2872 = vld [vmem:[%s477 + $0x70] sm:$0xff]
      %v2873 = vld [vmem:[%s477 + $0x78] sm:$0xff]
      %v2874 = vld [vmem:[%s477 + $0x80] sm:$0xff]
      %v2875 = vld [vmem:[%s477 + $0x88] sm:$0xff]
      %v2876 = vld [vmem:[%s477 + $0x90] sm:$0xff]
      %v2877 = vld [vmem:[%s477 + $0x98] sm:$0xff]
      %v2878 = vld [vmem:[%s477 + $0xa0] sm:$0xff]
      %v2879 = vld [vmem:[%s477 + $0xa8] sm:$0xff]
      %v2880 = vld [vmem:[%s477 + $0xb0] sm:$0xff]
      %v2881 = vld [vmem:[%s477 + $0xb8] sm:$0xff]
      %v2882 = vld [vmem:[%s477 + $0xc0] sm:$0xff]
      %v2883 = vld [vmem:[%s477 + $0xc8] sm:$0xff]
      %v2884 = vld [vmem:[%s477 + $0xd0] sm:$0xff]
      %v2885 = vld [vmem:[%s477 + $0xd8] sm:$0xff]
      %v2886 = vld [vmem:[%s477 + $0xe0] sm:$0xff]
      %v2887 = vld [vmem:[%s477 + $0xe8] sm:$0xff]
      %v2888 = vld [vmem:[%s477 + $0xf0] sm:$0xff]
      %v2889 = vld [vmem:[%s477 + $0xf8] sm:$0xff]
      %vm2890 = vcmask 130048
      %v2892 = vsel %vm2890, %v2850, 0
      %v2895 = vsel %vm2890, %v2851, 0
      %v2898 = vsel %vm2890, %v2852, 0
      %v2901 = vsel %vm2890, %v2853, 0
      %v2904 = vsel %vm2890, %v2854, 0
      %v2907 = vsel %vm2890, %v2855, 0
      %v2910 = vsel %vm2890, %v2856, 0
      %v2913 = vsel %vm2890, %v2857, 0
      %v2916 = vsel %vm2890, %v2858, 0
      %v2919 = vsel %vm2890, %v2859, 0
      %v2922 = vsel %vm2890, %v2860, 0
      %v2925 = vsel %vm2890, %v2861, 0
      %v2928 = vsel %vm2890, %v2862, 0
      %v2931 = vsel %vm2890, %v2863, 0
      %v2934 = vsel %vm2890, %v2864, 0
      %v2937 = vsel %vm2890, %v2865, 0
      %v2940 = vsel %vm2890, %v2866, 0
      %v2943 = vsel %vm2890, %v2867, 0
      %v2946 = vsel %vm2890, %v2868, 0
      %v2949 = vsel %vm2890, %v2869, 0
      %v2952 = vsel %vm2890, %v2870, 0
      %v2955 = vsel %vm2890, %v2871, 0
      %v2958 = vsel %vm2890, %v2872, 0
      %v2961 = vsel %vm2890, %v2873, 0
      %v2964 = vsel %vm2890, %v2874, 0
      %v2967 = vsel %vm2890, %v2875, 0
      %v2970 = vsel %vm2890, %v2876, 0
      %v2973 = vsel %vm2890, %v2877, 0
      %v2976 = vsel %vm2890, %v2878, 0
      %v2979 = vsel %vm2890, %v2879, 0
      %v2982 = vsel %vm2890, %v2880, 0
      %v2985 = vsel %vm2890, %v2881, 0
      %v2988 = vsel %vm2890, %v2882, 0
      %v2991 = vsel %vm2890, %v2883, 0
      %v2994 = vsel %vm2890, %v2884, 0
      %v2997 = vsel %vm2890, %v2885, 0
      %v3000 = vsel %vm2890, %v2886, 0
      %v3003 = vsel %vm2890, %v2887, 0
      %v3006 = vsel %vm2890, %v2888, 0
      %v3009 = vsel %vm2890, %v2889, 0
      %3011 = vmatpush.xpose.msra.mxu0 %v2961
      %3012 = vmatpush.xpose.msra.mxu0 %v2958
      %3013 = vmatpush.xpose.msra.mxu0 %v2955
      %3014 = vmatpush.xpose.msra.mxu0 %v2952
      %3015 = vmatpush.xpose.msra.mxu0 %v2949
      %3016 = vmatpush.xpose.msra.mxu0 %v2946
      %3017 = vmatpush.xpose.msra.mxu0 %v2943
      %3018 = vmatpush.xpose.msra.mxu0 %v2940
      %3019 = vmatpush.xpose.msra.mxu0 %v2937
      %3020 = vmatpush.xpose.msra.mxu0 %v2934
      %3021 = vmatpush.xpose.msra.mxu0 %v2931
      %3022 = vmatpush.xpose.msra.mxu0 %v2928
      %3023 = vmatpush.xpose.msra.mxu0 %v2925
      %3024 = vmatpush.xpose.msra.mxu0 %v2922
      %3025 = vmatpush.xpose.msra.mxu0 %v2919
      %3026 = vmatpush.xpose.msra.mxu0 %v2916
      %3027 = vmatmul.f32.gmra.mxu0 %v2892
      %v3028 = vpop.f32.mrf.mxu0
      %v3029 = vadd.f32 0.0, %v3028
      %3030 = vmatmul.f32.gmra.mxu0 %v2895
      %v3031 = vpop.f32.mrf.mxu0
      %v3032 = vadd.f32 0.0, %v3031
      %3033 = vmatmul.f32.gmra.mxu0 %v2898
      %v3034 = vpop.f32.mrf.mxu0
      %v3035 = vadd.f32 0.0, %v3034
      %3036 = vmatmul.f32.gmra.mxu0 %v2901
      %v3037 = vpop.f32.mrf.mxu0
      %v3038 = vadd.f32 0.0, %v3037
      %3039 = vmatmul.f32.gmra.mxu0 %v2904
      %v3040 = vpop.f32.mrf.mxu0
      %v3041 = vadd.f32 0.0, %v3040
      %3042 = vmatmul.f32.gmra.mxu0 %v2907
      %v3043 = vpop.f32.mrf.mxu0
      %v3044 = vadd.f32 0.0, %v3043
      %3045 = vmatmul.f32.gmra.mxu0 %v2910
      %v3046 = vpop.f32.mrf.mxu0
      %v3047 = vadd.f32 0.0, %v3046
      %3048 = vmatmul.f32.gmra.mxu0 %v2913
      %v3049 = vpop.f32.mrf.mxu0
      %v3050 = vadd.f32 0.0, %v3049
      %3051 = vdwg.mxu0
      %3052 = vmatpush.xpose.msra.mxu0 %v3009
      %3053 = vmatpush.xpose.msra.mxu0 %v3006
      %3054 = vmatpush.xpose.msra.mxu0 %v3003
      %3055 = vmatpush.xpose.msra.mxu0 %v3000
      %3056 = vmatpush.xpose.msra.mxu0 %v2997
      %3057 = vmatpush.xpose.msra.mxu0 %v2994
      %3058 = vmatpush.xpose.msra.mxu0 %v2991
      %3059 = vmatpush.xpose.msra.mxu0 %v2988
      %3060 = vmatpush.xpose.msra.mxu0 %v2985
      %3061 = vmatpush.xpose.msra.mxu0 %v2982
      %3062 = vmatpush.xpose.msra.mxu0 %v2979
      %3063 = vmatpush.xpose.msra.mxu0 %v2976
      %3064 = vmatpush.xpose.msra.mxu0 %v2973
      %3065 = vmatpush.xpose.msra.mxu0 %v2970
      %3066 = vmatpush.xpose.msra.mxu0 %v2967
      %3067 = vmatpush.xpose.msra.mxu0 %v2964
      %3068 = vmatmul.f32.gmra.mxu0 %v2892
      %v3069 = vpop.f32.mrf.mxu0
      %v3070 = vadd.f32 0.0, %v3069
      %3071 = vmatmul.f32.gmra.mxu0 %v2895
      %v3072 = vpop.f32.mrf.mxu0
      %v3073 = vadd.f32 0.0, %v3072
      %3074 = vmatmul.f32.gmra.mxu0 %v2898
      %v3075 = vpop.f32.mrf.mxu0
      %v3076 = vadd.f32 0.0, %v3075
      %3077 = vmatmul.f32.gmra.mxu0 %v2901
      %v3078 = vpop.f32.mrf.mxu0
      %v3079 = vadd.f32 0.0, %v3078
      %3080 = vmatmul.f32.gmra.mxu0 %v2904
      %v3081 = vpop.f32.mrf.mxu0
      %v3082 = vadd.f32 0.0, %v3081
      %3083 = vmatmul.f32.gmra.mxu0 %v2907
      %v3084 = vpop.f32.mrf.mxu0
      %v3085 = vadd.f32 0.0, %v3084
      %3086 = vmatmul.f32.gmra.mxu0 %v2910
      %v3087 = vpop.f32.mrf.mxu0
      %v3088 = vadd.f32 0.0, %v3087
      %3089 = vmatmul.f32.gmra.mxu0 %v2913
      %v3090 = vpop.f32.mrf.mxu0
      %v3091 = vadd.f32 0.0, %v3090
      %3092 = vdwg.mxu0
      %3093 = vst [vmem:[%s690 + $0x10] sm:$0xff] %v3029
      %3094 = vst [vmem:[%s690 + $0x18] sm:$0xff] %v3070
      %3095 = vst [vmem:[%s690 + $0x40] sm:$0xff] %v3032
      %3096 = vst [vmem:[%s690 + $0x48] sm:$0xff] %v3073
      %3097 = vst [vmem:[%s690 + $0x70] sm:$0xff] %v3035
      %3098 = vst [vmem:[%s690 + $0x78] sm:$0xff] %v3076
      %3099 = vst [vmem:[%s690 + $0xa0] sm:$0xff] %v3038
      %3100 = vst [vmem:[%s690 + $0xa8] sm:$0xff] %v3079
      %3101 = vst [vmem:[%s690 + $0xd0] sm:$0xff] %v3041
      %3102 = vst [vmem:[%s690 + $0xd8] sm:$0xff] %v3082
      %3103 = vst [vmem:[%s690 + $0x100] sm:$0xff] %v3044
      %3104 = vst [vmem:[%s690 + $0x108] sm:$0xff] %v3085
      %3105 = vst [vmem:[%s690 + $0x130] sm:$0xff] %v3047
      %3106 = vst [vmem:[%s690 + $0x138] sm:$0xff] %v3088
      %3107 = vst [vmem:[%s690 + $0x160] sm:$0xff] %v3050
      %3108 = vst [vmem:[%s690 + $0x168] sm:$0xff] %v3091
      %v3109 = vld [vmem:[%s4] sm:$0xff]
      %v3110 = vld [vmem:[%s4 + $0x8] sm:$0xff]
      %v3111 = vld [vmem:[%s4 + $0x10] sm:$0x1]
      %v3112 = vld [vmem:[%s4 + $0x18] sm:$0x1]
      %v3113 = vld [vmem:[%s5] sm:$0x3]
      %v3114 = vld [vmem:[#allocation2] sm:$0x80]
      %v3115 = vld [vmem:[#allocation2 + $0x8] sm:$0x80]
      %v3116 = vld [vmem:[#allocation2 + $0x10] sm:$0x7f]
      %v3117 = vld [vmem:[#allocation2 + $0x18] sm:$0x7f]
      %v3118 = vld [vmem:[#allocation2 + $0x30] sm:$0x80]
      %v3119 = vld [vmem:[#allocation2 + $0x38] sm:$0x80]
      %v3120 = vld [vmem:[#allocation2 + $0x40] sm:$0x7f]
      %v3121 = vld [vmem:[#allocation2 + $0x48] sm:$0x7f]
      %v3122 = vld [vmem:[#allocation2 + $0x60] sm:$0x80]
      %v3123 = vld [vmem:[#allocation2 + $0x68] sm:$0x80]
      %v3124 = vld [vmem:[#allocation2 + $0x70] sm:$0x7f]
      %v3125 = vld [vmem:[#allocation2 + $0x78] sm:$0x7f]
      %v3126 = vld [vmem:[#allocation2 + $0x90] sm:$0x80]
      %v3127 = vld [vmem:[#allocation2 + $0x98] sm:$0x80]
      %v3128 = vld [vmem:[#allocation2 + $0xa0] sm:$0x7f]
      %v3129 = vld [vmem:[#allocation2 + $0xa8] sm:$0x7f]
      %v3130 = vld [vmem:[#allocation2 + $0xc0] sm:$0x80]
      %v3131 = vld [vmem:[#allocation2 + $0xc8] sm:$0x80]
      %v3132 = vld [vmem:[#allocation2 + $0xd0] sm:$0x7f]
      %v3133 = vld [vmem:[#allocation2 + $0xd8] sm:$0x7f]
      %v3134 = vld [vmem:[#allocation2 + $0xf0] sm:$0x80]
      %v3135 = vld [vmem:[#allocation2 + $0xf8] sm:$0x80]
      %v3136 = vld [vmem:[#allocation2 + $0x100] sm:$0x7f]
      %v3137 = vld [vmem:[#allocation2 + $0x108] sm:$0x7f]
      %v3138 = vld [vmem:[#allocation2 + $0x120] sm:$0x80]
      %v3139 = vld [vmem:[#allocation2 + $0x128] sm:$0x80]
      %v3140 = vld [vmem:[#allocation2 + $0x130] sm:$0x7f]
      %v3141 = vld [vmem:[#allocation2 + $0x138] sm:$0x7f]
      %v3142 = vld [vmem:[#allocation2 + $0x150] sm:$0x80]
      %v3143 = vld [vmem:[#allocation2 + $0x158] sm:$0x80]
      %v3144 = vld [vmem:[#allocation2 + $0x160] sm:$0x7f]
      %v3145 = vld [vmem:[#allocation2 + $0x168] sm:$0x7f]
      %v3146 = vld [vmem:[#allocation2 + $0x180] sm:$0x80]
      %v3147 = vld [vmem:[#allocation2 + $0x188] sm:$0x80]
      %v3148 = vld [vmem:[#allocation2 + $0x190] sm:$0x7f]
      %v3149 = vld [vmem:[#allocation2 + $0x198] sm:$0x7f]
      %v3150 = vld [vmem:[#allocation2 + $0x1b0] sm:$0x80]
      %v3151 = vld [vmem:[#allocation2 + $0x1b8] sm:$0x80]
      %v3152 = vld [vmem:[#allocation2 + $0x1c0] sm:$0x7f]
      %v3153 = vld [vmem:[#allocation2 + $0x1c8] sm:$0x7f]
      %v3154 = vperm.slane %v3109, 0
      %v3155 = vperm.slane %v3110, 0
      %v3156 = vmul.f32 %v3114, %v3154
      %v3157 = vmul.f32 %v3115, %v3155
      %v3158 = vmul.f32 %v3116, %v3154
      %v3159 = vmul.f32 %v3117, %v3155
      %v3160 = vmul.f32 %v3118, %v3154
      %v3161 = vmul.f32 %v3119, %v3155
      %v3162 = vmul.f32 %v3120, %v3154
      %v3163 = vmul.f32 %v3121, %v3155
      %v3164 = vmul.f32 %v3122, %v3154
      %v3165 = vmul.f32 %v3123, %v3155
      %v3166 = vmul.f32 %v3124, %v3154
      %v3167 = vmul.f32 %v3125, %v3155
      %v3168 = vmul.f32 %v3126, %v3154
      %v3169 = vmul.f32 %v3127, %v3155
      %v3170 = vmul.f32 %v3128, %v3154
      %v3171 = vmul.f32 %v3129, %v3155
      %v3172 = vmul.f32 %v3130, %v3154
      %v3173 = vmul.f32 %v3131, %v3155
      %v3174 = vmul.f32 %v3132, %v3154
      %v3175 = vmul.f32 %v3133, %v3155
      %v3176 = vmul.f32 %v3134, %v3154
      %v3177 = vmul.f32 %v3135, %v3155
      %v3178 = vmul.f32 %v3136, %v3154
      %v3179 = vmul.f32 %v3137, %v3155
      %v3180 = vmul.f32 %v3138, %v3154
      %v3181 = vmul.f32 %v3139, %v3155
      %v3182 = vmul.f32 %v3140, %v3154
      %v3183 = vmul.f32 %v3141, %v3155
      %v3184 = vmul.f32 %v3142, %v3154
      %v3185 = vmul.f32 %v3143, %v3155
      %v3186 = vmul.f32 %v3144, %v3154
      %v3187 = vmul.f32 %v3145, %v3155
      %v3188 = vadd.f32 %v3156, 0.0
      %v3189 = vadd.f32 %v3157, 0.0
      %v3190 = vadd.f32 %v3158, 0.0
      %v3191 = vadd.f32 %v3159, 0.0
      %v3192 = vadd.f32 %v3160, 0.0
      %v3193 = vadd.f32 %v3161, 0.0
      %v3194 = vadd.f32 %v3162, 0.0
      %v3195 = vadd.f32 %v3163, 0.0
      %v3196 = vadd.f32 %v3164, 0.0
      %v3197 = vadd.f32 %v3165, 0.0
      %v3198 = vadd.f32 %v3166, 0.0
      %v3199 = vadd.f32 %v3167, 0.0
      %v3200 = vadd.f32 %v3168, 0.0
      %v3201 = vadd.f32 %v3169, 0.0
      %v3202 = vadd.f32 %v3170, 0.0
      %v3203 = vadd.f32 %v3171, 0.0
      %v3204 = vadd.f32 %v3172, 0.0
      %v3205 = vadd.f32 %v3173, 0.0
      %v3206 = vadd.f32 %v3174, 0.0
      %v3207 = vadd.f32 %v3175, 0.0
      %v3208 = vadd.f32 %v3176, 0.0
      %v3209 = vadd.f32 %v3177, 0.0
      %v3210 = vadd.f32 %v3178, 0.0
      %v3211 = vadd.f32 %v3179, 0.0
      %v3212 = vadd.f32 %v3180, 0.0
      %v3213 = vadd.f32 %v3181, 0.0
      %v3214 = vadd.f32 %v3182, 0.0
      %v3215 = vadd.f32 %v3183, 0.0
      %v3216 = vadd.f32 %v3184, 0.0
      %v3217 = vadd.f32 %v3185, 0.0
      %v3218 = vadd.f32 %v3186, 0.0
      %v3219 = vadd.f32 %v3187, 0.0
      %v3220 = vperm.slane %v3109, 3
      %v3221 = vperm.slane %v3110, 3
      %v3222 = vmul.f32 %v3118, %v3220
      %v3223 = vmul.f32 %v3119, %v3221
      %v3224 = vmul.f32 %v3120, %v3220
      %v3225 = vmul.f32 %v3121, %v3221
      %v3226 = vmul.f32 %v3122, %v3220
      %v3227 = vmul.f32 %v3123, %v3221
      %v3228 = vmul.f32 %v3124, %v3220
      %v3229 = vmul.f32 %v3125, %v3221
      %v3230 = vmul.f32 %v3126, %v3220
      %v3231 = vmul.f32 %v3127, %v3221
      %v3232 = vmul.f32 %v3128, %v3220
      %v3233 = vmul.f32 %v3129, %v3221
      %v3234 = vmul.f32 %v3130, %v3220
      %v3235 = vmul.f32 %v3131, %v3221
      %v3236 = vmul.f32 %v3132, %v3220
      %v3237 = vmul.f32 %v3133, %v3221
      %v3238 = vmul.f32 %v3134, %v3220
      %v3239 = vmul.f32 %v3135, %v3221
      %v3240 = vmul.f32 %v3136, %v3220
      %v3241 = vmul.f32 %v3137, %v3221
      %v3242 = vmul.f32 %v3138, %v3220
      %v3243 = vmul.f32 %v3139, %v3221
      %v3244 = vmul.f32 %v3140, %v3220
      %v3245 = vmul.f32 %v3141, %v3221
      %v3246 = vmul.f32 %v3142, %v3220
      %v3247 = vmul.f32 %v3143, %v3221
      %v3248 = vmul.f32 %v3144, %v3220
      %v3249 = vmul.f32 %v3145, %v3221
      %v3250 = vmul.f32 %v3146, %v3220
      %v3251 = vmul.f32 %v3147, %v3221
      %v3252 = vmul.f32 %v3148, %v3220
      %v3253 = vmul.f32 %v3149, %v3221
      %v3254 = vadd.f32 %v3188, %v3222
      %v3255 = vadd.f32 %v3189, %v3223
      %v3256 = vadd.f32 %v3190, %v3224
      %v3257 = vadd.f32 %v3191, %v3225
      %v3258 = vadd.f32 %v3192, %v3226
      %v3259 = vadd.f32 %v3193, %v3227
      %v3260 = vadd.f32 %v3194, %v3228
      %v3261 = vadd.f32 %v3195, %v3229
      %v3262 = vadd.f32 %v3196, %v3230
      %v3263 = vadd.f32 %v3197, %v3231
      %v3264 = vadd.f32 %v3198, %v3232
      %v3265 = vadd.f32 %v3199, %v3233
      %v3266 = vadd.f32 %v3200, %v3234
      %v3267 = vadd.f32 %v3201, %v3235
      %v3268 = vadd.f32 %v3202, %v3236
      %v3269 = vadd.f32 %v3203, %v3237
      %v3270 = vadd.f32 %v3204, %v3238
      %v3271 = vadd.f32 %v3205, %v3239
      %v3272 = vadd.f32 %v3206, %v3240
      %v3273 = vadd.f32 %v3207, %v3241
      %v3274 = vadd.f32 %v3208, %v3242
      %v3275 = vadd.f32 %v3209, %v3243
      %v3276 = vadd.f32 %v3210, %v3244
      %v3277 = vadd.f32 %v3211, %v3245
      %v3278 = vadd.f32 %v3212, %v3246
      %v3279 = vadd.f32 %v3213, %v3247
      %v3280 = vadd.f32 %v3214, %v3248
      %v3281 = vadd.f32 %v3215, %v3249
      %v3282 = vadd.f32 %v3216, %v3250
      %v3283 = vadd.f32 %v3217, %v3251
      %v3284 = vadd.f32 %v3218, %v3252
      %v3285 = vadd.f32 %v3219, %v3253
      %v3286 = vperm.slane %v3109, 6
      %v3287 = vperm.slane %v3110, 6
      %v3288 = vmul.f32 %v3122, %v3286
      %v3289 = vmul.f32 %v3123, %v3287
      %v3290 = vmul.f32 %v3124, %v3286
      %v3291 = vmul.f32 %v3125, %v3287
      %v3292 = vmul.f32 %v3126, %v3286
      %v3293 = vmul.f32 %v3127, %v3287
      %v3294 = vmul.f32 %v3128, %v3286
      %v3295 = vmul.f32 %v3129, %v3287
      %v3296 = vmul.f32 %v3130, %v3286
      %v3297 = vmul.f32 %v3131, %v3287
      %v3298 = vmul.f32 %v3132, %v3286
      %v3299 = vmul.f32 %v3133, %v3287
      %v3300 = vmul.f32 %v3134, %v3286
      %v3301 = vmul.f32 %v3135, %v3287
      %v3302 = vmul.f32 %v3136, %v3286
      %v3303 = vmul.f32 %v3137, %v3287
      %v3304 = vmul.f32 %v3138, %v3286
      %v3305 = vmul.f32 %v3139, %v3287
      %v3306 = vmul.f32 %v3140, %v3286
      %v3307 = vmul.f32 %v3141, %v3287
      %v3308 = vmul.f32 %v3142, %v3286
      %v3309 = vmul.f32 %v3143, %v3287
      %v3310 = vmul.f32 %v3144, %v3286
      %v3311 = vmul.f32 %v3145, %v3287
      %v3312 = vmul.f32 %v3146, %v3286
      %v3313 = vmul.f32 %v3147, %v3287
      %v3314 = vmul.f32 %v3148, %v3286
      %v3315 = vmul.f32 %v3149, %v3287
      %v3316 = vmul.f32 %v3150, %v3286
      %v3317 = vmul.f32 %v3151, %v3287
      %v3318 = vmul.f32 %v3152, %v3286
      %v3319 = vmul.f32 %v3153, %v3287
      %v3320 = vadd.f32 %v3254, %v3288
      %v3321 = vadd.f32 %v3255, %v3289
      %v3322 = vadd.f32 %v3256, %v3290
      %v3323 = vadd.f32 %v3257, %v3291
      %v3324 = vadd.f32 %v3258, %v3292
      %v3325 = vadd.f32 %v3259, %v3293
      %v3326 = vadd.f32 %v3260, %v3294
      %v3327 = vadd.f32 %v3261, %v3295
      %v3328 = vadd.f32 %v3262, %v3296
      %v3329 = vadd.f32 %v3263, %v3297
      %v3330 = vadd.f32 %v3264, %v3298
      %v3331 = vadd.f32 %v3265, %v3299
      %v3332 = vadd.f32 %v3266, %v3300
      %v3333 = vadd.f32 %v3267, %v3301
      %v3334 = vadd.f32 %v3268, %v3302
      %v3335 = vadd.f32 %v3269, %v3303
      %v3336 = vadd.f32 %v3270, %v3304
      %v3337 = vadd.f32 %v3271, %v3305
      %v3338 = vadd.f32 %v3272, %v3306
      %v3339 = vadd.f32 %v3273, %v3307
      %v3340 = vadd.f32 %v3274, %v3308
      %v3341 = vadd.f32 %v3275, %v3309
      %v3342 = vadd.f32 %v3276, %v3310
      %v3343 = vadd.f32 %v3277, %v3311
      %v3344 = vadd.f32 %v3278, %v3312
      %v3345 = vadd.f32 %v3279, %v3313
      %v3346 = vadd.f32 %v3280, %v3314
      %v3347 = vadd.f32 %v3281, %v3315
      %v3348 = vadd.f32 %v3282, %v3316
      %v3349 = vadd.f32 %v3283, %v3317
      %v3350 = vadd.f32 %v3284, %v3318
      %v3351 = vadd.f32 %v3285, %v3319
      %v3352 = vld [vmem:[#allocation2 + $0x10] sm:$0xff]
      %v3353 = vld [vmem:[#allocation2 + $0x18] sm:$0xff]
      %v3354 = vld [vmem:[#allocation2 + $0x40] sm:$0xff]
      %v3355 = vld [vmem:[#allocation2 + $0x48] sm:$0xff]
      %v3356 = vld [vmem:[#allocation2 + $0x70] sm:$0xff]
      %v3357 = vld [vmem:[#allocation2 + $0x78] sm:$0xff]
      %v3358 = vld [vmem:[#allocation2 + $0xa0] sm:$0xff]
      %v3359 = vld [vmem:[#allocation2 + $0xa8] sm:$0xff]
      %v3360 = vld [vmem:[#allocation2 + $0xd0] sm:$0xff]
      %v3361 = vld [vmem:[#allocation2 + $0xd8] sm:$0xff]
      %v3362 = vld [vmem:[#allocation2 + $0x100] sm:$0xff]
      %v3363 = vld [vmem:[#allocation2 + $0x108] sm:$0xff]
      %v3364 = vld [vmem:[#allocation2 + $0x130] sm:$0xff]
      %v3365 = vld [vmem:[#allocation2 + $0x138] sm:$0xff]
      %v3366 = vld [vmem:[#allocation2 + $0x160] sm:$0xff]
      %v3367 = vld [vmem:[#allocation2 + $0x168] sm:$0xff]
      %v3368 = vld [vmem:[#allocation2 + $0x190] sm:$0xff]
      %v3369 = vld [vmem:[#allocation2 + $0x198] sm:$0xff]
      %v3370 = vld [vmem:[#allocation2 + $0x1c0] sm:$0xff]
      %v3371 = vld [vmem:[#allocation2 + $0x1c8] sm:$0xff]
      %v3372 = vperm.slane %v3109, 1
      %v3373 = vperm.slane %v3110, 1
      %v3374 = vmul.f32 %v3352, %v3372
      %v3375 = vmul.f32 %v3353, %v3373
      %v3376 = vmul.f32 %v3354, %v3372
      %v3377 = vmul.f32 %v3355, %v3373
      %v3378 = vmul.f32 %v3356, %v3372
      %v3379 = vmul.f32 %v3357, %v3373
      %v3380 = vmul.f32 %v3358, %v3372
      %v3381 = vmul.f32 %v3359, %v3373
      %v3382 = vmul.f32 %v3360, %v3372
      %v3383 = vmul.f32 %v3361, %v3373
      %v3384 = vmul.f32 %v3362, %v3372
      %v3385 = vmul.f32 %v3363, %v3373
      %v3386 = vmul.f32 %v3364, %v3372
      %v3387 = vmul.f32 %v3365, %v3373
      %v3388 = vmul.f32 %v3366, %v3372
      %v3389 = vmul.f32 %v3367, %v3373
      %v3406 = vrot.slane %v3374, 1
      %v3407 = vrot.slane %v3375, 1
      %v3408 = vrot.slane %v3376, 1
      %v3409 = vrot.slane %v3377, 1
      %v3410 = vrot.slane %v3378, 1
      %v3411 = vrot.slane %v3379, 1
      %v3412 = vrot.slane %v3380, 1
      %v3413 = vrot.slane %v3381, 1
      %v3414 = vrot.slane %v3382, 1
      %v3415 = vrot.slane %v3383, 1
      %v3416 = vrot.slane %v3384, 1
      %v3417 = vrot.slane %v3385, 1
      %v3418 = vrot.slane %v3386, 1
      %v3419 = vrot.slane %v3387, 1
      %v3420 = vrot.slane %v3388, 1
      %v3421 = vrot.slane %v3389, 1
      %v3438 = vadd.f32 %v3320, %v3406
      %v3439 = vadd.f32 %v3321, %v3407
      %v3440 = vadd.f32 %v3322, %v3406
      %v3441 = vadd.f32 %v3323, %v3407
      %v3442 = vadd.f32 %v3324, %v3408
      %v3443 = vadd.f32 %v3325, %v3409
      %v3444 = vadd.f32 %v3326, %v3408
      %v3445 = vadd.f32 %v3327, %v3409
      %v3446 = vadd.f32 %v3328, %v3410
      %v3447 = vadd.f32 %v3329, %v3411
      %v3448 = vadd.f32 %v3330, %v3410
      %v3449 = vadd.f32 %v3331, %v3411
      %v3450 = vadd.f32 %v3332, %v3412
      %v3451 = vadd.f32 %v3333, %v3413
      %v3452 = vadd.f32 %v3334, %v3412
      %v3453 = vadd.f32 %v3335, %v3413
      %v3454 = vadd.f32 %v3336, %v3414
      %v3455 = vadd.f32 %v3337, %v3415
      %v3456 = vadd.f32 %v3338, %v3414
      %v3457 = vadd.f32 %v3339, %v3415
      %v3458 = vadd.f32 %v3340, %v3416
      %v3459 = vadd.f32 %v3341, %v3417
      %v3460 = vadd.f32 %v3342, %v3416
      %v3461 = vadd.f32 %v3343, %v3417
      %v3462 = vadd.f32 %v3344, %v3418
      %v3463 = vadd.f32 %v3345, %v3419
      %v3464 = vadd.f32 %v3346, %v3418
      %v3465 = vadd.f32 %v3347, %v3419
      %v3466 = vadd.f32 %v3348, %v3420
      %v3467 = vadd.f32 %v3349, %v3421
      %v3468 = vadd.f32 %v3350, %v3420
      %v3469 = vadd.f32 %v3351, %v3421
      %v3470 = vperm.slane %v3109, 4
      %v3471 = vperm.slane %v3110, 4
      %v3472 = vmul.f32 %v3354, %v3470
      %v3473 = vmul.f32 %v3355, %v3471
      %v3474 = vmul.f32 %v3356, %v3470
      %v3475 = vmul.f32 %v3357, %v3471
      %v3476 = vmul.f32 %v3358, %v3470
      %v3477 = vmul.f32 %v3359, %v3471
      %v3478 = vmul.f32 %v3360, %v3470
      %v3479 = vmul.f32 %v3361, %v3471
      %v3480 = vmul.f32 %v3362, %v3470
      %v3481 = vmul.f32 %v3363, %v3471
      %v3482 = vmul.f32 %v3364, %v3470
      %v3483 = vmul.f32 %v3365, %v3471
      %v3484 = vmul.f32 %v3366, %v3470
      %v3485 = vmul.f32 %v3367, %v3471
      %v3486 = vmul.f32 %v3368, %v3470
      %v3487 = vmul.f32 %v3369, %v3471
      %v3504 = vrot.slane %v3472, 1
      %v3505 = vrot.slane %v3473, 1
      %v3506 = vrot.slane %v3474, 1
      %v3507 = vrot.slane %v3475, 1
      %v3508 = vrot.slane %v3476, 1
      %v3509 = vrot.slane %v3477, 1
      %v3510 = vrot.slane %v3478, 1
      %v3511 = vrot.slane %v3479, 1
      %v3512 = vrot.slane %v3480, 1
      %v3513 = vrot.slane %v3481, 1
      %v3514 = vrot.slane %v3482, 1
      %v3515 = vrot.slane %v3483, 1
      %v3516 = vrot.slane %v3484, 1
      %v3517 = vrot.slane %v3485, 1
      %v3518 = vrot.slane %v3486, 1
      %v3519 = vrot.slane %v3487, 1
      %v3536 = vadd.f32 %v3438, %v3504
      %v3537 = vadd.f32 %v3439, %v3505
      %v3538 = vadd.f32 %v3440, %v3504
      %v3539 = vadd.f32 %v3441, %v3505
      %v3540 = vadd.f32 %v3442, %v3506
      %v3541 = vadd.f32 %v3443, %v3507
      %v3542 = vadd.f32 %v3444, %v3506
      %v3543 = vadd.f32 %v3445, %v3507
      %v3544 = vadd.f32 %v3446, %v3508
      %v3545 = vadd.f32 %v3447, %v3509
      %v3546 = vadd.f32 %v3448, %v3508
      %v3547 = vadd.f32 %v3449, %v3509
      %v3548 = vadd.f32 %v3450, %v3510
      %v3549 = vadd.f32 %v3451, %v3511
      %v3550 = vadd.f32 %v3452, %v3510
      %v3551 = vadd.f32 %v3453, %v3511
      %v3552 = vadd.f32 %v3454, %v3512
      %v3553 = vadd.f32 %v3455, %v3513
      %v3554 = vadd.f32 %v3456, %v3512
      %v3555 = vadd.f32 %v3457, %v3513
      %v3556 = vadd.f32 %v3458, %v3514
      %v3557 = vadd.f32 %v3459, %v3515
      %v3558 = vadd.f32 %v3460, %v3514
      %v3559 = vadd.f32 %v3461, %v3515
      %v3560 = vadd.f32 %v3462, %v3516
      %v3561 = vadd.f32 %v3463, %v3517
      %v3562 = vadd.f32 %v3464, %v3516
      %v3563 = vadd.f32 %v3465, %v3517
      %v3564 = vadd.f32 %v3466, %v3518
      %v3565 = vadd.f32 %v3467, %v3519
      %v3566 = vadd.f32 %v3468, %v3518
      %v3567 = vadd.f32 %v3469, %v3519
      %v3568 = vperm.slane %v3109, 7
      %v3569 = vperm.slane %v3110, 7
      %v3570 = vmul.f32 %v3356, %v3568
      %v3571 = vmul.f32 %v3357, %v3569
      %v3572 = vmul.f32 %v3358, %v3568
      %v3573 = vmul.f32 %v3359, %v3569
      %v3574 = vmul.f32 %v3360, %v3568
      %v3575 = vmul.f32 %v3361, %v3569
      %v3576 = vmul.f32 %v3362, %v3568
      %v3577 = vmul.f32 %v3363, %v3569
      %v3578 = vmul.f32 %v3364, %v3568
      %v3579 = vmul.f32 %v3365, %v3569
      %v3580 = vmul.f32 %v3366, %v3568
      %v3581 = vmul.f32 %v3367, %v3569
      %v3582 = vmul.f32 %v3368, %v3568
      %v3583 = vmul.f32 %v3369, %v3569
      %v3584 = vmul.f32 %v3370, %v3568
      %v3585 = vmul.f32 %v3371, %v3569
      %v3602 = vrot.slane %v3570, 1
      %v3603 = vrot.slane %v3571, 1
      %v3604 = vrot.slane %v3572, 1
      %v3605 = vrot.slane %v3573, 1
      %v3606 = vrot.slane %v3574, 1
      %v3607 = vrot.slane %v3575, 1
      %v3608 = vrot.slane %v3576, 1
      %v3609 = vrot.slane %v3577, 1
      %v3610 = vrot.slane %v3578, 1
      %v3611 = vrot.slane %v3579, 1
      %v3612 = vrot.slane %v3580, 1
      %v3613 = vrot.slane %v3581, 1
      %v3614 = vrot.slane %v3582, 1
      %v3615 = vrot.slane %v3583, 1
      %v3616 = vrot.slane %v3584, 1
      %v3617 = vrot.slane %v3585, 1
      %v3634 = vadd.f32 %v3536, %v3602
      %v3635 = vadd.f32 %v3537, %v3603
      %v3636 = vadd.f32 %v3538, %v3602
      %v3637 = vadd.f32 %v3539, %v3603
      %v3638 = vadd.f32 %v3540, %v3604
      %v3639 = vadd.f32 %v3541, %v3605
      %v3640 = vadd.f32 %v3542, %v3604
      %v3641 = vadd.f32 %v3543, %v3605
      %v3642 = vadd.f32 %v3544, %v3606
      %v3643 = vadd.f32 %v3545, %v3607
      %v3644 = vadd.f32 %v3546, %v3606
      %v3645 = vadd.f32 %v3547, %v3607
      %v3646 = vadd.f32 %v3548, %v3608
      %v3647 = vadd.f32 %v3549, %v3609
      %v3648 = vadd.f32 %v3550, %v3608
      %v3649 = vadd.f32 %v3551, %v3609
      %v3650 = vadd.f32 %v3552, %v3610
      %v3651 = vadd.f32 %v3553, %v3611
      %v3652 = vadd.f32 %v3554, %v3610
      %v3653 = vadd.f32 %v3555, %v3611
      %v3654 = vadd.f32 %v3556, %v3612
      %v3655 = vadd.f32 %v3557, %v3613
      %v3656 = vadd.f32 %v3558, %v3612
      %v3657 = vadd.f32 %v3559, %v3613
      %v3658 = vadd.f32 %v3560, %v3614
      %v3659 = vadd.f32 %v3561, %v3615
      %v3660 = vadd.f32 %v3562, %v3614
      %v3661 = vadd.f32 %v3563, %v3615
      %v3662 = vadd.f32 %v3564, %v3616
      %v3663 = vadd.f32 %v3565, %v3617
      %v3664 = vadd.f32 %v3566, %v3616
      %v3665 = vadd.f32 %v3567, %v3617
      %v3666 = vld [vmem:[#allocation2 + $0x10] sm:$0xfe]
      %v3667 = vld [vmem:[#allocation2 + $0x18] sm:$0xfe]
      %v3668 = vld [vmem:[#allocation2 + $0x20] sm:$0x1]
      %v3669 = vld [vmem:[#allocation2 + $0x28] sm:$0x1]
      %v3670 = vld [vmem:[#allocation2 + $0x40] sm:$0xfe]
      %v3671 = vld [vmem:[#allocation2 + $0x48] sm:$0xfe]
      %v3672 = vld [vmem:[#allocation2 + $0x50] sm:$0x1]
      %v3673 = vld [vmem:[#allocation2 + $0x58] sm:$0x1]
      %v3674 = vld [vmem:[#allocation2 + $0x70] sm:$0xfe]
      %v3675 = vld [vmem:[#allocation2 + $0x78] sm:$0xfe]
      %v3676 = vld [vmem:[#allocation2 + $0x80] sm:$0x1]
      %v3677 = vld [vmem:[#allocation2 + $0x88] sm:$0x1]
      %v3678 = vld [vmem:[#allocation2 + $0xa0] sm:$0xfe]
      %v3679 = vld [vmem:[#allocation2 + $0xa8] sm:$0xfe]
      %v3680 = vld [vmem:[#allocation2 + $0xb0] sm:$0x1]
      %v3681 = vld [vmem:[#allocation2 + $0xb8] sm:$0x1]
      %v3682 = vld [vmem:[#allocation2 + $0xd0] sm:$0xfe]
      %v3683 = vld [vmem:[#allocation2 + $0xd8] sm:$0xfe]
      %v3684 = vld [vmem:[#allocation2 + $0xe0] sm:$0x1]
      %v3685 = vld [vmem:[#allocation2 + $0xe8] sm:$0x1]
      %v3686 = vld [vmem:[#allocation2 + $0x100] sm:$0xfe]
      %v3687 = vld [vmem:[#allocation2 + $0x108] sm:$0xfe]
      %v3688 = vld [vmem:[#allocation2 + $0x110] sm:$0x1]
      %v3689 = vld [vmem:[#allocation2 + $0x118] sm:$0x1]
      %v3690 = vld [vmem:[#allocation2 + $0x130] sm:$0xfe]
      %v3691 = vld [vmem:[#allocation2 + $0x138] sm:$0xfe]
      %v3692 = vld [vmem:[#allocation2 + $0x140] sm:$0x1]
      %v3693 = vld [vmem:[#allocation2 + $0x148] sm:$0x1]
      %v3694 = vld [vmem:[#allocation2 + $0x160] sm:$0xfe]
      %v3695 = vld [vmem:[#allocation2 + $0x168] sm:$0xfe]
      %v3696 = vld [vmem:[#allocation2 + $0x170] sm:$0x1]
      %v3697 = vld [vmem:[#allocation2 + $0x178] sm:$0x1]
      %v3698 = vld [vmem:[#allocation2 + $0x190] sm:$0xfe]
      %v3699 = vld [vmem:[#allocation2 + $0x198] sm:$0xfe]
      %v3700 = vld [vmem:[#allocation2 + $0x1a0] sm:$0x1]
      %v3701 = vld [vmem:[#allocation2 + $0x1a8] sm:$0x1]
      %v3702 = vld [vmem:[#allocation2 + $0x1c0] sm:$0xfe]
      %v3703 = vld [vmem:[#allocation2 + $0x1c8] sm:$0xfe]
      %v3704 = vld [vmem:[#allocation2 + $0x1d0] sm:$0x1]
      %v3705 = vld [vmem:[#allocation2 + $0x1d8] sm:$0x1]
      %v3706 = vperm.slane %v3109, 2
      %v3707 = vperm.slane %v3110, 2
      %v3708 = vmul.f32 %v3666, %v3706
      %v3709 = vmul.f32 %v3667, %v3707
      %v3710 = vmul.f32 %v3668, %v3706
      %v3711 = vmul.f32 %v3669, %v3707
      %v3712 = vmul.f32 %v3670, %v3706
      %v3713 = vmul.f32 %v3671, %v3707
      %v3714 = vmul.f32 %v3672, %v3706
      %v3715 = vmul.f32 %v3673, %v3707
      %v3716 = vmul.f32 %v3674, %v3706
      %v3717 = vmul.f32 %v3675, %v3707
      %v3718 = vmul.f32 %v3676, %v3706
      %v3719 = vmul.f32 %v3677, %v3707
      %v3720 = vmul.f32 %v3678, %v3706
      %v3721 = vmul.f32 %v3679, %v3707
      %v3722 = vmul.f32 %v3680, %v3706
      %v3723 = vmul.f32 %v3681, %v3707
      %v3724 = vmul.f32 %v3682, %v3706
      %v3725 = vmul.f32 %v3683, %v3707
      %v3726 = vmul.f32 %v3684, %v3706
      %v3727 = vmul.f32 %v3685, %v3707
      %v3728 = vmul.f32 %v3686, %v3706
      %v3729 = vmul.f32 %v3687, %v3707
      %v3730 = vmul.f32 %v3688, %v3706
      %v3731 = vmul.f32 %v3689, %v3707
      %v3732 = vmul.f32 %v3690, %v3706
      %v3733 = vmul.f32 %v3691, %v3707
      %v3734 = vmul.f32 %v3692, %v3706
      %v3735 = vmul.f32 %v3693, %v3707
      %v3736 = vmul.f32 %v3694, %v3706
      %v3737 = vmul.f32 %v3695, %v3707
      %v3738 = vmul.f32 %v3696, %v3706
      %v3739 = vmul.f32 %v3697, %v3707
      %vm3772 = vcmask 1045504
      %v3773 = vrot.slane %v3708, 2
      %v3774 = vrot.slane %v3709, 2
      %v3775 = vrot.slane %v3710, 2
      %v3776 = vsel %vm3772, %v3773, %v3775
      %v3777 = vrot.slane %v3711, 2
      %v3778 = vsel %vm3772, %v3774, %v3777
      %v3779 = vrot.slane %v3712, 2
      %v3780 = vrot.slane %v3713, 2
      %v3781 = vrot.slane %v3714, 2
      %v3782 = vsel %vm3772, %v3779, %v3781
      %v3783 = vrot.slane %v3715, 2
      %v3784 = vsel %vm3772, %v3780, %v3783
      %v3785 = vrot.slane %v3716, 2
      %v3786 = vrot.slane %v3717, 2
      %v3787 = vrot.slane %v3718, 2
      %v3788 = vsel %vm3772, %v3785, %v3787
      %v3789 = vrot.slane %v3719, 2
      %v3790 = vsel %vm3772, %v3786, %v3789
      %v3791 = vrot.slane %v3720, 2
      %v3792 = vrot.slane %v3721, 2
      %v3793 = vrot.slane %v3722, 2
      %v3794 = vsel %vm3772, %v3791, %v3793
      %v3795 = vrot.slane %v3723, 2
      %v3796 = vsel %vm3772, %v3792, %v3795
      %v3797 = vrot.slane %v3724, 2
      %v3798 = vrot.slane %v3725, 2
      %v3799 = vrot.slane %v3726, 2
      %v3800 = vsel %vm3772, %v3797, %v3799
      %v3801 = vrot.slane %v3727, 2
      %v3802 = vsel %vm3772, %v3798, %v3801
      %v3803 = vrot.slane %v3728, 2
      %v3804 = vrot.slane %v3729, 2
      %v3805 = vrot.slane %v3730, 2
      %v3806 = vsel %vm3772, %v3803, %v3805
      %v3807 = vrot.slane %v3731, 2
      %v3808 = vsel %vm3772, %v3804, %v3807
      %v3809 = vrot.slane %v3732, 2
      %v3810 = vrot.slane %v3733, 2
      %v3811 = vrot.slane %v3734, 2
      %v3812 = vsel %vm3772, %v3809, %v3811
      %v3813 = vrot.slane %v3735, 2
      %v3814 = vsel %vm3772, %v3810, %v3813
      %v3815 = vrot.slane %v3736, 2
      %v3816 = vrot.slane %v3737, 2
      %v3817 = vrot.slane %v3738, 2
      %v3818 = vsel %vm3772, %v3815, %v3817
      %v3819 = vrot.slane %v3739, 2
      %v3820 = vsel %vm3772, %v3816, %v3819
      %v3853 = vadd.f32 %v3634, %v3773
      %v3854 = vadd.f32 %v3635, %v3774
      %v3855 = vadd.f32 %v3636, %v3776
      %v3856 = vadd.f32 %v3637, %v3778
      %v3857 = vadd.f32 %v3638, %v3779
      %v3858 = vadd.f32 %v3639, %v3780
      %v3859 = vadd.f32 %v3640, %v3782
      %v3860 = vadd.f32 %v3641, %v3784
      %v3861 = vadd.f32 %v3642, %v3785
      %v3862 = vadd.f32 %v3643, %v3786
      %v3863 = vadd.f32 %v3644, %v3788
      %v3864 = vadd.f32 %v3645, %v3790
      %v3865 = vadd.f32 %v3646, %v3791
      %v3866 = vadd.f32 %v3647, %v3792
      %v3867 = vadd.f32 %v3648, %v3794
      %v3868 = vadd.f32 %v3649, %v3796
      %v3869 = vadd.f32 %v3650, %v3797
      %v3870 = vadd.f32 %v3651, %v3798
      %v3871 = vadd.f32 %v3652, %v3800
      %v3872 = vadd.f32 %v3653, %v3802
      %v3873 = vadd.f32 %v3654, %v3803
      %v3874 = vadd.f32 %v3655, %v3804
      %v3875 = vadd.f32 %v3656, %v3806
      %v3876 = vadd.f32 %v3657, %v3808
      %v3877 = vadd.f32 %v3658, %v3809
      %v3878 = vadd.f32 %v3659, %v3810
      %v3879 = vadd.f32 %v3660, %v3812
      %v3880 = vadd.f32 %v3661, %v3814
      %v3881 = vadd.f32 %v3662, %v3815
      %v3882 = vadd.f32 %v3663, %v3816
      %v3883 = vadd.f32 %v3664, %v3818
      %v3884 = vadd.f32 %v3665, %v3820
      %v3885 = vperm.slane %v3109, 5
      %v3886 = vperm.slane %v3110, 5
      %v3887 = vmul.f32 %v3670, %v3885
      %v3888 = vmul.f32 %v3671, %v3886
      %v3889 = vmul.f32 %v3672, %v3885
      %v3890 = vmul.f32 %v3673, %v3886
      %v3891 = vmul.f32 %v3674, %v3885
      %v3892 = vmul.f32 %v3675, %v3886
      %v3893 = vmul.f32 %v3676, %v3885
      %v3894 = vmul.f32 %v3677, %v3886
      %v3895 = vmul.f32 %v3678, %v3885
      %v3896 = vmul.f32 %v3679, %v3886
      %v3897 = vmul.f32 %v3680, %v3885
      %v3898 = vmul.f32 %v3681, %v3886
      %v3899 = vmul.f32 %v3682, %v3885
      %v3900 = vmul.f32 %v3683, %v3886
      %v3901 = vmul.f32 %v3684, %v3885
      %v3902 = vmul.f32 %v3685, %v3886
      %v3903 = vmul.f32 %v3686, %v3885
      %v3904 = vmul.f32 %v3687, %v3886
      %v3905 = vmul.f32 %v3688, %v3885
      %v3906 = vmul.f32 %v3689, %v3886
      %v3907 = vmul.f32 %v3690, %v3885
      %v3908 = vmul.f32 %v3691, %v3886
      %v3909 = vmul.f32 %v3692, %v3885
      %v3910 = vmul.f32 %v3693, %v3886
      %v3911 = vmul.f32 %v3694, %v3885
      %v3912 = vmul.f32 %v3695, %v3886
      %v3913 = vmul.f32 %v3696, %v3885
      %v3914 = vmul.f32 %v3697, %v3886
      %v3915 = vmul.f32 %v3698, %v3885
      %v3916 = vmul.f32 %v3699, %v3886
      %v3917 = vmul.f32 %v3700, %v3885
      %v3918 = vmul.f32 %v3701, %v3886
      %v3951 = vrot.slane %v3887, 2
      %v3952 = vrot.slane %v3888, 2
      %v3953 = vrot.slane %v3889, 2
      %v3954 = vsel %vm3772, %v3951, %v3953
      %v3955 = vrot.slane %v3890, 2
      %v3956 = vsel %vm3772, %v3952, %v3955
      %v3957 = vrot.slane %v3891, 2
      %v3958 = vrot.slane %v3892, 2
      %v3959 = vrot.slane %v3893, 2
      %v3960 = vsel %vm3772, %v3957, %v3959
      %v3961 = vrot.slane %v3894, 2
      %v3962 = vsel %vm3772, %v3958, %v3961
      %v3963 = vrot.slane %v3895, 2
      %v3964 = vrot.slane %v3896, 2
      %v3965 = vrot.slane %v3897, 2
      %v3966 = vsel %vm3772, %v3963, %v3965
      %v3967 = vrot.slane %v3898, 2
      %v3968 = vsel %vm3772, %v3964, %v3967
      %v3969 = vrot.slane %v3899, 2
      %v3970 = vrot.slane %v3900, 2
      %v3971 = vrot.slane %v3901, 2
      %v3972 = vsel %vm3772, %v3969, %v3971
      %v3973 = vrot.slane %v3902, 2
      %v3974 = vsel %vm3772, %v3970, %v3973
      %v3975 = vrot.slane %v3903, 2
      %v3976 = vrot.slane %v3904, 2
      %v3977 = vrot.slane %v3905, 2
      %v3978 = vsel %vm3772, %v3975, %v3977
      %v3979 = vrot.slane %v3906, 2
      %v3980 = vsel %vm3772, %v3976, %v3979
      %v3981 = vrot.slane %v3907, 2
      %v3982 = vrot.slane %v3908, 2
      %v3983 = vrot.slane %v3909, 2
      %v3984 = vsel %vm3772, %v3981, %v3983
      %v3985 = vrot.slane %v3910, 2
      %v3986 = vsel %vm3772, %v3982, %v3985
      %v3987 = vrot.slane %v3911, 2
      %v3988 = vrot.slane %v3912, 2
      %v3989 = vrot.slane %v3913, 2
      %v3990 = vsel %vm3772, %v3987, %v3989
      %v3991 = vrot.slane %v3914, 2
      %v3992 = vsel %vm3772, %v3988, %v3991
      %v3993 = vrot.slane %v3915, 2
      %v3994 = vrot.slane %v3916, 2
      %v3995 = vrot.slane %v3917, 2
      %v3996 = vsel %vm3772, %v3993, %v3995
      %v3997 = vrot.slane %v3918, 2
      %v3998 = vsel %vm3772, %v3994, %v3997
      %v4031 = vadd.f32 %v3853, %v3951
      %v4032 = vadd.f32 %v3854, %v3952
      %v4033 = vadd.f32 %v3855, %v3954
      %v4034 = vadd.f32 %v3856, %v3956
      %v4035 = vadd.f32 %v3857, %v3957
      %v4036 = vadd.f32 %v3858, %v3958
      %v4037 = vadd.f32 %v3859, %v3960
      %v4038 = vadd.f32 %v3860, %v3962
      %v4039 = vadd.f32 %v3861, %v3963
      %v4040 = vadd.f32 %v3862, %v3964
      %v4041 = vadd.f32 %v3863, %v3966
      %v4042 = vadd.f32 %v3864, %v3968
      %v4043 = vadd.f32 %v3865, %v3969
      %v4044 = vadd.f32 %v3866, %v3970
      %v4045 = vadd.f32 %v3867, %v3972
      %v4046 = vadd.f32 %v3868, %v3974
      %v4047 = vadd.f32 %v3869, %v3975
      %v4048 = vadd.f32 %v3870, %v3976
      %v4049 = vadd.f32 %v3871, %v3978
      %v4050 = vadd.f32 %v3872, %v3980
      %v4051 = vadd.f32 %v3873, %v3981
      %v4052 = vadd.f32 %v3874, %v3982
      %v4053 = vadd.f32 %v3875, %v3984
      %v4054 = vadd.f32 %v3876, %v3986
      %v4055 = vadd.f32 %v3877, %v3987
      %v4056 = vadd.f32 %v3878, %v3988
      %v4057 = vadd.f32 %v3879, %v3990
      %v4058 = vadd.f32 %v3880, %v3992
      %v4059 = vadd.f32 %v3881, %v3993
      %v4060 = vadd.f32 %v3882, %v3994
      %v4061 = vadd.f32 %v3883, %v3996
      %v4062 = vadd.f32 %v3884, %v3998
      %v4063 = vperm.slane %v3111, 0
      %v4064 = vperm.slane %v3112, 0
      %v4065 = vmul.f32 %v3674, %v4063
      %v4066 = vmul.f32 %v3675, %v4064
      %v4067 = vmul.f32 %v3676, %v4063
      %v4068 = vmul.f32 %v3677, %v4064
      %v4069 = vmul.f32 %v3678, %v4063
      %v4070 = vmul.f32 %v3679, %v4064
      %v4071 = vmul.f32 %v3680, %v4063
      %v4072 = vmul.f32 %v3681, %v4064
      %v4073 = vmul.f32 %v3682, %v4063
      %v4074 = vmul.f32 %v3683, %v4064
      %v4075 = vmul.f32 %v3684, %v4063
      %v4076 = vmul.f32 %v3685, %v4064
      %v4077 = vmul.f32 %v3686, %v4063
      %v4078 = vmul.f32 %v3687, %v4064
      %v4079 = vmul.f32 %v3688, %v4063
      %v4080 = vmul.f32 %v3689, %v4064
      %v4081 = vmul.f32 %v3690, %v4063
      %v4082 = vmul.f32 %v3691, %v4064
      %v4083 = vmul.f32 %v3692, %v4063
      %v4084 = vmul.f32 %v3693, %v4064
      %v4085 = vmul.f32 %v3694, %v4063
      %v4086 = vmul.f32 %v3695, %v4064
      %v4087 = vmul.f32 %v3696, %v4063
      %v4088 = vmul.f32 %v3697, %v4064
      %v4089 = vmul.f32 %v3698, %v4063
      %v4090 = vmul.f32 %v3699, %v4064
      %v4091 = vmul.f32 %v3700, %v4063
      %v4092 = vmul.f32 %v3701, %v4064
      %v4093 = vmul.f32 %v3702, %v4063
      %v4094 = vmul.f32 %v3703, %v4064
      %v4095 = vmul.f32 %v3704, %v4063
      %v4096 = vmul.f32 %v3705, %v4064
      %v4129 = vrot.slane %v4065, 2
      %v4130 = vrot.slane %v4066, 2
      %v4131 = vrot.slane %v4067, 2
      %v4132 = vsel %vm3772, %v4129, %v4131
      %v4133 = vrot.slane %v4068, 2
      %v4134 = vsel %vm3772, %v4130, %v4133
      %v4135 = vrot.slane %v4069, 2
      %v4136 = vrot.slane %v4070, 2
      %v4137 = vrot.slane %v4071, 2
      %v4138 = vsel %vm3772, %v4135, %v4137
      %v4139 = vrot.slane %v4072, 2
      %v4140 = vsel %vm3772, %v4136, %v4139
      %v4141 = vrot.slane %v4073, 2
      %v4142 = vrot.slane %v4074, 2
      %v4143 = vrot.slane %v4075, 2
      %v4144 = vsel %vm3772, %v4141, %v4143
      %v4145 = vrot.slane %v4076, 2
      %v4146 = vsel %vm3772, %v4142, %v4145
      %v4147 = vrot.slane %v4077, 2
      %v4148 = vrot.slane %v4078, 2
      %v4149 = vrot.slane %v4079, 2
      %v4150 = vsel %vm3772, %v4147, %v4149
      %v4151 = vrot.slane %v4080, 2
      %v4152 = vsel %vm3772, %v4148, %v4151
      %v4153 = vrot.slane %v4081, 2
      %v4154 = vrot.slane %v4082, 2
      %v4155 = vrot.slane %v4083, 2
      %v4156 = vsel %vm3772, %v4153, %v4155
      %v4157 = vrot.slane %v4084, 2
      %v4158 = vsel %vm3772, %v4154, %v4157
      %v4159 = vrot.slane %v4085, 2
      %v4160 = vrot.slane %v4086, 2
      %v4161 = vrot.slane %v4087, 2
      %v4162 = vsel %vm3772, %v4159, %v4161
      %v4163 = vrot.slane %v4088, 2
      %v4164 = vsel %vm3772, %v4160, %v4163
      %v4165 = vrot.slane %v4089, 2
      %v4166 = vrot.slane %v4090, 2
      %v4167 = vrot.slane %v4091, 2
      %v4168 = vsel %vm3772, %v4165, %v4167
      %v4169 = vrot.slane %v4092, 2
      %v4170 = vsel %vm3772, %v4166, %v4169
      %v4171 = vrot.slane %v4093, 2
      %v4172 = vrot.slane %v4094, 2
      %v4173 = vrot.slane %v4095, 2
      %v4174 = vsel %vm3772, %v4171, %v4173
      %v4175 = vrot.slane %v4096, 2
      %v4176 = vsel %vm3772, %v4172, %v4175
      %v4209 = vadd.f32 %v4031, %v4129
      %v4210 = vadd.f32 %v4032, %v4130
      %v4211 = vadd.f32 %v4033, %v4132
      %v4212 = vadd.f32 %v4034, %v4134
      %v4213 = vadd.f32 %v4035, %v4135
      %v4214 = vadd.f32 %v4036, %v4136
      %v4215 = vadd.f32 %v4037, %v4138
      %v4216 = vadd.f32 %v4038, %v4140
      %v4217 = vadd.f32 %v4039, %v4141
      %v4218 = vadd.f32 %v4040, %v4142
      %v4219 = vadd.f32 %v4041, %v4144
      %v4220 = vadd.f32 %v4042, %v4146
      %v4221 = vadd.f32 %v4043, %v4147
      %v4222 = vadd.f32 %v4044, %v4148
      %v4223 = vadd.f32 %v4045, %v4150
      %v4224 = vadd.f32 %v4046, %v4152
      %v4225 = vadd.f32 %v4047, %v4153
      %v4226 = vadd.f32 %v4048, %v4154
      %v4227 = vadd.f32 %v4049, %v4156
      %v4228 = vadd.f32 %v4050, %v4158
      %v4229 = vadd.f32 %v4051, %v4159
      %v4230 = vadd.f32 %v4052, %v4160
      %v4231 = vadd.f32 %v4053, %v4162
      %v4232 = vadd.f32 %v4054, %v4164
      %v4233 = vadd.f32 %v4055, %v4165
      %v4234 = vadd.f32 %v4056, %v4166
      %v4235 = vadd.f32 %v4057, %v4168
      %v4236 = vadd.f32 %v4058, %v4170
      %v4237 = vadd.f32 %v4059, %v4171
      %v4238 = vadd.f32 %v4060, %v4172
      %v4239 = vadd.f32 %v4061, %v4174
      %v4240 = vadd.f32 %v4062, %v4176
      %v4242 = vperm.slane %v3113, 0
      %v4243 = vperm.slane %v3113, 1
      %v4246 = vadd.f32 %v4209, %v4242
      %v4247 = vadd.f32 %v4210, %v4243
      %v4248 = vadd.f32 %v4211, %v4242
      %v4249 = vadd.f32 %v4212, %v4243
      %v4250 = vadd.f32 %v4213, %v4242
      %v4251 = vadd.f32 %v4214, %v4243
      %v4252 = vadd.f32 %v4215, %v4242
      %v4253 = vadd.f32 %v4216, %v4243
      %v4254 = vadd.f32 %v4217, %v4242
      %v4255 = vadd.f32 %v4218, %v4243
      %v4256 = vadd.f32 %v4219, %v4242
      %v4257 = vadd.f32 %v4220, %v4243
      %v4258 = vadd.f32 %v4221, %v4242
      %v4259 = vadd.f32 %v4222, %v4243
      %v4260 = vadd.f32 %v4223, %v4242
      %v4261 = vadd.f32 %v4224, %v4243
      %v4262 = vadd.f32 %v4225, %v4242
      %v4263 = vadd.f32 %v4226, %v4243
      %v4264 = vadd.f32 %v4227, %v4242
      %v4265 = vadd.f32 %v4228, %v4243
      %v4266 = vadd.f32 %v4229, %v4242
      %v4267 = vadd.f32 %v4230, %v4243
      %v4268 = vadd.f32 %v4231, %v4242
      %v4269 = vadd.f32 %v4232, %v4243
      %v4270 = vadd.f32 %v4233, %v4242
      %v4271 = vadd.f32 %v4234, %v4243
      %v4272 = vadd.f32 %v4235, %v4242
      %v4273 = vadd.f32 %v4236, %v4243
      %v4274 = vadd.f32 %v4237, %v4242
      %v4275 = vadd.f32 %v4238, %v4243
      %v4276 = vadd.f32 %v4239, %v4242
      %v4277 = vadd.f32 %v4240, %v4243
      %v4278 = vmax.f32 %v4246, 0.0
      %v4279 = vmax.f32 %v4247, 0.0
      %v4280 = vmax.f32 %v4248, 0.0
      %v4281 = vmax.f32 %v4249, 0.0
      %v4282 = vmax.f32 %v4250, 0.0
      %v4283 = vmax.f32 %v4251, 0.0
      %v4284 = vmax.f32 %v4252, 0.0
      %v4285 = vmax.f32 %v4253, 0.0
      %v4286 = vmax.f32 %v4254, 0.0
      %v4287 = vmax.f32 %v4255, 0.0
      %v4288 = vmax.f32 %v4256, 0.0
      %v4289 = vmax.f32 %v4257, 0.0
      %v4290 = vmax.f32 %v4258, 0.0
      %v4291 = vmax.f32 %v4259, 0.0
      %v4292 = vmax.f32 %v4260, 0.0
      %v4293 = vmax.f32 %v4261, 0.0
      %v4294 = vmax.f32 %v4262, 0.0
      %v4295 = vmax.f32 %v4263, 0.0
      %v4296 = vmax.f32 %v4264, 0.0
      %v4297 = vmax.f32 %v4265, 0.0
      %v4298 = vmax.f32 %v4266, 0.0
      %v4299 = vmax.f32 %v4267, 0.0
      %v4300 = vmax.f32 %v4268, 0.0
      %v4301 = vmax.f32 %v4269, 0.0
      %v4302 = vmax.f32 %v4270, 0.0
      %v4303 = vmax.f32 %v4271, 0.0
      %v4304 = vmax.f32 %v4272, 0.0
      %v4305 = vmax.f32 %v4273, 0.0
      %v4306 = vmax.f32 %v4274, 0.0
      %v4307 = vmax.f32 %v4275, 0.0
      %v4308 = vmax.f32 %v4276, 0.0
      %v4309 = vmax.f32 %v4277, 0.0
      %v4342 = vrot.slane %v4278, 7
      %v4343 = vrot.slane %v4280, 7
      %v4344 = vsel %vm779, %v4342, %v4343
      %v4345 = vrot.slane %v4279, 7
      %v4346 = vrot.slane %v4281, 7
      %v4347 = vsel %vm779, %v4345, %v4346
      %v4348 = vrot.slane %v4282, 7
      %v4349 = vrot.slane %v4284, 7
      %v4350 = vsel %vm779, %v4348, %v4349
      %v4351 = vrot.slane %v4283, 7
      %v4352 = vrot.slane %v4285, 7
      %v4353 = vsel %vm779, %v4351, %v4352
      %v4354 = vrot.slane %v4286, 7
      %v4355 = vrot.slane %v4288, 7
      %v4356 = vsel %vm779, %v4354, %v4355
      %v4357 = vrot.slane %v4287, 7
      %v4358 = vrot.slane %v4289, 7
      %v4359 = vsel %vm779, %v4357, %v4358
      %v4360 = vrot.slane %v4290, 7
      %v4361 = vrot.slane %v4292, 7
      %v4362 = vsel %vm779, %v4360, %v4361
      %v4363 = vrot.slane %v4291, 7
      %v4364 = vrot.slane %v4293, 7
      %v4365 = vsel %vm779, %v4363, %v4364
      %v4366 = vrot.slane %v4294, 7
      %v4367 = vrot.slane %v4296, 7
      %v4368 = vsel %vm779, %v4366, %v4367
      %v4369 = vrot.slane %v4295, 7
      %v4370 = vrot.slane %v4297, 7
      %v4371 = vsel %vm779, %v4369, %v4370
      %v4372 = vrot.slane %v4298, 7
      %v4373 = vrot.slane %v4300, 7
      %v4374 = vsel %vm779, %v4372, %v4373
      %v4375 = vrot.slane %v4299, 7
      %v4376 = vrot.slane %v4301, 7
      %v4377 = vsel %vm779, %v4375, %v4376
      %v4378 = vrot.slane %v4302, 7
      %v4379 = vrot.slane %v4304, 7
      %v4380 = vsel %vm779, %v4378, %v4379
      %v4381 = vrot.slane %v4303, 7
      %v4382 = vrot.slane %v4305, 7
      %v4383 = vsel %vm779, %v4381, %v4382
      %v4384 = vrot.slane %v4306, 7
      %v4385 = vrot.slane %v4308, 7
      %v4386 = vsel %vm779, %v4384, %v4385
      %v4387 = vrot.slane %v4307, 7
      %v4388 = vrot.slane %v4309, 7
      %v4389 = vsel %vm779, %v4387, %v4388
      %v4406 = vld [vmem:[%s6] sm:$0xff]
      %v4407 = vld [vmem:[%s6 + $0x8] sm:$0x1]
      %v4408 = vld [vmem:[%s7] sm:$0x1]
      %v4409 = vld [vmem:[#allocation3 + $0x7] sm:$0xff]
      %v4410 = vld [vmem:[#allocation3 + $0x1f] sm:$0xff]
      %v4411 = vld [vmem:[#allocation3 + $0x37] sm:$0xff]
      %v4412 = vld [vmem:[#allocation3 + $0x4f] sm:$0xff]
      %v4413 = vld [vmem:[#allocation3 + $0x67] sm:$0xff]
      %v4414 = vld [vmem:[#allocation3 + $0x7f] sm:$0xff]
      %v4415 = vld [vmem:[#allocation3 + $0x97] sm:$0xff]
      %v4416 = vld [vmem:[#allocation3 + $0xaf] sm:$0xff]
      %v4417 = vld [vmem:[#allocation3 + $0xc7] sm:$0xff]
      %v4418 = vld [vmem:[#allocation3 + $0xdf] sm:$0xff]
      %v4419 = vperm.slane %v4406, 0
      %v4420 = vmul.f32 %v4409, %v4419
      %v4421 = vmul.f32 %v4410, %v4419
      %v4422 = vmul.f32 %v4411, %v4419
      %v4423 = vmul.f32 %v4412, %v4419
      %v4424 = vmul.f32 %v4413, %v4419
      %v4425 = vmul.f32 %v4414, %v4419
      %v4426 = vmul.f32 %v4415, %v4419
      %v4427 = vmul.f32 %v4416, %v4419
      %v4428 = vadd.f32 %v4420, 0.0
      %v4429 = vadd.f32 %v4421, 0.0
      %v4430 = vadd.f32 %v4422, 0.0
      %v4431 = vadd.f32 %v4423, 0.0
      %v4432 = vadd.f32 %v4424, 0.0
      %v4433 = vadd.f32 %v4425, 0.0
      %v4434 = vadd.f32 %v4426, 0.0
      %v4435 = vadd.f32 %v4427, 0.0
      %v4436 = vperm.slane %v4406, 3
      %v4437 = vmul.f32 %v4410, %v4436
      %v4438 = vmul.f32 %v4411, %v4436
      %v4439 = vmul.f32 %v4412, %v4436
      %v4440 = vmul.f32 %v4413, %v4436
      %v4441 = vmul.f32 %v4414, %v4436
      %v4442 = vmul.f32 %v4415, %v4436
      %v4443 = vmul.f32 %v4416, %v4436
      %v4444 = vmul.f32 %v4417, %v4436
      %v4445 = vadd.f32 %v4428, %v4437
      %v4446 = vadd.f32 %v4429, %v4438
      %v4447 = vadd.f32 %v4430, %v4439
      %v4448 = vadd.f32 %v4431, %v4440
      %v4449 = vadd.f32 %v4432, %v4441
      %v4450 = vadd.f32 %v4433, %v4442
      %v4451 = vadd.f32 %v4434, %v4443
      %v4452 = vadd.f32 %v4435, %v4444
      %v4453 = vperm.slane %v4406, 6
      %v4454 = vmul.f32 %v4411, %v4453
      %v4455 = vmul.f32 %v4412, %v4453
      %v4456 = vmul.f32 %v4413, %v4453
      %v4457 = vmul.f32 %v4414, %v4453
      %v4458 = vmul.f32 %v4415, %v4453
      %v4459 = vmul.f32 %v4416, %v4453
      %v4460 = vmul.f32 %v4417, %v4453
      %v4461 = vmul.f32 %v4418, %v4453
      %v4462 = vadd.f32 %v4445, %v4454
      %v4463 = vadd.f32 %v4446, %v4455
      %v4464 = vadd.f32 %v4447, %v4456
      %v4465 = vadd.f32 %v4448, %v4457
      %v4466 = vadd.f32 %v4449, %v4458
      %v4467 = vadd.f32 %v4450, %v4459
      %v4468 = vadd.f32 %v4451, %v4460
      %v4469 = vadd.f32 %v4452, %v4461
      %v4470 = vld [vmem:[#allocation3 + $0x8] sm:$0xff]
      %v4471 = vld [vmem:[#allocation3 + $0x20] sm:$0xff]
      %v4472 = vld [vmem:[#allocation3 + $0x38] sm:$0xff]
      %v4473 = vld [vmem:[#allocation3 + $0x50] sm:$0xff]
      %v4474 = vld [vmem:[#allocation3 + $0x68] sm:$0xff]
      %v4475 = vld [vmem:[#allocation3 + $0x80] sm:$0xff]
      %v4476 = vld [vmem:[#allocation3 + $0x98] sm:$0xff]
      %v4477 = vld [vmem:[#allocation3 + $0xb0] sm:$0xff]
      %v4478 = vld [vmem:[#allocation3 + $0xc8] sm:$0xff]
      %v4479 = vld [vmem:[#allocation3 + $0xe0] sm:$0xff]
      %v4480 = vperm.slane %v4406, 1
      %v4481 = vmul.f32 %v4470, %v4480
      %v4482 = vmul.f32 %v4471, %v4480
      %v4483 = vmul.f32 %v4472, %v4480
      %v4484 = vmul.f32 %v4473, %v4480
      %v4485 = vmul.f32 %v4474, %v4480
      %v4486 = vmul.f32 %v4475, %v4480
      %v4487 = vmul.f32 %v4476, %v4480
      %v4488 = vmul.f32 %v4477, %v4480
      %v4489 = vadd.f32 %v4462, %v4481
      %v4490 = vadd.f32 %v4463, %v4482
      %v4491 = vadd.f32 %v4464, %v4483
      %v4492 = vadd.f32 %v4465, %v4484
      %v4493 = vadd.f32 %v4466, %v4485
      %v4494 = vadd.f32 %v4467, %v4486
      %v4495 = vadd.f32 %v4468, %v4487
      %v4496 = vadd.f32 %v4469, %v4488
      %v4497 = vperm.slane %v4406, 4
      %v4498 = vmul.f32 %v4471, %v4497
      %v4499 = vmul.f32 %v4472, %v4497
      %v4500 = vmul.f32 %v4473, %v4497
      %v4501 = vmul.f32 %v4474, %v4497
      %v4502 = vmul.f32 %v4475, %v4497
      %v4503 = vmul.f32 %v4476, %v4497
      %v4504 = vmul.f32 %v4477, %v4497
      %v4505 = vmul.f32 %v4478, %v4497
      %v4506 = vadd.f32 %v4489, %v4498
      %v4507 = vadd.f32 %v4490, %v4499
      %v4508 = vadd.f32 %v4491, %v4500
      %v4509 = vadd.f32 %v4492, %v4501
      %v4510 = vadd.f32 %v4493, %v4502
      %v4511 = vadd.f32 %v4494, %v4503
      %v4512 = vadd.f32 %v4495, %v4504
      %v4513 = vadd.f32 %v4496, %v4505
      %v4514 = vperm.slane %v4406, 7
      %v4515 = vmul.f32 %v4472, %v4514
      %v4516 = vmul.f32 %v4473, %v4514
      %v4517 = vmul.f32 %v4474, %v4514
      %v4518 = vmul.f32 %v4475, %v4514
      %v4519 = vmul.f32 %v4476, %v4514
      %v4520 = vmul.f32 %v4477, %v4514
      %v4521 = vmul.f32 %v4478, %v4514
      %v4522 = vmul.f32 %v4479, %v4514
      %v4523 = vadd.f32 %v4506, %v4515
      %v4524 = vadd.f32 %v4507, %v4516
      %v4525 = vadd.f32 %v4508, %v4517
      %v4526 = vadd.f32 %v4509, %v4518
      %v4527 = vadd.f32 %v4510, %v4519
      %v4528 = vadd.f32 %v4511, %v4520
      %v4529 = vadd.f32 %v4512, %v4521
      %v4530 = vadd.f32 %v4513, %v4522
      %v4531 = vld [vmem:[#allocation3 + $0x9] sm:$0xff]
      %v4532 = vld [vmem:[#allocation3 + $0x21] sm:$0xff]
      %v4533 = vld [vmem:[#allocation3 + $0x39] sm:$0xff]
      %v4534 = vld [vmem:[#allocation3 + $0x51] sm:$0xff]
      %v4535 = vld [vmem:[#allocation3 + $0x69] sm:$0xff]
      %v4536 = vld [vmem:[#allocation3 + $0x81] sm:$0xff]
      %v4537 = vld [vmem:[#allocation3 + $0x99] sm:$0xff]
      %v4538 = vld [vmem:[#allocation3 + $0xb1] sm:$0xff]
      %v4539 = vld [vmem:[#allocation3 + $0xc9] sm:$0xff]
      %v4540 = vld [vmem:[#allocation3 + $0xe1] sm:$0xff]
      %v4541 = vperm.slane %v4406, 2
      %v4542 = vmul.f32 %v4531, %v4541
      %v4543 = vmul.f32 %v4532, %v4541
      %v4544 = vmul.f32 %v4533, %v4541
      %v4545 = vmul.f32 %v4534, %v4541
      %v4546 = vmul.f32 %v4535, %v4541
      %v4547 = vmul.f32 %v4536, %v4541
      %v4548 = vmul.f32 %v4537, %v4541
      %v4549 = vmul.f32 %v4538, %v4541
      %v4550 = vadd.f32 %v4523, %v4542
      %v4551 = vadd.f32 %v4524, %v4543
      %v4552 = vadd.f32 %v4525, %v4544
      %v4553 = vadd.f32 %v4526, %v4545
      %v4554 = vadd.f32 %v4527, %v4546
      %v4555 = vadd.f32 %v4528, %v4547
      %v4556 = vadd.f32 %v4529, %v4548
      %v4557 = vadd.f32 %v4530, %v4549
      %v4558 = vperm.slane %v4406, 5
      %v4559 = vmul.f32 %v4532, %v4558
      %v4560 = vmul.f32 %v4533, %v4558
      %v4561 = vmul.f32 %v4534, %v4558
      %v4562 = vmul.f32 %v4535, %v4558
      %v4563 = vmul.f32 %v4536, %v4558
      %v4564 = vmul.f32 %v4537, %v4558
      %v4565 = vmul.f32 %v4538, %v4558
      %v4566 = vmul.f32 %v4539, %v4558
      %v4567 = vadd.f32 %v4550, %v4559
      %v4568 = vadd.f32 %v4551, %v4560
      %v4569 = vadd.f32 %v4552, %v4561
      %v4570 = vadd.f32 %v4553, %v4562
      %v4571 = vadd.f32 %v4554, %v4563
      %v4572 = vadd.f32 %v4555, %v4564
      %v4573 = vadd.f32 %v4556, %v4565
      %v4574 = vadd.f32 %v4557, %v4566
      %v4575 = vperm.slane %v4407, 0
      %v4576 = vmul.f32 %v4533, %v4575
      %v4577 = vmul.f32 %v4534, %v4575
      %v4578 = vmul.f32 %v4535, %v4575
      %v4579 = vmul.f32 %v4536, %v4575
      %v4580 = vmul.f32 %v4537, %v4575
      %v4581 = vmul.f32 %v4538, %v4575
      %v4582 = vmul.f32 %v4539, %v4575
      %v4583 = vmul.f32 %v4540, %v4575
      %v4584 = vadd.f32 %v4567, %v4576
      %v4585 = vadd.f32 %v4568, %v4577
      %v4586 = vadd.f32 %v4569, %v4578
      %v4587 = vadd.f32 %v4570, %v4579
      %v4588 = vadd.f32 %v4571, %v4580
      %v4589 = vadd.f32 %v4572, %v4581
      %v4590 = vadd.f32 %v4573, %v4582
      %v4591 = vadd.f32 %v4574, %v4583
      %v4593 = vperm.slane %v4408, 0
      %v4595 = vadd.f32 %v4584, %v4593
      %v4596 = vadd.f32 %v4585, %v4593
      %v4597 = vadd.f32 %v4586, %v4593
      %v4598 = vadd.f32 %v4587, %v4593
      %v4599 = vadd.f32 %v4588, %v4593
      %v4600 = vadd.f32 %v4589, %v4593
      %v4601 = vadd.f32 %v4590, %v4593
      %v4602 = vadd.f32 %v4591, %v4593
      %v4603 = vmax.f32 %v4595, 0.0
      %v4604 = vmax.f32 %v4596, 0.0
      %v4605 = vmax.f32 %v4597, 0.0
      %v4606 = vmax.f32 %v4598, 0.0
      %v4607 = vmax.f32 %v4599, 0.0
      %v4608 = vmax.f32 %v4600, 0.0
      %v4609 = vmax.f32 %v4601, 0.0
      %v4610 = vmax.f32 %v4602, 0.0
      %v4611 = vpack.c.bf16 %v4350, %v4344
      %v4612 = vpack.c.bf16 %v4353, %v4347
      %v4613 = vpack.c.bf16 %v4604, %v4603
      %v4614 = vpack.c.bf16 %v4362, %v4356
      %v4615 = vpack.c.bf16 %v4365, %v4359
      %v4616 = vpack.c.bf16 %v4606, %v4605
      %v4617 = vpack.c.bf16 %v4374, %v4368
      %v4618 = vpack.c.bf16 %v4377, %v4371
      %v4619 = vpack.c.bf16 %v4608, %v4607
      %v4620 = vpack.c.bf16 %v4386, %v4380
      %v4621 = vpack.c.bf16 %v4389, %v4383
      %v4622 = vpack.c.bf16 %v4610, %v4609
      %v4623 = vld [vmem:[%s8] sm:$0xff]
      %v4624 = vld [vmem:[%s8 + $0x8] sm:$0xff]
      %v4625 = vld [vmem:[%s8 + $0x10] sm:$0xff]
      %v4626 = vld [vmem:[%s8 + $0x18] sm:$0xff]
      %v4627 = vld [vmem:[%s8 + $0x20] sm:$0xff]
      %v4628 = vld [vmem:[%s8 + $0x28] sm:$0xff]
      %v4629 = vld [vmem:[%s8 + $0x30] sm:$0xff]
      %v4630 = vld [vmem:[%s8 + $0x38] sm:$0xff]
      %v4631 = vld [vmem:[%s8 + $0x40] sm:$0xff]
      %v4632 = vld [vmem:[%s8 + $0x48] sm:$0xff]
      %v4633 = vld [vmem:[%s8 + $0x50] sm:$0xff]
      %v4634 = vld [vmem:[%s8 + $0x58] sm:$0xff]
      %v4635 = vld [vmem:[%s8 + $0x60] sm:$0xff]
      %v4636 = vld [vmem:[%s8 + $0x68] sm:$0xff]
      %v4637 = vld [vmem:[%s8 + $0x70] sm:$0xff]
      %v4638 = vld [vmem:[%s8 + $0x78] sm:$0xff]
      %v4639 = vld [vmem:[%s8 + $0x80] sm:$0xff]
      %v4640 = vld [vmem:[%s8 + $0x88] sm:$0xff]
      %v4641 = vld [vmem:[%s8 + $0x90] sm:$0xff]
      %v4642 = vld [vmem:[%s8 + $0x98] sm:$0xff]
      %v4643 = vld [vmem:[%s8 + $0xa0] sm:$0xff]
      %v4644 = vld [vmem:[%s8 + $0xa8] sm:$0xff]
      %v4645 = vld [vmem:[%s8 + $0xb0] sm:$0xff]
      %v4646 = vld [vmem:[%s8 + $0xb8] sm:$0xff]
      %v4647 = vld [vmem:[%s8 + $0xc0] sm:$0xff]
      %v4648 = vld [vmem:[%s8 + $0xc8] sm:$0xff]
      %v4649 = vld [vmem:[%s8 + $0xd0] sm:$0xff]
      %v4650 = vld [vmem:[%s8 + $0xd8] sm:$0xff]
      %v4651 = vld [vmem:[%s8 + $0xe0] sm:$0xff]
      %v4652 = vld [vmem:[%s8 + $0xe8] sm:$0xff]
      %v4653 = vld [vmem:[%s8 + $0xf0] sm:$0xff]
      %v4654 = vld [vmem:[%s8 + $0xf8] sm:$0xff]
      %v4655 = vld [vmem:[%s8 + $0x100] sm:$0xff]
      %v4656 = vld [vmem:[%s8 + $0x108] sm:$0xff]
      %v4657 = vld [vmem:[%s8 + $0x110] sm:$0xff]
      %v4658 = vld [vmem:[%s8 + $0x118] sm:$0xff]
      %v4659 = vld [vmem:[%s8 + $0x120] sm:$0xff]
      %v4660 = vld [vmem:[%s8 + $0x128] sm:$0xff]
      %v4661 = vld [vmem:[%s9] sm:$0x3]
      %v4663 = vperm.slane %v4661, 0
      %v4664 = vperm.slane %v4661, 1
      %v4705 = vunpack.c.l.b16 %v4623
      %v4706 = vunpack.c.h.b16 %v4623
      %v4707 = vunpack.c.l.b16 %v4624
      %v4708 = vunpack.c.h.b16 %v4624
      %v4709 = vunpack.c.l.b16 %v4625
      %v4710 = vunpack.c.h.b16 %v4625
      %v4711 = vunpack.c.l.b16 %v4626
      %v4712 = vunpack.c.h.b16 %v4626
      %v4713 = vunpack.c.l.b16 %v4627
      %v4714 = vunpack.c.h.b16 %v4627
      %v4715 = vunpack.c.l.b16 %v4628
      %v4716 = vunpack.c.h.b16 %v4628
      %v4717 = vunpack.c.l.b16 %v4629
      %v4718 = vunpack.c.h.b16 %v4629
      %v4719 = vunpack.c.l.b16 %v4630
      %v4720 = vunpack.c.h.b16 %v4630
      %v4721 = vunpack.c.l.b16 %v4631
      %v4722 = vunpack.c.h.b16 %v4631
      %v4723 = vunpack.c.l.b16 %v4632
      %v4724 = vunpack.c.h.b16 %v4632
      %v4725 = vunpack.c.l.b16 %v4633
      %v4726 = vunpack.c.h.b16 %v4633
      %v4727 = vunpack.c.l.b16 %v4634
      %v4728 = vunpack.c.h.b16 %v4634
      %v4729 = vunpack.c.l.b16 %v4635
      %v4730 = vunpack.c.h.b16 %v4635
      %v4731 = vunpack.c.l.b16 %v4636
      %v4732 = vunpack.c.h.b16 %v4636
      %v4733 = vunpack.c.l.b16 %v4637
      %v4734 = vunpack.c.h.b16 %v4637
      %v4735 = vunpack.c.l.b16 %v4638
      %v4736 = vunpack.c.h.b16 %v4638
      %v4737 = vunpack.c.l.b16 %v4639
      %v4738 = vunpack.c.h.b16 %v4639
      %v4739 = vunpack.c.l.b16 %v4640
      %v4740 = vunpack.c.h.b16 %v4640
      %v4741 = vunpack.c.l.b16 %v4641
      %v4742 = vunpack.c.h.b16 %v4641
      %v4743 = vunpack.c.l.b16 %v4642
      %v4744 = vunpack.c.h.b16 %v4642
      %v4745 = vunpack.c.l.b16 %v4643
      %v4746 = vunpack.c.h.b16 %v4643
      %v4747 = vunpack.c.l.b16 %v4644
      %v4748 = vunpack.c.h.b16 %v4644
      %v4749 = vunpack.c.l.b16 %v4645
      %v4750 = vunpack.c.h.b16 %v4645
      %v4751 = vunpack.c.l.b16 %v4646
      %v4752 = vunpack.c.h.b16 %v4646
      %v4753 = vunpack.c.l.b16 %v4647
      %v4754 = vunpack.c.h.b16 %v4647
      %v4755 = vunpack.c.l.b16 %v4648
      %v4756 = vunpack.c.h.b16 %v4648
      %v4757 = vunpack.c.l.b16 %v4649
      %v4758 = vunpack.c.h.b16 %v4649
      %v4759 = vunpack.c.l.b16 %v4650
      %v4760 = vunpack.c.h.b16 %v4650
      %v4761 = vunpack.c.l.b16 %v4651
      %v4762 = vunpack.c.h.b16 %v4651
      %v4763 = vunpack.c.l.b16 %v4652
      %v4764 = vunpack.c.h.b16 %v4652
      %v4765 = vunpack.c.l.b16 %v4653
      %v4766 = vunpack.c.h.b16 %v4653
      %v4767 = vunpack.c.l.b16 %v4654
      %v4768 = vunpack.c.h.b16 %v4654
      %v4769 = vunpack.c.l.b16 %v4655
      %v4770 = vunpack.c.h.b16 %v4655
      %v4771 = vunpack.c.l.b16 %v4656
      %v4772 = vunpack.c.h.b16 %v4656
      %v4773 = vunpack.c.l.b16 %v4657
      %v4774 = vunpack.c.h.b16 %v4657
      %v4775 = vunpack.c.l.b16 %v4658
      %v4776 = vunpack.c.h.b16 %v4658
      %v4777 = vunpack.c.l.b16 %v4659
      %v4778 = vunpack.c.h.b16 %v4659
      %v4779 = vunpack.c.l.b16 %v4660
      %v4780 = vunpack.c.h.b16 %v4660
      %v4781 = vpack.c.b16 %v4707, %v4705
      %v4782 = vpack.c.b16 %v4708, %v4706
      %v4783 = vpack.c.b16 %v4711, %v4709
      %v4784 = vpack.c.b16 %v4712, %v4710
      %v4785 = vpack.c.b16 %v4715, %v4713
      %v4786 = vpack.c.b16 %v4716, %v4714
      %v4787 = vpack.c.b16 %v4719, %v4717
      %v4788 = vpack.c.b16 %v4720, %v4718
      %v4789 = vpack.c.b16 %v4723, %v4721
      %v4790 = vpack.c.b16 %v4724, %v4722
      %v4791 = vpack.c.b16 %v4727, %v4725
      %v4792 = vpack.c.b16 %v4728, %v4726
      %v4793 = vpack.c.b16 %v4731, %v4729
      %v4794 = vpack.c.b16 %v4732, %v4730
      %v4795 = vpack.c.b16 %v4735, %v4733
      %v4796 = vpack.c.b16 %v4736, %v4734
      %v4797 = vpack.c.b16 %v4739, %v4737
      %v4798 = vpack.c.b16 %v4740, %v4738
      %v4799 = vpack.c.b16 %v4743, %v4741
      %v4800 = vpack.c.b16 %v4744, %v4742
      %v4801 = vpack.c.b16 %v4747, %v4745
      %v4802 = vpack.c.b16 %v4748, %v4746
      %v4803 = vpack.c.b16 %v4751, %v4749
      %v4804 = vpack.c.b16 %v4752, %v4750
      %v4805 = vpack.c.b16 %v4755, %v4753
      %v4806 = vpack.c.b16 %v4756, %v4754
      %v4807 = vpack.c.b16 %v4759, %v4757
      %v4808 = vpack.c.b16 %v4760, %v4758
      %v4809 = vpack.c.b16 %v4763, %v4761
      %v4810 = vpack.c.b16 %v4764, %v4762
      %v4811 = vpack.c.b16 %v4767, %v4765
      %v4812 = vpack.c.b16 %v4768, %v4766
      %v4813 = vpack.c.b16 %v4771, %v4769
      %v4814 = vpack.c.b16 %v4772, %v4770
      %v4815 = vpack.c.b16 %v4775, %v4773
      %v4816 = vpack.c.b16 %v4776, %v4774
      %v4817 = vpack.c.b16 %v4779, %v4777
      %v4818 = vpack.c.b16 %v4780, %v4778
      %v4858 = vsel %vm566, %v4613, 0
      %v4861 = vsel %vm566, %v4616, 0
      %v4864 = vsel %vm566, %v4619, 0
      %v4867 = vsel %vm566, %v4622, 0
      %4869 = vmatpush.bf16.msra.mxu0 %v4795
      %4870 = vmatpush.bf16.msra.mxu0 %v4793
      %4871 = vmatpush.bf16.msra.mxu0 %v4791
      %4872 = vmatpush.bf16.msra.mxu0 %v4789
      %4873 = vmatpush.bf16.msra.mxu0 %v4787
      %4874 = vmatpush.bf16.msra.mxu0 %v4785
      %4875 = vmatpush.bf16.msra.mxu0 %v4783
      %4876 = vmatpush.bf16.msra.mxu0 %v4781
      %4877 = vmatmul.bf16.gmra.mxu0 %v4611
      %v4878 = vpop.f32.mrf.mxu0
      %v4879 = vadd.f32 %v4663, %v4878
      %v4880 = vpop.f32.mrf.mxu0
      %v4881 = vadd.f32 %v4663, %v4880
      %4882 = vmatmul.bf16.gmra.mxu0 %v4614
      %v4883 = vpop.f32.mrf.mxu0
      %v4884 = vadd.f32 %v4663, %v4883
      %v4885 = vpop.f32.mrf.mxu0
      %v4886 = vadd.f32 %v4663, %v4885
      %4887 = vmatmul.bf16.gmra.mxu0 %v4617
      %v4888 = vpop.f32.mrf.mxu0
      %v4889 = vadd.f32 %v4663, %v4888
      %v4890 = vpop.f32.mrf.mxu0
      %v4891 = vadd.f32 %v4663, %v4890
      %4892 = vmatmul.bf16.gmra.mxu0 %v4620
      %v4893 = vpop.f32.mrf.mxu0
      %v4894 = vadd.f32 %v4663, %v4893
      %v4895 = vpop.f32.mrf.mxu0
      %v4896 = vadd.f32 %v4663, %v4895
      %4897 = vdwg.mxu0
      %4898 = vmatpush.bf16.msra.mxu0 %v4811
      %4899 = vmatpush.bf16.msra.mxu0 %v4809
      %4900 = vmatpush.bf16.msra.mxu0 %v4807
      %4901 = vmatpush.bf16.msra.mxu0 %v4805
      %4902 = vmatpush.bf16.msra.mxu0 %v4803
      %4903 = vmatpush.bf16.msra.mxu0 %v4801
      %4904 = vmatpush.bf16.msra.mxu0 %v4799
      %4905 = vmatpush.bf16.msra.mxu0 %v4797
      %4906 = vmatmul.bf16.gmra.mxu0 %v4612
      %v4907 = vpop.f32.mrf.mxu0
      %v4908 = vadd.f32 %v4879, %v4907
      %v4909 = vpop.f32.mrf.mxu0
      %v4910 = vadd.f32 %v4881, %v4909
      %4911 = vmatmul.bf16.gmra.mxu0 %v4615
      %v4912 = vpop.f32.mrf.mxu0
      %v4913 = vadd.f32 %v4884, %v4912
      %v4914 = vpop.f32.mrf.mxu0
      %v4915 = vadd.f32 %v4886, %v4914
      %4916 = vmatmul.bf16.gmra.mxu0 %v4618
      %v4917 = vpop.f32.mrf.mxu0
      %v4918 = vadd.f32 %v4889, %v4917
      %v4919 = vpop.f32.mrf.mxu0
      %v4920 = vadd.f32 %v4891, %v4919
      %4921 = vmatmul.bf16.gmra.mxu0 %v4621
      %v4922 = vpop.f32.mrf.mxu0
      %v4923 = vadd.f32 %v4894, %v4922
      %v4924 = vpop.f32.mrf.mxu0
      %v4925 = vadd.f32 %v4896, %v4924
      %4926 = vdwg.mxu0
      %4927 = vmatpush.bf16.msra.mxu0 0
      %4928 = vmatpush.bf16.msra.mxu0 0
      %4929 = vmatpush.bf16.msra.mxu0 0
      %4930 = vmatpush.bf16.msra.mxu0 0
      %4931 = vmatpush.bf16.msra.mxu0 0
      %4932 = vmatpush.bf16.msra.mxu0 %v4817
      %4933 = vmatpush.bf16.msra.mxu0 %v4815
      %4934 = vmatpush.bf16.msra.mxu0 %v4813
      %4935 = vmatmul.bf16.gmra.mxu0 %v4858
      %v4936 = vpop.f32.mrf.mxu0
      %v4937 = vadd.f32 %v4908, %v4936
      %v4938 = vpop.f32.mrf.mxu0
      %v4939 = vadd.f32 %v4910, %v4938
      %4940 = vmatmul.bf16.gmra.mxu0 %v4861
      %v4941 = vpop.f32.mrf.mxu0
      %v4942 = vadd.f32 %v4913, %v4941
      %v4943 = vpop.f32.mrf.mxu0
      %v4944 = vadd.f32 %v4915, %v4943
      %4945 = vmatmul.bf16.gmra.mxu0 %v4864
      %v4946 = vpop.f32.mrf.mxu0
      %v4947 = vadd.f32 %v4918, %v4946
      %v4948 = vpop.f32.mrf.mxu0
      %v4949 = vadd.f32 %v4920, %v4948
      %4950 = vmatmul.bf16.gmra.mxu0 %v4867
      %v4951 = vpop.f32.mrf.mxu0
      %v4952 = vadd.f32 %v4923, %v4951
      %v4953 = vpop.f32.mrf.mxu0
      %v4954 = vadd.f32 %v4925, %v4953
      %4955 = vdwg.mxu0
      %4956 = vmatpush.bf16.msra.mxu0 %v4796
      %4957 = vmatpush.bf16.msra.mxu0 %v4794
      %4958 = vmatpush.bf16.msra.mxu0 %v4792
      %4959 = vmatpush.bf16.msra.mxu0 %v4790
      %4960 = vmatpush.bf16.msra.mxu0 %v4788
      %4961 = vmatpush.bf16.msra.mxu0 %v4786
      %4962 = vmatpush.bf16.msra.mxu0 %v4784
      %4963 = vmatpush.bf16.msra.mxu0 %v4782
      %4964 = vmatmul.bf16.gmra.mxu0 %v4611
      %v4965 = vpop.f32.mrf.mxu0
      %v4966 = vadd.f32 %v4664, %v4965
      %v4967 = vpop.f32.mrf.mxu0
      %v4968 = vadd.f32 %v4664, %v4967
      %4969 = vmatmul.bf16.gmra.mxu0 %v4614
      %v4970 = vpop.f32.mrf.mxu0
      %v4971 = vadd.f32 %v4664, %v4970
      %v4972 = vpop.f32.mrf.mxu0
      %v4973 = vadd.f32 %v4664, %v4972
      %4974 = vmatmul.bf16.gmra.mxu0 %v4617
      %v4975 = vpop.f32.mrf.mxu0
      %v4976 = vadd.f32 %v4664, %v4975
      %v4977 = vpop.f32.mrf.mxu0
      %v4978 = vadd.f32 %v4664, %v4977
      %4979 = vmatmul.bf16.gmra.mxu0 %v4620
      %v4980 = vpop.f32.mrf.mxu0
      %v4981 = vadd.f32 %v4664, %v4980
      %v4982 = vpop.f32.mrf.mxu0
      %v4983 = vadd.f32 %v4664, %v4982
      %4984 = vdwg.mxu0
      %4985 = vmatpush.bf16.msra.mxu0 %v4812
      %4986 = vmatpush.bf16.msra.mxu0 %v4810
      %4987 = vmatpush.bf16.msra.mxu0 %v4808
      %4988 = vmatpush.bf16.msra.mxu0 %v4806
      %4989 = vmatpush.bf16.msra.mxu0 %v4804
      %4990 = vmatpush.bf16.msra.mxu0 %v4802
      %4991 = vmatpush.bf16.msra.mxu0 %v4800
      %4992 = vmatpush.bf16.msra.mxu0 %v4798
      %4993 = vmatmul.bf16.gmra.mxu0 %v4612
      %v4994 = vpop.f32.mrf.mxu0
      %v4995 = vadd.f32 %v4966, %v4994
      %v4996 = vpop.f32.mrf.mxu0
      %v4997 = vadd.f32 %v4968, %v4996
      %4998 = vmatmul.bf16.gmra.mxu0 %v4615
      %v4999 = vpop.f32.mrf.mxu0
      %v5000 = vadd.f32 %v4971, %v4999
      %v5001 = vpop.f32.mrf.mxu0
      %v5002 = vadd.f32 %v4973, %v5001
      %5003 = vmatmul.bf16.gmra.mxu0 %v4618
      %v5004 = vpop.f32.mrf.mxu0
      %v5005 = vadd.f32 %v4976, %v5004
      %v5006 = vpop.f32.mrf.mxu0
      %v5007 = vadd.f32 %v4978, %v5006
      %5008 = vmatmul.bf16.gmra.mxu0 %v4621
      %v5009 = vpop.f32.mrf.mxu0
      %v5010 = vadd.f32 %v4981, %v5009
      %v5011 = vpop.f32.mrf.mxu0
      %v5012 = vadd.f32 %v4983, %v5011
      %5013 = vdwg.mxu0
      %5014 = vmatpush.bf16.msra.mxu0 0
      %5015 = vmatpush.bf16.msra.mxu0 0
      %5016 = vmatpush.bf16.msra.mxu0 0
      %5017 = vmatpush.bf16.msra.mxu0 0
      %5018 = vmatpush.bf16.msra.mxu0 0
      %5019 = vmatpush.bf16.msra.mxu0 %v4818
      %5020 = vmatpush.bf16.msra.mxu0 %v4816
      %5021 = vmatpush.bf16.msra.mxu0 %v4814
      %5022 = vmatmul.bf16.gmra.mxu0 %v4858
      %v5023 = vpop.f32.mrf.mxu0
      %v5024 = vadd.f32 %v4995, %v5023
      %v5025 = vpop.f32.mrf.mxu0
      %v5026 = vadd.f32 %v4997, %v5025
      %5027 = vmatmul.bf16.gmra.mxu0 %v4861
      %v5028 = vpop.f32.mrf.mxu0
      %v5029 = vadd.f32 %v5000, %v5028
      %v5030 = vpop.f32.mrf.mxu0
      %v5031 = vadd.f32 %v5002, %v5030
      %5032 = vmatmul.bf16.gmra.mxu0 %v4864
      %v5033 = vpop.f32.mrf.mxu0
      %v5034 = vadd.f32 %v5005, %v5033
      %v5035 = vpop.f32.mrf.mxu0
      %v5036 = vadd.f32 %v5007, %v5035
      %5037 = vmatmul.bf16.gmra.mxu0 %v4867
      %v5038 = vpop.f32.mrf.mxu0
      %v5039 = vadd.f32 %v5010, %v5038
      %v5040 = vpop.f32.mrf.mxu0
      %v5041 = vadd.f32 %v5012, %v5040
      %5042 = vdwg.mxu0
      %v5043 = vmax.f32 %v4937, 0.0
      %v5044 = vmax.f32 %v5024, 0.0
      %v5045 = vmax.f32 %v4939, 0.0
      %v5046 = vmax.f32 %v5026, 0.0
      %v5047 = vmax.f32 %v4942, 0.0
      %v5048 = vmax.f32 %v5029, 0.0
      %v5049 = vmax.f32 %v4944, 0.0
      %v5050 = vmax.f32 %v5031, 0.0
      %v5051 = vmax.f32 %v4947, 0.0
      %v5052 = vmax.f32 %v5034, 0.0
      %v5053 = vmax.f32 %v4949, 0.0
      %v5054 = vmax.f32 %v5036, 0.0
      %v5055 = vmax.f32 %v4952, 0.0
      %v5056 = vmax.f32 %v5039, 0.0
      %v5057 = vmax.f32 %v4954, 0.0
      %v5058 = vmax.f32 %v5041, 0.0
      %5059 = vst [vmem:[%s690 + $0x10] sm:$0xff] %v5043
      %5060 = vst [vmem:[%s690 + $0x18] sm:$0xff] %v5044
      %5061 = vst [vmem:[%s690 + $0x40] sm:$0xff] %v5045
      %5062 = vst [vmem:[%s690 + $0x48] sm:$0xff] %v5046
      %5063 = vst [vmem:[%s690 + $0x70] sm:$0xff] %v5047
      %5064 = vst [vmem:[%s690 + $0x78] sm:$0xff] %v5048
      %5065 = vst [vmem:[%s690 + $0xa0] sm:$0xff] %v5049
      %5066 = vst [vmem:[%s690 + $0xa8] sm:$0xff] %v5050
      %5067 = vst [vmem:[%s690 + $0xd0] sm:$0xff] %v5051
      %5068 = vst [vmem:[%s690 + $0xd8] sm:$0xff] %v5052
      %5069 = vst [vmem:[%s690 + $0x100] sm:$0xff] %v5053
      %5070 = vst [vmem:[%s690 + $0x108] sm:$0xff] %v5054
      %5071 = vst [vmem:[%s690 + $0x130] sm:$0xff] %v5055
      %5072 = vst [vmem:[%s690 + $0x138] sm:$0xff] %v5056
      %5073 = vst [vmem:[%s690 + $0x160] sm:$0xff] %v5057
      %5074 = vst [vmem:[%s690 + $0x168] sm:$0xff] %v5058
      %v5075 = vld [vmem:[%s10] sm:$0xff]
      %v5076 = vld [vmem:[%s10 + $0x8] sm:$0xff]
      %v5077 = vld [vmem:[%s10 + $0x10] sm:$0x1]
      %v5078 = vld [vmem:[%s10 + $0x18] sm:$0x1]
      %v5079 = vld [vmem:[%s11] sm:$0x3]
      %v5080 = vld [vmem:[#allocation2] sm:$0x80]
      %v5081 = vld [vmem:[#allocation2 + $0x8] sm:$0x80]
      %v5082 = vld [vmem:[#allocation2 + $0x10] sm:$0x7f]
      %v5083 = vld [vmem:[#allocation2 + $0x18] sm:$0x7f]
      %v5084 = vld [vmem:[#allocation2 + $0x30] sm:$0x80]
      %v5085 = vld [vmem:[#allocation2 + $0x38] sm:$0x80]
      %v5086 = vld [vmem:[#allocation2 + $0x40] sm:$0x7f]
      %v5087 = vld [vmem:[#allocation2 + $0x48] sm:$0x7f]
      %v5088 = vld [vmem:[#allocation2 + $0x60] sm:$0x80]
      %v5089 = vld [vmem:[#allocation2 + $0x68] sm:$0x80]
      %v5090 = vld [vmem:[#allocation2 + $0x70] sm:$0x7f]
      %v5091 = vld [vmem:[#allocation2 + $0x78] sm:$0x7f]
      %v5092 = vld [vmem:[#allocation2 + $0x90] sm:$0x80]
      %v5093 = vld [vmem:[#allocation2 + $0x98] sm:$0x80]
      %v5094 = vld [vmem:[#allocation2 + $0xa0] sm:$0x7f]
      %v5095 = vld [vmem:[#allocation2 + $0xa8] sm:$0x7f]
      %v5096 = vld [vmem:[#allocation2 + $0xc0] sm:$0x80]
      %v5097 = vld [vmem:[#allocation2 + $0xc8] sm:$0x80]
      %v5098 = vld [vmem:[#allocation2 + $0xd0] sm:$0x7f]
      %v5099 = vld [vmem:[#allocation2 + $0xd8] sm:$0x7f]
      %v5100 = vld [vmem:[#allocation2 + $0xf0] sm:$0x80]
      %v5101 = vld [vmem:[#allocation2 + $0xf8] sm:$0x80]
      %v5102 = vld [vmem:[#allocation2 + $0x100] sm:$0x7f]
      %v5103 = vld [vmem:[#allocation2 + $0x108] sm:$0x7f]
      %v5104 = vld [vmem:[#allocation2 + $0x120] sm:$0x80]
      %v5105 = vld [vmem:[#allocation2 + $0x128] sm:$0x80]
      %v5106 = vld [vmem:[#allocation2 + $0x130] sm:$0x7f]
      %v5107 = vld [vmem:[#allocation2 + $0x138] sm:$0x7f]
      %v5108 = vld [vmem:[#allocation2 + $0x150] sm:$0x80]
      %v5109 = vld [vmem:[#allocation2 + $0x158] sm:$0x80]
      %v5110 = vld [vmem:[#allocation2 + $0x160] sm:$0x7f]
      %v5111 = vld [vmem:[#allocation2 + $0x168] sm:$0x7f]
      %v5112 = vld [vmem:[#allocation2 + $0x180] sm:$0x80]
      %v5113 = vld [vmem:[#allocation2 + $0x188] sm:$0x80]
      %v5114 = vld [vmem:[#allocation2 + $0x190] sm:$0x7f]
      %v5115 = vld [vmem:[#allocation2 + $0x198] sm:$0x7f]
      %v5116 = vld [vmem:[#allocation2 + $0x1b0] sm:$0x80]
      %v5117 = vld [vmem:[#allocation2 + $0x1b8] sm:$0x80]
      %v5118 = vld [vmem:[#allocation2 + $0x1c0] sm:$0x7f]
      %v5119 = vld [vmem:[#allocation2 + $0x1c8] sm:$0x7f]
      %v5120 = vperm.slane %v5075, 0
      %v5121 = vperm.slane %v5076, 0
      %v5122 = vmul.f32 %v5080, %v5120
      %v5123 = vmul.f32 %v5081, %v5121
      %v5124 = vmul.f32 %v5082, %v5120
      %v5125 = vmul.f32 %v5083, %v5121
      %v5126 = vmul.f32 %v5084, %v5120
      %v5127 = vmul.f32 %v5085, %v5121
      %v5128 = vmul.f32 %v5086, %v5120
      %v5129 = vmul.f32 %v5087, %v5121
      %v5130 = vmul.f32 %v5088, %v5120
      %v5131 = vmul.f32 %v5089, %v5121
      %v5132 = vmul.f32 %v5090, %v5120
      %v5133 = vmul.f32 %v5091, %v5121
      %v5134 = vmul.f32 %v5092, %v5120
      %v5135 = vmul.f32 %v5093, %v5121
      %v5136 = vmul.f32 %v5094, %v5120
      %v5137 = vmul.f32 %v5095, %v5121
      %v5138 = vmul.f32 %v5096, %v5120
      %v5139 = vmul.f32 %v5097, %v5121
      %v5140 = vmul.f32 %v5098, %v5120
      %v5141 = vmul.f32 %v5099, %v5121
      %v5142 = vmul.f32 %v5100, %v5120
      %v5143 = vmul.f32 %v5101, %v5121
      %v5144 = vmul.f32 %v5102, %v5120
      %v5145 = vmul.f32 %v5103, %v5121
      %v5146 = vmul.f32 %v5104, %v5120
      %v5147 = vmul.f32 %v5105, %v5121
      %v5148 = vmul.f32 %v5106, %v5120
      %v5149 = vmul.f32 %v5107, %v5121
      %v5150 = vmul.f32 %v5108, %v5120
      %v5151 = vmul.f32 %v5109, %v5121
      %v5152 = vmul.f32 %v5110, %v5120
      %v5153 = vmul.f32 %v5111, %v5121
      %v5154 = vadd.f32 %v5122, 0.0
      %v5155 = vadd.f32 %v5123, 0.0
      %v5156 = vadd.f32 %v5124, 0.0
      %v5157 = vadd.f32 %v5125, 0.0
      %v5158 = vadd.f32 %v5126, 0.0
      %v5159 = vadd.f32 %v5127, 0.0
      %v5160 = vadd.f32 %v5128, 0.0
      %v5161 = vadd.f32 %v5129, 0.0
      %v5162 = vadd.f32 %v5130, 0.0
      %v5163 = vadd.f32 %v5131, 0.0
      %v5164 = vadd.f32 %v5132, 0.0
      %v5165 = vadd.f32 %v5133, 0.0
      %v5166 = vadd.f32 %v5134, 0.0
      %v5167 = vadd.f32 %v5135, 0.0
      %v5168 = vadd.f32 %v5136, 0.0
      %v5169 = vadd.f32 %v5137, 0.0
      %v5170 = vadd.f32 %v5138, 0.0
      %v5171 = vadd.f32 %v5139, 0.0
      %v5172 = vadd.f32 %v5140, 0.0
      %v5173 = vadd.f32 %v5141, 0.0
      %v5174 = vadd.f32 %v5142, 0.0
      %v5175 = vadd.f32 %v5143, 0.0
      %v5176 = vadd.f32 %v5144, 0.0
      %v5177 = vadd.f32 %v5145, 0.0
      %v5178 = vadd.f32 %v5146, 0.0
      %v5179 = vadd.f32 %v5147, 0.0
      %v5180 = vadd.f32 %v5148, 0.0
      %v5181 = vadd.f32 %v5149, 0.0
      %v5182 = vadd.f32 %v5150, 0.0
      %v5183 = vadd.f32 %v5151, 0.0
      %v5184 = vadd.f32 %v5152, 0.0
      %v5185 = vadd.f32 %v5153, 0.0
      %v5186 = vperm.slane %v5075, 3
      %v5187 = vperm.slane %v5076, 3
      %v5188 = vmul.f32 %v5084, %v5186
      %v5189 = vmul.f32 %v5085, %v5187
      %v5190 = vmul.f32 %v5086, %v5186
      %v5191 = vmul.f32 %v5087, %v5187
      %v5192 = vmul.f32 %v5088, %v5186
      %v5193 = vmul.f32 %v5089, %v5187
      %v5194 = vmul.f32 %v5090, %v5186
      %v5195 = vmul.f32 %v5091, %v5187
      %v5196 = vmul.f32 %v5092, %v5186
      %v5197 = vmul.f32 %v5093, %v5187
      %v5198 = vmul.f32 %v5094, %v5186
      %v5199 = vmul.f32 %v5095, %v5187
      %v5200 = vmul.f32 %v5096, %v5186
      %v5201 = vmul.f32 %v5097, %v5187
      %v5202 = vmul.f32 %v5098, %v5186
      %v5203 = vmul.f32 %v5099, %v5187
      %v5204 = vmul.f32 %v5100, %v5186
      %v5205 = vmul.f32 %v5101, %v5187
      %v5206 = vmul.f32 %v5102, %v5186
      %v5207 = vmul.f32 %v5103, %v5187
      %v5208 = vmul.f32 %v5104, %v5186
      %v5209 = vmul.f32 %v5105, %v5187
      %v5210 = vmul.f32 %v5106, %v5186
      %v5211 = vmul.f32 %v5107, %v5187
      %v5212 = vmul.f32 %v5108, %v5186
      %v5213 = vmul.f32 %v5109, %v5187
      %v5214 = vmul.f32 %v5110, %v5186
      %v5215 = vmul.f32 %v5111, %v5187
      %v5216 = vmul.f32 %v5112, %v5186
      %v5217 = vmul.f32 %v5113, %v5187
      %v5218 = vmul.f32 %v5114, %v5186
      %v5219 = vmul.f32 %v5115, %v5187
      %v5220 = vadd.f32 %v5154, %v5188
      %v5221 = vadd.f32 %v5155, %v5189
      %v5222 = vadd.f32 %v5156, %v5190
      %v5223 = vadd.f32 %v5157, %v5191
      %v5224 = vadd.f32 %v5158, %v5192
      %v5225 = vadd.f32 %v5159, %v5193
      %v5226 = vadd.f32 %v5160, %v5194
      %v5227 = vadd.f32 %v5161, %v5195
      %v5228 = vadd.f32 %v5162, %v5196
      %v5229 = vadd.f32 %v5163, %v5197
      %v5230 = vadd.f32 %v5164, %v5198
      %v5231 = vadd.f32 %v5165, %v5199
      %v5232 = vadd.f32 %v5166, %v5200
      %v5233 = vadd.f32 %v5167, %v5201
      %v5234 = vadd.f32 %v5168, %v5202
      %v5235 = vadd.f32 %v5169, %v5203
      %v5236 = vadd.f32 %v5170, %v5204
      %v5237 = vadd.f32 %v5171, %v5205
      %v5238 = vadd.f32 %v5172, %v5206
      %v5239 = vadd.f32 %v5173, %v5207
      %v5240 = vadd.f32 %v5174, %v5208
      %v5241 = vadd.f32 %v5175, %v5209
      %v5242 = vadd.f32 %v5176, %v5210
      %v5243 = vadd.f32 %v5177, %v5211
      %v5244 = vadd.f32 %v5178, %v5212
      %v5245 = vadd.f32 %v5179, %v5213
      %v5246 = vadd.f32 %v5180, %v5214
      %v5247 = vadd.f32 %v5181, %v5215
      %v5248 = vadd.f32 %v5182, %v5216
      %v5249 = vadd.f32 %v5183, %v5217
      %v5250 = vadd.f32 %v5184, %v5218
      %v5251 = vadd.f32 %v5185, %v5219
      %v5252 = vperm.slane %v5075, 6
      %v5253 = vperm.slane %v5076, 6
      %v5254 = vmul.f32 %v5088, %v5252
      %v5255 = vmul.f32 %v5089, %v5253
      %v5256 = vmul.f32 %v5090, %v5252
      %v5257 = vmul.f32 %v5091, %v5253
      %v5258 = vmul.f32 %v5092, %v5252
      %v5259 = vmul.f32 %v5093, %v5253
      %v5260 = vmul.f32 %v5094, %v5252
      %v5261 = vmul.f32 %v5095, %v5253
      %v5262 = vmul.f32 %v5096, %v5252
      %v5263 = vmul.f32 %v5097, %v5253
      %v5264 = vmul.f32 %v5098, %v5252
      %v5265 = vmul.f32 %v5099, %v5253
      %v5266 = vmul.f32 %v5100, %v5252
      %v5267 = vmul.f32 %v5101, %v5253
      %v5268 = vmul.f32 %v5102, %v5252
      %v5269 = vmul.f32 %v5103, %v5253
      %v5270 = vmul.f32 %v5104, %v5252
      %v5271 = vmul.f32 %v5105, %v5253
      %v5272 = vmul.f32 %v5106, %v5252
      %v5273 = vmul.f32 %v5107, %v5253
      %v5274 = vmul.f32 %v5108, %v5252
      %v5275 = vmul.f32 %v5109, %v5253
      %v5276 = vmul.f32 %v5110, %v5252
      %v5277 = vmul.f32 %v5111, %v5253
      %v5278 = vmul.f32 %v5112, %v5252
      %v5279 = vmul.f32 %v5113, %v5253
      %v5280 = vmul.f32 %v5114, %v5252
      %v5281 = vmul.f32 %v5115, %v5253
      %v5282 = vmul.f32 %v5116, %v5252
      %v5283 = vmul.f32 %v5117, %v5253
      %v5284 = vmul.f32 %v5118, %v5252
      %v5285 = vmul.f32 %v5119, %v5253
      %v5286 = vadd.f32 %v5220, %v5254
      %v5287 = vadd.f32 %v5221, %v5255
      %v5288 = vadd.f32 %v5222, %v5256
      %v5289 = vadd.f32 %v5223, %v5257
      %v5290 = vadd.f32 %v5224, %v5258
      %v5291 = vadd.f32 %v5225, %v5259
      %v5292 = vadd.f32 %v5226, %v5260
      %v5293 = vadd.f32 %v5227, %v5261
      %v5294 = vadd.f32 %v5228, %v5262
      %v5295 = vadd.f32 %v5229, %v5263
      %v5296 = vadd.f32 %v5230, %v5264
      %v5297 = vadd.f32 %v5231, %v5265
      %v5298 = vadd.f32 %v5232, %v5266
      %v5299 = vadd.f32 %v5233, %v5267
      %v5300 = vadd.f32 %v5234, %v5268
      %v5301 = vadd.f32 %v5235, %v5269
      %v5302 = vadd.f32 %v5236, %v5270
      %v5303 = vadd.f32 %v5237, %v5271
      %v5304 = vadd.f32 %v5238, %v5272
      %v5305 = vadd.f32 %v5239, %v5273
      %v5306 = vadd.f32 %v5240, %v5274
      %v5307 = vadd.f32 %v5241, %v5275
      %v5308 = vadd.f32 %v5242, %v5276
      %v5309 = vadd.f32 %v5243, %v5277
      %v5310 = vadd.f32 %v5244, %v5278
      %v5311 = vadd.f32 %v5245, %v5279
      %v5312 = vadd.f32 %v5246, %v5280
      %v5313 = vadd.f32 %v5247, %v5281
      %v5314 = vadd.f32 %v5248, %v5282
      %v5315 = vadd.f32 %v5249, %v5283
      %v5316 = vadd.f32 %v5250, %v5284
      %v5317 = vadd.f32 %v5251, %v5285
      %v5318 = vld [vmem:[#allocation2 + $0x10] sm:$0xff]
      %v5319 = vld [vmem:[#allocation2 + $0x18] sm:$0xff]
      %v5320 = vld [vmem:[#allocation2 + $0x40] sm:$0xff]
      %v5321 = vld [vmem:[#allocation2 + $0x48] sm:$0xff]
      %v5322 = vld [vmem:[#allocation2 + $0x70] sm:$0xff]
      %v5323 = vld [vmem:[#allocation2 + $0x78] sm:$0xff]
      %v5324 = vld [vmem:[#allocation2 + $0xa0] sm:$0xff]
      %v5325 = vld [vmem:[#allocation2 + $0xa8] sm:$0xff]
      %v5326 = vld [vmem:[#allocation2 + $0xd0] sm:$0xff]
      %v5327 = vld [vmem:[#allocation2 + $0xd8] sm:$0xff]
      %v5328 = vld [vmem:[#allocation2 + $0x100] sm:$0xff]
      %v5329 = vld [vmem:[#allocation2 + $0x108] sm:$0xff]
      %v5330 = vld [vmem:[#allocation2 + $0x130] sm:$0xff]
      %v5331 = vld [vmem:[#allocation2 + $0x138] sm:$0xff]
      %v5332 = vld [vmem:[#allocation2 + $0x160] sm:$0xff]
      %v5333 = vld [vmem:[#allocation2 + $0x168] sm:$0xff]
      %v5334 = vld [vmem:[#allocation2 + $0x190] sm:$0xff]
      %v5335 = vld [vmem:[#allocation2 + $0x198] sm:$0xff]
      %v5336 = vld [vmem:[#allocation2 + $0x1c0] sm:$0xff]
      %v5337 = vld [vmem:[#allocation2 + $0x1c8] sm:$0xff]
      %v5338 = vperm.slane %v5075, 1
      %v5339 = vperm.slane %v5076, 1
      %v5340 = vmul.f32 %v5318, %v5338
      %v5341 = vmul.f32 %v5319, %v5339
      %v5342 = vmul.f32 %v5320, %v5338
      %v5343 = vmul.f32 %v5321, %v5339
      %v5344 = vmul.f32 %v5322, %v5338
      %v5345 = vmul.f32 %v5323, %v5339
      %v5346 = vmul.f32 %v5324, %v5338
      %v5347 = vmul.f32 %v5325, %v5339
      %v5348 = vmul.f32 %v5326, %v5338
      %v5349 = vmul.f32 %v5327, %v5339
      %v5350 = vmul.f32 %v5328, %v5338
      %v5351 = vmul.f32 %v5329, %v5339
      %v5352 = vmul.f32 %v5330, %v5338
      %v5353 = vmul.f32 %v5331, %v5339
      %v5354 = vmul.f32 %v5332, %v5338
      %v5355 = vmul.f32 %v5333, %v5339
      %v5372 = vrot.slane %v5340, 1
      %v5373 = vrot.slane %v5341, 1
      %v5374 = vrot.slane %v5342, 1
      %v5375 = vrot.slane %v5343, 1
      %v5376 = vrot.slane %v5344, 1
      %v5377 = vrot.slane %v5345, 1
      %v5378 = vrot.slane %v5346, 1
      %v5379 = vrot.slane %v5347, 1
      %v5380 = vrot.slane %v5348, 1
      %v5381 = vrot.slane %v5349, 1
      %v5382 = vrot.slane %v5350, 1
      %v5383 = vrot.slane %v5351, 1
      %v5384 = vrot.slane %v5352, 1
      %v5385 = vrot.slane %v5353, 1
      %v5386 = vrot.slane %v5354, 1
      %v5387 = vrot.slane %v5355, 1
      %v5404 = vadd.f32 %v5286, %v5372
      %v5405 = vadd.f32 %v5287, %v5373
      %v5406 = vadd.f32 %v5288, %v5372
      %v5407 = vadd.f32 %v5289, %v5373
      %v5408 = vadd.f32 %v5290, %v5374
      %v5409 = vadd.f32 %v5291, %v5375
      %v5410 = vadd.f32 %v5292, %v5374
      %v5411 = vadd.f32 %v5293, %v5375
      %v5412 = vadd.f32 %v5294, %v5376
      %v5413 = vadd.f32 %v5295, %v5377
      %v5414 = vadd.f32 %v5296, %v5376
      %v5415 = vadd.f32 %v5297, %v5377
      %v5416 = vadd.f32 %v5298, %v5378
      %v5417 = vadd.f32 %v5299, %v5379
      %v5418 = vadd.f32 %v5300, %v5378
      %v5419 = vadd.f32 %v5301, %v5379
      %v5420 = vadd.f32 %v5302, %v5380
      %v5421 = vadd.f32 %v5303, %v5381
      %v5422 = vadd.f32 %v5304, %v5380
      %v5423 = vadd.f32 %v5305, %v5381
      %v5424 = vadd.f32 %v5306, %v5382
      %v5425 = vadd.f32 %v5307, %v5383
      %v5426 = vadd.f32 %v5308, %v5382
      %v5427 = vadd.f32 %v5309, %v5383
      %v5428 = vadd.f32 %v5310, %v5384
      %v5429 = vadd.f32 %v5311, %v5385
      %v5430 = vadd.f32 %v5312, %v5384
      %v5431 = vadd.f32 %v5313, %v5385
      %v5432 = vadd.f32 %v5314, %v5386
      %v5433 = vadd.f32 %v5315, %v5387
      %v5434 = vadd.f32 %v5316, %v5386
      %v5435 = vadd.f32 %v5317, %v5387
      %v5436 = vperm.slane %v5075, 4
      %v5437 = vperm.slane %v5076, 4
      %v5438 = vmul.f32 %v5320, %v5436
      %v5439 = vmul.f32 %v5321, %v5437
      %v5440 = vmul.f32 %v5322, %v5436
      %v5441 = vmul.f32 %v5323, %v5437
      %v5442 = vmul.f32 %v5324, %v5436
      %v5443 = vmul.f32 %v5325, %v5437
      %v5444 = vmul.f32 %v5326, %v5436
      %v5445 = vmul.f32 %v5327, %v5437
      %v5446 = vmul.f32 %v5328, %v5436
      %v5447 = vmul.f32 %v5329, %v5437
      %v5448 = vmul.f32 %v5330, %v5436
      %v5449 = vmul.f32 %v5331, %v5437
      %v5450 = vmul.f32 %v5332, %v5436
      %v5451 = vmul.f32 %v5333, %v5437
      %v5452 = vmul.f32 %v5334, %v5436
      %v5453 = vmul.f32 %v5335, %v5437
      %v5470 = vrot.slane %v5438, 1
      %v5471 = vrot.slane %v5439, 1
      %v5472 = vrot.slane %v5440, 1
      %v5473 = vrot.slane %v5441, 1
      %v5474 = vrot.slane %v5442, 1
      %v5475 = vrot.slane %v5443, 1
      %v5476 = vrot.slane %v5444, 1
      %v5477 = vrot.slane %v5445, 1
      %v5478 = vrot.slane %v5446, 1
      %v5479 = vrot.slane %v5447, 1
      %v5480 = vrot.slane %v5448, 1
      %v5481 = vrot.slane %v5449, 1
      %v5482 = vrot.slane %v5450, 1
      %v5483 = vrot.slane %v5451, 1
      %v5484 = vrot.slane %v5452, 1
      %v5485 = vrot.slane %v5453, 1
      %v5502 = vadd.f32 %v5404, %v5470
      %v5503 = vadd.f32 %v5405, %v5471
      %v5504 = vadd.f32 %v5406, %v5470
      %v5505 = vadd.f32 %v5407, %v5471
      %v5506 = vadd.f32 %v5408, %v5472
      %v5507 = vadd.f32 %v5409, %v5473
      %v5508 = vadd.f32 %v5410, %v5472
      %v5509 = vadd.f32 %v5411, %v5473
      %v5510 = vadd.f32 %v5412, %v5474
      %v5511 = vadd.f32 %v5413, %v5475
      %v5512 = vadd.f32 %v5414, %v5474
      %v5513 = vadd.f32 %v5415, %v5475
      %v5514 = vadd.f32 %v5416, %v5476
      %v5515 = vadd.f32 %v5417, %v5477
      %v5516 = vadd.f32 %v5418, %v5476
      %v5517 = vadd.f32 %v5419, %v5477
      %v5518 = vadd.f32 %v5420, %v5478
      %v5519 = vadd.f32 %v5421, %v5479
      %v5520 = vadd.f32 %v5422, %v5478
      %v5521 = vadd.f32 %v5423, %v5479
      %v5522 = vadd.f32 %v5424, %v5480
      %v5523 = vadd.f32 %v5425, %v5481
      %v5524 = vadd.f32 %v5426, %v5480
      %v5525 = vadd.f32 %v5427, %v5481
      %v5526 = vadd.f32 %v5428, %v5482
      %v5527 = vadd.f32 %v5429, %v5483
      %v5528 = vadd.f32 %v5430, %v5482
      %v5529 = vadd.f32 %v5431, %v5483
      %v5530 = vadd.f32 %v5432, %v5484
      %v5531 = vadd.f32 %v5433, %v5485
      %v5532 = vadd.f32 %v5434, %v5484
      %v5533 = vadd.f32 %v5435, %v5485
      %v5534 = vperm.slane %v5075, 7
      %v5535 = vperm.slane %v5076, 7
      %v5536 = vmul.f32 %v5322, %v5534
      %v5537 = vmul.f32 %v5323, %v5535
      %v5538 = vmul.f32 %v5324, %v5534
      %v5539 = vmul.f32 %v5325, %v5535
      %v5540 = vmul.f32 %v5326, %v5534
      %v5541 = vmul.f32 %v5327, %v5535
      %v5542 = vmul.f32 %v5328, %v5534
      %v5543 = vmul.f32 %v5329, %v5535
      %v5544 = vmul.f32 %v5330, %v5534
      %v5545 = vmul.f32 %v5331, %v5535
      %v5546 = vmul.f32 %v5332, %v5534
      %v5547 = vmul.f32 %v5333, %v5535
      %v5548 = vmul.f32 %v5334, %v5534
      %v5549 = vmul.f32 %v5335, %v5535
      %v5550 = vmul.f32 %v5336, %v5534
      %v5551 = vmul.f32 %v5337, %v5535
      %v5568 = vrot.slane %v5536, 1
      %v5569 = vrot.slane %v5537, 1
      %v5570 = vrot.slane %v5538, 1
      %v5571 = vrot.slane %v5539, 1
      %v5572 = vrot.slane %v5540, 1
      %v5573 = vrot.slane %v5541, 1
      %v5574 = vrot.slane %v5542, 1
      %v5575 = vrot.slane %v5543, 1
      %v5576 = vrot.slane %v5544, 1
      %v5577 = vrot.slane %v5545, 1
      %v5578 = vrot.slane %v5546, 1
      %v5579 = vrot.slane %v5547, 1
      %v5580 = vrot.slane %v5548, 1
      %v5581 = vrot.slane %v5549, 1
      %v5582 = vrot.slane %v5550, 1
      %v5583 = vrot.slane %v5551, 1
      %v5600 = vadd.f32 %v5502, %v5568
      %v5601 = vadd.f32 %v5503, %v5569
      %v5602 = vadd.f32 %v5504, %v5568
      %v5603 = vadd.f32 %v5505, %v5569
      %v5604 = vadd.f32 %v5506, %v5570
      %v5605 = vadd.f32 %v5507, %v5571
      %v5606 = vadd.f32 %v5508, %v5570
      %v5607 = vadd.f32 %v5509, %v5571
      %v5608 = vadd.f32 %v5510, %v5572
      %v5609 = vadd.f32 %v5511, %v5573
      %v5610 = vadd.f32 %v5512, %v5572
      %v5611 = vadd.f32 %v5513, %v5573
      %v5612 = vadd.f32 %v5514, %v5574
      %v5613 = vadd.f32 %v5515, %v5575
      %v5614 = vadd.f32 %v5516, %v5574
      %v5615 = vadd.f32 %v5517, %v5575
      %v5616 = vadd.f32 %v5518, %v5576
      %v5617 = vadd.f32 %v5519, %v5577
      %v5618 = vadd.f32 %v5520, %v5576
      %v5619 = vadd.f32 %v5521, %v5577
      %v5620 = vadd.f32 %v5522, %v5578
      %v5621 = vadd.f32 %v5523, %v5579
      %v5622 = vadd.f32 %v5524, %v5578
      %v5623 = vadd.f32 %v5525, %v5579
      %v5624 = vadd.f32 %v5526, %v5580
      %v5625 = vadd.f32 %v5527, %v5581
      %v5626 = vadd.f32 %v5528, %v5580
      %v5627 = vadd.f32 %v5529, %v5581
      %v5628 = vadd.f32 %v5530, %v5582
      %v5629 = vadd.f32 %v5531, %v5583
      %v5630 = vadd.f32 %v5532, %v5582
      %v5631 = vadd.f32 %v5533, %v5583
      %v5632 = vld [vmem:[#allocation2 + $0x10] sm:$0xfe]
      %v5633 = vld [vmem:[#allocation2 + $0x18] sm:$0xfe]
      %v5634 = vld [vmem:[#allocation2 + $0x20] sm:$0x1]
      %v5635 = vld [vmem:[#allocation2 + $0x28] sm:$0x1]
      %v5636 = vld [vmem:[#allocation2 + $0x40] sm:$0xfe]
      %v5637 = vld [vmem:[#allocation2 + $0x48] sm:$0xfe]
      %v5638 = vld [vmem:[#allocation2 + $0x50] sm:$0x1]
      %v5639 = vld [vmem:[#allocation2 + $0x58] sm:$0x1]
      %v5640 = vld [vmem:[#allocation2 + $0x70] sm:$0xfe]
      %v5641 = vld [vmem:[#allocation2 + $0x78] sm:$0xfe]
      %v5642 = vld [vmem:[#allocation2 + $0x80] sm:$0x1]
      %v5643 = vld [vmem:[#allocation2 + $0x88] sm:$0x1]
      %v5644 = vld [vmem:[#allocation2 + $0xa0] sm:$0xfe]
      %v5645 = vld [vmem:[#allocation2 + $0xa8] sm:$0xfe]
      %v5646 = vld [vmem:[#allocation2 + $0xb0] sm:$0x1]
      %v5647 = vld [vmem:[#allocation2 + $0xb8] sm:$0x1]
      %v5648 = vld [vmem:[#allocation2 + $0xd0] sm:$0xfe]
      %v5649 = vld [vmem:[#allocation2 + $0xd8] sm:$0xfe]
      %v5650 = vld [vmem:[#allocation2 + $0xe0] sm:$0x1]
      %v5651 = vld [vmem:[#allocation2 + $0xe8] sm:$0x1]
      %v5652 = vld [vmem:[#allocation2 + $0x100] sm:$0xfe]
      %v5653 = vld [vmem:[#allocation2 + $0x108] sm:$0xfe]
      %v5654 = vld [vmem:[#allocation2 + $0x110] sm:$0x1]
      %v5655 = vld [vmem:[#allocation2 + $0x118] sm:$0x1]
      %v5656 = vld [vmem:[#allocation2 + $0x130] sm:$0xfe]
      %v5657 = vld [vmem:[#allocation2 + $0x138] sm:$0xfe]
      %v5658 = vld [vmem:[#allocation2 + $0x140] sm:$0x1]
      %v5659 = vld [vmem:[#allocation2 + $0x148] sm:$0x1]
      %v5660 = vld [vmem:[#allocation2 + $0x160] sm:$0xfe]
      %v5661 = vld [vmem:[#allocation2 + $0x168] sm:$0xfe]
      %v5662 = vld [vmem:[#allocation2 + $0x170] sm:$0x1]
      %v5663 = vld [vmem:[#allocation2 + $0x178] sm:$0x1]
      %v5664 = vld [vmem:[#allocation2 + $0x190] sm:$0xfe]
      %v5665 = vld [vmem:[#allocation2 + $0x198] sm:$0xfe]
      %v5666 = vld [vmem:[#allocation2 + $0x1a0] sm:$0x1]
      %v5667 = vld [vmem:[#allocation2 + $0x1a8] sm:$0x1]
      %v5668 = vld [vmem:[#allocation2 + $0x1c0] sm:$0xfe]
      %v5669 = vld [vmem:[#allocation2 + $0x1c8] sm:$0xfe]
      %v5670 = vld [vmem:[#allocation2 + $0x1d0] sm:$0x1]
      %v5671 = vld [vmem:[#allocation2 + $0x1d8] sm:$0x1]
      %v5672 = vperm.slane %v5075, 2
      %v5673 = vperm.slane %v5076, 2
      %v5674 = vmul.f32 %v5632, %v5672
      %v5675 = vmul.f32 %v5633, %v5673
      %v5676 = vmul.f32 %v5634, %v5672
      %v5677 = vmul.f32 %v5635, %v5673
      %v5678 = vmul.f32 %v5636, %v5672
      %v5679 = vmul.f32 %v5637, %v5673
      %v5680 = vmul.f32 %v5638, %v5672
      %v5681 = vmul.f32 %v5639, %v5673
      %v5682 = vmul.f32 %v5640, %v5672
      %v5683 = vmul.f32 %v5641, %v5673
      %v5684 = vmul.f32 %v5642, %v5672
      %v5685 = vmul.f32 %v5643, %v5673
      %v5686 = vmul.f32 %v5644, %v5672
      %v5687 = vmul.f32 %v5645, %v5673
      %v5688 = vmul.f32 %v5646, %v5672
      %v5689 = vmul.f32 %v5647, %v5673
      %v5690 = vmul.f32 %v5648, %v5672
      %v5691 = vmul.f32 %v5649, %v5673
      %v5692 = vmul.f32 %v5650, %v5672
      %v5693 = vmul.f32 %v5651, %v5673
      %v5694 = vmul.f32 %v5652, %v5672
      %v5695 = vmul.f32 %v5653, %v5673
      %v5696 = vmul.f32 %v5654, %v5672
      %v5697 = vmul.f32 %v5655, %v5673
      %v5698 = vmul.f32 %v5656, %v5672
      %v5699 = vmul.f32 %v5657, %v5673
      %v5700 = vmul.f32 %v5658, %v5672
      %v5701 = vmul.f32 %v5659, %v5673
      %v5702 = vmul.f32 %v5660, %v5672
      %v5703 = vmul.f32 %v5661, %v5673
      %v5704 = vmul.f32 %v5662, %v5672
      %v5705 = vmul.f32 %v5663, %v5673
      %v5738 = vrot.slane %v5674, 2
      %v5739 = vrot.slane %v5675, 2
      %v5740 = vrot.slane %v5676, 2
      %v5741 = vsel %vm3772, %v5738, %v5740
      %v5742 = vrot.slane %v5677, 2
      %v5743 = vsel %vm3772, %v5739, %v5742
      %v5744 = vrot.slane %v5678, 2
      %v5745 = vrot.slane %v5679, 2
      %v5746 = vrot.slane %v5680, 2
      %v5747 = vsel %vm3772, %v5744, %v5746
      %v5748 = vrot.slane %v5681, 2
      %v5749 = vsel %vm3772, %v5745, %v5748
      %v5750 = vrot.slane %v5682, 2
      %v5751 = vrot.slane %v5683, 2
      %v5752 = vrot.slane %v5684, 2
      %v5753 = vsel %vm3772, %v5750, %v5752
      %v5754 = vrot.slane %v5685, 2
      %v5755 = vsel %vm3772, %v5751, %v5754
      %v5756 = vrot.slane %v5686, 2
      %v5757 = vrot.slane %v5687, 2
      %v5758 = vrot.slane %v5688, 2
      %v5759 = vsel %vm3772, %v5756, %v5758
      %v5760 = vrot.slane %v5689, 2
      %v5761 = vsel %vm3772, %v5757, %v5760
      %v5762 = vrot.slane %v5690, 2
      %v5763 = vrot.slane %v5691, 2
      %v5764 = vrot.slane %v5692, 2
      %v5765 = vsel %vm3772, %v5762, %v5764
      %v5766 = vrot.slane %v5693, 2
      %v5767 = vsel %vm3772, %v5763, %v5766
      %v5768 = vrot.slane %v5694, 2
      %v5769 = vrot.slane %v5695, 2
      %v5770 = vrot.slane %v5696, 2
      %v5771 = vsel %vm3772, %v5768, %v5770
      %v5772 = vrot.slane %v5697, 2
      %v5773 = vsel %vm3772, %v5769, %v5772
      %v5774 = vrot.slane %v5698, 2
      %v5775 = vrot.slane %v5699, 2
      %v5776 = vrot.slane %v5700, 2
      %v5777 = vsel %vm3772, %v5774, %v5776
      %v5778 = vrot.slane %v5701, 2
      %v5779 = vsel %vm3772, %v5775, %v5778
      %v5780 = vrot.slane %v5702, 2
      %v5781 = vrot.slane %v5703, 2
      %v5782 = vrot.slane %v5704, 2
      %v5783 = vsel %vm3772, %v5780, %v5782
      %v5784 = vrot.slane %v5705, 2
      %v5785 = vsel %vm3772, %v5781, %v5784
      %v5818 = vadd.f32 %v5600, %v5738
      %v5819 = vadd.f32 %v5601, %v5739
      %v5820 = vadd.f32 %v5602, %v5741
      %v5821 = vadd.f32 %v5603, %v5743
      %v5822 = vadd.f32 %v5604, %v5744
      %v5823 = vadd.f32 %v5605, %v5745
      %v5824 = vadd.f32 %v5606, %v5747
      %v5825 = vadd.f32 %v5607, %v5749
      %v5826 = vadd.f32 %v5608, %v5750
      %v5827 = vadd.f32 %v5609, %v5751
      %v5828 = vadd.f32 %v5610, %v5753
      %v5829 = vadd.f32 %v5611, %v5755
      %v5830 = vadd.f32 %v5612, %v5756
      %v5831 = vadd.f32 %v5613, %v5757
      %v5832 = vadd.f32 %v5614, %v5759
      %v5833 = vadd.f32 %v5615, %v5761
      %v5834 = vadd.f32 %v5616, %v5762
      %v5835 = vadd.f32 %v5617, %v5763
      %v5836 = vadd.f32 %v5618, %v5765
      %v5837 = vadd.f32 %v5619, %v5767
      %v5838 = vadd.f32 %v5620, %v5768
      %v5839 = vadd.f32 %v5621, %v5769
      %v5840 = vadd.f32 %v5622, %v5771
      %v5841 = vadd.f32 %v5623, %v5773
      %v5842 = vadd.f32 %v5624, %v5774
      %v5843 = vadd.f32 %v5625, %v5775
      %v5844 = vadd.f32 %v5626, %v5777
      %v5845 = vadd.f32 %v5627, %v5779
      %v5846 = vadd.f32 %v5628, %v5780
      %v5847 = vadd.f32 %v5629, %v5781
      %v5848 = vadd.f32 %v5630, %v5783
      %v5849 = vadd.f32 %v5631, %v5785
      %v5850 = vperm.slane %v5075, 5
      %v5851 = vperm.slane %v5076, 5
      %v5852 = vmul.f32 %v5636, %v5850
      %v5853 = vmul.f32 %v5637, %v5851
      %v5854 = vmul.f32 %v5638, %v5850
      %v5855 = vmul.f32 %v5639, %v5851
      %v5856 = vmul.f32 %v5640, %v5850
      %v5857 = vmul.f32 %v5641, %v5851
      %v5858 = vmul.f32 %v5642, %v5850
      %v5859 = vmul.f32 %v5643, %v5851
      %v5860 = vmul.f32 %v5644, %v5850
      %v5861 = vmul.f32 %v5645, %v5851
      %v5862 = vmul.f32 %v5646, %v5850
      %v5863 = vmul.f32 %v5647, %v5851
      %v5864 = vmul.f32 %v5648, %v5850
      %v5865 = vmul.f32 %v5649, %v5851
      %v5866 = vmul.f32 %v5650, %v5850
      %v5867 = vmul.f32 %v5651, %v5851
      %v5868 = vmul.f32 %v5652, %v5850
      %v5869 = vmul.f32 %v5653, %v5851
      %v5870 = vmul.f32 %v5654, %v5850
      %v5871 = vmul.f32 %v5655, %v5851
      %v5872 = vmul.f32 %v5656, %v5850
      %v5873 = vmul.f32 %v5657, %v5851
      %v5874 = vmul.f32 %v5658, %v5850
      %v5875 = vmul.f32 %v5659, %v5851
      %v5876 = vmul.f32 %v5660, %v5850
      %v5877 = vmul.f32 %v5661, %v5851
      %v5878 = vmul.f32 %v5662, %v5850
      %v5879 = vmul.f32 %v5663, %v5851
      %v5880 = vmul.f32 %v5664, %v5850
      %v5881 = vmul.f32 %v5665, %v5851
      %v5882 = vmul.f32 %v5666, %v5850
      %v5883 = vmul.f32 %v5667, %v5851
      %v5916 = vrot.slane %v5852, 2
      %v5917 = vrot.slane %v5853, 2
      %v5918 = vrot.slane %v5854, 2
      %v5919 = vsel %vm3772, %v5916, %v5918
      %v5920 = vrot.slane %v5855, 2
      %v5921 = vsel %vm3772, %v5917, %v5920
      %v5922 = vrot.slane %v5856, 2
      %v5923 = vrot.slane %v5857, 2
      %v5924 = vrot.slane %v5858, 2
      %v5925 = vsel %vm3772, %v5922, %v5924
      %v5926 = vrot.slane %v5859, 2
      %v5927 = vsel %vm3772, %v5923, %v5926
      %v5928 = vrot.slane %v5860, 2
      %v5929 = vrot.slane %v5861, 2
      %v5930 = vrot.slane %v5862, 2
      %v5931 = vsel %vm3772, %v5928, %v5930
      %v5932 = vrot.slane %v5863, 2
      %v5933 = vsel %vm3772, %v5929, %v5932
      %v5934 = vrot.slane %v5864, 2
      %v5935 = vrot.slane %v5865, 2
      %v5936 = vrot.slane %v5866, 2
      %v5937 = vsel %vm3772, %v5934, %v5936
      %v5938 = vrot.slane %v5867, 2
      %v5939 = vsel %vm3772, %v5935, %v5938
      %v5940 = vrot.slane %v5868, 2
      %v5941 = vrot.slane %v5869, 2
      %v5942 = vrot.slane %v5870, 2
      %v5943 = vsel %vm3772, %v5940, %v5942
      %v5944 = vrot.slane %v5871, 2
      %v5945 = vsel %vm3772, %v5941, %v5944
      %v5946 = vrot.slane %v5872, 2
      %v5947 = vrot.slane %v5873, 2
      %v5948 = vrot.slane %v5874, 2
      %v5949 = vsel %vm3772, %v5946, %v5948
      %v5950 = vrot.slane %v5875, 2
      %v5951 = vsel %vm3772, %v5947, %v5950
      %v5952 = vrot.slane %v5876, 2
      %v5953 = vrot.slane %v5877, 2
      %v5954 = vrot.slane %v5878, 2
      %v5955 = vsel %vm3772, %v5952, %v5954
      %v5956 = vrot.slane %v5879, 2
      %v5957 = vsel %vm3772, %v5953, %v5956
      %v5958 = vrot.slane %v5880, 2
      %v5959 = vrot.slane %v5881, 2
      %v5960 = vrot.slane %v5882, 2
      %v5961 = vsel %vm3772, %v5958, %v5960
      %v5962 = vrot.slane %v5883, 2
      %v5963 = vsel %vm3772, %v5959, %v5962
      %v5996 = vadd.f32 %v5818, %v5916
      %v5997 = vadd.f32 %v5819, %v5917
      %v5998 = vadd.f32 %v5820, %v5919
      %v5999 = vadd.f32 %v5821, %v5921
      %v6000 = vadd.f32 %v5822, %v5922
      %v6001 = vadd.f32 %v5823, %v5923
      %v6002 = vadd.f32 %v5824, %v5925
      %v6003 = vadd.f32 %v5825, %v5927
      %v6004 = vadd.f32 %v5826, %v5928
      %v6005 = vadd.f32 %v5827, %v5929
      %v6006 = vadd.f32 %v5828, %v5931
      %v6007 = vadd.f32 %v5829, %v5933
      %v6008 = vadd.f32 %v5830, %v5934
      %v6009 = vadd.f32 %v5831, %v5935
      %v6010 = vadd.f32 %v5832, %v5937
      %v6011 = vadd.f32 %v5833, %v5939
      %v6012 = vadd.f32 %v5834, %v5940
      %v6013 = vadd.f32 %v5835, %v5941
      %v6014 = vadd.f32 %v5836, %v5943
      %v6015 = vadd.f32 %v5837, %v5945
      %v6016 = vadd.f32 %v5838, %v5946
      %v6017 = vadd.f32 %v5839, %v5947
      %v6018 = vadd.f32 %v5840, %v5949
      %v6019 = vadd.f32 %v5841, %v5951
      %v6020 = vadd.f32 %v5842, %v5952
      %v6021 = vadd.f32 %v5843, %v5953
      %v6022 = vadd.f32 %v5844, %v5955
      %v6023 = vadd.f32 %v5845, %v5957
      %v6024 = vadd.f32 %v5846, %v5958
      %v6025 = vadd.f32 %v5847, %v5959
      %v6026 = vadd.f32 %v5848, %v5961
      %v6027 = vadd.f32 %v5849, %v5963
      %v6028 = vperm.slane %v5077, 0
      %v6029 = vperm.slane %v5078, 0
      %v6030 = vmul.f32 %v5640, %v6028
      %v6031 = vmul.f32 %v5641, %v6029
      %v6032 = vmul.f32 %v5642, %v6028
      %v6033 = vmul.f32 %v5643, %v6029
      %v6034 = vmul.f32 %v5644, %v6028
      %v6035 = vmul.f32 %v5645, %v6029
      %v6036 = vmul.f32 %v5646, %v6028
      %v6037 = vmul.f32 %v5647, %v6029
      %v6038 = vmul.f32 %v5648, %v6028
      %v6039 = vmul.f32 %v5649, %v6029
      %v6040 = vmul.f32 %v5650, %v6028
      %v6041 = vmul.f32 %v5651, %v6029
      %v6042 = vmul.f32 %v5652, %v6028
      %v6043 = vmul.f32 %v5653, %v6029
      %v6044 = vmul.f32 %v5654, %v6028
      %v6045 = vmul.f32 %v5655, %v6029
      %v6046 = vmul.f32 %v5656, %v6028
      %v6047 = vmul.f32 %v5657, %v6029
      %v6048 = vmul.f32 %v5658, %v6028
      %v6049 = vmul.f32 %v5659, %v6029
      %v6050 = vmul.f32 %v5660, %v6028
      %v6051 = vmul.f32 %v5661, %v6029
      %v6052 = vmul.f32 %v5662, %v6028
      %v6053 = vmul.f32 %v5663, %v6029
      %v6054 = vmul.f32 %v5664, %v6028
      %v6055 = vmul.f32 %v5665, %v6029
      %v6056 = vmul.f32 %v5666, %v6028
      %v6057 = vmul.f32 %v5667, %v6029
      %v6058 = vmul.f32 %v5668, %v6028
      %v6059 = vmul.f32 %v5669, %v6029
      %v6060 = vmul.f32 %v5670, %v6028
      %v6061 = vmul.f32 %v5671, %v6029
      %v6094 = vrot.slane %v6030, 2
      %v6095 = vrot.slane %v6031, 2
      %v6096 = vrot.slane %v6032, 2
      %v6097 = vsel %vm3772, %v6094, %v6096
      %v6098 = vrot.slane %v6033, 2
      %v6099 = vsel %vm3772, %v6095, %v6098
      %v6100 = vrot.slane %v6034, 2
      %v6101 = vrot.slane %v6035, 2
      %v6102 = vrot.slane %v6036, 2
      %v6103 = vsel %vm3772, %v6100, %v6102
      %v6104 = vrot.slane %v6037, 2
      %v6105 = vsel %vm3772, %v6101, %v6104
      %v6106 = vrot.slane %v6038, 2
      %v6107 = vrot.slane %v6039, 2
      %v6108 = vrot.slane %v6040, 2
      %v6109 = vsel %vm3772, %v6106, %v6108
      %v6110 = vrot.slane %v6041, 2
      %v6111 = vsel %vm3772, %v6107, %v6110
      %v6112 = vrot.slane %v6042, 2
      %v6113 = vrot.slane %v6043, 2
      %v6114 = vrot.slane %v6044, 2
      %v6115 = vsel %vm3772, %v6112, %v6114
      %v6116 = vrot.slane %v6045, 2
      %v6117 = vsel %vm3772, %v6113, %v6116
      %v6118 = vrot.slane %v6046, 2
      %v6119 = vrot.slane %v6047, 2
      %v6120 = vrot.slane %v6048, 2
      %v6121 = vsel %vm3772, %v6118, %v6120
      %v6122 = vrot.slane %v6049, 2
      %v6123 = vsel %vm3772, %v6119, %v6122
      %v6124 = vrot.slane %v6050, 2
      %v6125 = vrot.slane %v6051, 2
      %v6126 = vrot.slane %v6052, 2
      %v6127 = vsel %vm3772, %v6124, %v6126
      %v6128 = vrot.slane %v6053, 2
      %v6129 = vsel %vm3772, %v6125, %v6128
      %v6130 = vrot.slane %v6054, 2
      %v6131 = vrot.slane %v6055, 2
      %v6132 = vrot.slane %v6056, 2
      %v6133 = vsel %vm3772, %v6130, %v6132
      %v6134 = vrot.slane %v6057, 2
      %v6135 = vsel %vm3772, %v6131, %v6134
      %v6136 = vrot.slane %v6058, 2
      %v6137 = vrot.slane %v6059, 2
      %v6138 = vrot.slane %v6060, 2
      %v6139 = vsel %vm3772, %v6136, %v6138
      %v6140 = vrot.slane %v6061, 2
      %v6141 = vsel %vm3772, %v6137, %v6140
      %v6174 = vadd.f32 %v5996, %v6094
      %v6175 = vadd.f32 %v5997, %v6095
      %v6176 = vadd.f32 %v5998, %v6097
      %v6177 = vadd.f32 %v5999, %v6099
      %v6178 = vadd.f32 %v6000, %v6100
      %v6179 = vadd.f32 %v6001, %v6101
      %v6180 = vadd.f32 %v6002, %v6103
      %v6181 = vadd.f32 %v6003, %v6105
      %v6182 = vadd.f32 %v6004, %v6106
      %v6183 = vadd.f32 %v6005, %v6107
      %v6184 = vadd.f32 %v6006, %v6109
      %v6185 = vadd.f32 %v6007, %v6111
      %v6186 = vadd.f32 %v6008, %v6112
      %v6187 = vadd.f32 %v6009, %v6113
      %v6188 = vadd.f32 %v6010, %v6115
      %v6189 = vadd.f32 %v6011, %v6117
      %v6190 = vadd.f32 %v6012, %v6118
      %v6191 = vadd.f32 %v6013, %v6119
      %v6192 = vadd.f32 %v6014, %v6121
      %v6193 = vadd.f32 %v6015, %v6123
      %v6194 = vadd.f32 %v6016, %v6124
      %v6195 = vadd.f32 %v6017, %v6125
      %v6196 = vadd.f32 %v6018, %v6127
      %v6197 = vadd.f32 %v6019, %v6129
      %v6198 = vadd.f32 %v6020, %v6130
      %v6199 = vadd.f32 %v6021, %v6131
      %v6200 = vadd.f32 %v6022, %v6133
      %v6201 = vadd.f32 %v6023, %v6135
      %v6202 = vadd.f32 %v6024, %v6136
      %v6203 = vadd.f32 %v6025, %v6137
      %v6204 = vadd.f32 %v6026, %v6139
      %v6205 = vadd.f32 %v6027, %v6141
      %v6207 = vperm.slane %v5079, 0
      %v6208 = vperm.slane %v5079, 1
      %v6211 = vadd.f32 %v6174, %v6207
      %v6212 = vadd.f32 %v6175, %v6208
      %v6213 = vadd.f32 %v6176, %v6207
      %v6214 = vadd.f32 %v6177, %v6208
      %v6215 = vadd.f32 %v6178, %v6207
      %v6216 = vadd.f32 %v6179, %v6208
      %v6217 = vadd.f32 %v6180, %v6207
      %v6218 = vadd.f32 %v6181, %v6208
      %v6219 = vadd.f32 %v6182, %v6207
      %v6220 = vadd.f32 %v6183, %v6208
      %v6221 = vadd.f32 %v6184, %v6207
      %v6222 = vadd.f32 %v6185, %v6208
      %v6223 = vadd.f32 %v6186, %v6207
      %v6224 = vadd.f32 %v6187, %v6208
      %v6225 = vadd.f32 %v6188, %v6207
      %v6226 = vadd.f32 %v6189, %v6208
      %v6227 = vadd.f32 %v6190, %v6207
      %v6228 = vadd.f32 %v6191, %v6208
      %v6229 = vadd.f32 %v6192, %v6207
      %v6230 = vadd.f32 %v6193, %v6208
      %v6231 = vadd.f32 %v6194, %v6207
      %v6232 = vadd.f32 %v6195, %v6208
      %v6233 = vadd.f32 %v6196, %v6207
      %v6234 = vadd.f32 %v6197, %v6208
      %v6235 = vadd.f32 %v6198, %v6207
      %v6236 = vadd.f32 %v6199, %v6208
      %v6237 = vadd.f32 %v6200, %v6207
      %v6238 = vadd.f32 %v6201, %v6208
      %v6239 = vadd.f32 %v6202, %v6207
      %v6240 = vadd.f32 %v6203, %v6208
      %v6241 = vadd.f32 %v6204, %v6207
      %v6242 = vadd.f32 %v6205, %v6208
      %v6243 = vmax.f32 %v6211, 0.0
      %v6244 = vmax.f32 %v6212, 0.0
      %v6245 = vmax.f32 %v6213, 0.0
      %v6246 = vmax.f32 %v6214, 0.0
      %v6247 = vmax.f32 %v6215, 0.0
      %v6248 = vmax.f32 %v6216, 0.0
      %v6249 = vmax.f32 %v6217, 0.0
      %v6250 = vmax.f32 %v6218, 0.0
      %v6251 = vmax.f32 %v6219, 0.0
      %v6252 = vmax.f32 %v6220, 0.0
      %v6253 = vmax.f32 %v6221, 0.0
      %v6254 = vmax.f32 %v6222, 0.0
      %v6255 = vmax.f32 %v6223, 0.0
      %v6256 = vmax.f32 %v6224, 0.0
      %v6257 = vmax.f32 %v6225, 0.0
      %v6258 = vmax.f32 %v6226, 0.0
      %v6259 = vmax.f32 %v6227, 0.0
      %v6260 = vmax.f32 %v6228, 0.0
      %v6261 = vmax.f32 %v6229, 0.0
      %v6262 = vmax.f32 %v6230, 0.0
      %v6263 = vmax.f32 %v6231, 0.0
      %v6264 = vmax.f32 %v6232, 0.0
      %v6265 = vmax.f32 %v6233, 0.0
      %v6266 = vmax.f32 %v6234, 0.0
      %v6267 = vmax.f32 %v6235, 0.0
      %v6268 = vmax.f32 %v6236, 0.0
      %v6269 = vmax.f32 %v6237, 0.0
      %v6270 = vmax.f32 %v6238, 0.0
      %v6271 = vmax.f32 %v6239, 0.0
      %v6272 = vmax.f32 %v6240, 0.0
      %v6273 = vmax.f32 %v6241, 0.0
      %v6274 = vmax.f32 %v6242, 0.0
      %v6307 = vrot.slane %v6243, 7
      %v6308 = vrot.slane %v6245, 7
      %v6309 = vsel %vm779, %v6307, %v6308
      %v6310 = vrot.slane %v6244, 7
      %v6311 = vrot.slane %v6246, 7
      %v6312 = vsel %vm779, %v6310, %v6311
      %v6313 = vrot.slane %v6247, 7
      %v6314 = vrot.slane %v6249, 7
      %v6315 = vsel %vm779, %v6313, %v6314
      %v6316 = vrot.slane %v6248, 7
      %v6317 = vrot.slane %v6250, 7
      %v6318 = vsel %vm779, %v6316, %v6317
      %v6319 = vrot.slane %v6251, 7
      %v6320 = vrot.slane %v6253, 7
      %v6321 = vsel %vm779, %v6319, %v6320
      %v6322 = vrot.slane %v6252, 7
      %v6323 = vrot.slane %v6254, 7
      %v6324 = vsel %vm779, %v6322, %v6323
      %v6325 = vrot.slane %v6255, 7
      %v6326 = vrot.slane %v6257, 7
      %v6327 = vsel %vm779, %v6325, %v6326
      %v6328 = vrot.slane %v6256, 7
      %v6329 = vrot.slane %v6258, 7
      %v6330 = vsel %vm779, %v6328, %v6329
      %v6331 = vrot.slane %v6259, 7
      %v6332 = vrot.slane %v6261, 7
      %v6333 = vsel %vm779, %v6331, %v6332
      %v6334 = vrot.slane %v6260, 7
      %v6335 = vrot.slane %v6262, 7
      %v6336 = vsel %vm779, %v6334, %v6335
      %v6337 = vrot.slane %v6263, 7
      %v6338 = vrot.slane %v6265, 7
      %v6339 = vsel %vm779, %v6337, %v6338
      %v6340 = vrot.slane %v6264, 7
      %v6341 = vrot.slane %v6266, 7
      %v6342 = vsel %vm779, %v6340, %v6341
      %v6343 = vrot.slane %v6267, 7
      %v6344 = vrot.slane %v6269, 7
      %v6345 = vsel %vm779, %v6343, %v6344
      %v6346 = vrot.slane %v6268, 7
      %v6347 = vrot.slane %v6270, 7
      %v6348 = vsel %vm779, %v6346, %v6347
      %v6349 = vrot.slane %v6271, 7
      %v6350 = vrot.slane %v6273, 7
      %v6351 = vsel %vm779, %v6349, %v6350
      %v6352 = vrot.slane %v6272, 7
      %v6353 = vrot.slane %v6274, 7
      %v6354 = vsel %vm779, %v6352, %v6353
      %v6371 = vpack.c.bf16 %v6315, %v6309
      %v6372 = vpack.c.bf16 %v6318, %v6312
      %v6373 = vpack.c.bf16 %v6327, %v6321
      %v6374 = vpack.c.bf16 %v6330, %v6324
      %v6375 = vpack.c.bf16 %v6339, %v6333
      %v6376 = vpack.c.bf16 %v6342, %v6336
      %v6377 = vpack.c.bf16 %v6351, %v6345
      %v6378 = vpack.c.bf16 %v6354, %v6348
      %v6379 = vld [vmem:[%s12] sm:$0xff]
      %v6380 = vld [vmem:[%s12 + $0x8] sm:$0xff]
      %v6381 = vld [vmem:[%s12 + $0x10] sm:$0xff]
      %v6382 = vld [vmem:[%s12 + $0x18] sm:$0xff]
      %v6383 = vld [vmem:[%s12 + $0x20] sm:$0xff]
      %v6384 = vld [vmem:[%s12 + $0x28] sm:$0xff]
      %v6385 = vld [vmem:[%s12 + $0x30] sm:$0xff]
      %v6386 = vld [vmem:[%s12 + $0x38] sm:$0xff]
      %v6387 = vld [vmem:[%s12 + $0x40] sm:$0xff]
      %v6388 = vld [vmem:[%s12 + $0x48] sm:$0xff]
      %v6389 = vld [vmem:[%s12 + $0x50] sm:$0xff]
      %v6390 = vld [vmem:[%s12 + $0x58] sm:$0xff]
      %v6391 = vld [vmem:[%s12 + $0x60] sm:$0xff]
      %v6392 = vld [vmem:[%s12 + $0x68] sm:$0xff]
      %v6393 = vld [vmem:[%s12 + $0x70] sm:$0xff]
      %v6394 = vld [vmem:[%s12 + $0x78] sm:$0xff]
      %v6395 = vld [vmem:[%s12 + $0x80] sm:$0xff]
      %v6396 = vld [vmem:[%s12 + $0x88] sm:$0xff]
      %v6397 = vld [vmem:[%s12 + $0x90] sm:$0xff]
      %v6398 = vld [vmem:[%s12 + $0x98] sm:$0xff]
      %v6399 = vld [vmem:[%s12 + $0xa0] sm:$0xff]
      %v6400 = vld [vmem:[%s12 + $0xa8] sm:$0xff]
      %v6401 = vld [vmem:[%s12 + $0xb0] sm:$0xff]
      %v6402 = vld [vmem:[%s12 + $0xb8] sm:$0xff]
      %v6403 = vld [vmem:[%s12 + $0xc0] sm:$0xff]
      %v6404 = vld [vmem:[%s12 + $0xc8] sm:$0xff]
      %v6405 = vld [vmem:[%s12 + $0xd0] sm:$0xff]
      %v6406 = vld [vmem:[%s12 + $0xd8] sm:$0xff]
      %v6407 = vld [vmem:[%s12 + $0xe0] sm:$0xff]
      %v6408 = vld [vmem:[%s12 + $0xe8] sm:$0xff]
      %v6409 = vld [vmem:[%s12 + $0xf0] sm:$0xff]
      %v6410 = vld [vmem:[%s12 + $0xf8] sm:$0xff]
      %v6411 = vld [vmem:[%s13] sm:$0xff]
      %v6412 = vld [vmem:[%s13 + $0x8] sm:$0xff]
      %v6413 = vld [vmem:[%s13 + $0x10] sm:$0xff]
      %v6414 = vld [vmem:[%s13 + $0x18] sm:$0xff]
      %v6415 = vld [vmem:[%s13 + $0x20] sm:$0xff]
      %v6416 = vld [vmem:[%s13 + $0x28] sm:$0xff]
      %v6417 = vld [vmem:[%s13 + $0x30] sm:$0xff]
      %v6418 = vld [vmem:[%s13 + $0x38] sm:$0xff]
      %v6419 = vld [vmem:[%s13 + $0x40] sm:$0xff]
      %v6420 = vld [vmem:[%s13 + $0x48] sm:$0xff]
      %v6421 = vld [vmem:[%s13 + $0x50] sm:$0xff]
      %v6422 = vld [vmem:[%s13 + $0x58] sm:$0xff]
      %v6423 = vld [vmem:[%s13 + $0x60] sm:$0xff]
      %v6424 = vld [vmem:[%s13 + $0x68] sm:$0xff]
      %v6425 = vld [vmem:[%s13 + $0x70] sm:$0xff]
      %v6426 = vld [vmem:[%s13 + $0x78] sm:$0xff]
      %v6427 = vld [vmem:[%s13 + $0x80] sm:$0xff]
      %v6428 = vld [vmem:[%s13 + $0x88] sm:$0xff]
      %v6429 = vld [vmem:[%s13 + $0x90] sm:$0xff]
      %v6430 = vld [vmem:[%s13 + $0x98] sm:$0xff]
      %v6431 = vld [vmem:[%s13 + $0xa0] sm:$0xff]
      %v6432 = vld [vmem:[%s13 + $0xa8] sm:$0xff]
      %v6433 = vld [vmem:[%s13 + $0xb0] sm:$0xff]
      %v6434 = vld [vmem:[%s13 + $0xb8] sm:$0xff]
      %v6435 = vld [vmem:[%s13 + $0xc0] sm:$0xff]
      %v6436 = vld [vmem:[%s13 + $0xc8] sm:$0xff]
      %v6437 = vld [vmem:[%s13 + $0xd0] sm:$0xff]
      %v6438 = vld [vmem:[%s13 + $0xd8] sm:$0xff]
      %v6439 = vld [vmem:[%s13 + $0xe0] sm:$0xff]
      %v6440 = vld [vmem:[%s13 + $0xe8] sm:$0xff]
      %v6441 = vld [vmem:[%s13 + $0xf0] sm:$0xff]
      %v6442 = vld [vmem:[%s13 + $0xf8] sm:$0xff]
      %6444 = vset.pattern.permute.xlu0 0
      %6445 = vperm.xlu0 %6444, %v6411
      %v6446 = vpop.permute.xlu0 %6445
      %6449 = vset.pattern.permute.xlu0 0
      %6450 = vperm.xlu0 %6449, %v6412
      %v6451 = vpop.permute.xlu0 %6450
      %6454 = vset.pattern.permute.xlu0 0
      %6455 = vperm.xlu0 %6454, %v6413
      %v6456 = vpop.permute.xlu0 %6455
      %6459 = vset.pattern.permute.xlu0 0
      %6460 = vperm.xlu0 %6459, %v6414
      %v6461 = vpop.permute.xlu0 %6460
      %6464 = vset.pattern.permute.xlu0 0
      %6465 = vperm.xlu0 %6464, %v6415
      %v6466 = vpop.permute.xlu0 %6465
      %6469 = vset.pattern.permute.xlu0 0
      %6470 = vperm.xlu0 %6469, %v6416
      %v6471 = vpop.permute.xlu0 %6470
      %6474 = vset.pattern.permute.xlu0 0
      %6475 = vperm.xlu0 %6474, %v6417
      %v6476 = vpop.permute.xlu0 %6475
      %6479 = vset.pattern.permute.xlu0 0
      %6480 = vperm.xlu0 %6479, %v6418
      %v6481 = vpop.permute.xlu0 %6480
      %6484 = vset.pattern.permute.xlu0 0
      %6485 = vperm.xlu0 %6484, %v6419
      %v6486 = vpop.permute.xlu0 %6485
      %6489 = vset.pattern.permute.xlu0 0
      %6490 = vperm.xlu0 %6489, %v6420
      %v6491 = vpop.permute.xlu0 %6490
      %6494 = vset.pattern.permute.xlu0 0
      %6495 = vperm.xlu0 %6494, %v6421
      %v6496 = vpop.permute.xlu0 %6495
      %6499 = vset.pattern.permute.xlu0 0
      %6500 = vperm.xlu0 %6499, %v6422
      %v6501 = vpop.permute.xlu0 %6500
      %6504 = vset.pattern.permute.xlu0 0
      %6505 = vperm.xlu0 %6504, %v6423
      %v6506 = vpop.permute.xlu0 %6505
      %6509 = vset.pattern.permute.xlu0 0
      %6510 = vperm.xlu0 %6509, %v6424
      %v6511 = vpop.permute.xlu0 %6510
      %6514 = vset.pattern.permute.xlu0 0
      %6515 = vperm.xlu0 %6514, %v6425
      %v6516 = vpop.permute.xlu0 %6515
      %6519 = vset.pattern.permute.xlu0 0
      %6520 = vperm.xlu0 %6519, %v6426
      %v6521 = vpop.permute.xlu0 %6520
      %6524 = vset.pattern.permute.xlu0 0
      %6525 = vperm.xlu0 %6524, %v6427
      %v6526 = vpop.permute.xlu0 %6525
      %6529 = vset.pattern.permute.xlu0 0
      %6530 = vperm.xlu0 %6529, %v6428
      %v6531 = vpop.permute.xlu0 %6530
      %6534 = vset.pattern.permute.xlu0 0
      %6535 = vperm.xlu0 %6534, %v6429
      %v6536 = vpop.permute.xlu0 %6535
      %6539 = vset.pattern.permute.xlu0 0
      %6540 = vperm.xlu0 %6539, %v6430
      %v6541 = vpop.permute.xlu0 %6540
      %6544 = vset.pattern.permute.xlu0 0
      %6545 = vperm.xlu0 %6544, %v6431
      %v6546 = vpop.permute.xlu0 %6545
      %6549 = vset.pattern.permute.xlu0 0
      %6550 = vperm.xlu0 %6549, %v6432
      %v6551 = vpop.permute.xlu0 %6550
      %6554 = vset.pattern.permute.xlu0 0
      %6555 = vperm.xlu0 %6554, %v6433
      %v6556 = vpop.permute.xlu0 %6555
      %6559 = vset.pattern.permute.xlu0 0
      %6560 = vperm.xlu0 %6559, %v6434
      %v6561 = vpop.permute.xlu0 %6560
      %6564 = vset.pattern.permute.xlu0 0
      %6565 = vperm.xlu0 %6564, %v6435
      %v6566 = vpop.permute.xlu0 %6565
      %6569 = vset.pattern.permute.xlu0 0
      %6570 = vperm.xlu0 %6569, %v6436
      %v6571 = vpop.permute.xlu0 %6570
      %6574 = vset.pattern.permute.xlu0 0
      %6575 = vperm.xlu0 %6574, %v6437
      %v6576 = vpop.permute.xlu0 %6575
      %6579 = vset.pattern.permute.xlu0 0
      %6580 = vperm.xlu0 %6579, %v6438
      %v6581 = vpop.permute.xlu0 %6580
      %6584 = vset.pattern.permute.xlu0 0
      %6585 = vperm.xlu0 %6584, %v6439
      %v6586 = vpop.permute.xlu0 %6585
      %6589 = vset.pattern.permute.xlu0 0
      %6590 = vperm.xlu0 %6589, %v6440
      %v6591 = vpop.permute.xlu0 %6590
      %6594 = vset.pattern.permute.xlu0 0
      %6595 = vperm.xlu0 %6594, %v6441
      %v6596 = vpop.permute.xlu0 %6595
      %6599 = vset.pattern.permute.xlu0 0
      %6600 = vperm.xlu0 %6599, %v6442
      %v6601 = vpop.permute.xlu0 %6600
      %v6635 = vunpack.c.l.b16 %v6379
      %v6636 = vunpack.c.h.b16 %v6379
      %v6637 = vunpack.c.l.b16 %v6380
      %v6638 = vunpack.c.h.b16 %v6380
      %v6639 = vunpack.c.l.b16 %v6381
      %v6640 = vunpack.c.h.b16 %v6381
      %v6641 = vunpack.c.l.b16 %v6382
      %v6642 = vunpack.c.h.b16 %v6382
      %v6643 = vunpack.c.l.b16 %v6383
      %v6644 = vunpack.c.h.b16 %v6383
      %v6645 = vunpack.c.l.b16 %v6384
      %v6646 = vunpack.c.h.b16 %v6384
      %v6647 = vunpack.c.l.b16 %v6385
      %v6648 = vunpack.c.h.b16 %v6385
      %v6649 = vunpack.c.l.b16 %v6386
      %v6650 = vunpack.c.h.b16 %v6386
      %v6651 = vunpack.c.l.b16 %v6387
      %v6652 = vunpack.c.h.b16 %v6387
      %v6653 = vunpack.c.l.b16 %v6388
      %v6654 = vunpack.c.h.b16 %v6388
      %v6655 = vunpack.c.l.b16 %v6389
      %v6656 = vunpack.c.h.b16 %v6389
      %v6657 = vunpack.c.l.b16 %v6390
      %v6658 = vunpack.c.h.b16 %v6390
      %v6659 = vunpack.c.l.b16 %v6391
      %v6660 = vunpack.c.h.b16 %v6391
      %v6661 = vunpack.c.l.b16 %v6392
      %v6662 = vunpack.c.h.b16 %v6392
      %v6663 = vunpack.c.l.b16 %v6393
      %v6664 = vunpack.c.h.b16 %v6393
      %v6665 = vunpack.c.l.b16 %v6394
      %v6666 = vunpack.c.h.b16 %v6394
      %v6667 = vunpack.c.l.b16 %v6395
      %v6668 = vunpack.c.h.b16 %v6395
      %v6669 = vunpack.c.l.b16 %v6396
      %v6670 = vunpack.c.h.b16 %v6396
      %v6671 = vunpack.c.l.b16 %v6397
      %v6672 = vunpack.c.h.b16 %v6397
      %v6673 = vunpack.c.l.b16 %v6398
      %v6674 = vunpack.c.h.b16 %v6398
      %v6675 = vunpack.c.l.b16 %v6399
      %v6676 = vunpack.c.h.b16 %v6399
      %v6677 = vunpack.c.l.b16 %v6400
      %v6678 = vunpack.c.h.b16 %v6400
      %v6679 = vunpack.c.l.b16 %v6401
      %v6680 = vunpack.c.h.b16 %v6401
      %v6681 = vunpack.c.l.b16 %v6402
      %v6682 = vunpack.c.h.b16 %v6402
      %v6683 = vunpack.c.l.b16 %v6403
      %v6684 = vunpack.c.h.b16 %v6403
      %v6685 = vunpack.c.l.b16 %v6404
      %v6686 = vunpack.c.h.b16 %v6404
      %v6687 = vunpack.c.l.b16 %v6405
      %v6688 = vunpack.c.h.b16 %v6405
      %v6689 = vunpack.c.l.b16 %v6406
      %v6690 = vunpack.c.h.b16 %v6406
      %v6691 = vunpack.c.l.b16 %v6407
      %v6692 = vunpack.c.h.b16 %v6407
      %v6693 = vunpack.c.l.b16 %v6408
      %v6694 = vunpack.c.h.b16 %v6408
      %v6695 = vunpack.c.l.b16 %v6409
      %v6696 = vunpack.c.h.b16 %v6409
      %v6697 = vunpack.c.l.b16 %v6410
      %v6698 = vunpack.c.h.b16 %v6410
      %v6699 = vpack.c.b16 %v6637, %v6635
      %v6700 = vpack.c.b16 %v6638, %v6636
      %v6701 = vpack.c.b16 %v6641, %v6639
      %v6702 = vpack.c.b16 %v6642, %v6640
      %v6703 = vpack.c.b16 %v6645, %v6643
      %v6704 = vpack.c.b16 %v6646, %v6644
      %v6705 = vpack.c.b16 %v6649, %v6647
      %v6706 = vpack.c.b16 %v6650, %v6648
      %v6707 = vpack.c.b16 %v6653, %v6651
      %v6708 = vpack.c.b16 %v6654, %v6652
      %v6709 = vpack.c.b16 %v6657, %v6655
      %v6710 = vpack.c.b16 %v6658, %v6656
      %v6711 = vpack.c.b16 %v6661, %v6659
      %v6712 = vpack.c.b16 %v6662, %v6660
      %v6713 = vpack.c.b16 %v6665, %v6663
      %v6714 = vpack.c.b16 %v6666, %v6664
      %v6715 = vpack.c.b16 %v6669, %v6667
      %v6716 = vpack.c.b16 %v6670, %v6668
      %v6717 = vpack.c.b16 %v6673, %v6671
      %v6718 = vpack.c.b16 %v6674, %v6672
      %v6719 = vpack.c.b16 %v6677, %v6675
      %v6720 = vpack.c.b16 %v6678, %v6676
      %v6721 = vpack.c.b16 %v6681, %v6679
      %v6722 = vpack.c.b16 %v6682, %v6680
      %v6723 = vpack.c.b16 %v6685, %v6683
      %v6724 = vpack.c.b16 %v6686, %v6684
      %v6725 = vpack.c.b16 %v6689, %v6687
      %v6726 = vpack.c.b16 %v6690, %v6688
      %v6727 = vpack.c.b16 %v6693, %v6691
      %v6728 = vpack.c.b16 %v6694, %v6692
      %v6729 = vpack.c.b16 %v6697, %v6695
      %v6730 = vpack.c.b16 %v6698, %v6696
      %6763 = vmatpush.bf16.xpose.msra.mxu0 0
      %6764 = vmatpush.bf16.xpose.msra.mxu0 0
      %6765 = vmatpush.bf16.xpose.msra.mxu0 0
      %6766 = vmatpush.bf16.xpose.msra.mxu0 0
      %6767 = vmatpush.bf16.xpose.msra.mxu0 %v6377
      %6768 = vmatpush.bf16.xpose.msra.mxu0 %v6375
      %6769 = vmatpush.bf16.xpose.msra.mxu0 %v6373
      %6770 = vmatpush.bf16.xpose.msra.mxu0 %v6371
      %6771 = vmatmul.bf16.gmra.mxu0 %v6699
      %v6772 = vpop.f32.mrf.mxu0
      %v6773 = vadd.f32 %v6446, %v6772
      %v6774 = vpop.f32.mrf.mxu0
      %v6775 = vadd.f32 %v6451, %v6774
      %6776 = vmatmul.bf16.gmra.mxu0 %v6701
      %v6777 = vpop.f32.mrf.mxu0
      %v6778 = vadd.f32 %v6456, %v6777
      %v6779 = vpop.f32.mrf.mxu0
      %v6780 = vadd.f32 %v6461, %v6779
      %6781 = vmatmul.bf16.gmra.mxu0 %v6703
      %v6782 = vpop.f32.mrf.mxu0
      %v6783 = vadd.f32 %v6466, %v6782
      %v6784 = vpop.f32.mrf.mxu0
      %v6785 = vadd.f32 %v6471, %v6784
      %6786 = vmatmul.bf16.gmra.mxu0 %v6705
      %v6787 = vpop.f32.mrf.mxu0
      %v6788 = vadd.f32 %v6476, %v6787
      %v6789 = vpop.f32.mrf.mxu0
      %v6790 = vadd.f32 %v6481, %v6789
      %6791 = vmatmul.bf16.gmra.mxu0 %v6707
      %v6792 = vpop.f32.mrf.mxu0
      %v6793 = vadd.f32 %v6486, %v6792
      %v6794 = vpop.f32.mrf.mxu0
      %v6795 = vadd.f32 %v6491, %v6794
      %6796 = vmatmul.bf16.gmra.mxu0 %v6709
      %v6797 = vpop.f32.mrf.mxu0
      %v6798 = vadd.f32 %v6496, %v6797
      %v6799 = vpop.f32.mrf.mxu0
      %v6800 = vadd.f32 %v6501, %v6799
      %6801 = vmatmul.bf16.gmra.mxu0 %v6711
      %v6802 = vpop.f32.mrf.mxu0
      %v6803 = vadd.f32 %v6506, %v6802
      %v6804 = vpop.f32.mrf.mxu0
      %v6805 = vadd.f32 %v6511, %v6804
      %6806 = vmatmul.bf16.gmra.mxu0 %v6713
      %v6807 = vpop.f32.mrf.mxu0
      %v6808 = vadd.f32 %v6516, %v6807
      %v6809 = vpop.f32.mrf.mxu0
      %v6810 = vadd.f32 %v6521, %v6809
      %6811 = vmatmul.bf16.gmra.mxu0 %v6715
      %v6812 = vpop.f32.mrf.mxu0
      %v6813 = vadd.f32 %v6526, %v6812
      %v6814 = vpop.f32.mrf.mxu0
      %v6815 = vadd.f32 %v6531, %v6814
      %6816 = vmatmul.bf16.gmra.mxu0 %v6717
      %v6817 = vpop.f32.mrf.mxu0
      %v6818 = vadd.f32 %v6536, %v6817
      %v6819 = vpop.f32.mrf.mxu0
      %v6820 = vadd.f32 %v6541, %v6819
      %6821 = vmatmul.bf16.gmra.mxu0 %v6719
      %v6822 = vpop.f32.mrf.mxu0
      %v6823 = vadd.f32 %v6546, %v6822
      %v6824 = vpop.f32.mrf.mxu0
      %v6825 = vadd.f32 %v6551, %v6824
      %6826 = vmatmul.bf16.gmra.mxu0 %v6721
      %v6827 = vpop.f32.mrf.mxu0
      %v6828 = vadd.f32 %v6556, %v6827
      %v6829 = vpop.f32.mrf.mxu0
      %v6830 = vadd.f32 %v6561, %v6829
      %6831 = vmatmul.bf16.gmra.mxu0 %v6723
      %v6832 = vpop.f32.mrf.mxu0
      %v6833 = vadd.f32 %v6566, %v6832
      %v6834 = vpop.f32.mrf.mxu0
      %v6835 = vadd.f32 %v6571, %v6834
      %6836 = vmatmul.bf16.gmra.mxu0 %v6725
      %v6837 = vpop.f32.mrf.mxu0
      %v6838 = vadd.f32 %v6576, %v6837
      %v6839 = vpop.f32.mrf.mxu0
      %v6840 = vadd.f32 %v6581, %v6839
      %6841 = vmatmul.bf16.gmra.mxu0 %v6727
      %v6842 = vpop.f32.mrf.mxu0
      %v6843 = vadd.f32 %v6586, %v6842
      %v6844 = vpop.f32.mrf.mxu0
      %v6845 = vadd.f32 %v6591, %v6844
      %6846 = vmatmul.bf16.gmra.mxu0 %v6729
      %v6847 = vpop.f32.mrf.mxu0
      %v6848 = vadd.f32 %v6596, %v6847
      %v6849 = vpop.f32.mrf.mxu0
      %v6850 = vadd.f32 %v6601, %v6849
      %6851 = vdwg.mxu0
      %6852 = vmatpush.bf16.xpose.msra.mxu0 0
      %6853 = vmatpush.bf16.xpose.msra.mxu0 0
      %6854 = vmatpush.bf16.xpose.msra.mxu0 0
      %6855 = vmatpush.bf16.xpose.msra.mxu0 0
      %6856 = vmatpush.bf16.xpose.msra.mxu0 %v6378
      %6857 = vmatpush.bf16.xpose.msra.mxu0 %v6376
      %6858 = vmatpush.bf16.xpose.msra.mxu0 %v6374
      %6859 = vmatpush.bf16.xpose.msra.mxu0 %v6372
      %6860 = vmatmul.bf16.gmra.mxu0 %v6700
      %v6861 = vpop.f32.mrf.mxu0
      %v6862 = vadd.f32 %v6773, %v6861
      %v6863 = vpop.f32.mrf.mxu0
      %v6864 = vadd.f32 %v6775, %v6863
      %6865 = vmatmul.bf16.gmra.mxu0 %v6702
      %v6866 = vpop.f32.mrf.mxu0
      %v6867 = vadd.f32 %v6778, %v6866
      %v6868 = vpop.f32.mrf.mxu0
      %v6869 = vadd.f32 %v6780, %v6868
      %6870 = vmatmul.bf16.gmra.mxu0 %v6704
      %v6871 = vpop.f32.mrf.mxu0
      %v6872 = vadd.f32 %v6783, %v6871
      %v6873 = vpop.f32.mrf.mxu0
      %v6874 = vadd.f32 %v6785, %v6873
      %6875 = vmatmul.bf16.gmra.mxu0 %v6706
      %v6876 = vpop.f32.mrf.mxu0
      %v6877 = vadd.f32 %v6788, %v6876
      %v6878 = vpop.f32.mrf.mxu0
      %v6879 = vadd.f32 %v6790, %v6878
      %6880 = vmatmul.bf16.gmra.mxu0 %v6708
      %v6881 = vpop.f32.mrf.mxu0
      %v6882 = vadd.f32 %v6793, %v6881
      %v6883 = vpop.f32.mrf.mxu0
      %v6884 = vadd.f32 %v6795, %v6883
      %6885 = vmatmul.bf16.gmra.mxu0 %v6710
      %v6886 = vpop.f32.mrf.mxu0
      %v6887 = vadd.f32 %v6798, %v6886
      %v6888 = vpop.f32.mrf.mxu0
      %v6889 = vadd.f32 %v6800, %v6888
      %6890 = vmatmul.bf16.gmra.mxu0 %v6712
      %v6891 = vpop.f32.mrf.mxu0
      %v6892 = vadd.f32 %v6803, %v6891
      %v6893 = vpop.f32.mrf.mxu0
      %v6894 = vadd.f32 %v6805, %v6893
      %6895 = vmatmul.bf16.gmra.mxu0 %v6714
      %v6896 = vpop.f32.mrf.mxu0
      %v6897 = vadd.f32 %v6808, %v6896
      %v6898 = vpop.f32.mrf.mxu0
      %v6899 = vadd.f32 %v6810, %v6898
      %6900 = vmatmul.bf16.gmra.mxu0 %v6716
      %v6901 = vpop.f32.mrf.mxu0
      %v6902 = vadd.f32 %v6813, %v6901
      %v6903 = vpop.f32.mrf.mxu0
      %v6904 = vadd.f32 %v6815, %v6903
      %6905 = vmatmul.bf16.gmra.mxu0 %v6718
      %v6906 = vpop.f32.mrf.mxu0
      %v6907 = vadd.f32 %v6818, %v6906
      %v6908 = vpop.f32.mrf.mxu0
      %v6909 = vadd.f32 %v6820, %v6908
      %6910 = vmatmul.bf16.gmra.mxu0 %v6720
      %v6911 = vpop.f32.mrf.mxu0
      %v6912 = vadd.f32 %v6823, %v6911
      %v6913 = vpop.f32.mrf.mxu0
      %v6914 = vadd.f32 %v6825, %v6913
      %6915 = vmatmul.bf16.gmra.mxu0 %v6722
      %v6916 = vpop.f32.mrf.mxu0
      %v6917 = vadd.f32 %v6828, %v6916
      %v6918 = vpop.f32.mrf.mxu0
      %v6919 = vadd.f32 %v6830, %v6918
      %6920 = vmatmul.bf16.gmra.mxu0 %v6724
      %v6921 = vpop.f32.mrf.mxu0
      %v6922 = vadd.f32 %v6833, %v6921
      %v6923 = vpop.f32.mrf.mxu0
      %v6924 = vadd.f32 %v6835, %v6923
      %6925 = vmatmul.bf16.gmra.mxu0 %v6726
      %v6926 = vpop.f32.mrf.mxu0
      %v6927 = vadd.f32 %v6838, %v6926
      %v6928 = vpop.f32.mrf.mxu0
      %v6929 = vadd.f32 %v6840, %v6928
      %6930 = vmatmul.bf16.gmra.mxu0 %v6728
      %v6931 = vpop.f32.mrf.mxu0
      %v6932 = vadd.f32 %v6843, %v6931
      %v6933 = vpop.f32.mrf.mxu0
      %v6934 = vadd.f32 %v6845, %v6933
      %6935 = vmatmul.bf16.gmra.mxu0 %v6730
      %v6936 = vpop.f32.mrf.mxu0
      %v6937 = vadd.f32 %v6848, %v6936
      %v6938 = vpop.f32.mrf.mxu0
      %v6939 = vadd.f32 %v6850, %v6938
      %6940 = vdwg.mxu0
      %v6941 = vmax.f32 %v6862, 0.0
      %v6942 = vmax.f32 %v6864, 0.0
      %v6943 = vmax.f32 %v6867, 0.0
      %v6944 = vmax.f32 %v6869, 0.0
      %v6945 = vmax.f32 %v6872, 0.0
      %v6946 = vmax.f32 %v6874, 0.0
      %v6947 = vmax.f32 %v6877, 0.0
      %v6948 = vmax.f32 %v6879, 0.0
      %v6949 = vmax.f32 %v6882, 0.0
      %v6950 = vmax.f32 %v6884, 0.0
      %v6951 = vmax.f32 %v6887, 0.0
      %v6952 = vmax.f32 %v6889, 0.0
      %v6953 = vmax.f32 %v6892, 0.0
      %v6954 = vmax.f32 %v6894, 0.0
      %v6955 = vmax.f32 %v6897, 0.0
      %v6956 = vmax.f32 %v6899, 0.0
      %v6957 = vmax.f32 %v6902, 0.0
      %v6958 = vmax.f32 %v6904, 0.0
      %v6959 = vmax.f32 %v6907, 0.0
      %v6960 = vmax.f32 %v6909, 0.0
      %v6961 = vmax.f32 %v6912, 0.0
      %v6962 = vmax.f32 %v6914, 0.0
      %v6963 = vmax.f32 %v6917, 0.0
      %v6964 = vmax.f32 %v6919, 0.0
      %v6965 = vmax.f32 %v6922, 0.0
      %v6966 = vmax.f32 %v6924, 0.0
      %v6967 = vmax.f32 %v6927, 0.0
      %v6968 = vmax.f32 %v6929, 0.0
      %v6969 = vmax.f32 %v6932, 0.0
      %v6970 = vmax.f32 %v6934, 0.0
      %v6971 = vmax.f32 %v6937, 0.0
      %v6972 = vmax.f32 %v6939, 0.0
      %vm6973 = vcmask 523264
      %6974 = vst.msk [vmem:[%s487] sm:$0xff] %vm6973, %v6941
      %6975 = vst.msk [vmem:[%s487 + $0x8] sm:$0xff] %vm6973, %v6942
      %6976 = vst.msk [vmem:[%s487 + $0x10] sm:$0xff] %vm6973, %v6943
      %6977 = vst.msk [vmem:[%s487 + $0x18] sm:$0xff] %vm6973, %v6944
      %6978 = vst.msk [vmem:[%s487 + $0x20] sm:$0xff] %vm6973, %v6945
      %6979 = vst.msk [vmem:[%s487 + $0x28] sm:$0xff] %vm6973, %v6946
      %6980 = vst.msk [vmem:[%s487 + $0x30] sm:$0xff] %vm6973, %v6947
      %6981 = vst.msk [vmem:[%s487 + $0x38] sm:$0xff] %vm6973, %v6948
      %6982 = vst.msk [vmem:[%s487 + $0x40] sm:$0xff] %vm6973, %v6949
      %6983 = vst.msk [vmem:[%s487 + $0x48] sm:$0xff] %vm6973, %v6950
      %6984 = vst.msk [vmem:[%s487 + $0x50] sm:$0xff] %vm6973, %v6951
      %6985 = vst.msk [vmem:[%s487 + $0x58] sm:$0xff] %vm6973, %v6952
      %6986 = vst.msk [vmem:[%s487 + $0x60] sm:$0xff] %vm6973, %v6953
      %6987 = vst.msk [vmem:[%s487 + $0x68] sm:$0xff] %vm6973, %v6954
      %6988 = vst.msk [vmem:[%s487 + $0x70] sm:$0xff] %vm6973, %v6955
      %6989 = vst.msk [vmem:[%s487 + $0x78] sm:$0xff] %vm6973, %v6956
      %6990 = vst.msk [vmem:[%s487 + $0x80] sm:$0xff] %vm6973, %v6957
      %6991 = vst.msk [vmem:[%s487 + $0x88] sm:$0xff] %vm6973, %v6958
      %6992 = vst.msk [vmem:[%s487 + $0x90] sm:$0xff] %vm6973, %v6959
      %6993 = vst.msk [vmem:[%s487 + $0x98] sm:$0xff] %vm6973, %v6960
      %6994 = vst.msk [vmem:[%s487 + $0xa0] sm:$0xff] %vm6973, %v6961
      %6995 = vst.msk [vmem:[%s487 + $0xa8] sm:$0xff] %vm6973, %v6962
      %6996 = vst.msk [vmem:[%s487 + $0xb0] sm:$0xff] %vm6973, %v6963
      %6997 = vst.msk [vmem:[%s487 + $0xb8] sm:$0xff] %vm6973, %v6964
      %6998 = vst.msk [vmem:[%s487 + $0xc0] sm:$0xff] %vm6973, %v6965
      %6999 = vst.msk [vmem:[%s487 + $0xc8] sm:$0xff] %vm6973, %v6966
      %7000 = vst.msk [vmem:[%s487 + $0xd0] sm:$0xff] %vm6973, %v6967
      %7001 = vst.msk [vmem:[%s487 + $0xd8] sm:$0xff] %vm6973, %v6968
      %7002 = vst.msk [vmem:[%s487 + $0xe0] sm:$0xff] %vm6973, %v6969
      %7003 = vst.msk [vmem:[%s487 + $0xe8] sm:$0xff] %vm6973, %v6970
      %7004 = vst.msk [vmem:[%s487 + $0xf0] sm:$0xff] %vm6973, %v6971
      %7005 = vst.msk [vmem:[%s487 + $0xf8] sm:$0xff] %vm6973, %v6972
      %p7006 = scmp.lt.s32.totalorder %s25, 1
      %s7007 = scalar_select %p7006, %s25, 1
      %s7008 = smul.addr %s7007, 32
      %s7009 = smul.addr %s7008, 8
      %s7010 = scalar_lea.vmem %s14, %s7009
      // Predicated region
      $region77: #{decoder_forward.1} parent=75 // pred_check
        %p7011 = pneg %p347
      $region78: #{decoder_forward.1} parent=75 // pred_check_branch
        %7013 = sbr.rel (%p7011) target = $region80
      $region79: #{decoder_forward.1} parent=75 // pred_region
        _
      $region80: #{decoder_forward.1} parent=75 // pred_fallthru
        _
    $region76: #{decoder_forward.1} parent=5 // pred_fallthru
      _
    %p7014 = scmp.le.s32.totalorder 2, %s20
    // Predicated region
    $region81: #{decoder_forward.1} parent=5 // pred_check
      %p7015 = pneg %p7014
    $region82: #{decoder_forward.1} parent=5 // pred_check_branch
      %7017 = sbr.rel (%p7015) target = $region84
    $region83: #{decoder_forward.1} parent=5 // pred_region
      %s7018 = ssub.s32 %s20, 2
      // Predicated region
      $region85: #{decoder_forward.1} parent=83 // pred_check
        %p7019 = pneg %p353
      $region86: #{decoder_forward.1} parent=83 // pred_check_branch
        %7021 = sbr.rel (%p7019) target = $region88
      $region87: #{decoder_forward.1} parent=83 // pred_region
        %p7022 = scmp.lt.s32.totalorder %s26, 1
        %s7023 = scalar_select %p7022, %s26, 1
        %s7024 = smul.addr %s7023, 32
        %s7025 = smul.addr %s7024, 8
        %s7026 = scalar_lea.vmem %s14, %s7025
      $region88: #{decoder_forward.1} parent=83 // pred_fallthru
        _
    $region84: #{decoder_forward.1} parent=5 // pred_fallthru
      _
  $region6: #{decoder_forward.1} parent=0 // loop_footer
    %s24 = sadd.s32 1, %s20
  $region7: #{decoder_forward.1} parent=0 // loop_footer_branch
    %19 = sbr.rel target = $region3
  $region8: #{decoder_forward.1} parent=0 // loop_exit
    _

</llo_original>
